<compile_context>
chip_gen: v7x
topology: tpu7x:2x2x1
jax: 0.10.0
libtpu: 0.0.40
codegen_flags: <defaults>
</compile_context>

<pallas_src>
import functools
import math

import jax
import jax.numpy as jnp
from jax.experimental import pallas as pl
from jax.experimental.pallas import tpu as pltpu

NEG_INF = -1e30            # stand-in for float('-inf') masked_fill; identical softmax in f32
MATMUL_DTYPE = jnp.float32  # flip to jnp.bfloat16 on v6e/v7x for larger models (f32 accumulate)

WEIGHT_ORDER = (
    "se_w", "se_b", "ae_w", "ae_b",
    "ln_g", "ln_b",
    "sa_wqkv", "sa_bqkv", "sa_wo", "sa_bo",
    "ca_wq", "ca_bq", "ca_wkv", "ca_bkv", "ca_wo", "ca_bo",
    "fc1_w", "fc1_b", "fc2_w", "fc2_b",
    "mu_w", "mu_b",
)


# ----------------------------- fused Pallas kernel -----------------------------

def _gpt_fused_kernel(
    state_ref, actions_ref, pos_ref,
    se_w, se_b, ae_w, ae_b,
    ln_g, ln_b,
    sa_wqkv, sa_bqkv, sa_wo, sa_bo,
    ca_wq, ca_bq, ca_wkv, ca_bkv, ca_wo, ca_bo,
    fc1_w, fc1_b, fc2_w, fc2_b,
    mu_w, mu_b,
    out_ref,
    *, n_layers, num_heads, n_agents, model_dim,
):
    n, d, H = n_agents, model_dim, num_heads
    hd = d // H
    scale = 1.0 / math.sqrt(hd)

    def mm(x, w):
        return jnp.dot(x.astype(MATMUL_DTYPE), w.astype(MATMUL_DTYPE),
                       preferred_element_type=jnp.float32)

    def layer_norm(x, g, b):                       # g, b: (1, d)
        mu = jnp.mean(x, axis=-1, keepdims=True)
        var = jnp.mean(jnp.square(x - mu), axis=-1, keepdims=True)
        return (x - mu) * jax.lax.rsqrt(var + 1e-5) * g + b

    # Causal (tril) additive mask built in-register -- no HBM input / DMA needed.
    row = jax.lax.broadcasted_iota(jnp.int32, (n, n), 0)
    col = jax.lax.broadcasted_iota(jnp.int32, (n, n), 1)
    mask_add = jnp.where(col > row, NEG_INF, 0.0)

    def attention(q, k, v):
        # q/k/v: (n, d) with heads packed along lanes.  Per-head 8x8 dots, unrolled:
        # at these sizes the MXU work is negligible; the concat reproduces combine_heads.
        outs = []
        for h in range(H):
            sl = slice(h * hd, (h + 1) * hd)
            qh, kh, vh = q[:, sl], k[:, sl], v[:, sl]
            s = mm(qh, kh.T) * scale + mask_add
            s = s - jnp.max(s, axis=-1, keepdims=True)
            p = jnp.exp(s)
            p = p * pl.reciprocal(jnp.sum(p, axis=-1, keepdims=True), approx=True)
            outs.append(mm(p, vh))
        return jnp.concatenate(outs, axis=-1)      # (n, d)

    state = state_ref[0]        # (n, state_dim)
    actions = actions_ref[0]    # (n, action_dim)
    pos_emb = pos_ref[0]        # (n, d)

    # encoders (dropout is identity at eval time)
    enc = mm(state, se_w[...]) + se_b[...]                                   # state encoder
    x = pos_emb + jnp.maximum(mm(actions, ae_w[...]) + ae_b[...], 0.0)       # pos + ReLU(act emb)

    for l in range(n_layers):
        # --- masked self-attention (fused QKV projection) ---
        x = layer_norm(x, ln_g[3 * l + 0], ln_b[3 * l + 0])
        qkv = mm(x, sa_wqkv[l]) + sa_bqkv[l]                                 # (n, 3d)
        a = attention(qkv[:, :d], qkv[:, d:2 * d], qkv[:, 2 * d:])
        a = mm(a, sa_wo[l]) + sa_bo[l]
        x = layer_norm(x + a, ln_g[3 * l + 1], ln_b[3 * l + 1])

        # --- masked cross-attention over encoder output (fused KV projection) ---
        q = mm(x, ca_wq[l]) + ca_bq[l]
        kv = mm(enc, ca_wkv[l]) + ca_bkv[l]                                  # (n, 2d)
        a = attention(q, kv[:, :d], kv[:, d:])
        a = mm(a, ca_wo[l]) + ca_bo[l]
        x = layer_norm(x + a, ln_g[3 * l + 2], ln_b[3 * l + 2])

        # --- feed-forward MLP + residual ---
        h1 = jnp.maximum(mm(x, fc1_w[l]) + fc1_b[l], 0.0)
        x = x + mm(h1, fc2_w[l]) + fc2_b[l]

    out_ref[0] = (mm(x, mu_w[...]) + mu_b[...]).astype(out_ref.dtype)


# ----------------------------- parameter packing -----------------------------

def pack_params(params):
    """Pack per-layer dict params into a few layer-stacked arrays for the fused kernel."""
    layers = params["layers"]

    def stack_w(fn):
        return jnp.stack([fn(lp) for lp in layers])          # (L, in, out)

    def stack_b(fn):
        return jnp.stack([fn(lp).reshape(1, -1) for lp in layers])   # (L, 1, X)

    ln_g = jnp.stack([lp[k].reshape(1, -1) for lp in layers
                      for k in ("ln1_g", "ln2_g", "ln3_g")])  # (3L, 1, d)
    ln_b = jnp.stack([lp[k].reshape(1, -1) for lp in layers
                      for k in ("ln1_b", "ln2_b", "ln3_b")])

    packed = {
        "se_w": params["state_enc_w"], "se_b": params["state_enc_b"].reshape(1, -1),
        "ae_w": params["act_emb_w"],   "ae_b": params["act_emb_b"].reshape(1, -1),
        "mu_w": params["mu_w"],        "mu_b": params["mu_b"].reshape(1, -1),
        "ln_g": ln_g, "ln_b": ln_b,
        "sa_wqkv": stack_w(lambda p: jnp.concatenate(
            [p["self_attn"]["wq"], p["self_attn"]["wk"], p["self_attn"]["wv"]], axis=1)),
        "sa_bqkv": stack_b(lambda p: jnp.concatenate(
            [p["self_attn"]["bq"], p["self_attn"]["bk"], p["self_attn"]["bv"]])),
        "sa_wo": stack_w(lambda p: p["self_attn"]["wo"]),
        "sa_bo": stack_b(lambda p: p["self_attn"]["bo"]),
        "ca_wq": stack_w(lambda p: p["cross_attn"]["wq"]),
        "ca_bq": stack_b(lambda p: p["cross_attn"]["bq"]),
        "ca_wkv": stack_w(lambda p: jnp.concatenate(
            [p["cross_attn"]["wk"], p["cross_attn"]["wv"]], axis=1)),
        "ca_bkv": stack_b(lambda p: jnp.concatenate(
            [p["cross_attn"]["bk"], p["cross_attn"]["bv"]])),
        "ca_wo": stack_w(lambda p: p["cross_attn"]["wo"]),
        "ca_bo": stack_b(lambda p: p["cross_attn"]["bo"]),
        "fc1_w": stack_w(lambda p: p["fc1_w"]),
        "fc1_b": stack_b(lambda p: p["fc1_b"]),
        "fc2_w": stack_w(lambda p: p["fc2_w"]),
        "fc2_b": stack_b(lambda p: p["fc2_b"]),
    }
    return [packed[k] for k in WEIGHT_ORDER]


# ----------------------------- forward wrapper -----------------------------

def _batched_spec(x):
    shape = (1,) + tuple(x.shape[1:])
    return pl.BlockSpec(shape, lambda b: (b, 0, 0))


def _resident_spec(x):
    zeros = (0,) * x.ndim
    return pl.BlockSpec(tuple(x.shape), lambda b: zeros)


def gpt_forward(params, state, actions, pos, num_heads):
    bs, n, _ = state.shape
    d = params["state_enc_w"].shape[1]
    out_dim = params["mu_w"].shape[1]
    n_layers = len(params["layers"])

    # pos_embedding == nn.Embedding(max_agents, model_dim); the gather is plain-JAX glue.
    pos_embed = params["pos_table"][pos[..., 0]]              # (bs, n, d) == .squeeze(2)

    weights = pack_params(params)

    kernel = functools.partial(
        _gpt_fused_kernel,
        n_layers=n_layers, num_heads=num_heads, n_agents=n, model_dim=d)

    in_specs = ([_batched_spec(state), _batched_spec(actions), _batched_spec(pos_embed)]
                + [_resident_spec(w) for w in weights])

    return pl.pallas_call(
        kernel,
        out_shape=jax.ShapeDtypeStruct((bs, n, out_dim), jnp.float32),
        grid=(bs,),
        in_specs=in_specs,
        out_specs=pl.BlockSpec((1, n, out_dim), lambda b: (b, 0, 0)),
        compiler_params=pltpu.CompilerParams(
            dimension_semantics=("parallel",),        # v7x: 2 TCs split the batch
            vmem_limit_bytes=32 * 1024 * 1024,
        ),
    )(state, actions, pos_embed, *weights)


# ----------------------------- parameter init -----------------------------

def _init_attn(key, d):
    ks = jax.random.split(key, 4)
    ortho = jax.nn.initializers.orthogonal(scale=1.0)   # gain('linear') == 1
    z = lambda: jnp.zeros((d,), jnp.float32)
    return {
        "wq": ortho(ks[0], (d, d), jnp.float32), "bq": z(),
        "wk": ortho(ks[1], (d, d), jnp.float32), "bk": z(),
        "wv": ortho(ks[2], (d, d), jnp.float32), "bv": z(),
        "wo": ortho(ks[3], (d, d), jnp.float32), "bo": z(),
    }


def _init_layer(key, d, dim_ff):
    k_sa, k_ca, k_f1, k_f2 = jax.random.split(key, 4)
    ortho_relu = jax.nn.initializers.orthogonal(scale=math.sqrt(2.0))  # gain('relu')
    return {
        "ln1_g": jnp.ones((d,), jnp.float32), "ln1_b": jnp.zeros((d,), jnp.float32),
        "ln2_g": jnp.ones((d,), jnp.float32), "ln2_b": jnp.zeros((d,), jnp.float32),
        "ln3_g": jnp.ones((d,), jnp.float32), "ln3_b": jnp.zeros((d,), jnp.float32),
        "self_attn": _init_attn(k_sa, d),
        "cross_attn": _init_attn(k_ca, d),
        "fc1_w": ortho_relu(k_f1, (d, dim_ff), jnp.float32), "fc1_b": jnp.zeros((dim_ff,), jnp.float32),
        "fc2_w": ortho_relu(k_f2, (dim_ff, d), jnp.float32), "fc2_b": jnp.zeros((d,), jnp.float32),
    }


def init_gpt_params(key, state_dim, model_dim, action_dim, num_heads,
                    max_agents, dim_ff, n_layers, critic=False):
    keys = jax.random.split(key, n_layers + 4)
    ortho_relu = jax.nn.initializers.orthogonal(scale=math.sqrt(2.0))
    out_dim = 1 if critic else action_dim
    return {
        "state_enc_w": 0.1 * jax.random.normal(keys[0], (state_dim, model_dim), jnp.float32),
        "state_enc_b": jnp.zeros((model_dim,), jnp.float32),
        "act_emb_w": ortho_relu(keys[1], (action_dim, model_dim), jnp.float32),
        "act_emb_b": jnp.zeros((model_dim,), jnp.float32),
        "pos_table": jax.random.normal(keys[2], (max_agents, model_dim), jnp.float32),
        "mu_w": ortho_relu(keys[3], (model_dim, out_dim), jnp.float32),
        "mu_b": jnp.zeros((out_dim,), jnp.float32),
        "layers": [_init_layer(keys[4 + i], model_dim, dim_ff) for i in range(n_layers)],
    }


# ----------------------------- pure-JAX reference -----------------------------

def ref_forward(params, state, actions, pos, num_heads, mask_add):
    def lin(x, w, b): return x @ w + b

    def ln(x, g, b):
        mu = x.mean(-1, keepdims=True)
        var = ((x - mu) ** 2).mean(-1, keepdims=True)
        return (x - mu) / jnp.sqrt(var + 1e-5) * g + b

    def mha(p, Q, K, V):
        bs, n, d = Q.shape
        hd = d // num_heads
        split = lambda x: x.reshape(bs, n, num_heads, hd).transpose(0, 2, 1, 3)
        q, k, v = split(lin(Q, p["wq"], p["bq"])), split(lin(K, p["wk"], p["bk"])), split(lin(V, p["wv"], p["bv"]))
        s = q @ k.transpose(0, 1, 3, 2) / math.sqrt(hd) + mask_add[None, None]
        a = jax.nn.softmax(s, axis=-1)
        o = (a @ v).transpose(0, 2, 1, 3).reshape(bs, n, d)
        return lin(o, p["wo"], p["bo"])

    def layer(p, x, enc):
        x = ln(x, p["ln1_g"], p["ln1_b"])
        x = ln(x + mha(p["self_attn"], x, x, x), p["ln2_g"], p["ln2_b"])
        x = ln(x + mha(p["cross_attn"], x, enc, enc), p["ln3_g"], p["ln3_b"])
        ff = lin(jax.nn.relu(lin(x, p["fc1_w"], p["fc1_b"])), p["fc2_w"], p["fc2_b"])
        return x + ff

    state_enc = lin(state, params["state_enc_w"], params["state_enc_b"])
    x = params["pos_table"][pos[..., 0]] + jax.nn.relu(lin(actions, params["act_emb_w"], params["act_emb_b"]))
    for lp in params["layers"]:
        x = layer(lp, x, state_enc)
    return lin(x, params["mu_w"], params["mu_b"])


# ----------------------------- main -----------------------------

if __name__ == "__main__":
    bs, n_agents = 2, 8
    state_dim, action_dim = 6, 2
    model_dim, num_heads = 32, 4
    max_agents, dim_ff, n_layers = 8, 64, 2

    key = jax.random.PRNGKey(0)
    k_params, k_state, k_act = jax.random.split(key, 3)
    params = init_gpt_params(k_params, state_dim, model_dim, action_dim, num_heads,
                             max_agents, dim_ff, n_layers, critic=False)

    state = jax.random.normal(k_state, (bs, n_agents, state_dim), jnp.float32)
    actions = jax.random.normal(k_act, (bs, n_agents, action_dim), jnp.float32)
    pos = jnp.tile(jnp.arange(n_agents, dtype=jnp.int32)[None, :, None], (bs, 1, 1))  # (bs, n, 1)

    fwd = jax.jit(lambda p, s, a, ps: gpt_forward(p, s, a, ps, num_heads))
    out = jax.block_until_ready(fwd(params, state, actions, pos))

    # reference (causal tril mask, same as the in-kernel one)
    tril = jnp.tril(jnp.ones((max_agents, max_agents), jnp.float32))
    mask_add = jnp.where(tril[:n_agents, :n_agents] == 0, NEG_INF, 0.0).astype(jnp.float32)
    ref = ref_forward(params, state, actions, pos, num_heads, mask_add)

    assert out.shape == (bs, n_agents, action_dim), out.shape
    assert jnp.allclose(out, ref, atol=1e-2, rtol=1e-2), float(jnp.max(jnp.abs(out - ref)))

    print("KERNEL_OK")
</pallas_src>

<mosaic_0001>
module attributes {stable_mosaic.version = 11 : i64} {
  func.func @_gpt_fused_kernel(%arg0: i32, %arg1: memref<1x8x6xf32, #tpu.memory_space<vmem>>, %arg2: memref<1x8x2xf32, #tpu.memory_space<vmem>>, %arg3: memref<1x8x32xf32, #tpu.memory_space<vmem>>, %arg4: memref<6x32xf32, #tpu.memory_space<vmem>>, %arg5: memref<1x32xf32, #tpu.memory_space<vmem>>, %arg6: memref<2x32xf32, #tpu.memory_space<vmem>>, %arg7: memref<1x32xf32, #tpu.memory_space<vmem>>, %arg8: memref<6x1x32xf32, #tpu.memory_space<vmem>>, %arg9: memref<6x1x32xf32, #tpu.memory_space<vmem>>, %arg10: memref<2x32x96xf32, #tpu.memory_space<vmem>>, %arg11: memref<2x1x96xf32, #tpu.memory_space<vmem>>, %arg12: memref<2x32x32xf32, #tpu.memory_space<vmem>>, %arg13: memref<2x1x32xf32, #tpu.memory_space<vmem>>, %arg14: memref<2x32x32xf32, #tpu.memory_space<vmem>>, %arg15: memref<2x1x32xf32, #tpu.memory_space<vmem>>, %arg16: memref<2x32x64xf32, #tpu.memory_space<vmem>>, %arg17: memref<2x1x64xf32, #tpu.memory_space<vmem>>, %arg18: memref<2x32x32xf32, #tpu.memory_space<vmem>>, %arg19: memref<2x1x32xf32, #tpu.memory_space<vmem>>, %arg20: memref<2x32x64xf32, #tpu.memory_space<vmem>>, %arg21: memref<2x1x64xf32, #tpu.memory_space<vmem>>, %arg22: memref<2x64x32xf32, #tpu.memory_space<vmem>>, %arg23: memref<2x1x32xf32, #tpu.memory_space<vmem>>, %arg24: memref<32x2xf32, #tpu.memory_space<vmem>>, %arg25: memref<1x2xf32, #tpu.memory_space<vmem>>, %arg26: memref<1x8x2xf32, #tpu.memory_space<vmem>>) attributes {dimension_semantics = [#tpu.dimension_semantics<parallel>], iteration_bounds = array<i64: 2>, scalar_prefetch = 0 : i64, scratch_operands = 0 : i64, tpu.core_type = #tpu.core_type<tc>, window_params = [{transform_indices = @transform_0, window_bounds = array<i64: 1, 8, 6>}, {transform_indices = @transform_1, window_bounds = array<i64: 1, 8, 2>}, {transform_indices = @transform_2, window_bounds = array<i64: 1, 8, 32>}, {pipeline_mode = #tpu.pipeline_mode<synchronous>, transform_indices = @transform_3, window_bounds = array<i64: 6, 32>}, {pipeline_mode = #tpu.pipeline_mode<synchronous>, transform_indices = @transform_4, window_bounds = array<i64: 1, 32>}, {pipeline_mode = #tpu.pipeline_mode<synchronous>, transform_indices = @transform_5, window_bounds = array<i64: 2, 32>}, {pipeline_mode = #tpu.pipeline_mode<synchronous>, transform_indices = @transform_6, window_bounds = array<i64: 1, 32>}, {pipeline_mode = #tpu.pipeline_mode<synchronous>, transform_indices = @transform_7, window_bounds = array<i64: 6, 1, 32>}, {pipeline_mode = #tpu.pipeline_mode<synchronous>, transform_indices = @transform_8, window_bounds = array<i64: 6, 1, 32>}, {pipeline_mode = #tpu.pipeline_mode<synchronous>, transform_indices = @transform_9, window_bounds = array<i64: 2, 32, 96>}, {pipeline_mode = #tpu.pipeline_mode<synchronous>, transform_indices = @transform_10, window_bounds = array<i64: 2, 1, 96>}, {pipeline_mode = #tpu.pipeline_mode<synchronous>, transform_indices = @transform_11, window_bounds = array<i64: 2, 32, 32>}, {pipeline_mode = #tpu.pipeline_mode<synchronous>, transform_indices = @transform_12, window_bounds = array<i64: 2, 1, 32>}, {pipeline_mode = #tpu.pipeline_mode<synchronous>, transform_indices = @transform_13, window_bounds = array<i64: 2, 32, 32>}, {pipeline_mode = #tpu.pipeline_mode<synchronous>, transform_indices = @transform_14, window_bounds = array<i64: 2, 1, 32>}, {pipeline_mode = #tpu.pipeline_mode<synchronous>, transform_indices = @transform_15, window_bounds = array<i64: 2, 32, 64>}, {pipeline_mode = #tpu.pipeline_mode<synchronous>, transform_indices = @transform_16, window_bounds = array<i64: 2, 1, 64>}, {pipeline_mode = #tpu.pipeline_mode<synchronous>, transform_indices = @transform_17, window_bounds = array<i64: 2, 32, 32>}, {pipeline_mode = #tpu.pipeline_mode<synchronous>, transform_indices = @transform_18, window_bounds = array<i64: 2, 1, 32>}, {pipeline_mode = #tpu.pipeline_mode<synchronous>, transform_indices = @transform_19, window_bounds = array<i64: 2, 32, 64>}, {pipeline_mode = #tpu.pipeline_mode<synchronous>, transform_indices = @transform_20, window_bounds = array<i64: 2, 1, 64>}, {pipeline_mode = #tpu.pipeline_mode<synchronous>, transform_indices = @transform_21, window_bounds = array<i64: 2, 64, 32>}, {pipeline_mode = #tpu.pipeline_mode<synchronous>, transform_indices = @transform_22, window_bounds = array<i64: 2, 1, 32>}, {pipeline_mode = #tpu.pipeline_mode<synchronous>, transform_indices = @transform_23, window_bounds = array<i64: 32, 2>}, {pipeline_mode = #tpu.pipeline_mode<synchronous>, transform_indices = @transform_24, window_bounds = array<i64: 1, 2>}, {transform_indices = @transform_25, window_bounds = array<i64: 1, 8, 2>}]} {
    %0 = tpu.iota {dimensions = array<i32: 0>} : vector<8x8xi32>
    %1 = tpu.iota {dimensions = array<i32: 1>} : vector<8x8xi32>
    %2 = arith.cmpi sgt, %1, %0 : vector<8x8xi32>
    %cst = arith.constant -1.000000e+30 : f32
    %cst_0 = arith.constant 0.000000e+00 : f32
    %3 = vector.broadcast %cst : f32 to vector<8x8xf32>
    %4 = vector.broadcast %cst_0 : f32 to vector<8x8xf32>
    %5 = arith.select %2, %3, %4 : vector<8x8xi1>, vector<8x8xf32>
    %c0 = arith.constant 0 : index
    %c0_1 = arith.constant 0 : index
    %c0_2 = arith.constant 0 : index
    %6 = vector.load %arg1[%c0, %c0_1, %c0_2] : memref<1x8x6xf32, #tpu.memory_space<vmem>>, vector<1x8x6xf32>
    %7 = vector.shape_cast %6 : vector<1x8x6xf32> to vector<8x6xf32>
    %c0_3 = arith.constant 0 : index
    %c0_4 = arith.constant 0 : index
    %c0_5 = arith.constant 0 : index
    %8 = vector.load %arg2[%c0_3, %c0_4, %c0_5] : memref<1x8x2xf32, #tpu.memory_space<vmem>>, vector<1x8x2xf32>
    %9 = vector.shape_cast %8 : vector<1x8x2xf32> to vector<8x2xf32>
    %c0_6 = arith.constant 0 : index
    %c0_7 = arith.constant 0 : index
    %c0_8 = arith.constant 0 : index
    %10 = vector.load %arg3[%c0_6, %c0_7, %c0_8] : memref<1x8x32xf32, #tpu.memory_space<vmem>>, vector<1x8x32xf32>
    %11 = vector.shape_cast %10 : vector<1x8x32xf32> to vector<8x32xf32>
    %c0_9 = arith.constant 0 : index
    %c0_10 = arith.constant 0 : index
    %12 = vector.load %arg4[%c0_9, %c0_10] : memref<6x32xf32, #tpu.memory_space<vmem>>, vector<6x32xf32>
    %cst_11 = arith.constant dense<0.000000e+00> : vector<8x32xf32>
    %13 = tpu.matmul %7, %12, %cst_11 {dimension_numbers = #tpu.dot_dimension_numbers<[1], [0], [0], [1], [0, 0, 1, 1], [], []>} : vector<8x6xf32>, vector<6x32xf32>, vector<8x32xf32> -> vector<8x32xf32>
    %c0_12 = arith.constant 0 : index
    %c0_13 = arith.constant 0 : index
    %14 = vector.load %arg5[%c0_12, %c0_13] : memref<1x32xf32, #tpu.memory_space<vmem>>, vector<1x32xf32>
    %15 = vector.broadcast %14 : vector<1x32xf32> to vector<8x32xf32>
    %16 = arith.addf %13, %15 : vector<8x32xf32>
    %c0_14 = arith.constant 0 : index
    %c0_15 = arith.constant 0 : index
    %17 = vector.load %arg6[%c0_14, %c0_15] : memref<2x32xf32, #tpu.memory_space<vmem>>, vector<2x32xf32>
    %cst_16 = arith.constant dense<0.000000e+00> : vector<8x32xf32>
    %18 = tpu.matmul %9, %17, %cst_16 {dimension_numbers = #tpu.dot_dimension_numbers<[1], [0], [0], [1], [0, 0, 1, 1], [], []>} : vector<8x2xf32>, vector<2x32xf32>, vector<8x32xf32> -> vector<8x32xf32>
    %c0_17 = arith.constant 0 : index
    %c0_18 = arith.constant 0 : index
    %19 = vector.load %arg7[%c0_17, %c0_18] : memref<1x32xf32, #tpu.memory_space<vmem>>, vector<1x32xf32>
    %20 = vector.broadcast %19 : vector<1x32xf32> to vector<8x32xf32>
    %21 = arith.addf %18, %20 : vector<8x32xf32>
    %cst_19 = arith.constant 0.000000e+00 : f32
    %22 = vector.broadcast %cst_19 : f32 to vector<8x32xf32>
    %23 = arith.maximumf %21, %22 : vector<8x32xf32>
    %24 = arith.addf %11, %23 : vector<8x32xf32>
    %c0_20 = arith.constant 0 : index
    %c0_21 = arith.constant 0 : index
    %c0_22 = arith.constant 0 : index
    %25 = vector.load %arg8[%c0_20, %c0_21, %c0_22] : memref<6x1x32xf32, #tpu.memory_space<vmem>>, vector<1x1x32xf32>
    %26 = vector.shape_cast %25 : vector<1x1x32xf32> to vector<1x32xf32>
    %c0_23 = arith.constant 0 : index
    %c0_24 = arith.constant 0 : index
    %c0_25 = arith.constant 0 : index
    %27 = vector.load %arg9[%c0_23, %c0_24, %c0_25] : memref<6x1x32xf32, #tpu.memory_space<vmem>>, vector<1x1x32xf32>
    %28 = vector.shape_cast %27 : vector<1x1x32xf32> to vector<1x32xf32>
    %cst_26 = arith.constant dense<0.000000e+00> : vector<8xf32>
    %29 = vector.multi_reduction <add>, %24, %cst_26 [1] : vector<8x32xf32> to vector<8xf32>
    %30 = vector.shape_cast %29 : vector<8xf32> to vector<8x1xf32>
    %cst_27 = arith.constant 3.200000e+01 : f32
    %31 = vector.broadcast %cst_27 : f32 to vector<8x1xf32>
    %32 = arith.divf %30, %31 : vector<8x1xf32>
    %33 = vector.broadcast %32 : vector<8x1xf32> to vector<8x32xf32>
    %34 = arith.subf %24, %33 : vector<8x32xf32>
    %35 = arith.mulf %34, %34 : vector<8x32xf32>
    %cst_28 = arith.constant dense<0.000000e+00> : vector<8xf32>
    %36 = vector.multi_reduction <add>, %35, %cst_28 [1] : vector<8x32xf32> to vector<8xf32>
    %37 = vector.shape_cast %36 : vector<8xf32> to vector<8x1xf32>
    %cst_29 = arith.constant 3.200000e+01 : f32
    %38 = vector.broadcast %cst_29 : f32 to vector<8x1xf32>
    %39 = arith.divf %37, %38 : vector<8x1xf32>
    %40 = vector.broadcast %32 : vector<8x1xf32> to vector<8x32xf32>
    %41 = arith.subf %24, %40 : vector<8x32xf32>
    %cst_30 = arith.constant 9.99999974E-6 : f32
    %42 = vector.broadcast %cst_30 : f32 to vector<8x1xf32>
    %43 = arith.addf %39, %42 : vector<8x1xf32>
    %44 = math.rsqrt %43 : vector<8x1xf32>
    %45 = vector.broadcast %44 : vector<8x1xf32> to vector<8x32xf32>
    %46 = arith.mulf %41, %45 : vector<8x32xf32>
    %47 = vector.broadcast %26 : vector<1x32xf32> to vector<8x32xf32>
    %48 = arith.mulf %46, %47 : vector<8x32xf32>
    %49 = vector.broadcast %28 : vector<1x32xf32> to vector<8x32xf32>
    %50 = arith.addf %48, %49 : vector<8x32xf32>
    %c0_31 = arith.constant 0 : index
    %c0_32 = arith.constant 0 : index
    %c0_33 = arith.constant 0 : index
    %51 = vector.load %arg10[%c0_31, %c0_32, %c0_33] : memref<2x32x96xf32, #tpu.memory_space<vmem>>, vector<1x32x96xf32>
    %52 = vector.shape_cast %51 : vector<1x32x96xf32> to vector<32x96xf32>
    %cst_34 = arith.constant dense<0.000000e+00> : vector<8x96xf32>
    %53 = tpu.matmul %50, %52, %cst_34 {dimension_numbers = #tpu.dot_dimension_numbers<[1], [0], [0], [1], [0, 0, 1, 1], [], []>} : vector<8x32xf32>, vector<32x96xf32>, vector<8x96xf32> -> vector<8x96xf32>
    %c0_35 = arith.constant 0 : index
    %c0_36 = arith.constant 0 : index
    %c0_37 = arith.constant 0 : index
    %54 = vector.load %arg11[%c0_35, %c0_36, %c0_37] : memref<2x1x96xf32, #tpu.memory_space<vmem>>, vector<1x1x96xf32>
    %55 = vector.shape_cast %54 : vector<1x1x96xf32> to vector<1x96xf32>
    %56 = vector.broadcast %55 : vector<1x96xf32> to vector<8x96xf32>
    %57 = arith.addf %53, %56 : vector<8x96xf32>
    %58 = vector.extract_strided_slice %57 {offsets = [0, 0], sizes = [8, 32], strides = [1, 1]} : vector<8x96xf32> to vector<8x32xf32>
    %59 = vector.extract_strided_slice %57 {offsets = [0, 32], sizes = [8, 32], strides = [1, 1]} : vector<8x96xf32> to vector<8x32xf32>
    %60 = vector.extract_strided_slice %57 {offsets = [0, 64], sizes = [8, 32], strides = [1, 1]} : vector<8x96xf32> to vector<8x32xf32>
    %61 = vector.extract_strided_slice %58 {offsets = [0, 0], sizes = [8, 8], strides = [1, 1]} : vector<8x32xf32> to vector<8x8xf32>
    %62 = vector.extract_strided_slice %59 {offsets = [0, 0], sizes = [8, 8], strides = [1, 1]} : vector<8x32xf32> to vector<8x8xf32>
    %63 = vector.extract_strided_slice %60 {offsets = [0, 0], sizes = [8, 8], strides = [1, 1]} : vector<8x32xf32> to vector<8x8xf32>
    %64 = tpu.transpose %62, [1, 0] : vector<8x8xf32> -> vector<8x8xf32>
    %cst_38 = arith.constant dense<0.000000e+00> : vector<8x8xf32>
    %65 = tpu.matmul %61, %64, %cst_38 {dimension_numbers = #tpu.dot_dimension_numbers<[1], [0], [0], [1], [0, 0, 1, 1], [], []>} : vector<8x8xf32>, vector<8x8xf32>, vector<8x8xf32> -> vector<8x8xf32>
    %cst_39 = arith.constant 0.353553385 : f32
    %66 = vector.broadcast %cst_39 : f32 to vector<8x8xf32>
    %67 = arith.mulf %65, %66 : vector<8x8xf32>
    %68 = arith.addf %67, %5 : vector<8x8xf32>
    %cst_40 = arith.constant dense<0xFF800000> : vector<8xf32>
    %69 = vector.multi_reduction <maximumf>, %68, %cst_40 [1] : vector<8x8xf32> to vector<8xf32>
    %70 = vector.shape_cast %69 : vector<8xf32> to vector<8x1xf32>
    %71 = vector.broadcast %70 : vector<8x1xf32> to vector<8x8xf32>
    %72 = arith.subf %68, %71 : vector<8x8xf32>
    %73 = math.exp %72 : vector<8x8xf32>
    %cst_41 = arith.constant dense<0.000000e+00> : vector<8xf32>
    %74 = vector.multi_reduction <add>, %73, %cst_41 [1] : vector<8x8xf32> to vector<8xf32>
    %75 = vector.shape_cast %74 : vector<8xf32> to vector<8x1xf32>
    %76 = tpu.reciprocal %75 {approx = true} : vector<8x1xf32> -> vector<8x1xf32>
    %77 = vector.broadcast %76 : vector<8x1xf32> to vector<8x8xf32>
    %78 = arith.mulf %73, %77 : vector<8x8xf32>
    %cst_42 = arith.constant dense<0.000000e+00> : vector<8x8xf32>
    %79 = tpu.matmul %78, %63, %cst_42 {dimension_numbers = #tpu.dot_dimension_numbers<[1], [0], [0], [1], [0, 0, 1, 1], [], []>} : vector<8x8xf32>, vector<8x8xf32>, vector<8x8xf32> -> vector<8x8xf32>
    %80 = vector.extract_strided_slice %58 {offsets = [0, 8], sizes = [8, 8], strides = [1, 1]} : vector<8x32xf32> to vector<8x8xf32>
    %81 = vector.extract_strided_slice %59 {offsets = [0, 8], sizes = [8, 8], strides = [1, 1]} : vector<8x32xf32> to vector<8x8xf32>
    %82 = vector.extract_strided_slice %60 {offsets = [0, 8], sizes = [8, 8], strides = [1, 1]} : vector<8x32xf32> to vector<8x8xf32>
    %83 = tpu.transpose %81, [1, 0] : vector<8x8xf32> -> vector<8x8xf32>
    %cst_43 = arith.constant dense<0.000000e+00> : vector<8x8xf32>
    %84 = tpu.matmul %80, %83, %cst_43 {dimension_numbers = #tpu.dot_dimension_numbers<[1], [0], [0], [1], [0, 0, 1, 1], [], []>} : vector<8x8xf32>, vector<8x8xf32>, vector<8x8xf32> -> vector<8x8xf32>
    %cst_44 = arith.constant 0.353553385 : f32
    %85 = vector.broadcast %cst_44 : f32 to vector<8x8xf32>
    %86 = arith.mulf %84, %85 : vector<8x8xf32>
    %87 = arith.addf %86, %5 : vector<8x8xf32>
    %cst_45 = arith.constant dense<0xFF800000> : vector<8xf32>
    %88 = vector.multi_reduction <maximumf>, %87, %cst_45 [1] : vector<8x8xf32> to vector<8xf32>
    %89 = vector.shape_cast %88 : vector<8xf32> to vector<8x1xf32>
    %90 = vector.broadcast %89 : vector<8x1xf32> to vector<8x8xf32>
    %91 = arith.subf %87, %90 : vector<8x8xf32>
    %92 = math.exp %91 : vector<8x8xf32>
    %cst_46 = arith.constant dense<0.000000e+00> : vector<8xf32>
    %93 = vector.multi_reduction <add>, %92, %cst_46 [1] : vector<8x8xf32> to vector<8xf32>
    %94 = vector.shape_cast %93 : vector<8xf32> to vector<8x1xf32>
    %95 = tpu.reciprocal %94 {approx = true} : vector<8x1xf32> -> vector<8x1xf32>
    %96 = vector.broadcast %95 : vector<8x1xf32> to vector<8x8xf32>
    %97 = arith.mulf %92, %96 : vector<8x8xf32>
    %cst_47 = arith.constant dense<0.000000e+00> : vector<8x8xf32>
    %98 = tpu.matmul %97, %82, %cst_47 {dimension_numbers = #tpu.dot_dimension_numbers<[1], [0], [0], [1], [0, 0, 1, 1], [], []>} : vector<8x8xf32>, vector<8x8xf32>, vector<8x8xf32> -> vector<8x8xf32>
    %99 = vector.extract_strided_slice %58 {offsets = [0, 16], sizes = [8, 8], strides = [1, 1]} : vector<8x32xf32> to vector<8x8xf32>
    %100 = vector.extract_strided_slice %59 {offsets = [0, 16], sizes = [8, 8], strides = [1, 1]} : vector<8x32xf32> to vector<8x8xf32>
    %101 = vector.extract_strided_slice %60 {offsets = [0, 16], sizes = [8, 8], strides = [1, 1]} : vector<8x32xf32> to vector<8x8xf32>
    %102 = tpu.transpose %100, [1, 0] : vector<8x8xf32> -> vector<8x8xf32>
    %cst_48 = arith.constant dense<0.000000e+00> : vector<8x8xf32>
    %103 = tpu.matmul %99, %102, %cst_48 {dimension_numbers = #tpu.dot_dimension_numbers<[1], [0], [0], [1], [0, 0, 1, 1], [], []>} : vector<8x8xf32>, vector<8x8xf32>, vector<8x8xf32> -> vector<8x8xf32>
    %cst_49 = arith.constant 0.353553385 : f32
    %104 = vector.broadcast %cst_49 : f32 to vector<8x8xf32>
    %105 = arith.mulf %103, %104 : vector<8x8xf32>
    %106 = arith.addf %105, %5 : vector<8x8xf32>
    %cst_50 = arith.constant dense<0xFF800000> : vector<8xf32>
    %107 = vector.multi_reduction <maximumf>, %106, %cst_50 [1] : vector<8x8xf32> to vector<8xf32>
    %108 = vector.shape_cast %107 : vector<8xf32> to vector<8x1xf32>
    %109 = vector.broadcast %108 : vector<8x1xf32> to vector<8x8xf32>
    %110 = arith.subf %106, %109 : vector<8x8xf32>
    %111 = math.exp %110 : vector<8x8xf32>
    %cst_51 = arith.constant dense<0.000000e+00> : vector<8xf32>
    %112 = vector.multi_reduction <add>, %111, %cst_51 [1] : vector<8x8xf32> to vector<8xf32>
    %113 = vector.shape_cast %112 : vector<8xf32> to vector<8x1xf32>
    %114 = tpu.reciprocal %113 {approx = true} : vector<8x1xf32> -> vector<8x1xf32>
    %115 = vector.broadcast %114 : vector<8x1xf32> to vector<8x8xf32>
    %116 = arith.mulf %111, %115 : vector<8x8xf32>
    %cst_52 = arith.constant dense<0.000000e+00> : vector<8x8xf32>
    %117 = tpu.matmul %116, %101, %cst_52 {dimension_numbers = #tpu.dot_dimension_numbers<[1], [0], [0], [1], [0, 0, 1, 1], [], []>} : vector<8x8xf32>, vector<8x8xf32>, vector<8x8xf32> -> vector<8x8xf32>
    %118 = vector.extract_strided_slice %58 {offsets = [0, 24], sizes = [8, 8], strides = [1, 1]} : vector<8x32xf32> to vector<8x8xf32>
    %119 = vector.extract_strided_slice %59 {offsets = [0, 24], sizes = [8, 8], strides = [1, 1]} : vector<8x32xf32> to vector<8x8xf32>
    %120 = vector.extract_strided_slice %60 {offsets = [0, 24], sizes = [8, 8], strides = [1, 1]} : vector<8x32xf32> to vector<8x8xf32>
    %121 = tpu.transpose %119, [1, 0] : vector<8x8xf32> -> vector<8x8xf32>
    %cst_53 = arith.constant dense<0.000000e+00> : vector<8x8xf32>
    %122 = tpu.matmul %118, %121, %cst_53 {dimension_numbers = #tpu.dot_dimension_numbers<[1], [0], [0], [1], [0, 0, 1, 1], [], []>} : vector<8x8xf32>, vector<8x8xf32>, vector<8x8xf32> -> vector<8x8xf32>
    %cst_54 = arith.constant 0.353553385 : f32
    %123 = vector.broadcast %cst_54 : f32 to vector<8x8xf32>
    %124 = arith.mulf %122, %123 : vector<8x8xf32>
    %125 = arith.addf %124, %5 : vector<8x8xf32>
    %cst_55 = arith.constant dense<0xFF800000> : vector<8xf32>
    %126 = vector.multi_reduction <maximumf>, %125, %cst_55 [1] : vector<8x8xf32> to vector<8xf32>
    %127 = vector.shape_cast %126 : vector<8xf32> to vector<8x1xf32>
    %128 = vector.broadcast %127 : vector<8x1xf32> to vector<8x8xf32>
    %129 = arith.subf %125, %128 : vector<8x8xf32>
    %130 = math.exp %129 : vector<8x8xf32>
    %cst_56 = arith.constant dense<0.000000e+00> : vector<8xf32>
    %131 = vector.multi_reduction <add>, %130, %cst_56 [1] : vector<8x8xf32> to vector<8xf32>
    %132 = vector.shape_cast %131 : vector<8xf32> to vector<8x1xf32>
    %133 = tpu.reciprocal %132 {approx = true} : vector<8x1xf32> -> vector<8x1xf32>
    %134 = vector.broadcast %133 : vector<8x1xf32> to vector<8x8xf32>
    %135 = arith.mulf %130, %134 : vector<8x8xf32>
    %cst_57 = arith.constant dense<0.000000e+00> : vector<8x8xf32>
    %136 = tpu.matmul %135, %120, %cst_57 {dimension_numbers = #tpu.dot_dimension_numbers<[1], [0], [0], [1], [0, 0, 1, 1], [], []>} : vector<8x8xf32>, vector<8x8xf32>, vector<8x8xf32> -> vector<8x8xf32>
    %137 = tpu.concatenate %79, %98, %117, %136 in 1 : vector<8x8xf32>, vector<8x8xf32>, vector<8x8xf32>, vector<8x8xf32> -> vector<8x32xf32>
    %c0_58 = arith.constant 0 : index
    %c0_59 = arith.constant 0 : index
    %c0_60 = arith.constant 0 : index
    %138 = vector.load %arg12[%c0_58, %c0_59, %c0_60] : memref<2x32x32xf32, #tpu.memory_space<vmem>>, vector<1x32x32xf32>
    %139 = vector.shape_cast %138 : vector<1x32x32xf32> to vector<32x32xf32>
    %cst_61 = arith.constant dense<0.000000e+00> : vector<8x32xf32>
    %140 = tpu.matmul %137, %139, %cst_61 {dimension_numbers = #tpu.dot_dimension_numbers<[1], [0], [0], [1], [0, 0, 1, 1], [], []>} : vector<8x32xf32>, vector<32x32xf32>, vector<8x32xf32> -> vector<8x32xf32>
    %c0_62 = arith.constant 0 : index
    %c0_63 = arith.constant 0 : index
    %c0_64 = arith.constant 0 : index
    %141 = vector.load %arg13[%c0_62, %c0_63, %c0_64] : memref<2x1x32xf32, #tpu.memory_space<vmem>>, vector<1x1x32xf32>
    %142 = vector.shape_cast %141 : vector<1x1x32xf32> to vector<1x32xf32>
    %143 = vector.broadcast %142 : vector<1x32xf32> to vector<8x32xf32>
    %144 = arith.addf %140, %143 : vector<8x32xf32>
    %145 = arith.addf %50, %144 : vector<8x32xf32>
    %c1 = arith.constant 1 : index
    %c0_65 = arith.constant 0 : index
    %c0_66 = arith.constant 0 : index
    %146 = vector.load %arg8[%c1, %c0_65, %c0_66] : memref<6x1x32xf32, #tpu.memory_space<vmem>>, vector<1x1x32xf32>
    %147 = vector.shape_cast %146 : vector<1x1x32xf32> to vector<1x32xf32>
    %c1_67 = arith.constant 1 : index
    %c0_68 = arith.constant 0 : index
    %c0_69 = arith.constant 0 : index
    %148 = vector.load %arg9[%c1_67, %c0_68, %c0_69] : memref<6x1x32xf32, #tpu.memory_space<vmem>>, vector<1x1x32xf32>
    %149 = vector.shape_cast %148 : vector<1x1x32xf32> to vector<1x32xf32>
    %cst_70 = arith.constant dense<0.000000e+00> : vector<8xf32>
    %150 = vector.multi_reduction <add>, %145, %cst_70 [1] : vector<8x32xf32> to vector<8xf32>
    %151 = vector.shape_cast %150 : vector<8xf32> to vector<8x1xf32>
    %cst_71 = arith.constant 3.200000e+01 : f32
    %152 = vector.broadcast %cst_71 : f32 to vector<8x1xf32>
    %153 = arith.divf %151, %152 : vector<8x1xf32>
    %154 = vector.broadcast %153 : vector<8x1xf32> to vector<8x32xf32>
    %155 = arith.subf %145, %154 : vector<8x32xf32>
    %156 = arith.mulf %155, %155 : vector<8x32xf32>
    %cst_72 = arith.constant dense<0.000000e+00> : vector<8xf32>
    %157 = vector.multi_reduction <add>, %156, %cst_72 [1] : vector<8x32xf32> to vector<8xf32>
    %158 = vector.shape_cast %157 : vector<8xf32> to vector<8x1xf32>
    %cst_73 = arith.constant 3.200000e+01 : f32
    %159 = vector.broadcast %cst_73 : f32 to vector<8x1xf32>
    %160 = arith.divf %158, %159 : vector<8x1xf32>
    %161 = vector.broadcast %153 : vector<8x1xf32> to vector<8x32xf32>
    %162 = arith.subf %145, %161 : vector<8x32xf32>
    %cst_74 = arith.constant 9.99999974E-6 : f32
    %163 = vector.broadcast %cst_74 : f32 to vector<8x1xf32>
    %164 = arith.addf %160, %163 : vector<8x1xf32>
    %165 = math.rsqrt %164 : vector<8x1xf32>
    %166 = vector.broadcast %165 : vector<8x1xf32> to vector<8x32xf32>
    %167 = arith.mulf %162, %166 : vector<8x32xf32>
    %168 = vector.broadcast %147 : vector<1x32xf32> to vector<8x32xf32>
    %169 = arith.mulf %167, %168 : vector<8x32xf32>
    %170 = vector.broadcast %149 : vector<1x32xf32> to vector<8x32xf32>
    %171 = arith.addf %169, %170 : vector<8x32xf32>
    %c0_75 = arith.constant 0 : index
    %c0_76 = arith.constant 0 : index
    %c0_77 = arith.constant 0 : index
    %172 = vector.load %arg14[%c0_75, %c0_76, %c0_77] : memref<2x32x32xf32, #tpu.memory_space<vmem>>, vector<1x32x32xf32>
    %173 = vector.shape_cast %172 : vector<1x32x32xf32> to vector<32x32xf32>
    %cst_78 = arith.constant dense<0.000000e+00> : vector<8x32xf32>
    %174 = tpu.matmul %171, %173, %cst_78 {dimension_numbers = #tpu.dot_dimension_numbers<[1], [0], [0], [1], [0, 0, 1, 1], [], []>} : vector<8x32xf32>, vector<32x32xf32>, vector<8x32xf32> -> vector<8x32xf32>
    %c0_79 = arith.constant 0 : index
    %c0_80 = arith.constant 0 : index
    %c0_81 = arith.constant 0 : index
    %175 = vector.load %arg15[%c0_79, %c0_80, %c0_81] : memref<2x1x32xf32, #tpu.memory_space<vmem>>, vector<1x1x32xf32>
    %176 = vector.shape_cast %175 : vector<1x1x32xf32> to vector<1x32xf32>
    %177 = vector.broadcast %176 : vector<1x32xf32> to vector<8x32xf32>
    %178 = arith.addf %174, %177 : vector<8x32xf32>
    %c0_82 = arith.constant 0 : index
    %c0_83 = arith.constant 0 : index
    %c0_84 = arith.constant 0 : index
    %179 = vector.load %arg16[%c0_82, %c0_83, %c0_84] : memref<2x32x64xf32, #tpu.memory_space<vmem>>, vector<1x32x64xf32>
    %180 = vector.shape_cast %179 : vector<1x32x64xf32> to vector<32x64xf32>
    %cst_85 = arith.constant dense<0.000000e+00> : vector<8x64xf32>
    %181 = tpu.matmul %16, %180, %cst_85 {dimension_numbers = #tpu.dot_dimension_numbers<[1], [0], [0], [1], [0, 0, 1, 1], [], []>} : vector<8x32xf32>, vector<32x64xf32>, vector<8x64xf32> -> vector<8x64xf32>
    %c0_86 = arith.constant 0 : index
    %c0_87 = arith.constant 0 : index
    %c0_88 = arith.constant 0 : index
    %182 = vector.load %arg17[%c0_86, %c0_87, %c0_88] : memref<2x1x64xf32, #tpu.memory_space<vmem>>, vector<1x1x64xf32>
    %183 = vector.shape_cast %182 : vector<1x1x64xf32> to vector<1x64xf32>
    %184 = vector.broadcast %183 : vector<1x64xf32> to vector<8x64xf32>
    %185 = arith.addf %181, %184 : vector<8x64xf32>
    %186 = vector.extract_strided_slice %185 {offsets = [0, 0], sizes = [8, 32], strides = [1, 1]} : vector<8x64xf32> to vector<8x32xf32>
    %187 = vector.extract_strided_slice %185 {offsets = [0, 32], sizes = [8, 32], strides = [1, 1]} : vector<8x64xf32> to vector<8x32xf32>
    %188 = vector.extract_strided_slice %178 {offsets = [0, 0], sizes = [8, 8], strides = [1, 1]} : vector<8x32xf32> to vector<8x8xf32>
    %189 = vector.extract_strided_slice %186 {offsets = [0, 0], sizes = [8, 8], strides = [1, 1]} : vector<8x32xf32> to vector<8x8xf32>
    %190 = vector.extract_strided_slice %187 {offsets = [0, 0], sizes = [8, 8], strides = [1, 1]} : vector<8x32xf32> to vector<8x8xf32>
    %191 = tpu.transpose %189, [1, 0] : vector<8x8xf32> -> vector<8x8xf32>
    %cst_89 = arith.constant dense<0.000000e+00> : vector<8x8xf32>
    %192 = tpu.matmul %188, %191, %cst_89 {dimension_numbers = #tpu.dot_dimension_numbers<[1], [0], [0], [1], [0, 0, 1, 1], [], []>} : vector<8x8xf32>, vector<8x8xf32>, vector<8x8xf32> -> vector<8x8xf32>
    %cst_90 = arith.constant 0.353553385 : f32
    %193 = vector.broadcast %cst_90 : f32 to vector<8x8xf32>
    %194 = arith.mulf %192, %193 : vector<8x8xf32>
    %195 = arith.addf %194, %5 : vector<8x8xf32>
    %cst_91 = arith.constant dense<0xFF800000> : vector<8xf32>
    %196 = vector.multi_reduction <maximumf>, %195, %cst_91 [1] : vector<8x8xf32> to vector<8xf32>
    %197 = vector.shape_cast %196 : vector<8xf32> to vector<8x1xf32>
    %198 = vector.broadcast %197 : vector<8x1xf32> to vector<8x8xf32>
    %199 = arith.subf %195, %198 : vector<8x8xf32>
    %200 = math.exp %199 : vector<8x8xf32>
    %cst_92 = arith.constant dense<0.000000e+00> : vector<8xf32>
    %201 = vector.multi_reduction <add>, %200, %cst_92 [1] : vector<8x8xf32> to vector<8xf32>
    %202 = vector.shape_cast %201 : vector<8xf32> to vector<8x1xf32>
    %203 = tpu.reciprocal %202 {approx = true} : vector<8x1xf32> -> vector<8x1xf32>
    %204 = vector.broadcast %203 : vector<8x1xf32> to vector<8x8xf32>
    %205 = arith.mulf %200, %204 : vector<8x8xf32>
    %cst_93 = arith.constant dense<0.000000e+00> : vector<8x8xf32>
    %206 = tpu.matmul %205, %190, %cst_93 {dimension_numbers = #tpu.dot_dimension_numbers<[1], [0], [0], [1], [0, 0, 1, 1], [], []>} : vector<8x8xf32>, vector<8x8xf32>, vector<8x8xf32> -> vector<8x8xf32>
    %207 = vector.extract_strided_slice %178 {offsets = [0, 8], sizes = [8, 8], strides = [1, 1]} : vector<8x32xf32> to vector<8x8xf32>
    %208 = vector.extract_strided_slice %186 {offsets = [0, 8], sizes = [8, 8], strides = [1, 1]} : vector<8x32xf32> to vector<8x8xf32>
    %209 = vector.extract_strided_slice %187 {offsets = [0, 8], sizes = [8, 8], strides = [1, 1]} : vector<8x32xf32> to vector<8x8xf32>
    %210 = tpu.transpose %208, [1, 0] : vector<8x8xf32> -> vector<8x8xf32>
    %cst_94 = arith.constant dense<0.000000e+00> : vector<8x8xf32>
    %211 = tpu.matmul %207, %210, %cst_94 {dimension_numbers = #tpu.dot_dimension_numbers<[1], [0], [0], [1], [0, 0, 1, 1], [], []>} : vector<8x8xf32>, vector<8x8xf32>, vector<8x8xf32> -> vector<8x8xf32>
    %cst_95 = arith.constant 0.353553385 : f32
    %212 = vector.broadcast %cst_95 : f32 to vector<8x8xf32>
    %213 = arith.mulf %211, %212 : vector<8x8xf32>
    %214 = arith.addf %213, %5 : vector<8x8xf32>
    %cst_96 = arith.constant dense<0xFF800000> : vector<8xf32>
    %215 = vector.multi_reduction <maximumf>, %214, %cst_96 [1] : vector<8x8xf32> to vector<8xf32>
    %216 = vector.shape_cast %215 : vector<8xf32> to vector<8x1xf32>
    %217 = vector.broadcast %216 : vector<8x1xf32> to vector<8x8xf32>
    %218 = arith.subf %214, %217 : vector<8x8xf32>
    %219 = math.exp %218 : vector<8x8xf32>
    %cst_97 = arith.constant dense<0.000000e+00> : vector<8xf32>
    %220 = vector.multi_reduction <add>, %219, %cst_97 [1] : vector<8x8xf32> to vector<8xf32>
    %221 = vector.shape_cast %220 : vector<8xf32> to vector<8x1xf32>
    %222 = tpu.reciprocal %221 {approx = true} : vector<8x1xf32> -> vector<8x1xf32>
    %223 = vector.broadcast %222 : vector<8x1xf32> to vector<8x8xf32>
    %224 = arith.mulf %219, %223 : vector<8x8xf32>
    %cst_98 = arith.constant dense<0.000000e+00> : vector<8x8xf32>
    %225 = tpu.matmul %224, %209, %cst_98 {dimension_numbers = #tpu.dot_dimension_numbers<[1], [0], [0], [1], [0, 0, 1, 1], [], []>} : vector<8x8xf32>, vector<8x8xf32>, vector<8x8xf32> -> vector<8x8xf32>
    %226 = vector.extract_strided_slice %178 {offsets = [0, 16], sizes = [8, 8], strides = [1, 1]} : vector<8x32xf32> to vector<8x8xf32>
    %227 = vector.extract_strided_slice %186 {offsets = [0, 16], sizes = [8, 8], strides = [1, 1]} : vector<8x32xf32> to vector<8x8xf32>
    %228 = vector.extract_strided_slice %187 {offsets = [0, 16], sizes = [8, 8], strides = [1, 1]} : vector<8x32xf32> to vector<8x8xf32>
    %229 = tpu.transpose %227, [1, 0] : vector<8x8xf32> -> vector<8x8xf32>
    %cst_99 = arith.constant dense<0.000000e+00> : vector<8x8xf32>
    %230 = tpu.matmul %226, %229, %cst_99 {dimension_numbers = #tpu.dot_dimension_numbers<[1], [0], [0], [1], [0, 0, 1, 1], [], []>} : vector<8x8xf32>, vector<8x8xf32>, vector<8x8xf32> -> vector<8x8xf32>
    %cst_100 = arith.constant 0.353553385 : f32
    %231 = vector.broadcast %cst_100 : f32 to vector<8x8xf32>
    %232 = arith.mulf %230, %231 : vector<8x8xf32>
    %233 = arith.addf %232, %5 : vector<8x8xf32>
    %cst_101 = arith.constant dense<0xFF800000> : vector<8xf32>
    %234 = vector.multi_reduction <maximumf>, %233, %cst_101 [1] : vector<8x8xf32> to vector<8xf32>
    %235 = vector.shape_cast %234 : vector<8xf32> to vector<8x1xf32>
    %236 = vector.broadcast %235 : vector<8x1xf32> to vector<8x8xf32>
    %237 = arith.subf %233, %236 : vector<8x8xf32>
    %238 = math.exp %237 : vector<8x8xf32>
    %cst_102 = arith.constant dense<0.000000e+00> : vector<8xf32>
    %239 = vector.multi_reduction <add>, %238, %cst_102 [1] : vector<8x8xf32> to vector<8xf32>
    %240 = vector.shape_cast %239 : vector<8xf32> to vector<8x1xf32>
    %241 = tpu.reciprocal %240 {approx = true} : vector<8x1xf32> -> vector<8x1xf32>
    %242 = vector.broadcast %241 : vector<8x1xf32> to vector<8x8xf32>
    %243 = arith.mulf %238, %242 : vector<8x8xf32>
    %cst_103 = arith.constant dense<0.000000e+00> : vector<8x8xf32>
    %244 = tpu.matmul %243, %228, %cst_103 {dimension_numbers = #tpu.dot_dimension_numbers<[1], [0], [0], [1], [0, 0, 1, 1], [], []>} : vector<8x8xf32>, vector<8x8xf32>, vector<8x8xf32> -> vector<8x8xf32>
    %245 = vector.extract_strided_slice %178 {offsets = [0, 24], sizes = [8, 8], strides = [1, 1]} : vector<8x32xf32> to vector<8x8xf32>
    %246 = vector.extract_strided_slice %186 {offsets = [0, 24], sizes = [8, 8], strides = [1, 1]} : vector<8x32xf32> to vector<8x8xf32>
    %247 = vector.extract_strided_slice %187 {offsets = [0, 24], sizes = [8, 8], strides = [1, 1]} : vector<8x32xf32> to vector<8x8xf32>
    %248 = tpu.transpose %246, [1, 0] : vector<8x8xf32> -> vector<8x8xf32>
    %cst_104 = arith.constant dense<0.000000e+00> : vector<8x8xf32>
    %249 = tpu.matmul %245, %248, %cst_104 {dimension_numbers = #tpu.dot_dimension_numbers<[1], [0], [0], [1], [0, 0, 1, 1], [], []>} : vector<8x8xf32>, vector<8x8xf32>, vector<8x8xf32> -> vector<8x8xf32>
    %cst_105 = arith.constant 0.353553385 : f32
    %250 = vector.broadcast %cst_105 : f32 to vector<8x8xf32>
    %251 = arith.mulf %249, %250 : vector<8x8xf32>
    %252 = arith.addf %251, %5 : vector<8x8xf32>
    %cst_106 = arith.constant dense<0xFF800000> : vector<8xf32>
    %253 = vector.multi_reduction <maximumf>, %252, %cst_106 [1] : vector<8x8xf32> to vector<8xf32>
    %254 = vector.shape_cast %253 : vector<8xf32> to vector<8x1xf32>
    %255 = vector.broadcast %254 : vector<8x1xf32> to vector<8x8xf32>
    %256 = arith.subf %252, %255 : vector<8x8xf32>
    %257 = math.exp %256 : vector<8x8xf32>
    %cst_107 = arith.constant dense<0.000000e+00> : vector<8xf32>
    %258 = vector.multi_reduction <add>, %257, %cst_107 [1] : vector<8x8xf32> to vector<8xf32>
    %259 = vector.shape_cast %258 : vector<8xf32> to vector<8x1xf32>
    %260 = tpu.reciprocal %259 {approx = true} : vector<8x1xf32> -> vector<8x1xf32>
    %261 = vector.broadcast %260 : vector<8x1xf32> to vector<8x8xf32>
    %262 = arith.mulf %257, %261 : vector<8x8xf32>
    %cst_108 = arith.constant dense<0.000000e+00> : vector<8x8xf32>
    %263 = tpu.matmul %262, %247, %cst_108 {dimension_numbers = #tpu.dot_dimension_numbers<[1], [0], [0], [1], [0, 0, 1, 1], [], []>} : vector<8x8xf32>, vector<8x8xf32>, vector<8x8xf32> -> vector<8x8xf32>
    %264 = tpu.concatenate %206, %225, %244, %263 in 1 : vector<8x8xf32>, vector<8x8xf32>, vector<8x8xf32>, vector<8x8xf32> -> vector<8x32xf32>
    %c0_109 = arith.constant 0 : index
    %c0_110 = arith.constant 0 : index
    %c0_111 = arith.constant 0 : index
    %265 = vector.load %arg18[%c0_109, %c0_110, %c0_111] : memref<2x32x32xf32, #tpu.memory_space<vmem>>, vector<1x32x32xf32>
    %266 = vector.shape_cast %265 : vector<1x32x32xf32> to vector<32x32xf32>
    %cst_112 = arith.constant dense<0.000000e+00> : vector<8x32xf32>
    %267 = tpu.matmul %264, %266, %cst_112 {dimension_numbers = #tpu.dot_dimension_numbers<[1], [0], [0], [1], [0, 0, 1, 1], [], []>} : vector<8x32xf32>, vector<32x32xf32>, vector<8x32xf32> -> vector<8x32xf32>
    %c0_113 = arith.constant 0 : index
    %c0_114 = arith.constant 0 : index
    %c0_115 = arith.constant 0 : index
    %268 = vector.load %arg19[%c0_113, %c0_114, %c0_115] : memref<2x1x32xf32, #tpu.memory_space<vmem>>, vector<1x1x32xf32>
    %269 = vector.shape_cast %268 : vector<1x1x32xf32> to vector<1x32xf32>
    %270 = vector.broadcast %269 : vector<1x32xf32> to vector<8x32xf32>
    %271 = arith.addf %267, %270 : vector<8x32xf32>
    %272 = arith.addf %171, %271 : vector<8x32xf32>
    %c2 = arith.constant 2 : index
    %c0_116 = arith.constant 0 : index
    %c0_117 = arith.constant 0 : index
    %273 = vector.load %arg8[%c2, %c0_116, %c0_117] : memref<6x1x32xf32, #tpu.memory_space<vmem>>, vector<1x1x32xf32>
    %274 = vector.shape_cast %273 : vector<1x1x32xf32> to vector<1x32xf32>
    %c2_118 = arith.constant 2 : index
    %c0_119 = arith.constant 0 : index
    %c0_120 = arith.constant 0 : index
    %275 = vector.load %arg9[%c2_118, %c0_119, %c0_120] : memref<6x1x32xf32, #tpu.memory_space<vmem>>, vector<1x1x32xf32>
    %276 = vector.shape_cast %275 : vector<1x1x32xf32> to vector<1x32xf32>
    %cst_121 = arith.constant dense<0.000000e+00> : vector<8xf32>
    %277 = vector.multi_reduction <add>, %272, %cst_121 [1] : vector<8x32xf32> to vector<8xf32>
    %278 = vector.shape_cast %277 : vector<8xf32> to vector<8x1xf32>
    %cst_122 = arith.constant 3.200000e+01 : f32
    %279 = vector.broadcast %cst_122 : f32 to vector<8x1xf32>
    %280 = arith.divf %278, %279 : vector<8x1xf32>
    %281 = vector.broadcast %280 : vector<8x1xf32> to vector<8x32xf32>
    %282 = arith.subf %272, %281 : vector<8x32xf32>
    %283 = arith.mulf %282, %282 : vector<8x32xf32>
    %cst_123 = arith.constant dense<0.000000e+00> : vector<8xf32>
    %284 = vector.multi_reduction <add>, %283, %cst_123 [1] : vector<8x32xf32> to vector<8xf32>
    %285 = vector.shape_cast %284 : vector<8xf32> to vector<8x1xf32>
    %cst_124 = arith.constant 3.200000e+01 : f32
    %286 = vector.broadcast %cst_124 : f32 to vector<8x1xf32>
    %287 = arith.divf %285, %286 : vector<8x1xf32>
    %288 = vector.broadcast %280 : vector<8x1xf32> to vector<8x32xf32>
    %289 = arith.subf %272, %288 : vector<8x32xf32>
    %cst_125 = arith.constant 9.99999974E-6 : f32
    %290 = vector.broadcast %cst_125 : f32 to vector<8x1xf32>
    %291 = arith.addf %287, %290 : vector<8x1xf32>
    %292 = math.rsqrt %291 : vector<8x1xf32>
    %293 = vector.broadcast %292 : vector<8x1xf32> to vector<8x32xf32>
    %294 = arith.mulf %289, %293 : vector<8x32xf32>
    %295 = vector.broadcast %274 : vector<1x32xf32> to vector<8x32xf32>
    %296 = arith.mulf %294, %295 : vector<8x32xf32>
    %297 = vector.broadcast %276 : vector<1x32xf32> to vector<8x32xf32>
    %298 = arith.addf %296, %297 : vector<8x32xf32>
    %c0_126 = arith.constant 0 : index
    %c0_127 = arith.constant 0 : index
    %c0_128 = arith.constant 0 : index
    %299 = vector.load %arg20[%c0_126, %c0_127, %c0_128] : memref<2x32x64xf32, #tpu.memory_space<vmem>>, vector<1x32x64xf32>
    %300 = vector.shape_cast %299 : vector<1x32x64xf32> to vector<32x64xf32>
    %cst_129 = arith.constant dense<0.000000e+00> : vector<8x64xf32>
    %301 = tpu.matmul %298, %300, %cst_129 {dimension_numbers = #tpu.dot_dimension_numbers<[1], [0], [0], [1], [0, 0, 1, 1], [], []>} : vector<8x32xf32>, vector<32x64xf32>, vector<8x64xf32> -> vector<8x64xf32>
    %c0_130 = arith.constant 0 : index
    %c0_131 = arith.constant 0 : index
    %c0_132 = arith.constant 0 : index
    %302 = vector.load %arg21[%c0_130, %c0_131, %c0_132] : memref<2x1x64xf32, #tpu.memory_space<vmem>>, vector<1x1x64xf32>
    %303 = vector.shape_cast %302 : vector<1x1x64xf32> to vector<1x64xf32>
    %304 = vector.broadcast %303 : vector<1x64xf32> to vector<8x64xf32>
    %305 = arith.addf %301, %304 : vector<8x64xf32>
    %cst_133 = arith.constant 0.000000e+00 : f32
    %306 = vector.broadcast %cst_133 : f32 to vector<8x64xf32>
    %307 = arith.maximumf %305, %306 : vector<8x64xf32>
    %c0_134 = arith.constant 0 : index
    %c0_135 = arith.constant 0 : index
    %c0_136 = arith.constant 0 : index
    %308 = vector.load %arg22[%c0_134, %c0_135, %c0_136] : memref<2x64x32xf32, #tpu.memory_space<vmem>>, vector<1x64x32xf32>
    %309 = vector.shape_cast %308 : vector<1x64x32xf32> to vector<64x32xf32>
    %cst_137 = arith.constant dense<0.000000e+00> : vector<8x32xf32>
    %310 = tpu.matmul %307, %309, %cst_137 {dimension_numbers = #tpu.dot_dimension_numbers<[1], [0], [0], [1], [0, 0, 1, 1], [], []>} : vector<8x64xf32>, vector<64x32xf32>, vector<8x32xf32> -> vector<8x32xf32>
    %311 = arith.addf %298, %310 : vector<8x32xf32>
    %c0_138 = arith.constant 0 : index
    %c0_139 = arith.constant 0 : index
    %c0_140 = arith.constant 0 : index
    %312 = vector.load %arg23[%c0_138, %c0_139, %c0_140] : memref<2x1x32xf32, #tpu.memory_space<vmem>>, vector<1x1x32xf32>
    %313 = vector.shape_cast %312 : vector<1x1x32xf32> to vector<1x32xf32>
    %314 = vector.broadcast %313 : vector<1x32xf32> to vector<8x32xf32>
    %315 = arith.addf %311, %314 : vector<8x32xf32>
    %c3 = arith.constant 3 : index
    %c0_141 = arith.constant 0 : index
    %c0_142 = arith.constant 0 : index
    %316 = vector.load %arg8[%c3, %c0_141, %c0_142] : memref<6x1x32xf32, #tpu.memory_space<vmem>>, vector<1x1x32xf32>
    %317 = vector.shape_cast %316 : vector<1x1x32xf32> to vector<1x32xf32>
    %c3_143 = arith.constant 3 : index
    %c0_144 = arith.constant 0 : index
    %c0_145 = arith.constant 0 : index
    %318 = vector.load %arg9[%c3_143, %c0_144, %c0_145] : memref<6x1x32xf32, #tpu.memory_space<vmem>>, vector<1x1x32xf32>
    %319 = vector.shape_cast %318 : vector<1x1x32xf32> to vector<1x32xf32>
    %cst_146 = arith.constant dense<0.000000e+00> : vector<8xf32>
    %320 = vector.multi_reduction <add>, %315, %cst_146 [1] : vector<8x32xf32> to vector<8xf32>
    %321 = vector.shape_cast %320 : vector<8xf32> to vector<8x1xf32>
    %cst_147 = arith.constant 3.200000e+01 : f32
    %322 = vector.broadcast %cst_147 : f32 to vector<8x1xf32>
    %323 = arith.divf %321, %322 : vector<8x1xf32>
    %324 = vector.broadcast %323 : vector<8x1xf32> to vector<8x32xf32>
    %325 = arith.subf %315, %324 : vector<8x32xf32>
    %326 = arith.mulf %325, %325 : vector<8x32xf32>
    %cst_148 = arith.constant dense<0.000000e+00> : vector<8xf32>
    %327 = vector.multi_reduction <add>, %326, %cst_148 [1] : vector<8x32xf32> to vector<8xf32>
    %328 = vector.shape_cast %327 : vector<8xf32> to vector<8x1xf32>
    %cst_149 = arith.constant 3.200000e+01 : f32
    %329 = vector.broadcast %cst_149 : f32 to vector<8x1xf32>
    %330 = arith.divf %328, %329 : vector<8x1xf32>
    %331 = vector.broadcast %323 : vector<8x1xf32> to vector<8x32xf32>
    %332 = arith.subf %315, %331 : vector<8x32xf32>
    %cst_150 = arith.constant 9.99999974E-6 : f32
    %333 = vector.broadcast %cst_150 : f32 to vector<8x1xf32>
    %334 = arith.addf %330, %333 : vector<8x1xf32>
    %335 = math.rsqrt %334 : vector<8x1xf32>
    %336 = vector.broadcast %335 : vector<8x1xf32> to vector<8x32xf32>
    %337 = arith.mulf %332, %336 : vector<8x32xf32>
    %338 = vector.broadcast %317 : vector<1x32xf32> to vector<8x32xf32>
    %339 = arith.mulf %337, %338 : vector<8x32xf32>
    %340 = vector.broadcast %319 : vector<1x32xf32> to vector<8x32xf32>
    %341 = arith.addf %339, %340 : vector<8x32xf32>
    %c1_151 = arith.constant 1 : index
    %c0_152 = arith.constant 0 : index
    %c0_153 = arith.constant 0 : index
    %342 = vector.load %arg10[%c1_151, %c0_152, %c0_153] : memref<2x32x96xf32, #tpu.memory_space<vmem>>, vector<1x32x96xf32>
    %343 = vector.shape_cast %342 : vector<1x32x96xf32> to vector<32x96xf32>
    %cst_154 = arith.constant dense<0.000000e+00> : vector<8x96xf32>
    %344 = tpu.matmul %341, %343, %cst_154 {dimension_numbers = #tpu.dot_dimension_numbers<[1], [0], [0], [1], [0, 0, 1, 1], [], []>} : vector<8x32xf32>, vector<32x96xf32>, vector<8x96xf32> -> vector<8x96xf32>
    %c1_155 = arith.constant 1 : index
    %c0_156 = arith.constant 0 : index
    %c0_157 = arith.constant 0 : index
    %345 = vector.load %arg11[%c1_155, %c0_156, %c0_157] : memref<2x1x96xf32, #tpu.memory_space<vmem>>, vector<1x1x96xf32>
    %346 = vector.shape_cast %345 : vector<1x1x96xf32> to vector<1x96xf32>
    %347 = vector.broadcast %346 : vector<1x96xf32> to vector<8x96xf32>
    %348 = arith.addf %344, %347 : vector<8x96xf32>
    %349 = vector.extract_strided_slice %348 {offsets = [0, 0], sizes = [8, 32], strides = [1, 1]} : vector<8x96xf32> to vector<8x32xf32>
    %350 = vector.extract_strided_slice %348 {offsets = [0, 32], sizes = [8, 32], strides = [1, 1]} : vector<8x96xf32> to vector<8x32xf32>
    %351 = vector.extract_strided_slice %348 {offsets = [0, 64], sizes = [8, 32], strides = [1, 1]} : vector<8x96xf32> to vector<8x32xf32>
    %352 = vector.extract_strided_slice %349 {offsets = [0, 0], sizes = [8, 8], strides = [1, 1]} : vector<8x32xf32> to vector<8x8xf32>
    %353 = vector.extract_strided_slice %350 {offsets = [0, 0], sizes = [8, 8], strides = [1, 1]} : vector<8x32xf32> to vector<8x8xf32>
    %354 = vector.extract_strided_slice %351 {offsets = [0, 0], sizes = [8, 8], strides = [1, 1]} : vector<8x32xf32> to vector<8x8xf32>
    %355 = tpu.transpose %353, [1, 0] : vector<8x8xf32> -> vector<8x8xf32>
    %cst_158 = arith.constant dense<0.000000e+00> : vector<8x8xf32>
    %356 = tpu.matmul %352, %355, %cst_158 {dimension_numbers = #tpu.dot_dimension_numbers<[1], [0], [0], [1], [0, 0, 1, 1], [], []>} : vector<8x8xf32>, vector<8x8xf32>, vector<8x8xf32> -> vector<8x8xf32>
    %cst_159 = arith.constant 0.353553385 : f32
    %357 = vector.broadcast %cst_159 : f32 to vector<8x8xf32>
    %358 = arith.mulf %356, %357 : vector<8x8xf32>
    %359 = arith.addf %358, %5 : vector<8x8xf32>
    %cst_160 = arith.constant dense<0xFF800000> : vector<8xf32>
    %360 = vector.multi_reduction <maximumf>, %359, %cst_160 [1] : vector<8x8xf32> to vector<8xf32>
    %361 = vector.shape_cast %360 : vector<8xf32> to vector<8x1xf32>
    %362 = vector.broadcast %361 : vector<8x1xf32> to vector<8x8xf32>
    %363 = arith.subf %359, %362 : vector<8x8xf32>
    %364 = math.exp %363 : vector<8x8xf32>
    %cst_161 = arith.constant dense<0.000000e+00> : vector<8xf32>
    %365 = vector.multi_reduction <add>, %364, %cst_161 [1] : vector<8x8xf32> to vector<8xf32>
    %366 = vector.shape_cast %365 : vector<8xf32> to vector<8x1xf32>
    %367 = tpu.reciprocal %366 {approx = true} : vector<8x1xf32> -> vector<8x1xf32>
    %368 = vector.broadcast %367 : vector<8x1xf32> to vector<8x8xf32>
    %369 = arith.mulf %364, %368 : vector<8x8xf32>
    %cst_162 = arith.constant dense<0.000000e+00> : vector<8x8xf32>
    %370 = tpu.matmul %369, %354, %cst_162 {dimension_numbers = #tpu.dot_dimension_numbers<[1], [0], [0], [1], [0, 0, 1, 1], [], []>} : vector<8x8xf32>, vector<8x8xf32>, vector<8x8xf32> -> vector<8x8xf32>
    %371 = vector.extract_strided_slice %349 {offsets = [0, 8], sizes = [8, 8], strides = [1, 1]} : vector<8x32xf32> to vector<8x8xf32>
    %372 = vector.extract_strided_slice %350 {offsets = [0, 8], sizes = [8, 8], strides = [1, 1]} : vector<8x32xf32> to vector<8x8xf32>
    %373 = vector.extract_strided_slice %351 {offsets = [0, 8], sizes = [8, 8], strides = [1, 1]} : vector<8x32xf32> to vector<8x8xf32>
    %374 = tpu.transpose %372, [1, 0] : vector<8x8xf32> -> vector<8x8xf32>
    %cst_163 = arith.constant dense<0.000000e+00> : vector<8x8xf32>
    %375 = tpu.matmul %371, %374, %cst_163 {dimension_numbers = #tpu.dot_dimension_numbers<[1], [0], [0], [1], [0, 0, 1, 1], [], []>} : vector<8x8xf32>, vector<8x8xf32>, vector<8x8xf32> -> vector<8x8xf32>
    %cst_164 = arith.constant 0.353553385 : f32
    %376 = vector.broadcast %cst_164 : f32 to vector<8x8xf32>
    %377 = arith.mulf %375, %376 : vector<8x8xf32>
    %378 = arith.addf %377, %5 : vector<8x8xf32>
    %cst_165 = arith.constant dense<0xFF800000> : vector<8xf32>
    %379 = vector.multi_reduction <maximumf>, %378, %cst_165 [1] : vector<8x8xf32> to vector<8xf32>
    %380 = vector.shape_cast %379 : vector<8xf32> to vector<8x1xf32>
    %381 = vector.broadcast %380 : vector<8x1xf32> to vector<8x8xf32>
    %382 = arith.subf %378, %381 : vector<8x8xf32>
    %383 = math.exp %382 : vector<8x8xf32>
    %cst_166 = arith.constant dense<0.000000e+00> : vector<8xf32>
    %384 = vector.multi_reduction <add>, %383, %cst_166 [1] : vector<8x8xf32> to vector<8xf32>
    %385 = vector.shape_cast %384 : vector<8xf32> to vector<8x1xf32>
    %386 = tpu.reciprocal %385 {approx = true} : vector<8x1xf32> -> vector<8x1xf32>
    %387 = vector.broadcast %386 : vector<8x1xf32> to vector<8x8xf32>
    %388 = arith.mulf %383, %387 : vector<8x8xf32>
    %cst_167 = arith.constant dense<0.000000e+00> : vector<8x8xf32>
    %389 = tpu.matmul %388, %373, %cst_167 {dimension_numbers = #tpu.dot_dimension_numbers<[1], [0], [0], [1], [0, 0, 1, 1], [], []>} : vector<8x8xf32>, vector<8x8xf32>, vector<8x8xf32> -> vector<8x8xf32>
    %390 = vector.extract_strided_slice %349 {offsets = [0, 16], sizes = [8, 8], strides = [1, 1]} : vector<8x32xf32> to vector<8x8xf32>
    %391 = vector.extract_strided_slice %350 {offsets = [0, 16], sizes = [8, 8], strides = [1, 1]} : vector<8x32xf32> to vector<8x8xf32>
    %392 = vector.extract_strided_slice %351 {offsets = [0, 16], sizes = [8, 8], strides = [1, 1]} : vector<8x32xf32> to vector<8x8xf32>
    %393 = tpu.transpose %391, [1, 0] : vector<8x8xf32> -> vector<8x8xf32>
    %cst_168 = arith.constant dense<0.000000e+00> : vector<8x8xf32>
    %394 = tpu.matmul %390, %393, %cst_168 {dimension_numbers = #tpu.dot_dimension_numbers<[1], [0], [0], [1], [0, 0, 1, 1], [], []>} : vector<8x8xf32>, vector<8x8xf32>, vector<8x8xf32> -> vector<8x8xf32>
    %cst_169 = arith.constant 0.353553385 : f32
    %395 = vector.broadcast %cst_169 : f32 to vector<8x8xf32>
    %396 = arith.mulf %394, %395 : vector<8x8xf32>
    %397 = arith.addf %396, %5 : vector<8x8xf32>
    %cst_170 = arith.constant dense<0xFF800000> : vector<8xf32>
    %398 = vector.multi_reduction <maximumf>, %397, %cst_170 [1] : vector<8x8xf32> to vector<8xf32>
    %399 = vector.shape_cast %398 : vector<8xf32> to vector<8x1xf32>
    %400 = vector.broadcast %399 : vector<8x1xf32> to vector<8x8xf32>
    %401 = arith.subf %397, %400 : vector<8x8xf32>
    %402 = math.exp %401 : vector<8x8xf32>
    %cst_171 = arith.constant dense<0.000000e+00> : vector<8xf32>
    %403 = vector.multi_reduction <add>, %402, %cst_171 [1] : vector<8x8xf32> to vector<8xf32>
    %404 = vector.shape_cast %403 : vector<8xf32> to vector<8x1xf32>
    %405 = tpu.reciprocal %404 {approx = true} : vector<8x1xf32> -> vector<8x1xf32>
    %406 = vector.broadcast %405 : vector<8x1xf32> to vector<8x8xf32>
    %407 = arith.mulf %402, %406 : vector<8x8xf32>
    %cst_172 = arith.constant dense<0.000000e+00> : vector<8x8xf32>
    %408 = tpu.matmul %407, %392, %cst_172 {dimension_numbers = #tpu.dot_dimension_numbers<[1], [0], [0], [1], [0, 0, 1, 1], [], []>} : vector<8x8xf32>, vector<8x8xf32>, vector<8x8xf32> -> vector<8x8xf32>
    %409 = vector.extract_strided_slice %349 {offsets = [0, 24], sizes = [8, 8], strides = [1, 1]} : vector<8x32xf32> to vector<8x8xf32>
    %410 = vector.extract_strided_slice %350 {offsets = [0, 24], sizes = [8, 8], strides = [1, 1]} : vector<8x32xf32> to vector<8x8xf32>
    %411 = vector.extract_strided_slice %351 {offsets = [0, 24], sizes = [8, 8], strides = [1, 1]} : vector<8x32xf32> to vector<8x8xf32>
    %412 = tpu.transpose %410, [1, 0] : vector<8x8xf32> -> vector<8x8xf32>
    %cst_173 = arith.constant dense<0.000000e+00> : vector<8x8xf32>
    %413 = tpu.matmul %409, %412, %cst_173 {dimension_numbers = #tpu.dot_dimension_numbers<[1], [0], [0], [1], [0, 0, 1, 1], [], []>} : vector<8x8xf32>, vector<8x8xf32>, vector<8x8xf32> -> vector<8x8xf32>
    %cst_174 = arith.constant 0.353553385 : f32
    %414 = vector.broadcast %cst_174 : f32 to vector<8x8xf32>
    %415 = arith.mulf %413, %414 : vector<8x8xf32>
    %416 = arith.addf %415, %5 : vector<8x8xf32>
    %cst_175 = arith.constant dense<0xFF800000> : vector<8xf32>
    %417 = vector.multi_reduction <maximumf>, %416, %cst_175 [1] : vector<8x8xf32> to vector<8xf32>
    %418 = vector.shape_cast %417 : vector<8xf32> to vector<8x1xf32>
    %419 = vector.broadcast %418 : vector<8x1xf32> to vector<8x8xf32>
    %420 = arith.subf %416, %419 : vector<8x8xf32>
    %421 = math.exp %420 : vector<8x8xf32>
    %cst_176 = arith.constant dense<0.000000e+00> : vector<8xf32>
    %422 = vector.multi_reduction <add>, %421, %cst_176 [1] : vector<8x8xf32> to vector<8xf32>
    %423 = vector.shape_cast %422 : vector<8xf32> to vector<8x1xf32>
    %424 = tpu.reciprocal %423 {approx = true} : vector<8x1xf32> -> vector<8x1xf32>
    %425 = vector.broadcast %424 : vector<8x1xf32> to vector<8x8xf32>
    %426 = arith.mulf %421, %425 : vector<8x8xf32>
    %cst_177 = arith.constant dense<0.000000e+00> : vector<8x8xf32>
    %427 = tpu.matmul %426, %411, %cst_177 {dimension_numbers = #tpu.dot_dimension_numbers<[1], [0], [0], [1], [0, 0, 1, 1], [], []>} : vector<8x8xf32>, vector<8x8xf32>, vector<8x8xf32> -> vector<8x8xf32>
    %428 = tpu.concatenate %370, %389, %408, %427 in 1 : vector<8x8xf32>, vector<8x8xf32>, vector<8x8xf32>, vector<8x8xf32> -> vector<8x32xf32>
    %c1_178 = arith.constant 1 : index
    %c0_179 = arith.constant 0 : index
    %c0_180 = arith.constant 0 : index
    %429 = vector.load %arg12[%c1_178, %c0_179, %c0_180] : memref<2x32x32xf32, #tpu.memory_space<vmem>>, vector<1x32x32xf32>
    %430 = vector.shape_cast %429 : vector<1x32x32xf32> to vector<32x32xf32>
    %cst_181 = arith.constant dense<0.000000e+00> : vector<8x32xf32>
    %431 = tpu.matmul %428, %430, %cst_181 {dimension_numbers = #tpu.dot_dimension_numbers<[1], [0], [0], [1], [0, 0, 1, 1], [], []>} : vector<8x32xf32>, vector<32x32xf32>, vector<8x32xf32> -> vector<8x32xf32>
    %c1_182 = arith.constant 1 : index
    %c0_183 = arith.constant 0 : index
    %c0_184 = arith.constant 0 : index
    %432 = vector.load %arg13[%c1_182, %c0_183, %c0_184] : memref<2x1x32xf32, #tpu.memory_space<vmem>>, vector<1x1x32xf32>
    %433 = vector.shape_cast %432 : vector<1x1x32xf32> to vector<1x32xf32>
    %434 = vector.broadcast %433 : vector<1x32xf32> to vector<8x32xf32>
    %435 = arith.addf %431, %434 : vector<8x32xf32>
    %436 = arith.addf %341, %435 : vector<8x32xf32>
    %c4 = arith.constant 4 : index
    %c0_185 = arith.constant 0 : index
    %c0_186 = arith.constant 0 : index
    %437 = vector.load %arg8[%c4, %c0_185, %c0_186] : memref<6x1x32xf32, #tpu.memory_space<vmem>>, vector<1x1x32xf32>
    %438 = vector.shape_cast %437 : vector<1x1x32xf32> to vector<1x32xf32>
    %c4_187 = arith.constant 4 : index
    %c0_188 = arith.constant 0 : index
    %c0_189 = arith.constant 0 : index
    %439 = vector.load %arg9[%c4_187, %c0_188, %c0_189] : memref<6x1x32xf32, #tpu.memory_space<vmem>>, vector<1x1x32xf32>
    %440 = vector.shape_cast %439 : vector<1x1x32xf32> to vector<1x32xf32>
    %cst_190 = arith.constant dense<0.000000e+00> : vector<8xf32>
    %441 = vector.multi_reduction <add>, %436, %cst_190 [1] : vector<8x32xf32> to vector<8xf32>
    %442 = vector.shape_cast %441 : vector<8xf32> to vector<8x1xf32>
    %cst_191 = arith.constant 3.200000e+01 : f32
    %443 = vector.broadcast %cst_191 : f32 to vector<8x1xf32>
    %444 = arith.divf %442, %443 : vector<8x1xf32>
    %445 = vector.broadcast %444 : vector<8x1xf32> to vector<8x32xf32>
    %446 = arith.subf %436, %445 : vector<8x32xf32>
    %447 = arith.mulf %446, %446 : vector<8x32xf32>
    %cst_192 = arith.constant dense<0.000000e+00> : vector<8xf32>
    %448 = vector.multi_reduction <add>, %447, %cst_192 [1] : vector<8x32xf32> to vector<8xf32>
    %449 = vector.shape_cast %448 : vector<8xf32> to vector<8x1xf32>
    %cst_193 = arith.constant 3.200000e+01 : f32
    %450 = vector.broadcast %cst_193 : f32 to vector<8x1xf32>
    %451 = arith.divf %449, %450 : vector<8x1xf32>
    %452 = vector.broadcast %444 : vector<8x1xf32> to vector<8x32xf32>
    %453 = arith.subf %436, %452 : vector<8x32xf32>
    %cst_194 = arith.constant 9.99999974E-6 : f32
    %454 = vector.broadcast %cst_194 : f32 to vector<8x1xf32>
    %455 = arith.addf %451, %454 : vector<8x1xf32>
    %456 = math.rsqrt %455 : vector<8x1xf32>
    %457 = vector.broadcast %456 : vector<8x1xf32> to vector<8x32xf32>
    %458 = arith.mulf %453, %457 : vector<8x32xf32>
    %459 = vector.broadcast %438 : vector<1x32xf32> to vector<8x32xf32>
    %460 = arith.mulf %458, %459 : vector<8x32xf32>
    %461 = vector.broadcast %440 : vector<1x32xf32> to vector<8x32xf32>
    %462 = arith.addf %460, %461 : vector<8x32xf32>
    %c1_195 = arith.constant 1 : index
    %c0_196 = arith.constant 0 : index
    %c0_197 = arith.constant 0 : index
    %463 = vector.load %arg14[%c1_195, %c0_196, %c0_197] : memref<2x32x32xf32, #tpu.memory_space<vmem>>, vector<1x32x32xf32>
    %464 = vector.shape_cast %463 : vector<1x32x32xf32> to vector<32x32xf32>
    %cst_198 = arith.constant dense<0.000000e+00> : vector<8x32xf32>
    %465 = tpu.matmul %462, %464, %cst_198 {dimension_numbers = #tpu.dot_dimension_numbers<[1], [0], [0], [1], [0, 0, 1, 1], [], []>} : vector<8x32xf32>, vector<32x32xf32>, vector<8x32xf32> -> vector<8x32xf32>
    %c1_199 = arith.constant 1 : index
    %c0_200 = arith.constant 0 : index
    %c0_201 = arith.constant 0 : index
    %466 = vector.load %arg15[%c1_199, %c0_200, %c0_201] : memref<2x1x32xf32, #tpu.memory_space<vmem>>, vector<1x1x32xf32>
    %467 = vector.shape_cast %466 : vector<1x1x32xf32> to vector<1x32xf32>
    %468 = vector.broadcast %467 : vector<1x32xf32> to vector<8x32xf32>
    %469 = arith.addf %465, %468 : vector<8x32xf32>
    %c1_202 = arith.constant 1 : index
    %c0_203 = arith.constant 0 : index
    %c0_204 = arith.constant 0 : index
    %470 = vector.load %arg16[%c1_202, %c0_203, %c0_204] : memref<2x32x64xf32, #tpu.memory_space<vmem>>, vector<1x32x64xf32>
    %471 = vector.shape_cast %470 : vector<1x32x64xf32> to vector<32x64xf32>
    %cst_205 = arith.constant dense<0.000000e+00> : vector<8x64xf32>
    %472 = tpu.matmul %16, %471, %cst_205 {dimension_numbers = #tpu.dot_dimension_numbers<[1], [0], [0], [1], [0, 0, 1, 1], [], []>} : vector<8x32xf32>, vector<32x64xf32>, vector<8x64xf32> -> vector<8x64xf32>
    %c1_206 = arith.constant 1 : index
    %c0_207 = arith.constant 0 : index
    %c0_208 = arith.constant 0 : index
    %473 = vector.load %arg17[%c1_206, %c0_207, %c0_208] : memref<2x1x64xf32, #tpu.memory_space<vmem>>, vector<1x1x64xf32>
    %474 = vector.shape_cast %473 : vector<1x1x64xf32> to vector<1x64xf32>
    %475 = vector.broadcast %474 : vector<1x64xf32> to vector<8x64xf32>
    %476 = arith.addf %472, %475 : vector<8x64xf32>
    %477 = vector.extract_strided_slice %476 {offsets = [0, 0], sizes = [8, 32], strides = [1, 1]} : vector<8x64xf32> to vector<8x32xf32>
    %478 = vector.extract_strided_slice %476 {offsets = [0, 32], sizes = [8, 32], strides = [1, 1]} : vector<8x64xf32> to vector<8x32xf32>
    %479 = vector.extract_strided_slice %469 {offsets = [0, 0], sizes = [8, 8], strides = [1, 1]} : vector<8x32xf32> to vector<8x8xf32>
    %480 = vector.extract_strided_slice %477 {offsets = [0, 0], sizes = [8, 8], strides = [1, 1]} : vector<8x32xf32> to vector<8x8xf32>
    %481 = vector.extract_strided_slice %478 {offsets = [0, 0], sizes = [8, 8], strides = [1, 1]} : vector<8x32xf32> to vector<8x8xf32>
    %482 = tpu.transpose %480, [1, 0] : vector<8x8xf32> -> vector<8x8xf32>
    %cst_209 = arith.constant dense<0.000000e+00> : vector<8x8xf32>
    %483 = tpu.matmul %479, %482, %cst_209 {dimension_numbers = #tpu.dot_dimension_numbers<[1], [0], [0], [1], [0, 0, 1, 1], [], []>} : vector<8x8xf32>, vector<8x8xf32>, vector<8x8xf32> -> vector<8x8xf32>
    %cst_210 = arith.constant 0.353553385 : f32
    %484 = vector.broadcast %cst_210 : f32 to vector<8x8xf32>
    %485 = arith.mulf %483, %484 : vector<8x8xf32>
    %486 = arith.addf %485, %5 : vector<8x8xf32>
    %cst_211 = arith.constant dense<0xFF800000> : vector<8xf32>
    %487 = vector.multi_reduction <maximumf>, %486, %cst_211 [1] : vector<8x8xf32> to vector<8xf32>
    %488 = vector.shape_cast %487 : vector<8xf32> to vector<8x1xf32>
    %489 = vector.broadcast %488 : vector<8x1xf32> to vector<8x8xf32>
    %490 = arith.subf %486, %489 : vector<8x8xf32>
    %491 = math.exp %490 : vector<8x8xf32>
    %cst_212 = arith.constant dense<0.000000e+00> : vector<8xf32>
    %492 = vector.multi_reduction <add>, %491, %cst_212 [1] : vector<8x8xf32> to vector<8xf32>
    %493 = vector.shape_cast %492 : vector<8xf32> to vector<8x1xf32>
    %494 = tpu.reciprocal %493 {approx = true} : vector<8x1xf32> -> vector<8x1xf32>
    %495 = vector.broadcast %494 : vector<8x1xf32> to vector<8x8xf32>
    %496 = arith.mulf %491, %495 : vector<8x8xf32>
    %cst_213 = arith.constant dense<0.000000e+00> : vector<8x8xf32>
    %497 = tpu.matmul %496, %481, %cst_213 {dimension_numbers = #tpu.dot_dimension_numbers<[1], [0], [0], [1], [0, 0, 1, 1], [], []>} : vector<8x8xf32>, vector<8x8xf32>, vector<8x8xf32> -> vector<8x8xf32>
    %498 = vector.extract_strided_slice %469 {offsets = [0, 8], sizes = [8, 8], strides = [1, 1]} : vector<8x32xf32> to vector<8x8xf32>
    %499 = vector.extract_strided_slice %477 {offsets = [0, 8], sizes = [8, 8], strides = [1, 1]} : vector<8x32xf32> to vector<8x8xf32>
    %500 = vector.extract_strided_slice %478 {offsets = [0, 8], sizes = [8, 8], strides = [1, 1]} : vector<8x32xf32> to vector<8x8xf32>
    %501 = tpu.transpose %499, [1, 0] : vector<8x8xf32> -> vector<8x8xf32>
    %cst_214 = arith.constant dense<0.000000e+00> : vector<8x8xf32>
    %502 = tpu.matmul %498, %501, %cst_214 {dimension_numbers = #tpu.dot_dimension_numbers<[1], [0], [0], [1], [0, 0, 1, 1], [], []>} : vector<8x8xf32>, vector<8x8xf32>, vector<8x8xf32> -> vector<8x8xf32>
    %cst_215 = arith.constant 0.353553385 : f32
    %503 = vector.broadcast %cst_215 : f32 to vector<8x8xf32>
    %504 = arith.mulf %502, %503 : vector<8x8xf32>
    %505 = arith.addf %504, %5 : vector<8x8xf32>
    %cst_216 = arith.constant dense<0xFF800000> : vector<8xf32>
    %506 = vector.multi_reduction <maximumf>, %505, %cst_216 [1] : vector<8x8xf32> to vector<8xf32>
    %507 = vector.shape_cast %506 : vector<8xf32> to vector<8x1xf32>
    %508 = vector.broadcast %507 : vector<8x1xf32> to vector<8x8xf32>
    %509 = arith.subf %505, %508 : vector<8x8xf32>
    %510 = math.exp %509 : vector<8x8xf32>
    %cst_217 = arith.constant dense<0.000000e+00> : vector<8xf32>
    %511 = vector.multi_reduction <add>, %510, %cst_217 [1] : vector<8x8xf32> to vector<8xf32>
    %512 = vector.shape_cast %511 : vector<8xf32> to vector<8x1xf32>
    %513 = tpu.reciprocal %512 {approx = true} : vector<8x1xf32> -> vector<8x1xf32>
    %514 = vector.broadcast %513 : vector<8x1xf32> to vector<8x8xf32>
    %515 = arith.mulf %510, %514 : vector<8x8xf32>
    %cst_218 = arith.constant dense<0.000000e+00> : vector<8x8xf32>
    %516 = tpu.matmul %515, %500, %cst_218 {dimension_numbers = #tpu.dot_dimension_numbers<[1], [0], [0], [1], [0, 0, 1, 1], [], []>} : vector<8x8xf32>, vector<8x8xf32>, vector<8x8xf32> -> vector<8x8xf32>
    %517 = vector.extract_strided_slice %469 {offsets = [0, 16], sizes = [8, 8], strides = [1, 1]} : vector<8x32xf32> to vector<8x8xf32>
    %518 = vector.extract_strided_slice %477 {offsets = [0, 16], sizes = [8, 8], strides = [1, 1]} : vector<8x32xf32> to vector<8x8xf32>
    %519 = vector.extract_strided_slice %478 {offsets = [0, 16], sizes = [8, 8], strides = [1, 1]} : vector<8x32xf32> to vector<8x8xf32>
    %520 = tpu.transpose %518, [1, 0] : vector<8x8xf32> -> vector<8x8xf32>
    %cst_219 = arith.constant dense<0.000000e+00> : vector<8x8xf32>
    %521 = tpu.matmul %517, %520, %cst_219 {dimension_numbers = #tpu.dot_dimension_numbers<[1], [0], [0], [1], [0, 0, 1, 1], [], []>} : vector<8x8xf32>, vector<8x8xf32>, vector<8x8xf32> -> vector<8x8xf32>
    %cst_220 = arith.constant 0.353553385 : f32
    %522 = vector.broadcast %cst_220 : f32 to vector<8x8xf32>
    %523 = arith.mulf %521, %522 : vector<8x8xf32>
    %524 = arith.addf %523, %5 : vector<8x8xf32>
    %cst_221 = arith.constant dense<0xFF800000> : vector<8xf32>
    %525 = vector.multi_reduction <maximumf>, %524, %cst_221 [1] : vector<8x8xf32> to vector<8xf32>
    %526 = vector.shape_cast %525 : vector<8xf32> to vector<8x1xf32>
    %527 = vector.broadcast %526 : vector<8x1xf32> to vector<8x8xf32>
    %528 = arith.subf %524, %527 : vector<8x8xf32>
    %529 = math.exp %528 : vector<8x8xf32>
    %cst_222 = arith.constant dense<0.000000e+00> : vector<8xf32>
    %530 = vector.multi_reduction <add>, %529, %cst_222 [1] : vector<8x8xf32> to vector<8xf32>
    %531 = vector.shape_cast %530 : vector<8xf32> to vector<8x1xf32>
    %532 = tpu.reciprocal %531 {approx = true} : vector<8x1xf32> -> vector<8x1xf32>
    %533 = vector.broadcast %532 : vector<8x1xf32> to vector<8x8xf32>
    %534 = arith.mulf %529, %533 : vector<8x8xf32>
    %cst_223 = arith.constant dense<0.000000e+00> : vector<8x8xf32>
    %535 = tpu.matmul %534, %519, %cst_223 {dimension_numbers = #tpu.dot_dimension_numbers<[1], [0], [0], [1], [0, 0, 1, 1], [], []>} : vector<8x8xf32>, vector<8x8xf32>, vector<8x8xf32> -> vector<8x8xf32>
    %536 = vector.extract_strided_slice %469 {offsets = [0, 24], sizes = [8, 8], strides = [1, 1]} : vector<8x32xf32> to vector<8x8xf32>
    %537 = vector.extract_strided_slice %477 {offsets = [0, 24], sizes = [8, 8], strides = [1, 1]} : vector<8x32xf32> to vector<8x8xf32>
    %538 = vector.extract_strided_slice %478 {offsets = [0, 24], sizes = [8, 8], strides = [1, 1]} : vector<8x32xf32> to vector<8x8xf32>
    %539 = tpu.transpose %537, [1, 0] : vector<8x8xf32> -> vector<8x8xf32>
    %cst_224 = arith.constant dense<0.000000e+00> : vector<8x8xf32>
    %540 = tpu.matmul %536, %539, %cst_224 {dimension_numbers = #tpu.dot_dimension_numbers<[1], [0], [0], [1], [0, 0, 1, 1], [], []>} : vector<8x8xf32>, vector<8x8xf32>, vector<8x8xf32> -> vector<8x8xf32>
    %cst_225 = arith.constant 0.353553385 : f32
    %541 = vector.broadcast %cst_225 : f32 to vector<8x8xf32>
    %542 = arith.mulf %540, %541 : vector<8x8xf32>
    %543 = arith.addf %542, %5 : vector<8x8xf32>
    %cst_226 = arith.constant dense<0xFF800000> : vector<8xf32>
    %544 = vector.multi_reduction <maximumf>, %543, %cst_226 [1] : vector<8x8xf32> to vector<8xf32>
    %545 = vector.shape_cast %544 : vector<8xf32> to vector<8x1xf32>
    %546 = vector.broadcast %545 : vector<8x1xf32> to vector<8x8xf32>
    %547 = arith.subf %543, %546 : vector<8x8xf32>
    %548 = math.exp %547 : vector<8x8xf32>
    %cst_227 = arith.constant dense<0.000000e+00> : vector<8xf32>
    %549 = vector.multi_reduction <add>, %548, %cst_227 [1] : vector<8x8xf32> to vector<8xf32>
    %550 = vector.shape_cast %549 : vector<8xf32> to vector<8x1xf32>
    %551 = tpu.reciprocal %550 {approx = true} : vector<8x1xf32> -> vector<8x1xf32>
    %552 = vector.broadcast %551 : vector<8x1xf32> to vector<8x8xf32>
    %553 = arith.mulf %548, %552 : vector<8x8xf32>
    %cst_228 = arith.constant dense<0.000000e+00> : vector<8x8xf32>
    %554 = tpu.matmul %553, %538, %cst_228 {dimension_numbers = #tpu.dot_dimension_numbers<[1], [0], [0], [1], [0, 0, 1, 1], [], []>} : vector<8x8xf32>, vector<8x8xf32>, vector<8x8xf32> -> vector<8x8xf32>
    %555 = tpu.concatenate %497, %516, %535, %554 in 1 : vector<8x8xf32>, vector<8x8xf32>, vector<8x8xf32>, vector<8x8xf32> -> vector<8x32xf32>
    %c1_229 = arith.constant 1 : index
    %c0_230 = arith.constant 0 : index
    %c0_231 = arith.constant 0 : index
    %556 = vector.load %arg18[%c1_229, %c0_230, %c0_231] : memref<2x32x32xf32, #tpu.memory_space<vmem>>, vector<1x32x32xf32>
    %557 = vector.shape_cast %556 : vector<1x32x32xf32> to vector<32x32xf32>
    %cst_232 = arith.constant dense<0.000000e+00> : vector<8x32xf32>
    %558 = tpu.matmul %555, %557, %cst_232 {dimension_numbers = #tpu.dot_dimension_numbers<[1], [0], [0], [1], [0, 0, 1, 1], [], []>} : vector<8x32xf32>, vector<32x32xf32>, vector<8x32xf32> -> vector<8x32xf32>
    %c1_233 = arith.constant 1 : index
    %c0_234 = arith.constant 0 : index
    %c0_235 = arith.constant 0 : index
    %559 = vector.load %arg19[%c1_233, %c0_234, %c0_235] : memref<2x1x32xf32, #tpu.memory_space<vmem>>, vector<1x1x32xf32>
    %560 = vector.shape_cast %559 : vector<1x1x32xf32> to vector<1x32xf32>
    %561 = vector.broadcast %560 : vector<1x32xf32> to vector<8x32xf32>
    %562 = arith.addf %558, %561 : vector<8x32xf32>
    %563 = arith.addf %462, %562 : vector<8x32xf32>
    %c5 = arith.constant 5 : index
    %c0_236 = arith.constant 0 : index
    %c0_237 = arith.constant 0 : index
    %564 = vector.load %arg8[%c5, %c0_236, %c0_237] : memref<6x1x32xf32, #tpu.memory_space<vmem>>, vector<1x1x32xf32>
    %565 = vector.shape_cast %564 : vector<1x1x32xf32> to vector<1x32xf32>
    %c5_238 = arith.constant 5 : index
    %c0_239 = arith.constant 0 : index
    %c0_240 = arith.constant 0 : index
    %566 = vector.load %arg9[%c5_238, %c0_239, %c0_240] : memref<6x1x32xf32, #tpu.memory_space<vmem>>, vector<1x1x32xf32>
    %567 = vector.shape_cast %566 : vector<1x1x32xf32> to vector<1x32xf32>
    %cst_241 = arith.constant dense<0.000000e+00> : vector<8xf32>
    %568 = vector.multi_reduction <add>, %563, %cst_241 [1] : vector<8x32xf32> to vector<8xf32>
    %569 = vector.shape_cast %568 : vector<8xf32> to vector<8x1xf32>
    %cst_242 = arith.constant 3.200000e+01 : f32
    %570 = vector.broadcast %cst_242 : f32 to vector<8x1xf32>
    %571 = arith.divf %569, %570 : vector<8x1xf32>
    %572 = vector.broadcast %571 : vector<8x1xf32> to vector<8x32xf32>
    %573 = arith.subf %563, %572 : vector<8x32xf32>
    %574 = arith.mulf %573, %573 : vector<8x32xf32>
    %cst_243 = arith.constant dense<0.000000e+00> : vector<8xf32>
    %575 = vector.multi_reduction <add>, %574, %cst_243 [1] : vector<8x32xf32> to vector<8xf32>
    %576 = vector.shape_cast %575 : vector<8xf32> to vector<8x1xf32>
    %cst_244 = arith.constant 3.200000e+01 : f32
    %577 = vector.broadcast %cst_244 : f32 to vector<8x1xf32>
    %578 = arith.divf %576, %577 : vector<8x1xf32>
    %579 = vector.broadcast %571 : vector<8x1xf32> to vector<8x32xf32>
    %580 = arith.subf %563, %579 : vector<8x32xf32>
    %cst_245 = arith.constant 9.99999974E-6 : f32
    %581 = vector.broadcast %cst_245 : f32 to vector<8x1xf32>
    %582 = arith.addf %578, %581 : vector<8x1xf32>
    %583 = math.rsqrt %582 : vector<8x1xf32>
    %584 = vector.broadcast %583 : vector<8x1xf32> to vector<8x32xf32>
    %585 = arith.mulf %580, %584 : vector<8x32xf32>
    %586 = vector.broadcast %565 : vector<1x32xf32> to vector<8x32xf32>
    %587 = arith.mulf %585, %586 : vector<8x32xf32>
    %588 = vector.broadcast %567 : vector<1x32xf32> to vector<8x32xf32>
    %589 = arith.addf %587, %588 : vector<8x32xf32>
    %c1_246 = arith.constant 1 : index
    %c0_247 = arith.constant 0 : index
    %c0_248 = arith.constant 0 : index
    %590 = vector.load %arg20[%c1_246, %c0_247, %c0_248] : memref<2x32x64xf32, #tpu.memory_space<vmem>>, vector<1x32x64xf32>
    %591 = vector.shape_cast %590 : vector<1x32x64xf32> to vector<32x64xf32>
    %cst_249 = arith.constant dense<0.000000e+00> : vector<8x64xf32>
    %592 = tpu.matmul %589, %591, %cst_249 {dimension_numbers = #tpu.dot_dimension_numbers<[1], [0], [0], [1], [0, 0, 1, 1], [], []>} : vector<8x32xf32>, vector<32x64xf32>, vector<8x64xf32> -> vector<8x64xf32>
    %c1_250 = arith.constant 1 : index
    %c0_251 = arith.constant 0 : index
    %c0_252 = arith.constant 0 : index
    %593 = vector.load %arg21[%c1_250, %c0_251, %c0_252] : memref<2x1x64xf32, #tpu.memory_space<vmem>>, vector<1x1x64xf32>
    %594 = vector.shape_cast %593 : vector<1x1x64xf32> to vector<1x64xf32>
    %595 = vector.broadcast %594 : vector<1x64xf32> to vector<8x64xf32>
    %596 = arith.addf %592, %595 : vector<8x64xf32>
    %cst_253 = arith.constant 0.000000e+00 : f32
    %597 = vector.broadcast %cst_253 : f32 to vector<8x64xf32>
    %598 = arith.maximumf %596, %597 : vector<8x64xf32>
    %c1_254 = arith.constant 1 : index
    %c0_255 = arith.constant 0 : index
    %c0_256 = arith.constant 0 : index
    %599 = vector.load %arg22[%c1_254, %c0_255, %c0_256] : memref<2x64x32xf32, #tpu.memory_space<vmem>>, vector<1x64x32xf32>
    %600 = vector.shape_cast %599 : vector<1x64x32xf32> to vector<64x32xf32>
    %cst_257 = arith.constant dense<0.000000e+00> : vector<8x32xf32>
    %601 = tpu.matmul %598, %600, %cst_257 {dimension_numbers = #tpu.dot_dimension_numbers<[1], [0], [0], [1], [0, 0, 1, 1], [], []>} : vector<8x64xf32>, vector<64x32xf32>, vector<8x32xf32> -> vector<8x32xf32>
    %602 = arith.addf %589, %601 : vector<8x32xf32>
    %c1_258 = arith.constant 1 : index
    %c0_259 = arith.constant 0 : index
    %c0_260 = arith.constant 0 : index
    %603 = vector.load %arg23[%c1_258, %c0_259, %c0_260] : memref<2x1x32xf32, #tpu.memory_space<vmem>>, vector<1x1x32xf32>
    %604 = vector.shape_cast %603 : vector<1x1x32xf32> to vector<1x32xf32>
    %605 = vector.broadcast %604 : vector<1x32xf32> to vector<8x32xf32>
    %606 = arith.addf %602, %605 : vector<8x32xf32>
    %c0_261 = arith.constant 0 : index
    %c0_262 = arith.constant 0 : index
    %607 = vector.load %arg24[%c0_261, %c0_262] : memref<32x2xf32, #tpu.memory_space<vmem>>, vector<32x2xf32>
    %cst_263 = arith.constant dense<0.000000e+00> : vector<8x2xf32>
    %608 = tpu.matmul %606, %607, %cst_263 {dimension_numbers = #tpu.dot_dimension_numbers<[1], [0], [0], [1], [0, 0, 1, 1], [], []>} : vector<8x32xf32>, vector<32x2xf32>, vector<8x2xf32> -> vector<8x2xf32>
    %c0_264 = arith.constant 0 : index
    %c0_265 = arith.constant 0 : index
    %609 = vector.load %arg25[%c0_264, %c0_265] : memref<1x2xf32, #tpu.memory_space<vmem>>, vector<1x2xf32>
    %610 = vector.broadcast %609 : vector<1x2xf32> to vector<8x2xf32>
    %611 = arith.addf %608, %610 : vector<8x2xf32>
    %c0_266 = arith.constant 0 : index
    %c0_267 = arith.constant 0 : index
    %c0_268 = arith.constant 0 : index
    %612 = vector.load %arg26[%c0_266, %c0_267, %c0_268] : memref<1x8x2xf32, #tpu.memory_space<vmem>>, vector<1x8x2xf32>
    %613 = vector.shape_cast %612 : vector<1x8x2xf32> to vector<8x2xf32>
    %614 = vector.shape_cast %611 : vector<8x2xf32> to vector<1x8x2xf32>
    tpu.vector_store %arg26[%c0_266, %c0_267, %c0_268], %614 {strides = array<i32>} : memref<1x8x2xf32, #tpu.memory_space<vmem>>, vector<1x8x2xf32>,
    return
  }
  func.func @transform_0(%arg0: i32) -> (i32, i32, i32) {
    %c0_i32 = arith.constant 0 : i32
    %c0_i32_0 = arith.constant 0 : i32
    %c0_i32_1 = arith.constant 0 : i32
    return %arg0, %c0_i32, %c0_i32_0 : i32, i32, i32
  }
  func.func @transform_1(%arg0: i32) -> (i32, i32, i32) {
    %c0_i32 = arith.constant 0 : i32
    %c0_i32_0 = arith.constant 0 : i32
    %c0_i32_1 = arith.constant 0 : i32
    return %arg0, %c0_i32, %c0_i32_0 : i32, i32, i32
  }
  func.func @transform_2(%arg0: i32) -> (i32, i32, i32) {
    %c0_i32 = arith.constant 0 : i32
    %c0_i32_0 = arith.constant 0 : i32
    %c0_i32_1 = arith.constant 0 : i32
    return %arg0, %c0_i32, %c0_i32_0 : i32, i32, i32
  }
  func.func @transform_3(%arg0: i32) -> (i32, i32) {
    %c0_i32 = arith.constant 0 : i32
    %c0_i32_0 = arith.constant 0 : i32
    %c0_i32_1 = arith.constant 0 : i32
    return %c0_i32, %c0_i32_0 : i32, i32
  }
  func.func @transform_4(%arg0: i32) -> (i32, i32) {
    %c0_i32 = arith.constant 0 : i32
    %c0_i32_0 = arith.constant 0 : i32
    %c0_i32_1 = arith.constant 0 : i32
    return %c0_i32, %c0_i32_0 : i32, i32
  }
  func.func @transform_5(%arg0: i32) -> (i32, i32) {
    %c0_i32 = arith.constant 0 : i32
    %c0_i32_0 = arith.constant 0 : i32
    %c0_i32_1 = arith.constant 0 : i32
    return %c0_i32, %c0_i32_0 : i32, i32
  }
  func.func @transform_6(%arg0: i32) -> (i32, i32) {
    %c0_i32 = arith.constant 0 : i32
    %c0_i32_0 = arith.constant 0 : i32
    %c0_i32_1 = arith.constant 0 : i32
    return %c0_i32, %c0_i32_0 : i32, i32
  }
  func.func @transform_7(%arg0: i32) -> (i32, i32, i32) {
    %c0_i32 = arith.constant 0 : i32
    %c0_i32_0 = arith.constant 0 : i32
    %c0_i32_1 = arith.constant 0 : i32
    %c0_i32_2 = arith.constant 0 : i32
    return %c0_i32, %c0_i32_0, %c0_i32_1 : i32, i32, i32
  }
  func.func @transform_8(%arg0: i32) -> (i32, i32, i32) {
    %c0_i32 = arith.constant 0 : i32
    %c0_i32_0 = arith.constant 0 : i32
    %c0_i32_1 = arith.constant 0 : i32
    %c0_i32_2 = arith.constant 0 : i32
    return %c0_i32, %c0_i32_0, %c0_i32_1 : i32, i32, i32
  }
  func.func @transform_9(%arg0: i32) -> (i32, i32, i32) {
    %c0_i32 = arith.constant 0 : i32
    %c0_i32_0 = arith.constant 0 : i32
    %c0_i32_1 = arith.constant 0 : i32
    %c0_i32_2 = arith.constant 0 : i32
    return %c0_i32, %c0_i32_0, %c0_i32_1 : i32, i32, i32
  }
  func.func @transform_10(%arg0: i32) -> (i32, i32, i32) {
    %c0_i32 = arith.constant 0 : i32
    %c0_i32_0 = arith.constant 0 : i32
    %c0_i32_1 = arith.constant 0 : i32
    %c0_i32_2 = arith.constant 0 : i32
    return %c0_i32, %c0_i32_0, %c0_i32_1 : i32, i32, i32
  }
  func.func @transform_11(%arg0: i32) -> (i32, i32, i32) {
    %c0_i32 = arith.constant 0 : i32
    %c0_i32_0 = arith.constant 0 : i32
    %c0_i32_1 = arith.constant 0 : i32
    %c0_i32_2 = arith.constant 0 : i32
    return %c0_i32, %c0_i32_0, %c0_i32_1 : i32, i32, i32
  }
  func.func @transform_12(%arg0: i32) -> (i32, i32, i32) {
    %c0_i32 = arith.constant 0 : i32
    %c0_i32_0 = arith.constant 0 : i32
    %c0_i32_1 = arith.constant 0 : i32
    %c0_i32_2 = arith.constant 0 : i32
    return %c0_i32, %c0_i32_0, %c0_i32_1 : i32, i32, i32
  }
  func.func @transform_13(%arg0: i32) -> (i32, i32, i32) {
    %c0_i32 = arith.constant 0 : i32
    %c0_i32_0 = arith.constant 0 : i32
    %c0_i32_1 = arith.constant 0 : i32
    %c0_i32_2 = arith.constant 0 : i32
    return %c0_i32, %c0_i32_0, %c0_i32_1 : i32, i32, i32
  }
  func.func @transform_14(%arg0: i32) -> (i32, i32, i32) {
    %c0_i32 = arith.constant 0 : i32
    %c0_i32_0 = arith.constant 0 : i32
    %c0_i32_1 = arith.constant 0 : i32
    %c0_i32_2 = arith.constant 0 : i32
    return %c0_i32, %c0_i32_0, %c0_i32_1 : i32, i32, i32
  }
  func.func @transform_15(%arg0: i32) -> (i32, i32, i32) {
    %c0_i32 = arith.constant 0 : i32
    %c0_i32_0 = arith.constant 0 : i32
    %c0_i32_1 = arith.constant 0 : i32
    %c0_i32_2 = arith.constant 0 : i32
    return %c0_i32, %c0_i32_0, %c0_i32_1 : i32, i32, i32
  }
  func.func @transform_16(%arg0: i32) -> (i32, i32, i32) {
    %c0_i32 = arith.constant 0 : i32
    %c0_i32_0 = arith.constant 0 : i32
    %c0_i32_1 = arith.constant 0 : i32
    %c0_i32_2 = arith.constant 0 : i32
    return %c0_i32, %c0_i32_0, %c0_i32_1 : i32, i32, i32
  }
  func.func @transform_17(%arg0: i32) -> (i32, i32, i32) {
    %c0_i32 = arith.constant 0 : i32
    %c0_i32_0 = arith.constant 0 : i32
    %c0_i32_1 = arith.constant 0 : i32
    %c0_i32_2 = arith.constant 0 : i32
    return %c0_i32, %c0_i32_0, %c0_i32_1 : i32, i32, i32
  }
  func.func @transform_18(%arg0: i32) -> (i32, i32, i32) {
    %c0_i32 = arith.constant 0 : i32
    %c0_i32_0 = arith.constant 0 : i32
    %c0_i32_1 = arith.constant 0 : i32
    %c0_i32_2 = arith.constant 0 : i32
    return %c0_i32, %c0_i32_0, %c0_i32_1 : i32, i32, i32
  }
  func.func @transform_19(%arg0: i32) -> (i32, i32, i32) {
    %c0_i32 = arith.constant 0 : i32
    %c0_i32_0 = arith.constant 0 : i32
    %c0_i32_1 = arith.constant 0 : i32
    %c0_i32_2 = arith.constant 0 : i32
    return %c0_i32, %c0_i32_0, %c0_i32_1 : i32, i32, i32
  }
  func.func @transform_20(%arg0: i32) -> (i32, i32, i32) {
    %c0_i32 = arith.constant 0 : i32
    %c0_i32_0 = arith.constant 0 : i32
    %c0_i32_1 = arith.constant 0 : i32
    %c0_i32_2 = arith.constant 0 : i32
    return %c0_i32, %c0_i32_0, %c0_i32_1 : i32, i32, i32
  }
  func.func @transform_21(%arg0: i32) -> (i32, i32, i32) {
    %c0_i32 = arith.constant 0 : i32
    %c0_i32_0 = arith.constant 0 : i32
    %c0_i32_1 = arith.constant 0 : i32
    %c0_i32_2 = arith.constant 0 : i32
    return %c0_i32, %c0_i32_0, %c0_i32_1 : i32, i32, i32
  }
  func.func @transform_22(%arg0: i32) -> (i32, i32, i32) {
    %c0_i32 = arith.constant 0 : i32
    %c0_i32_0 = arith.constant 0 : i32
    %c0_i32_1 = arith.constant 0 : i32
    %c0_i32_2 = arith.constant 0 : i32
    return %c0_i32, %c0_i32_0, %c0_i32_1 : i32, i32, i32
  }
  func.func @transform_23(%arg0: i32) -> (i32, i32) {
    %c0_i32 = arith.constant 0 : i32
    %c0_i32_0 = arith.constant 0 : i32
    %c0_i32_1 = arith.constant 0 : i32
    return %c0_i32, %c0_i32_0 : i32, i32
  }
  func.func @transform_24(%arg0: i32) -> (i32, i32) {
    %c0_i32 = arith.constant 0 : i32
    %c0_i32_0 = arith.constant 0 : i32
    %c0_i32_1 = arith.constant 0 : i32
    return %c0_i32, %c0_i32_0 : i32, i32
  }
  func.func @transform_25(%arg0: i32) -> (i32, i32, i32) {
    %c0_i32 = arith.constant 0 : i32
    %c0_i32_0 = arith.constant 0 : i32
    %c0_i32_1 = arith.constant 0 : i32
    return %arg0, %c0_i32, %c0_i32_0 : i32, i32, i32
  }
}

</mosaic_0001>

<llo_original>
// kernel: _lambda_.1
$region0: #{_lambda_.1}
  #allocation0 [shape = 'u32[]', space=smem, size = 0x4, offset = 0x4, fixed_abs, tag = 'smem constant byte address 0x4 - core index']
  #allocation1 [shape = 'u32[144,128]{1,0:T(1,128)}', space=vmem, size = 0x12000, scoped, tag = 'internal scratch']
  %s0 = inlined_call_operand.vmem [shape: f32[2,8,6], index: 0, kind: input, shape index: {}]
  %s1 = inlined_call_operand.vmem [shape: f32[2,8,2], index: 1, kind: input, shape index: {}]
  %s2 = inlined_call_operand.vmem [shape: f32[2,8,32], index: 2, kind: input, shape index: {}]
  %s3 = inlined_call_operand.vmem [shape: f32[6,32], index: 3, kind: input, shape index: {}]
  %s4 = inlined_call_operand.vmem [shape: f32[1,32], index: 4, kind: input, shape index: {}]
  %s5 = inlined_call_operand.vmem [shape: f32[2,32], index: 5, kind: input, shape index: {}]
  %s6 = inlined_call_operand.vmem [shape: f32[1,32], index: 6, kind: input, shape index: {}]
  %s7 = inlined_call_operand.vmem [shape: f32[6,1,32], index: 7, kind: input, shape index: {}]
  %s8 = inlined_call_operand.vmem [shape: f32[6,1,32], index: 8, kind: input, shape index: {}]
  %s9 = inlined_call_operand.vmem [shape: f32[2,32,96], index: 9, kind: input, shape index: {}]
  %s10 = inlined_call_operand.vmem [shape: f32[2,1,96], index: 10, kind: input, shape index: {}]
  %s11 = inlined_call_operand.vmem [shape: f32[2,32,32], index: 11, kind: input, shape index: {}]
  %s12 = inlined_call_operand.vmem [shape: f32[2,1,32], index: 12, kind: input, shape index: {}]
  %s13 = inlined_call_operand.vmem [shape: f32[2,32,32], index: 13, kind: input, shape index: {}]
  %s14 = inlined_call_operand.vmem [shape: f32[2,1,32], index: 14, kind: input, shape index: {}]
  %s15 = inlined_call_operand.vmem [shape: f32[2,32,64], index: 15, kind: input, shape index: {}]
  %s16 = inlined_call_operand.vmem [shape: f32[2,1,64], index: 16, kind: input, shape index: {}]
  %s17 = inlined_call_operand.vmem [shape: f32[2,32,32], index: 17, kind: input, shape index: {}]
  %s18 = inlined_call_operand.vmem [shape: f32[2,1,32], index: 18, kind: input, shape index: {}]
  %s19 = inlined_call_operand.vmem [shape: f32[2,32,64], index: 19, kind: input, shape index: {}]
  %s20 = inlined_call_operand.vmem [shape: f32[2,1,64], index: 20, kind: input, shape index: {}]
  %s21 = inlined_call_operand.vmem [shape: f32[2,64,32], index: 21, kind: input, shape index: {}]
  %s22 = inlined_call_operand.vmem [shape: f32[2,1,32], index: 22, kind: input, shape index: {}]
  %s23 = inlined_call_operand.vmem [shape: f32[32,2], index: 23, kind: input, shape index: {}]
  %s24 = inlined_call_operand.vmem [shape: f32[1,2], index: 24, kind: input, shape index: {}]
  %s25 = inlined_call_operand.vmem [shape: f32[2,8,2], index: 25, kind: output, shape index: {}]
  %s26 = sld [smem:[#allocation0]]
  $region133: #{_lambda_.1} parent=0
    _
  %s28 = ssub.s32 1, %s26
  %s29 = scalar_select 0, %s28, %s26
  loop: start=0, step=1, limit=4
  $region2: #{_lambda_.1} parent=0 // loop_pre_header
    _
  $region3: #{_lambda_.1} parent=0 // loop_header
    %s31 = sphi 0, %s35
    %p32 = scmp.ge.s32.totalorder %s31, 4
    %s41 = sphi 0, %s43
    %s44 = sphi 0, %s41
    %s45 = sphi 0, %s44
    %s61 = sphi 0, %s45
    %s67 = sphi 0, %s69
    %s70 = sphi 0, %s67
    %s71 = sphi 0, %s70
    %s87 = sphi 0, %s71
    %s93 = sphi 0, %s95
    %s96 = sphi 0, %s93
    %s97 = sphi 0, %s96
    %s113 = sphi 0, %s97
    %s117 = sphi 0, %s117
    %s119 = sphi 0, %s117
    %s120 = sphi 0, %s119
    %s134 = sphi 0, %s120
    %s138 = sphi 0, %s138
    %s140 = sphi 0, %s138
    %s141 = sphi 0, %s140
    %s155 = sphi 0, %s141
    %s159 = sphi 0, %s159
    %s161 = sphi 0, %s159
    %s162 = sphi 0, %s161
    %s176 = sphi 0, %s162
    %s180 = sphi 0, %s180
    %s182 = sphi 0, %s180
    %s183 = sphi 0, %s182
    %s197 = sphi 0, %s183
    %s201 = sphi 0, %s201
    %s203 = sphi 0, %s201
    %s204 = sphi 0, %s203
    %s218 = sphi 0, %s204
    %s222 = sphi 0, %s222
    %s224 = sphi 0, %s222
    %s225 = sphi 0, %s224
    %s239 = sphi 0, %s225
    %s243 = sphi 0, %s243
    %s245 = sphi 0, %s243
    %s246 = sphi 0, %s245
    %s260 = sphi 0, %s246
    %s264 = sphi 0, %s264
    %s266 = sphi 0, %s264
    %s267 = sphi 0, %s266
    %s281 = sphi 0, %s267
    %s285 = sphi 0, %s285
    %s287 = sphi 0, %s285
    %s288 = sphi 0, %s287
    %s302 = sphi 0, %s288
    %s306 = sphi 0, %s306
    %s308 = sphi 0, %s306
    %s309 = sphi 0, %s308
    %s323 = sphi 0, %s309
    %s327 = sphi 0, %s327
    %s329 = sphi 0, %s327
    %s330 = sphi 0, %s329
    %s344 = sphi 0, %s330
    %s348 = sphi 0, %s348
    %s350 = sphi 0, %s348
    %s351 = sphi 0, %s350
    %s365 = sphi 0, %s351
    %s369 = sphi 0, %s369
    %s371 = sphi 0, %s369
    %s372 = sphi 0, %s371
    %s386 = sphi 0, %s372
    %s390 = sphi 0, %s390
    %s392 = sphi 0, %s390
    %s393 = sphi 0, %s392
    %s407 = sphi 0, %s393
    %s411 = sphi 0, %s411
    %s413 = sphi 0, %s411
    %s414 = sphi 0, %s413
    %s428 = sphi 0, %s414
    %s432 = sphi 0, %s432
    %s434 = sphi 0, %s432
    %s435 = sphi 0, %s434
    %s449 = sphi 0, %s435
    %s453 = sphi 0, %s453
    %s455 = sphi 0, %s453
    %s456 = sphi 0, %s455
    %s470 = sphi 0, %s456
    %s474 = sphi 0, %s474
    %s476 = sphi 0, %s474
    %s477 = sphi 0, %s476
    %s491 = sphi 0, %s477
    %s495 = sphi 0, %s495
    %s497 = sphi 0, %s495
    %s498 = sphi 0, %s497
    %s512 = sphi 0, %s498
    %s516 = sphi 0, %s516
    %s518 = sphi 0, %s516
    %s519 = sphi 0, %s518
    %s533 = sphi 0, %s519
    %s537 = sphi 0, %s537
    %s539 = sphi 0, %s537
    %s540 = sphi 0, %s539
    %s554 = sphi 0, %s540
    %s558 = sphi 0, %s558
    %s560 = sphi 0, %s558
    %s561 = sphi 0, %s560
    %s575 = sphi 0, %s561
    %s581 = sphi 0, %s583
    %s584 = sphi 0, %s581
    %s585 = sphi 0, %s584
    %s601 = sphi 0, %s585
  $region4: #{_lambda_.1} parent=0 // loop_header_branch
    %34 = sbr.rel (%p32) target = $region8
  $region5: #{_lambda_.1} parent=0 // loop_body
    %s36 = ssub.s32 %s31, 1
    %s37 = ssub.s32 %s31, 2
    %s38 = sadd.s32 %s31, 1
    %s39 = ssub.s32 %s31, %s38
    %p40 = scmp.eq.s32.totalorder %s39, 0
    %s42 = sadd.s32 %s41, 1
    %s43 = scalar_select %p40, %s41, %s42
    %p46 = pneg %p40
    %p47 = scmp.eq.s32.totalorder %s31, 1
    %p48 = por %p46, %p47
    %p49 = scmp.ne.s32.totalorder %s41, %s44
    %p50 = scmp.eq.s32.totalorder %s31, 0
    %p51 = por %p49, %p50
    %p52 = scmp.ne.s32.totalorder %s41, %s44
    %p53 = scmp.eq.s32.totalorder %s36, 1
    %p54 = por %p52, %p53
    %p55 = scmp.ne.s32.totalorder %s44, %s45
    %p56 = scmp.eq.s32.totalorder %s36, 0
    %p57 = por %p55, %p56
    %p58 = scmp.ne.s32.totalorder %s44, %s45
    %p59 = scmp.eq.s32.totalorder %s37, 1
    %p60 = por %p58, %p59
    %p62 = scmp.ne.s32.totalorder %s45, %s61
    %p63 = scmp.eq.s32.totalorder %s37, 0
    %p64 = por %p62, %p63
    %s65 = ssub.s32 %s31, %s38
    %p66 = scmp.eq.s32.totalorder %s65, 0
    %s68 = sadd.s32 %s67, 1
    %s69 = scalar_select %p66, %s67, %s68
    %p72 = pneg %p66
    %p73 = scmp.eq.s32.totalorder %s31, 1
    %p74 = por %p72, %p73
    %p75 = scmp.ne.s32.totalorder %s67, %s70
    %p76 = scmp.eq.s32.totalorder %s31, 0
    %p77 = por %p75, %p76
    %p78 = scmp.ne.s32.totalorder %s67, %s70
    %p79 = scmp.eq.s32.totalorder %s36, 1
    %p80 = por %p78, %p79
    %p81 = scmp.ne.s32.totalorder %s70, %s71
    %p82 = scmp.eq.s32.totalorder %s36, 0
    %p83 = por %p81, %p82
    %p84 = scmp.ne.s32.totalorder %s70, %s71
    %p85 = scmp.eq.s32.totalorder %s37, 1
    %p86 = por %p84, %p85
    %p88 = scmp.ne.s32.totalorder %s71, %s87
    %p89 = scmp.eq.s32.totalorder %s37, 0
    %p90 = por %p88, %p89
    %s91 = ssub.s32 %s31, %s38
    %p92 = scmp.eq.s32.totalorder %s91, 0
    %s94 = sadd.s32 %s93, 1
    %s95 = scalar_select %p92, %s93, %s94
    %p98 = pneg %p92
    %p99 = scmp.eq.s32.totalorder %s31, 1
    %p100 = por %p98, %p99
    %p101 = scmp.ne.s32.totalorder %s93, %s96
    %p102 = scmp.eq.s32.totalorder %s31, 0
    %p103 = por %p101, %p102
    %p104 = scmp.ne.s32.totalorder %s93, %s96
    %p105 = scmp.eq.s32.totalorder %s36, 1
    %p106 = por %p104, %p105
    %p107 = scmp.ne.s32.totalorder %s96, %s97
    %p108 = scmp.eq.s32.totalorder %s36, 0
    %p109 = por %p107, %p108
    %p110 = scmp.ne.s32.totalorder %s96, %s97
    %p111 = scmp.eq.s32.totalorder %s37, 1
    %p112 = por %p110, %p111
    %p114 = scmp.ne.s32.totalorder %s97, %s113
    %p115 = scmp.eq.s32.totalorder %s37, 0
    %p116 = por %p114, %p115
    %s118 = sadd.s32 %s117, 1
    %p121 = scmp.eq.s32.totalorder %s31, 1
    %p122 = scmp.ne.s32.totalorder %s117, %s119
    %p123 = scmp.eq.s32.totalorder %s31, 0
    %p124 = por %p122, %p123
    %p125 = scmp.ne.s32.totalorder %s117, %s119
    %p126 = scmp.eq.s32.totalorder %s36, 1
    %p127 = por %p125, %p126
    %p128 = scmp.ne.s32.totalorder %s119, %s120
    %p129 = scmp.eq.s32.totalorder %s36, 0
    %p130 = por %p128, %p129
    %p131 = scmp.ne.s32.totalorder %s119, %s120
    %p132 = scmp.eq.s32.totalorder %s37, 1
    %p133 = por %p131, %p132
    %p135 = scmp.ne.s32.totalorder %s120, %s134
    %p136 = scmp.eq.s32.totalorder %s37, 0
    %p137 = por %p135, %p136
    %s139 = sadd.s32 %s138, 1
    %p142 = scmp.eq.s32.totalorder %s31, 1
    %p143 = scmp.ne.s32.totalorder %s138, %s140
    %p144 = scmp.eq.s32.totalorder %s31, 0
    %p145 = por %p143, %p144
    %p146 = scmp.ne.s32.totalorder %s138, %s140
    %p147 = scmp.eq.s32.totalorder %s36, 1
    %p148 = por %p146, %p147
    %p149 = scmp.ne.s32.totalorder %s140, %s141
    %p150 = scmp.eq.s32.totalorder %s36, 0
    %p151 = por %p149, %p150
    %p152 = scmp.ne.s32.totalorder %s140, %s141
    %p153 = scmp.eq.s32.totalorder %s37, 1
    %p154 = por %p152, %p153
    %p156 = scmp.ne.s32.totalorder %s141, %s155
    %p157 = scmp.eq.s32.totalorder %s37, 0
    %p158 = por %p156, %p157
    %s160 = sadd.s32 %s159, 1
    %p163 = scmp.eq.s32.totalorder %s31, 1
    %p164 = scmp.ne.s32.totalorder %s159, %s161
    %p165 = scmp.eq.s32.totalorder %s31, 0
    %p166 = por %p164, %p165
    %p167 = scmp.ne.s32.totalorder %s159, %s161
    %p168 = scmp.eq.s32.totalorder %s36, 1
    %p169 = por %p167, %p168
    %p170 = scmp.ne.s32.totalorder %s161, %s162
    %p171 = scmp.eq.s32.totalorder %s36, 0
    %p172 = por %p170, %p171
    %p173 = scmp.ne.s32.totalorder %s161, %s162
    %p174 = scmp.eq.s32.totalorder %s37, 1
    %p175 = por %p173, %p174
    %p177 = scmp.ne.s32.totalorder %s162, %s176
    %p178 = scmp.eq.s32.totalorder %s37, 0
    %p179 = por %p177, %p178
    %s181 = sadd.s32 %s180, 1
    %p184 = scmp.eq.s32.totalorder %s31, 1
    %p185 = scmp.ne.s32.totalorder %s180, %s182
    %p186 = scmp.eq.s32.totalorder %s31, 0
    %p187 = por %p185, %p186
    %p188 = scmp.ne.s32.totalorder %s180, %s182
    %p189 = scmp.eq.s32.totalorder %s36, 1
    %p190 = por %p188, %p189
    %p191 = scmp.ne.s32.totalorder %s182, %s183
    %p192 = scmp.eq.s32.totalorder %s36, 0
    %p193 = por %p191, %p192
    %p194 = scmp.ne.s32.totalorder %s182, %s183
    %p195 = scmp.eq.s32.totalorder %s37, 1
    %p196 = por %p194, %p195
    %p198 = scmp.ne.s32.totalorder %s183, %s197
    %p199 = scmp.eq.s32.totalorder %s37, 0
    %p200 = por %p198, %p199
    %s202 = sadd.s32 %s201, 1
    %p205 = scmp.eq.s32.totalorder %s31, 1
    %p206 = scmp.ne.s32.totalorder %s201, %s203
    %p207 = scmp.eq.s32.totalorder %s31, 0
    %p208 = por %p206, %p207
    %p209 = scmp.ne.s32.totalorder %s201, %s203
    %p210 = scmp.eq.s32.totalorder %s36, 1
    %p211 = por %p209, %p210
    %p212 = scmp.ne.s32.totalorder %s203, %s204
    %p213 = scmp.eq.s32.totalorder %s36, 0
    %p214 = por %p212, %p213
    %p215 = scmp.ne.s32.totalorder %s203, %s204
    %p216 = scmp.eq.s32.totalorder %s37, 1
    %p217 = por %p215, %p216
    %p219 = scmp.ne.s32.totalorder %s204, %s218
    %p220 = scmp.eq.s32.totalorder %s37, 0
    %p221 = por %p219, %p220
    %s223 = sadd.s32 %s222, 1
    %p226 = scmp.eq.s32.totalorder %s31, 1
    %p227 = scmp.ne.s32.totalorder %s222, %s224
    %p228 = scmp.eq.s32.totalorder %s31, 0
    %p229 = por %p227, %p228
    %p230 = scmp.ne.s32.totalorder %s222, %s224
    %p231 = scmp.eq.s32.totalorder %s36, 1
    %p232 = por %p230, %p231
    %p233 = scmp.ne.s32.totalorder %s224, %s225
    %p234 = scmp.eq.s32.totalorder %s36, 0
    %p235 = por %p233, %p234
    %p236 = scmp.ne.s32.totalorder %s224, %s225
    %p237 = scmp.eq.s32.totalorder %s37, 1
    %p238 = por %p236, %p237
    %p240 = scmp.ne.s32.totalorder %s225, %s239
    %p241 = scmp.eq.s32.totalorder %s37, 0
    %p242 = por %p240, %p241
    %s244 = sadd.s32 %s243, 1
    %p247 = scmp.eq.s32.totalorder %s31, 1
    %p248 = scmp.ne.s32.totalorder %s243, %s245
    %p249 = scmp.eq.s32.totalorder %s31, 0
    %p250 = por %p248, %p249
    %p251 = scmp.ne.s32.totalorder %s243, %s245
    %p252 = scmp.eq.s32.totalorder %s36, 1
    %p253 = por %p251, %p252
    %p254 = scmp.ne.s32.totalorder %s245, %s246
    %p255 = scmp.eq.s32.totalorder %s36, 0
    %p256 = por %p254, %p255
    %p257 = scmp.ne.s32.totalorder %s245, %s246
    %p258 = scmp.eq.s32.totalorder %s37, 1
    %p259 = por %p257, %p258
    %p261 = scmp.ne.s32.totalorder %s246, %s260
    %p262 = scmp.eq.s32.totalorder %s37, 0
    %p263 = por %p261, %p262
    %s265 = sadd.s32 %s264, 1
    %p268 = scmp.eq.s32.totalorder %s31, 1
    %p269 = scmp.ne.s32.totalorder %s264, %s266
    %p270 = scmp.eq.s32.totalorder %s31, 0
    %p271 = por %p269, %p270
    %p272 = scmp.ne.s32.totalorder %s264, %s266
    %p273 = scmp.eq.s32.totalorder %s36, 1
    %p274 = por %p272, %p273
    %p275 = scmp.ne.s32.totalorder %s266, %s267
    %p276 = scmp.eq.s32.totalorder %s36, 0
    %p277 = por %p275, %p276
    %p278 = scmp.ne.s32.totalorder %s266, %s267
    %p279 = scmp.eq.s32.totalorder %s37, 1
    %p280 = por %p278, %p279
    %p282 = scmp.ne.s32.totalorder %s267, %s281
    %p283 = scmp.eq.s32.totalorder %s37, 0
    %p284 = por %p282, %p283
    %s286 = sadd.s32 %s285, 1
    %p289 = scmp.eq.s32.totalorder %s31, 1
    %p290 = scmp.ne.s32.totalorder %s285, %s287
    %p291 = scmp.eq.s32.totalorder %s31, 0
    %p292 = por %p290, %p291
    %p293 = scmp.ne.s32.totalorder %s285, %s287
    %p294 = scmp.eq.s32.totalorder %s36, 1
    %p295 = por %p293, %p294
    %p296 = scmp.ne.s32.totalorder %s287, %s288
    %p297 = scmp.eq.s32.totalorder %s36, 0
    %p298 = por %p296, %p297
    %p299 = scmp.ne.s32.totalorder %s287, %s288
    %p300 = scmp.eq.s32.totalorder %s37, 1
    %p301 = por %p299, %p300
    %p303 = scmp.ne.s32.totalorder %s288, %s302
    %p304 = scmp.eq.s32.totalorder %s37, 0
    %p305 = por %p303, %p304
    %s307 = sadd.s32 %s306, 1
    %p310 = scmp.eq.s32.totalorder %s31, 1
    %p311 = scmp.ne.s32.totalorder %s306, %s308
    %p312 = scmp.eq.s32.totalorder %s31, 0
    %p313 = por %p311, %p312
    %p314 = scmp.ne.s32.totalorder %s306, %s308
    %p315 = scmp.eq.s32.totalorder %s36, 1
    %p316 = por %p314, %p315
    %p317 = scmp.ne.s32.totalorder %s308, %s309
    %p318 = scmp.eq.s32.totalorder %s36, 0
    %p319 = por %p317, %p318
    %p320 = scmp.ne.s32.totalorder %s308, %s309
    %p321 = scmp.eq.s32.totalorder %s37, 1
    %p322 = por %p320, %p321
    %p324 = scmp.ne.s32.totalorder %s309, %s323
    %p325 = scmp.eq.s32.totalorder %s37, 0
    %p326 = por %p324, %p325
    %s328 = sadd.s32 %s327, 1
    %p331 = scmp.eq.s32.totalorder %s31, 1
    %p332 = scmp.ne.s32.totalorder %s327, %s329
    %p333 = scmp.eq.s32.totalorder %s31, 0
    %p334 = por %p332, %p333
    %p335 = scmp.ne.s32.totalorder %s327, %s329
    %p336 = scmp.eq.s32.totalorder %s36, 1
    %p337 = por %p335, %p336
    %p338 = scmp.ne.s32.totalorder %s329, %s330
    %p339 = scmp.eq.s32.totalorder %s36, 0
    %p340 = por %p338, %p339
    %p341 = scmp.ne.s32.totalorder %s329, %s330
    %p342 = scmp.eq.s32.totalorder %s37, 1
    %p343 = por %p341, %p342
    %p345 = scmp.ne.s32.totalorder %s330, %s344
    %p346 = scmp.eq.s32.totalorder %s37, 0
    %p347 = por %p345, %p346
    %s349 = sadd.s32 %s348, 1
    %p352 = scmp.eq.s32.totalorder %s31, 1
    %p353 = scmp.ne.s32.totalorder %s348, %s350
    %p354 = scmp.eq.s32.totalorder %s31, 0
    %p355 = por %p353, %p354
    %p356 = scmp.ne.s32.totalorder %s348, %s350
    %p357 = scmp.eq.s32.totalorder %s36, 1
    %p358 = por %p356, %p357
    %p359 = scmp.ne.s32.totalorder %s350, %s351
    %p360 = scmp.eq.s32.totalorder %s36, 0
    %p361 = por %p359, %p360
    %p362 = scmp.ne.s32.totalorder %s350, %s351
    %p363 = scmp.eq.s32.totalorder %s37, 1
    %p364 = por %p362, %p363
    %p366 = scmp.ne.s32.totalorder %s351, %s365
    %p367 = scmp.eq.s32.totalorder %s37, 0
    %p368 = por %p366, %p367
    %s370 = sadd.s32 %s369, 1
    %p373 = scmp.eq.s32.totalorder %s31, 1
    %p374 = scmp.ne.s32.totalorder %s369, %s371
    %p375 = scmp.eq.s32.totalorder %s31, 0
    %p376 = por %p374, %p375
    %p377 = scmp.ne.s32.totalorder %s369, %s371
    %p378 = scmp.eq.s32.totalorder %s36, 1
    %p379 = por %p377, %p378
    %p380 = scmp.ne.s32.totalorder %s371, %s372
    %p381 = scmp.eq.s32.totalorder %s36, 0
    %p382 = por %p380, %p381
    %p383 = scmp.ne.s32.totalorder %s371, %s372
    %p384 = scmp.eq.s32.totalorder %s37, 1
    %p385 = por %p383, %p384
    %p387 = scmp.ne.s32.totalorder %s372, %s386
    %p388 = scmp.eq.s32.totalorder %s37, 0
    %p389 = por %p387, %p388
    %s391 = sadd.s32 %s390, 1
    %p394 = scmp.eq.s32.totalorder %s31, 1
    %p395 = scmp.ne.s32.totalorder %s390, %s392
    %p396 = scmp.eq.s32.totalorder %s31, 0
    %p397 = por %p395, %p396
    %p398 = scmp.ne.s32.totalorder %s390, %s392
    %p399 = scmp.eq.s32.totalorder %s36, 1
    %p400 = por %p398, %p399
    %p401 = scmp.ne.s32.totalorder %s392, %s393
    %p402 = scmp.eq.s32.totalorder %s36, 0
    %p403 = por %p401, %p402
    %p404 = scmp.ne.s32.totalorder %s392, %s393
    %p405 = scmp.eq.s32.totalorder %s37, 1
    %p406 = por %p404, %p405
    %p408 = scmp.ne.s32.totalorder %s393, %s407
    %p409 = scmp.eq.s32.totalorder %s37, 0
    %p410 = por %p408, %p409
    %s412 = sadd.s32 %s411, 1
    %p415 = scmp.eq.s32.totalorder %s31, 1
    %p416 = scmp.ne.s32.totalorder %s411, %s413
    %p417 = scmp.eq.s32.totalorder %s31, 0
    %p418 = por %p416, %p417
    %p419 = scmp.ne.s32.totalorder %s411, %s413
    %p420 = scmp.eq.s32.totalorder %s36, 1
    %p421 = por %p419, %p420
    %p422 = scmp.ne.s32.totalorder %s413, %s414
    %p423 = scmp.eq.s32.totalorder %s36, 0
    %p424 = por %p422, %p423
    %p425 = scmp.ne.s32.totalorder %s413, %s414
    %p426 = scmp.eq.s32.totalorder %s37, 1
    %p427 = por %p425, %p426
    %p429 = scmp.ne.s32.totalorder %s414, %s428
    %p430 = scmp.eq.s32.totalorder %s37, 0
    %p431 = por %p429, %p430
    %s433 = sadd.s32 %s432, 1
    %p436 = scmp.eq.s32.totalorder %s31, 1
    %p437 = scmp.ne.s32.totalorder %s432, %s434
    %p438 = scmp.eq.s32.totalorder %s31, 0
    %p439 = por %p437, %p438
    %p440 = scmp.ne.s32.totalorder %s432, %s434
    %p441 = scmp.eq.s32.totalorder %s36, 1
    %p442 = por %p440, %p441
    %p443 = scmp.ne.s32.totalorder %s434, %s435
    %p444 = scmp.eq.s32.totalorder %s36, 0
    %p445 = por %p443, %p444
    %p446 = scmp.ne.s32.totalorder %s434, %s435
    %p447 = scmp.eq.s32.totalorder %s37, 1
    %p448 = por %p446, %p447
    %p450 = scmp.ne.s32.totalorder %s435, %s449
    %p451 = scmp.eq.s32.totalorder %s37, 0
    %p452 = por %p450, %p451
    %s454 = sadd.s32 %s453, 1
    %p457 = scmp.eq.s32.totalorder %s31, 1
    %p458 = scmp.ne.s32.totalorder %s453, %s455
    %p459 = scmp.eq.s32.totalorder %s31, 0
    %p460 = por %p458, %p459
    %p461 = scmp.ne.s32.totalorder %s453, %s455
    %p462 = scmp.eq.s32.totalorder %s36, 1
    %p463 = por %p461, %p462
    %p464 = scmp.ne.s32.totalorder %s455, %s456
    %p465 = scmp.eq.s32.totalorder %s36, 0
    %p466 = por %p464, %p465
    %p467 = scmp.ne.s32.totalorder %s455, %s456
    %p468 = scmp.eq.s32.totalorder %s37, 1
    %p469 = por %p467, %p468
    %p471 = scmp.ne.s32.totalorder %s456, %s470
    %p472 = scmp.eq.s32.totalorder %s37, 0
    %p473 = por %p471, %p472
    %s475 = sadd.s32 %s474, 1
    %p478 = scmp.eq.s32.totalorder %s31, 1
    %p479 = scmp.ne.s32.totalorder %s474, %s476
    %p480 = scmp.eq.s32.totalorder %s31, 0
    %p481 = por %p479, %p480
    %p482 = scmp.ne.s32.totalorder %s474, %s476
    %p483 = scmp.eq.s32.totalorder %s36, 1
    %p484 = por %p482, %p483
    %p485 = scmp.ne.s32.totalorder %s476, %s477
    %p486 = scmp.eq.s32.totalorder %s36, 0
    %p487 = por %p485, %p486
    %p488 = scmp.ne.s32.totalorder %s476, %s477
    %p489 = scmp.eq.s32.totalorder %s37, 1
    %p490 = por %p488, %p489
    %p492 = scmp.ne.s32.totalorder %s477, %s491
    %p493 = scmp.eq.s32.totalorder %s37, 0
    %p494 = por %p492, %p493
    %s496 = sadd.s32 %s495, 1
    %p499 = scmp.eq.s32.totalorder %s31, 1
    %p500 = scmp.ne.s32.totalorder %s495, %s497
    %p501 = scmp.eq.s32.totalorder %s31, 0
    %p502 = por %p500, %p501
    %p503 = scmp.ne.s32.totalorder %s495, %s497
    %p504 = scmp.eq.s32.totalorder %s36, 1
    %p505 = por %p503, %p504
    %p506 = scmp.ne.s32.totalorder %s497, %s498
    %p507 = scmp.eq.s32.totalorder %s36, 0
    %p508 = por %p506, %p507
    %p509 = scmp.ne.s32.totalorder %s497, %s498
    %p510 = scmp.eq.s32.totalorder %s37, 1
    %p511 = por %p509, %p510
    %p513 = scmp.ne.s32.totalorder %s498, %s512
    %p514 = scmp.eq.s32.totalorder %s37, 0
    %p515 = por %p513, %p514
    %s517 = sadd.s32 %s516, 1
    %p520 = scmp.eq.s32.totalorder %s31, 1
    %p521 = scmp.ne.s32.totalorder %s516, %s518
    %p522 = scmp.eq.s32.totalorder %s31, 0
    %p523 = por %p521, %p522
    %p524 = scmp.ne.s32.totalorder %s516, %s518
    %p525 = scmp.eq.s32.totalorder %s36, 1
    %p526 = por %p524, %p525
    %p527 = scmp.ne.s32.totalorder %s518, %s519
    %p528 = scmp.eq.s32.totalorder %s36, 0
    %p529 = por %p527, %p528
    %p530 = scmp.ne.s32.totalorder %s518, %s519
    %p531 = scmp.eq.s32.totalorder %s37, 1
    %p532 = por %p530, %p531
    %p534 = scmp.ne.s32.totalorder %s519, %s533
    %p535 = scmp.eq.s32.totalorder %s37, 0
    %p536 = por %p534, %p535
    %s538 = sadd.s32 %s537, 1
    %p541 = scmp.eq.s32.totalorder %s31, 1
    %p542 = scmp.ne.s32.totalorder %s537, %s539
    %p543 = scmp.eq.s32.totalorder %s31, 0
    %p544 = por %p542, %p543
    %p545 = scmp.ne.s32.totalorder %s537, %s539
    %p546 = scmp.eq.s32.totalorder %s36, 1
    %p547 = por %p545, %p546
    %p548 = scmp.ne.s32.totalorder %s539, %s540
    %p549 = scmp.eq.s32.totalorder %s36, 0
    %p550 = por %p548, %p549
    %p551 = scmp.ne.s32.totalorder %s539, %s540
    %p552 = scmp.eq.s32.totalorder %s37, 1
    %p553 = por %p551, %p552
    %p555 = scmp.ne.s32.totalorder %s540, %s554
    %p556 = scmp.eq.s32.totalorder %s37, 0
    %p557 = por %p555, %p556
    %s559 = sadd.s32 %s558, 1
    %p562 = scmp.eq.s32.totalorder %s31, 1
    %p563 = scmp.ne.s32.totalorder %s558, %s560
    %p564 = scmp.eq.s32.totalorder %s31, 0
    %p565 = por %p563, %p564
    %p566 = scmp.ne.s32.totalorder %s558, %s560
    %p567 = scmp.eq.s32.totalorder %s36, 1
    %p568 = por %p566, %p567
    %p569 = scmp.ne.s32.totalorder %s560, %s561
    %p570 = scmp.eq.s32.totalorder %s36, 0
    %p571 = por %p569, %p570
    %p572 = scmp.ne.s32.totalorder %s560, %s561
    %p573 = scmp.eq.s32.totalorder %s37, 1
    %p574 = por %p572, %p573
    %p576 = scmp.ne.s32.totalorder %s561, %s575
    %p577 = scmp.eq.s32.totalorder %s37, 0
    %p578 = por %p576, %p577
    %s579 = ssub.s32 %s31, %s38
    %p580 = scmp.eq.s32.totalorder %s579, 0
    %s582 = sadd.s32 %s581, 1
    %s583 = scalar_select %p580, %s581, %s582
    %p586 = pneg %p580
    %p587 = scmp.eq.s32.totalorder %s31, 1
    %p588 = por %p586, %p587
    %p589 = scmp.ne.s32.totalorder %s581, %s584
    %p590 = scmp.eq.s32.totalorder %s31, 0
    %p591 = por %p589, %p590
    %p592 = scmp.ne.s32.totalorder %s581, %s584
    %p593 = scmp.eq.s32.totalorder %s36, 1
    %p594 = por %p592, %p593
    %p595 = scmp.ne.s32.totalorder %s584, %s585
    %p596 = scmp.eq.s32.totalorder %s36, 0
    %p597 = por %p595, %p596
    %p598 = scmp.ne.s32.totalorder %s584, %s585
    %p599 = scmp.eq.s32.totalorder %s37, 1
    %p600 = por %p598, %p599
    %p602 = scmp.ne.s32.totalorder %s585, %s601
    %p603 = scmp.eq.s32.totalorder %s37, 0
    %p604 = por %p602, %p603
    %p605 = scmp.le.s32.totalorder 1, %s31
    %p606 = scmp.lt.s32.totalorder %s31, 3
    %p607 = pnand %p605, %p606
    %p608 = pneg %p607
    // Predicated region
    $region9: #{_lambda_.1} parent=5 // pred_check
      _
    $region10: #{_lambda_.1} parent=5 // pred_check_branch
      %610 = sbr.rel (%p607) target = $region12
    $region11: #{_lambda_.1} parent=5 // pred_region
      %s611 = ssub.s32 %s31, 1
      // Predicated region
      $region13: #{_lambda_.1} parent=11 // pred_check
        %p612 = pneg %p130
      $region14: #{_lambda_.1} parent=11 // pred_check_branch
        %614 = sbr.rel (%p612) target = $region16
      $region15: #{_lambda_.1} parent=11 // pred_region
        _
      $region16: #{_lambda_.1} parent=11 // pred_fallthru
        _
      // Predicated region
      $region17: #{_lambda_.1} parent=11 // pred_check
        %p615 = pneg %p151
      $region18: #{_lambda_.1} parent=11 // pred_check_branch
        %617 = sbr.rel (%p615) target = $region20
      $region19: #{_lambda_.1} parent=11 // pred_region
        _
      $region20: #{_lambda_.1} parent=11 // pred_fallthru
        _
      // Predicated region
      $region21: #{_lambda_.1} parent=11 // pred_check
        %p618 = pneg %p172
      $region22: #{_lambda_.1} parent=11 // pred_check_branch
        %620 = sbr.rel (%p618) target = $region24
      $region23: #{_lambda_.1} parent=11 // pred_region
        _
      $region24: #{_lambda_.1} parent=11 // pred_fallthru
        _
      // Predicated region
      $region25: #{_lambda_.1} parent=11 // pred_check
        %p621 = pneg %p193
      $region26: #{_lambda_.1} parent=11 // pred_check_branch
        %623 = sbr.rel (%p621) target = $region28
      $region27: #{_lambda_.1} parent=11 // pred_region
        _
      $region28: #{_lambda_.1} parent=11 // pred_fallthru
        _
      // Predicated region
      $region29: #{_lambda_.1} parent=11 // pred_check
        %p624 = pneg %p214
      $region30: #{_lambda_.1} parent=11 // pred_check_branch
        %626 = sbr.rel (%p624) target = $region32
      $region31: #{_lambda_.1} parent=11 // pred_region
        _
      $region32: #{_lambda_.1} parent=11 // pred_fallthru
        _
      // Predicated region
      $region33: #{_lambda_.1} parent=11 // pred_check
        %p627 = pneg %p235
      $region34: #{_lambda_.1} parent=11 // pred_check_branch
        %629 = sbr.rel (%p627) target = $region36
      $region35: #{_lambda_.1} parent=11 // pred_region
        _
      $region36: #{_lambda_.1} parent=11 // pred_fallthru
        _
      // Predicated region
      $region37: #{_lambda_.1} parent=11 // pred_check
        %p630 = pneg %p256
      $region38: #{_lambda_.1} parent=11 // pred_check_branch
        %632 = sbr.rel (%p630) target = $region40
      $region39: #{_lambda_.1} parent=11 // pred_region
        _
      $region40: #{_lambda_.1} parent=11 // pred_fallthru
        _
      // Predicated region
      $region41: #{_lambda_.1} parent=11 // pred_check
        %p633 = pneg %p277
      $region42: #{_lambda_.1} parent=11 // pred_check_branch
        %635 = sbr.rel (%p633) target = $region44
      $region43: #{_lambda_.1} parent=11 // pred_region
        _
      $region44: #{_lambda_.1} parent=11 // pred_fallthru
        _
      // Predicated region
      $region45: #{_lambda_.1} parent=11 // pred_check
        %p636 = pneg %p298
      $region46: #{_lambda_.1} parent=11 // pred_check_branch
        %638 = sbr.rel (%p636) target = $region48
      $region47: #{_lambda_.1} parent=11 // pred_region
        _
      $region48: #{_lambda_.1} parent=11 // pred_fallthru
        _
      // Predicated region
      $region49: #{_lambda_.1} parent=11 // pred_check
        %p639 = pneg %p319
      $region50: #{_lambda_.1} parent=11 // pred_check_branch
        %641 = sbr.rel (%p639) target = $region52
      $region51: #{_lambda_.1} parent=11 // pred_region
        _
      $region52: #{_lambda_.1} parent=11 // pred_fallthru
        _
      // Predicated region
      $region53: #{_lambda_.1} parent=11 // pred_check
        %p642 = pneg %p340
      $region54: #{_lambda_.1} parent=11 // pred_check_branch
        %644 = sbr.rel (%p642) target = $region56
      $region55: #{_lambda_.1} parent=11 // pred_region
        _
      $region56: #{_lambda_.1} parent=11 // pred_fallthru
        _
      // Predicated region
      $region57: #{_lambda_.1} parent=11 // pred_check
        %p645 = pneg %p361
      $region58: #{_lambda_.1} parent=11 // pred_check_branch
        %647 = sbr.rel (%p645) target = $region60
      $region59: #{_lambda_.1} parent=11 // pred_region
        _
      $region60: #{_lambda_.1} parent=11 // pred_fallthru
        _
      // Predicated region
      $region61: #{_lambda_.1} parent=11 // pred_check
        %p648 = pneg %p382
      $region62: #{_lambda_.1} parent=11 // pred_check_branch
        %650 = sbr.rel (%p648) target = $region64
      $region63: #{_lambda_.1} parent=11 // pred_region
        _
      $region64: #{_lambda_.1} parent=11 // pred_fallthru
        _
      // Predicated region
      $region65: #{_lambda_.1} parent=11 // pred_check
        %p651 = pneg %p403
      $region66: #{_lambda_.1} parent=11 // pred_check_branch
        %653 = sbr.rel (%p651) target = $region68
      $region67: #{_lambda_.1} parent=11 // pred_region
        _
      $region68: #{_lambda_.1} parent=11 // pred_fallthru
        _
      // Predicated region
      $region69: #{_lambda_.1} parent=11 // pred_check
        %p654 = pneg %p424
      $region70: #{_lambda_.1} parent=11 // pred_check_branch
        %656 = sbr.rel (%p654) target = $region72
      $region71: #{_lambda_.1} parent=11 // pred_region
        _
      $region72: #{_lambda_.1} parent=11 // pred_fallthru
        _
      // Predicated region
      $region73: #{_lambda_.1} parent=11 // pred_check
        %p657 = pneg %p445
      $region74: #{_lambda_.1} parent=11 // pred_check_branch
        %659 = sbr.rel (%p657) target = $region76
      $region75: #{_lambda_.1} parent=11 // pred_region
        _
      $region76: #{_lambda_.1} parent=11 // pred_fallthru
        _
      // Predicated region
      $region77: #{_lambda_.1} parent=11 // pred_check
        %p660 = pneg %p466
      $region78: #{_lambda_.1} parent=11 // pred_check_branch
        %662 = sbr.rel (%p660) target = $region80
      $region79: #{_lambda_.1} parent=11 // pred_region
        _
      $region80: #{_lambda_.1} parent=11 // pred_fallthru
        _
      // Predicated region
      $region81: #{_lambda_.1} parent=11 // pred_check
        %p663 = pneg %p487
      $region82: #{_lambda_.1} parent=11 // pred_check_branch
        %665 = sbr.rel (%p663) target = $region84
      $region83: #{_lambda_.1} parent=11 // pred_region
        _
      $region84: #{_lambda_.1} parent=11 // pred_fallthru
        _
      // Predicated region
      $region85: #{_lambda_.1} parent=11 // pred_check
        %p666 = pneg %p508
      $region86: #{_lambda_.1} parent=11 // pred_check_branch
        %668 = sbr.rel (%p666) target = $region88
      $region87: #{_lambda_.1} parent=11 // pred_region
        _
      $region88: #{_lambda_.1} parent=11 // pred_fallthru
        _
      // Predicated region
      $region89: #{_lambda_.1} parent=11 // pred_check
        %p669 = pneg %p529
      $region90: #{_lambda_.1} parent=11 // pred_check_branch
        %671 = sbr.rel (%p669) target = $region92
      $region91: #{_lambda_.1} parent=11 // pred_region
        _
      $region92: #{_lambda_.1} parent=11 // pred_fallthru
        _
      // Predicated region
      $region93: #{_lambda_.1} parent=11 // pred_check
        %p672 = pneg %p550
      $region94: #{_lambda_.1} parent=11 // pred_check_branch
        %674 = sbr.rel (%p672) target = $region96
      $region95: #{_lambda_.1} parent=11 // pred_region
        _
      $region96: #{_lambda_.1} parent=11 // pred_fallthru
        _
      // Predicated region
      $region97: #{_lambda_.1} parent=11 // pred_check
        %p675 = pneg %p571
      $region98: #{_lambda_.1} parent=11 // pred_check_branch
        %677 = sbr.rel (%p675) target = $region100
      $region99: #{_lambda_.1} parent=11 // pred_region
        _
      $region100: #{_lambda_.1} parent=11 // pred_fallthru
        _
    $region12: #{_lambda_.1} parent=5 // pred_fallthru
      _
    %p678 = scmp.lt.s32.totalorder %s31, 2
    // Predicated region
    $region101: #{_lambda_.1} parent=5 // pred_check
      %p679 = pneg %p678
    $region102: #{_lambda_.1} parent=5 // pred_check_branch
      %681 = sbr.rel (%p679) target = $region104
    $region103: #{_lambda_.1} parent=5 // pred_region
      // Predicated region
      $region105: #{_lambda_.1} parent=103 // pred_check
        %p682 = pneg %p51
      $region106: #{_lambda_.1} parent=103 // pred_check_branch
        %684 = sbr.rel (%p682) target = $region108
      $region107: #{_lambda_.1} parent=103 // pred_region
        %p685 = scmp.lt.s32.totalorder %s31, 1
        %s686 = scalar_select %p685, %s31, 1
        %s687 = smul.addr %s686, 8
        %s688 = scalar_lea.vmem %s0, %s687
      $region108: #{_lambda_.1} parent=103 // pred_fallthru
        _
      // Predicated region
      $region109: #{_lambda_.1} parent=103 // pred_check
        %p689 = pneg %p77
      $region110: #{_lambda_.1} parent=103 // pred_check_branch
        %691 = sbr.rel (%p689) target = $region112
      $region111: #{_lambda_.1} parent=103 // pred_region
        %p692 = scmp.lt.s32.totalorder %s31, 1
        %s693 = scalar_select %p692, %s31, 1
        %s694 = smul.addr %s693, 8
        %s695 = scalar_lea.vmem %s1, %s694
      $region112: #{_lambda_.1} parent=103 // pred_fallthru
        _
      // Predicated region
      $region113: #{_lambda_.1} parent=103 // pred_check
        %p696 = pneg %p103
      $region114: #{_lambda_.1} parent=103 // pred_check_branch
        %698 = sbr.rel (%p696) target = $region116
      $region115: #{_lambda_.1} parent=103 // pred_region
        %p699 = scmp.lt.s32.totalorder %s31, 1
        %s700 = scalar_select %p699, %s31, 1
        %s701 = smul.addr %s700, 8
        %s702 = scalar_lea.vmem %s2, %s701
      $region116: #{_lambda_.1} parent=103 // pred_fallthru
        _
    $region104: #{_lambda_.1} parent=5 // pred_fallthru
      _
    %p703 = scmp.le.s32.totalorder 1, %s31
    %p704 = scmp.lt.s32.totalorder %s31, 3
    %p705 = pnand %p703, %p704
    %p706 = pneg %p705
    // Predicated region
    $region117: #{_lambda_.1} parent=5 // pred_check
      _
    $region118: #{_lambda_.1} parent=5 // pred_check_branch
      %708 = sbr.rel (%p705) target = $region120
    $region119: #{_lambda_.1} parent=5 // pred_region
      %s709 = ssub.s32 %s31, 1
      %p710 = scmp.lt.s32.totalorder %s36, 1
      %s711 = scalar_select %p710, %s36, 1
      %s712 = smul.addr %s711, 8
      %s713 = scalar_lea.vmem %s0, %s712
      %p714 = pneg %p57
      %p715 = pneg %p54
      %p716 = scmp.lt.s32.totalorder %s36, 1
      %s717 = scalar_select %p716, %s36, 1
      %s718 = smul.addr %s717, 8
      %s719 = scalar_lea.vmem %s1, %s718
      %p720 = pneg %p83
      %p721 = pneg %p80
      %p722 = scmp.lt.s32.totalorder %s36, 1
      %s723 = scalar_select %p722, %s36, 1
      %s724 = smul.addr %s723, 8
      %s725 = scalar_lea.vmem %s2, %s724
      %p726 = pneg %p109
      %p727 = pneg %p106
      %p728 = pneg %p130
      %p729 = pneg %p127
      %p730 = pneg %p151
      %p731 = pneg %p148
      %p732 = pneg %p172
      %p733 = pneg %p169
      %p734 = pneg %p193
      %p735 = pneg %p190
      %p736 = pneg %p214
      %p737 = pneg %p211
      %p738 = pneg %p235
      %p739 = pneg %p232
      %p740 = pneg %p256
      %p741 = pneg %p253
      %p742 = pneg %p277
      %p743 = pneg %p274
      %p744 = pneg %p298
      %p745 = pneg %p295
      %p746 = pneg %p319
      %p747 = pneg %p316
      %p748 = pneg %p340
      %p749 = pneg %p337
      %p750 = pneg %p361
      %p751 = pneg %p358
      %p752 = pneg %p382
      %p753 = pneg %p379
      %p754 = pneg %p403
      %p755 = pneg %p400
      %p756 = pneg %p424
      %p757 = pneg %p421
      %p758 = pneg %p445
      %p759 = pneg %p442
      %p760 = pneg %p466
      %p761 = pneg %p463
      %p762 = pneg %p487
      %p763 = pneg %p484
      %p764 = pneg %p508
      %p765 = pneg %p505
      %p766 = pneg %p529
      %p767 = pneg %p526
      %p768 = pneg %p550
      %p769 = pneg %p547
      %p770 = pneg %p571
      %p771 = pneg %p568
      %p772 = pneg %p597
      %p773 = pneg %p594
      %p774 = scmp.lt.s32.totalorder %s36, 1
      %s775 = scalar_select %p774, %s36, 1
      %s776 = smul.addr %s775, 8
      %s777 = scalar_lea.vmem %s25, %s776
      %p778 = scmp.lt.s32.totalorder %s36, 1
      %s779 = scalar_select %p778, %s36, 1
      %s780 = smul.addr %s779, 8
      %s781 = scalar_lea.vmem %s0, %s780
      %p782 = scmp.lt.s32.totalorder %s36, 1
      %s783 = scalar_select %p782, %s36, 1
      %s784 = smul.addr %s783, 8
      %s785 = scalar_lea.vmem %s1, %s784
      %p786 = scmp.lt.s32.totalorder %s36, 1
      %s787 = scalar_select %p786, %s36, 1
      %s788 = smul.addr %s787, 8
      %s789 = scalar_lea.vmem %s2, %s788
      %p790 = scmp.lt.s32.totalorder %s36, 1
      %s791 = scalar_select %p790, %s36, 1
      %s792 = smul.addr %s791, 8
      %s793 = scalar_lea.vmem %s25, %s792
      %v794 = vlaneseq
      %v795 = vshrl.u32 %v794, 7
      %v796 = vlaneseq
      %v797 = vand.u32 %v796, 127
      %vm798 = vcmp.gt.s32.totalorder %v797, %v795
      %v799 = vsel %vm798, -1e+30, 0.0
      %v800 = vld [vmem:[%s781] sm:$0xff]
      %v801 = vld [vmem:[%s785] sm:$0xff]
      %v802 = vld [vmem:[%s789] sm:$0xff]
      %v803 = vld [vmem:[%s3] sm:$0x3f]
      %v804 = vld [vmem:[%s4] sm:$0x1]
      %v806 = vlaneseq
      %v807 = vshrl.u32 %v806, 7
      %v808 = vsub.s32 0, %v807
      %v809 = vrot.slane %v804, %v808
      %vm811 = vcmask 48128
      %v813 = vsel %vm811, %v800, 0
      %vm815 = vcmask 1045504
      %v817 = vsel %vm815, %v803, 0
      %819 = vmatprep.subr.mxu0 0.0
      %820 = vmatpush1.msra.mxu0 %v817
      %821 = vmatprep.subr.mxu0 0.0
      %822 = vmatpush1.msra.mxu0 0.0
      %823 = vmatprep.subr.mxu0 0.0
      %824 = vmatpush1.msra.mxu0 0.0
      %825 = vmatprep.subr.mxu0 0.0
      %826 = vmatpush1.msra.mxu0 0.0
      %827 = vmatprep.subr.mxu0 0.0
      %828 = vmatpush1.msra.mxu0 0.0
      %829 = vmatprep.subr.mxu0 0.0
      %830 = vmatpush1.msra.mxu0 0.0
      %831 = vmatprep.subr.mxu0 0.0
      %832 = vmatpush1.msra.mxu0 0.0
      %833 = vmatprep.subr.mxu0 0.0
      %834 = vmatpush1.msra.mxu0 0.0
      %835 = vmatprep.subr.mxu0 0.0
      %836 = vmatpush1.msra.mxu0 0.0
      %837 = vmatprep.subr.mxu0 0.0
      %838 = vmatpush1.msra.mxu0 0.0
      %839 = vmatprep.subr.mxu0 0.0
      %840 = vmatpush1.msra.mxu0 0.0
      %841 = vmatprep.subr.mxu0 0.0
      %842 = vmatpush1.msra.mxu0 0.0
      %843 = vmatprep.subr.mxu0 0.0
      %844 = vmatpush1.msra.mxu0 0.0
      %845 = vmatprep.subr.mxu0 0.0
      %846 = vmatpush1.msra.mxu0 0.0
      %847 = vmatprep.subr.mxu0 0.0
      %848 = vmatpush1.msra.mxu0 0.0
      %849 = vmatprep.subr.mxu0 0.0
      %850 = vmatpush1.msra.mxu0 0.0
      %851 = vmatprep.subr.mxu0 0.0
      %852 = vmatpush1.msra.mxu0 0.0
      %853 = vmatprep.subr.mxu0 0.0
      %854 = vmatpush1.msra.mxu0 0.0
      %855 = vmatprep.subr.mxu0 0.0
      %856 = vmatpush1.msra.mxu0 0.0
      %857 = vmatprep.subr.mxu0 0.0
      %858 = vmatpush1.msra.mxu0 0.0
      %859 = vmatprep.subr.mxu0 0.0
      %860 = vmatpush1.msra.mxu0 0.0
      %861 = vmatprep.subr.mxu0 0.0
      %862 = vmatpush1.msra.mxu0 0.0
      %863 = vmatprep.subr.mxu0 0.0
      %864 = vmatpush1.msra.mxu0 0.0
      %865 = vmatprep.subr.mxu0 0.0
      %866 = vmatpush1.msra.mxu0 0.0
      %867 = vmatprep.subr.mxu0 0.0
      %868 = vmatpush1.msra.mxu0 0.0
      %869 = vmatprep.subr.mxu0 0.0
      %870 = vmatpush1.msra.mxu0 0.0
      %871 = vmatprep.subr.mxu0 0.0
      %872 = vmatpush1.msra.mxu0 0.0
      %873 = vmatprep.subr.mxu0 0.0
      %874 = vmatpush1.msra.mxu0 0.0
      %875 = vmatprep.subr.mxu0 0.0
      %876 = vmatpush1.msra.mxu0 0.0
      %877 = vmatprep.subr.mxu0 0.0
      %878 = vmatpush1.msra.mxu0 0.0
      %879 = vmatprep.subr.mxu0 0.0
      %880 = vmatpush1.msra.mxu0 0.0
      %881 = vmatprep.subr.mxu0 0.0
      %882 = vmatpush1.msra.mxu0 0.0
      %883 = vmatprep.mubr.f32.mxu0 0.0
      %884 = vmatmul.mubr.f32.gmra.mrb[0].mxu0 %v813
      %v885 = vpop.f32.mrb[0].mxu0
      %v886 = vadd.f32 %v809, %v885
      %v887 = vpop.f32.mrb[0].mxu0
      %888 = vdwg.mxu0
      %v889 = vld [vmem:[%s5] sm:$0x3]
      %v890 = vld [vmem:[%s6] sm:$0x1]
      %v892 = vlaneseq
      %v893 = vshrl.u32 %v892, 7
      %v894 = vsub.s32 0, %v893
      %v895 = vrot.slane %v890, %v894
      %vm897 = vcmask 15360
      %v899 = vsel %vm897, %v801, 0
      %vm901 = vcmask 1041408
      %v903 = vsel %vm901, %v889, 0
      %905 = vmatprep.subr.mxu0 0.0
      %906 = vmatpush1.msra.mxu0 %v903
      %907 = vmatprep.subr.mxu0 0.0
      %908 = vmatpush1.msra.mxu0 0.0
      %909 = vmatprep.subr.mxu0 0.0
      %910 = vmatpush1.msra.mxu0 0.0
      %911 = vmatprep.subr.mxu0 0.0
      %912 = vmatpush1.msra.mxu0 0.0
      %913 = vmatprep.subr.mxu0 0.0
      %914 = vmatpush1.msra.mxu0 0.0
      %915 = vmatprep.subr.mxu0 0.0
      %916 = vmatpush1.msra.mxu0 0.0
      %917 = vmatprep.subr.mxu0 0.0
      %918 = vmatpush1.msra.mxu0 0.0
      %919 = vmatprep.subr.mxu0 0.0
      %920 = vmatpush1.msra.mxu0 0.0
      %921 = vmatprep.subr.mxu0 0.0
      %922 = vmatpush1.msra.mxu0 0.0
      %923 = vmatprep.subr.mxu0 0.0
      %924 = vmatpush1.msra.mxu0 0.0
      %925 = vmatprep.subr.mxu0 0.0
      %926 = vmatpush1.msra.mxu0 0.0
      %927 = vmatprep.subr.mxu0 0.0
      %928 = vmatpush1.msra.mxu0 0.0
      %929 = vmatprep.subr.mxu0 0.0
      %930 = vmatpush1.msra.mxu0 0.0
      %931 = vmatprep.subr.mxu0 0.0
      %932 = vmatpush1.msra.mxu0 0.0
      %933 = vmatprep.subr.mxu0 0.0
      %934 = vmatpush1.msra.mxu0 0.0
      %935 = vmatprep.subr.mxu0 0.0
      %936 = vmatpush1.msra.mxu0 0.0
      %937 = vmatprep.subr.mxu0 0.0
      %938 = vmatpush1.msra.mxu0 0.0
      %939 = vmatprep.subr.mxu0 0.0
      %940 = vmatpush1.msra.mxu0 0.0
      %941 = vmatprep.subr.mxu0 0.0
      %942 = vmatpush1.msra.mxu0 0.0
      %943 = vmatprep.subr.mxu0 0.0
      %944 = vmatpush1.msra.mxu0 0.0
      %945 = vmatprep.subr.mxu0 0.0
      %946 = vmatpush1.msra.mxu0 0.0
      %947 = vmatprep.subr.mxu0 0.0
      %948 = vmatpush1.msra.mxu0 0.0
      %949 = vmatprep.subr.mxu0 0.0
      %950 = vmatpush1.msra.mxu0 0.0
      %951 = vmatprep.subr.mxu0 0.0
      %952 = vmatpush1.msra.mxu0 0.0
      %953 = vmatprep.subr.mxu0 0.0
      %954 = vmatpush1.msra.mxu0 0.0
      %955 = vmatprep.subr.mxu0 0.0
      %956 = vmatpush1.msra.mxu0 0.0
      %957 = vmatprep.subr.mxu0 0.0
      %958 = vmatpush1.msra.mxu0 0.0
      %959 = vmatprep.subr.mxu0 0.0
      %960 = vmatpush1.msra.mxu0 0.0
      %961 = vmatprep.subr.mxu0 0.0
      %962 = vmatpush1.msra.mxu0 0.0
      %963 = vmatprep.subr.mxu0 0.0
      %964 = vmatpush1.msra.mxu0 0.0
      %965 = vmatprep.subr.mxu0 0.0
      %966 = vmatpush1.msra.mxu0 0.0
      %967 = vmatprep.subr.mxu0 0.0
      %968 = vmatpush1.msra.mxu0 0.0
      %969 = vmatprep.mubr.f32.mxu0 0.0
      %970 = vmatmul.mubr.f32.gmra.mrb[0].mxu0 %v899
      %v971 = vpop.f32.mrb[0].mxu0
      %v972 = vadd.f32 %v895, %v971
      %v973 = vpop.f32.mrb[0].mxu0
      %974 = vdwg.mxu0
      %v975 = vmax.f32 %v972, 0.0
      %v976 = vadd.f32 %v802, %v975
      %v977 = vld [vmem:[%s7] sm:$0x1]
      %v978 = vld [vmem:[%s8] sm:$0x1]
      %vm979 = vcmask 261120
      %v980 = vsel %vm979, %v976, 0.0
      %981 = vadd.xlane.f32.xlu0 %v980
      %v982 = vpop.xlane.xlu0 %981
      %v983 = vrcp.pop 32.0
      %v984 = vmul.f32 %v982, %v983
      %v985 = vsub.f32 %v976, %v984
      %v986 = vmul.f32 %v985, %v985
      %v987 = vsel %vm979, %v986, 0.0
      %988 = vadd.xlane.f32.xlu0 %v987
      %v989 = vpop.xlane.xlu0 %988
      %v990 = vmul.f32 %v989, %v983
      %v991 = vadd.f32 %v990, 1e-05
      %v992 = vrsqrt.pop %v991
      %v993 = vmul.f32 %v985, %v992
      %v995 = vlaneseq
      %v996 = vshrl.u32 %v995, 7
      %v997 = vsub.s32 0, %v996
      %v998 = vrot.slane %v977, %v997
      %v1000 = vmul.f32 %v993, %v998
      %v1002 = vlaneseq
      %v1003 = vshrl.u32 %v1002, 7
      %v1004 = vsub.s32 0, %v1003
      %v1005 = vrot.slane %v978, %v1004
      %v1007 = vadd.f32 %v1000, %v1005
      %v1008 = vld [vmem:[%s9] sm:$0xff]
      %v1009 = vld [vmem:[%s9 + $0x8] sm:$0xff]
      %v1010 = vld [vmem:[%s9 + $0x10] sm:$0xff]
      %v1011 = vld [vmem:[%s9 + $0x18] sm:$0xff]
      %v1012 = vld [vmem:[%s10] sm:$0x1]
      %v1014 = vlaneseq
      %v1015 = vshrl.u32 %v1014, 7
      %v1016 = vsub.s32 0, %v1015
      %v1017 = vrot.slane %v1012, %v1016
      %v1020 = vsel %vm979, %v1007, 0
      %1022 = vmatprep.subr.mxu0 0.0
      %1023 = vmatpush1.msra.mxu0 %v1008
      %1024 = vmatprep.subr.mxu0 0.0
      %1025 = vmatpush1.msra.mxu0 %v1009
      %1026 = vmatprep.subr.mxu0 0.0
      %1027 = vmatpush1.msra.mxu0 %v1010
      %1028 = vmatprep.subr.mxu0 0.0
      %1029 = vmatpush1.msra.mxu0 %v1011
      %1030 = vmatprep.subr.mxu0 0.0
      %1031 = vmatpush1.msra.mxu0 0.0
      %1032 = vmatprep.subr.mxu0 0.0
      %1033 = vmatpush1.msra.mxu0 0.0
      %1034 = vmatprep.subr.mxu0 0.0
      %1035 = vmatpush1.msra.mxu0 0.0
      %1036 = vmatprep.subr.mxu0 0.0
      %1037 = vmatpush1.msra.mxu0 0.0
      %1038 = vmatprep.subr.mxu0 0.0
      %1039 = vmatpush1.msra.mxu0 0.0
      %1040 = vmatprep.subr.mxu0 0.0
      %1041 = vmatpush1.msra.mxu0 0.0
      %1042 = vmatprep.subr.mxu0 0.0
      %1043 = vmatpush1.msra.mxu0 0.0
      %1044 = vmatprep.subr.mxu0 0.0
      %1045 = vmatpush1.msra.mxu0 0.0
      %1046 = vmatprep.subr.mxu0 0.0
      %1047 = vmatpush1.msra.mxu0 0.0
      %1048 = vmatprep.subr.mxu0 0.0
      %1049 = vmatpush1.msra.mxu0 0.0
      %1050 = vmatprep.subr.mxu0 0.0
      %1051 = vmatpush1.msra.mxu0 0.0
      %1052 = vmatprep.subr.mxu0 0.0
      %1053 = vmatpush1.msra.mxu0 0.0
      %1054 = vmatprep.subr.mxu0 0.0
      %1055 = vmatpush1.msra.mxu0 0.0
      %1056 = vmatprep.subr.mxu0 0.0
      %1057 = vmatpush1.msra.mxu0 0.0
      %1058 = vmatprep.subr.mxu0 0.0
      %1059 = vmatpush1.msra.mxu0 0.0
      %1060 = vmatprep.subr.mxu0 0.0
      %1061 = vmatpush1.msra.mxu0 0.0
      %1062 = vmatprep.subr.mxu0 0.0
      %1063 = vmatpush1.msra.mxu0 0.0
      %1064 = vmatprep.subr.mxu0 0.0
      %1065 = vmatpush1.msra.mxu0 0.0
      %1066 = vmatprep.subr.mxu0 0.0
      %1067 = vmatpush1.msra.mxu0 0.0
      %1068 = vmatprep.subr.mxu0 0.0
      %1069 = vmatpush1.msra.mxu0 0.0
      %1070 = vmatprep.subr.mxu0 0.0
      %1071 = vmatpush1.msra.mxu0 0.0
      %1072 = vmatprep.subr.mxu0 0.0
      %1073 = vmatpush1.msra.mxu0 0.0
      %1074 = vmatprep.subr.mxu0 0.0
      %1075 = vmatpush1.msra.mxu0 0.0
      %1076 = vmatprep.subr.mxu0 0.0
      %1077 = vmatpush1.msra.mxu0 0.0
      %1078 = vmatprep.subr.mxu0 0.0
      %1079 = vmatpush1.msra.mxu0 0.0
      %1080 = vmatprep.subr.mxu0 0.0
      %1081 = vmatpush1.msra.mxu0 0.0
      %1082 = vmatprep.subr.mxu0 0.0
      %1083 = vmatpush1.msra.mxu0 0.0
      %1084 = vmatprep.subr.mxu0 0.0
      %1085 = vmatpush1.msra.mxu0 0.0
      %1086 = vmatprep.mubr.f32.mxu0 0.0
      %1087 = vmatmul.mubr.f32.gmra.mrb[0].mxu0 %v1020
      %v1088 = vpop.f32.mrb[0].mxu0
      %v1089 = vadd.f32 %v1017, %v1088
      %v1090 = vpop.f32.mrb[0].mxu0
      %1091 = vdwg.mxu0
      %1093 = vrot.lane.b32.xlu0 %v1089, 96
      %v1094 = vpop.permute.xlu0 %1093
      %vm1095 = vcmask 64512
      %v1096 = vsel %vm1095, %v1089, 0
      %v1098 = vsel %vm1095, %v1094, 0
      %1100 = vmatprep.subr.mxu0 0.0
      %1101 = vmatpush1.xpose.msra.mxu0 %v1098
      %1102 = vmatprep.subr.mxu0 0.0
      %1103 = vmatpush1.xpose.msra.mxu0 0.0
      %1104 = vmatprep.subr.mxu0 0.0
      %1105 = vmatpush1.xpose.msra.mxu0 0.0
      %1106 = vmatprep.subr.mxu0 0.0
      %1107 = vmatpush1.xpose.msra.mxu0 0.0
      %1108 = vmatprep.subr.mxu0 0.0
      %1109 = vmatpush1.xpose.msra.mxu0 0.0
      %1110 = vmatprep.subr.mxu0 0.0
      %1111 = vmatpush1.xpose.msra.mxu0 0.0
      %1112 = vmatprep.subr.mxu0 0.0
      %1113 = vmatpush1.xpose.msra.mxu0 0.0
      %1114 = vmatprep.subr.mxu0 0.0
      %1115 = vmatpush1.xpose.msra.mxu0 0.0
      %1116 = vmatprep.subr.mxu0 0.0
      %1117 = vmatpush1.xpose.msra.mxu0 0.0
      %1118 = vmatprep.subr.mxu0 0.0
      %1119 = vmatpush1.xpose.msra.mxu0 0.0
      %1120 = vmatprep.subr.mxu0 0.0
      %1121 = vmatpush1.xpose.msra.mxu0 0.0
      %1122 = vmatprep.subr.mxu0 0.0
      %1123 = vmatpush1.xpose.msra.mxu0 0.0
      %1124 = vmatprep.subr.mxu0 0.0
      %1125 = vmatpush1.xpose.msra.mxu0 0.0
      %1126 = vmatprep.subr.mxu0 0.0
      %1127 = vmatpush1.xpose.msra.mxu0 0.0
      %1128 = vmatprep.subr.mxu0 0.0
      %1129 = vmatpush1.xpose.msra.mxu0 0.0
      %1130 = vmatprep.subr.mxu0 0.0
      %1131 = vmatpush1.xpose.msra.mxu0 0.0
      %1132 = vmatprep.subr.mxu0 0.0
      %1133 = vmatpush1.xpose.msra.mxu0 0.0
      %1134 = vmatprep.subr.mxu0 0.0
      %1135 = vmatpush1.xpose.msra.mxu0 0.0
      %1136 = vmatprep.subr.mxu0 0.0
      %1137 = vmatpush1.xpose.msra.mxu0 0.0
      %1138 = vmatprep.subr.mxu0 0.0
      %1139 = vmatpush1.xpose.msra.mxu0 0.0
      %1140 = vmatprep.subr.mxu0 0.0
      %1141 = vmatpush1.xpose.msra.mxu0 0.0
      %1142 = vmatprep.subr.mxu0 0.0
      %1143 = vmatpush1.xpose.msra.mxu0 0.0
      %1144 = vmatprep.subr.mxu0 0.0
      %1145 = vmatpush1.xpose.msra.mxu0 0.0
      %1146 = vmatprep.subr.mxu0 0.0
      %1147 = vmatpush1.xpose.msra.mxu0 0.0
      %1148 = vmatprep.subr.mxu0 0.0
      %1149 = vmatpush1.xpose.msra.mxu0 0.0
      %1150 = vmatprep.subr.mxu0 0.0
      %1151 = vmatpush1.xpose.msra.mxu0 0.0
      %1152 = vmatprep.subr.mxu0 0.0
      %1153 = vmatpush1.xpose.msra.mxu0 0.0
      %1154 = vmatprep.subr.mxu0 0.0
      %1155 = vmatpush1.xpose.msra.mxu0 0.0
      %1156 = vmatprep.subr.mxu0 0.0
      %1157 = vmatpush1.xpose.msra.mxu0 0.0
      %1158 = vmatprep.subr.mxu0 0.0
      %1159 = vmatpush1.xpose.msra.mxu0 0.0
      %1160 = vmatprep.subr.mxu0 0.0
      %1161 = vmatpush1.xpose.msra.mxu0 0.0
      %1162 = vmatprep.subr.mxu0 0.0
      %1163 = vmatpush1.xpose.msra.mxu0 0.0
      %1164 = vmatprep.mubr.f32.mxu0 0.0
      %1165 = vmatmul.mubr.f32.gmra.mrb[0].mxu0 %v1096
      %v1166 = vpop.f32.mrb[0].mxu0
      %v1167 = vadd.f32 0.0, %v1166
      %v1168 = vpop.f32.mrb[0].mxu0
      %1169 = vdwg.mxu0
      %v1170 = vmul.f32 %v1167, 0.35355338
      %v1171 = vadd.f32 %v1170, %v799
      %v1172 = vsel %vm1095, %v1171, -inf
      %1173 = vmax.xlane.f32.xlu0 %v1172
      %v1174 = vpop.xlane.xlu0 %1173
      %v1175 = vsub.f32 %v1171, %v1174
      %v1176 = vmul.f32 %v1175, 1.442695
      %v1177 = vpow.pop %v1176
      %v1178 = vsel %vm1095, %v1177, 0.0
      %1179 = vadd.xlane.f32.xlu0 %v1178
      %v1180 = vpop.xlane.xlu0 %1179
      %v1181 = vrcp.pop %v1180
      %v1182 = vmul.f32 %v1177, %v1181
      %1183 = vrot.lane.b32.xlu0 %v1089, 64
      %v1184 = vpop.permute.xlu0 %1183
      %v1187 = vsel %vm1095, %v1182, 0
      %1189 = vmatprep.subr.mxu0 0.0
      %1190 = vmatpush1.msra.mxu0 %v1184
      %1191 = vmatprep.subr.mxu0 0.0
      %1192 = vmatpush1.msra.mxu0 0.0
      %1193 = vmatprep.subr.mxu0 0.0
      %1194 = vmatpush1.msra.mxu0 0.0
      %1195 = vmatprep.subr.mxu0 0.0
      %1196 = vmatpush1.msra.mxu0 0.0
      %1197 = vmatprep.subr.mxu0 0.0
      %1198 = vmatpush1.msra.mxu0 0.0
      %1199 = vmatprep.subr.mxu0 0.0
      %1200 = vmatpush1.msra.mxu0 0.0
      %1201 = vmatprep.subr.mxu0 0.0
      %1202 = vmatpush1.msra.mxu0 0.0
      %1203 = vmatprep.subr.mxu0 0.0
      %1204 = vmatpush1.msra.mxu0 0.0
      %1205 = vmatprep.subr.mxu0 0.0
      %1206 = vmatpush1.msra.mxu0 0.0
      %1207 = vmatprep.subr.mxu0 0.0
      %1208 = vmatpush1.msra.mxu0 0.0
      %1209 = vmatprep.subr.mxu0 0.0
      %1210 = vmatpush1.msra.mxu0 0.0
      %1211 = vmatprep.subr.mxu0 0.0
      %1212 = vmatpush1.msra.mxu0 0.0
      %1213 = vmatprep.subr.mxu0 0.0
      %1214 = vmatpush1.msra.mxu0 0.0
      %1215 = vmatprep.subr.mxu0 0.0
      %1216 = vmatpush1.msra.mxu0 0.0
      %1217 = vmatprep.subr.mxu0 0.0
      %1218 = vmatpush1.msra.mxu0 0.0
      %1219 = vmatprep.subr.mxu0 0.0
      %1220 = vmatpush1.msra.mxu0 0.0
      %1221 = vmatprep.subr.mxu0 0.0
      %1222 = vmatpush1.msra.mxu0 0.0
      %1223 = vmatprep.subr.mxu0 0.0
      %1224 = vmatpush1.msra.mxu0 0.0
      %1225 = vmatprep.subr.mxu0 0.0
      %1226 = vmatpush1.msra.mxu0 0.0
      %1227 = vmatprep.subr.mxu0 0.0
      %1228 = vmatpush1.msra.mxu0 0.0
      %1229 = vmatprep.subr.mxu0 0.0
      %1230 = vmatpush1.msra.mxu0 0.0
      %1231 = vmatprep.subr.mxu0 0.0
      %1232 = vmatpush1.msra.mxu0 0.0
      %1233 = vmatprep.subr.mxu0 0.0
      %1234 = vmatpush1.msra.mxu0 0.0
      %1235 = vmatprep.subr.mxu0 0.0
      %1236 = vmatpush1.msra.mxu0 0.0
      %1237 = vmatprep.subr.mxu0 0.0
      %1238 = vmatpush1.msra.mxu0 0.0
      %1239 = vmatprep.subr.mxu0 0.0
      %1240 = vmatpush1.msra.mxu0 0.0
      %1241 = vmatprep.subr.mxu0 0.0
      %1242 = vmatpush1.msra.mxu0 0.0
      %1243 = vmatprep.subr.mxu0 0.0
      %1244 = vmatpush1.msra.mxu0 0.0
      %1245 = vmatprep.subr.mxu0 0.0
      %1246 = vmatpush1.msra.mxu0 0.0
      %1247 = vmatprep.subr.mxu0 0.0
      %1248 = vmatpush1.msra.mxu0 0.0
      %1249 = vmatprep.subr.mxu0 0.0
      %1250 = vmatpush1.msra.mxu0 0.0
      %1251 = vmatprep.subr.mxu0 0.0
      %1252 = vmatpush1.msra.mxu0 0.0
      %1253 = vmatprep.mubr.f32.mxu0 0.0
      %1254 = vmatmul.mubr.f32.gmra.mrb[0].mxu0 %v1187
      %v1255 = vpop.f32.mrb[0].mxu0
      %v1256 = vadd.f32 0.0, %v1255
      %v1257 = vpop.f32.mrb[0].mxu0
      %1258 = vdwg.mxu0
      %1259 = vrot.lane.b32.xlu0 %v1089, 120
      %v1260 = vpop.permute.xlu0 %1259
      %1261 = vrot.lane.b32.xlu0 %v1089, 88
      %v1262 = vpop.permute.xlu0 %1261
      %v1263 = vsel %vm1095, %v1260, 0
      %v1265 = vsel %vm1095, %v1262, 0
      %1267 = vmatprep.subr.mxu0 0.0
      %1268 = vmatpush1.xpose.msra.mxu0 %v1265
      %1269 = vmatprep.subr.mxu0 0.0
      %1270 = vmatpush1.xpose.msra.mxu0 0.0
      %1271 = vmatprep.subr.mxu0 0.0
      %1272 = vmatpush1.xpose.msra.mxu0 0.0
      %1273 = vmatprep.subr.mxu0 0.0
      %1274 = vmatpush1.xpose.msra.mxu0 0.0
      %1275 = vmatprep.subr.mxu0 0.0
      %1276 = vmatpush1.xpose.msra.mxu0 0.0
      %1277 = vmatprep.subr.mxu0 0.0
      %1278 = vmatpush1.xpose.msra.mxu0 0.0
      %1279 = vmatprep.subr.mxu0 0.0
      %1280 = vmatpush1.xpose.msra.mxu0 0.0
      %1281 = vmatprep.subr.mxu0 0.0
      %1282 = vmatpush1.xpose.msra.mxu0 0.0
      %1283 = vmatprep.subr.mxu0 0.0
      %1284 = vmatpush1.xpose.msra.mxu0 0.0
      %1285 = vmatprep.subr.mxu0 0.0
      %1286 = vmatpush1.xpose.msra.mxu0 0.0
      %1287 = vmatprep.subr.mxu0 0.0
      %1288 = vmatpush1.xpose.msra.mxu0 0.0
      %1289 = vmatprep.subr.mxu0 0.0
      %1290 = vmatpush1.xpose.msra.mxu0 0.0
      %1291 = vmatprep.subr.mxu0 0.0
      %1292 = vmatpush1.xpose.msra.mxu0 0.0
      %1293 = vmatprep.subr.mxu0 0.0
      %1294 = vmatpush1.xpose.msra.mxu0 0.0
      %1295 = vmatprep.subr.mxu0 0.0
      %1296 = vmatpush1.xpose.msra.mxu0 0.0
      %1297 = vmatprep.subr.mxu0 0.0
      %1298 = vmatpush1.xpose.msra.mxu0 0.0
      %1299 = vmatprep.subr.mxu0 0.0
      %1300 = vmatpush1.xpose.msra.mxu0 0.0
      %1301 = vmatprep.subr.mxu0 0.0
      %1302 = vmatpush1.xpose.msra.mxu0 0.0
      %1303 = vmatprep.subr.mxu0 0.0
      %1304 = vmatpush1.xpose.msra.mxu0 0.0
      %1305 = vmatprep.subr.mxu0 0.0
      %1306 = vmatpush1.xpose.msra.mxu0 0.0
      %1307 = vmatprep.subr.mxu0 0.0
      %1308 = vmatpush1.xpose.msra.mxu0 0.0
      %1309 = vmatprep.subr.mxu0 0.0
      %1310 = vmatpush1.xpose.msra.mxu0 0.0
      %1311 = vmatprep.subr.mxu0 0.0
      %1312 = vmatpush1.xpose.msra.mxu0 0.0
      %1313 = vmatprep.subr.mxu0 0.0
      %1314 = vmatpush1.xpose.msra.mxu0 0.0
      %1315 = vmatprep.subr.mxu0 0.0
      %1316 = vmatpush1.xpose.msra.mxu0 0.0
      %1317 = vmatprep.subr.mxu0 0.0
      %1318 = vmatpush1.xpose.msra.mxu0 0.0
      %1319 = vmatprep.subr.mxu0 0.0
      %1320 = vmatpush1.xpose.msra.mxu0 0.0
      %1321 = vmatprep.subr.mxu0 0.0
      %1322 = vmatpush1.xpose.msra.mxu0 0.0
      %1323 = vmatprep.subr.mxu0 0.0
      %1324 = vmatpush1.xpose.msra.mxu0 0.0
      %1325 = vmatprep.subr.mxu0 0.0
      %1326 = vmatpush1.xpose.msra.mxu0 0.0
      %1327 = vmatprep.subr.mxu0 0.0
      %1328 = vmatpush1.xpose.msra.mxu0 0.0
      %1329 = vmatprep.subr.mxu0 0.0
      %1330 = vmatpush1.xpose.msra.mxu0 0.0
      %1331 = vmatprep.mubr.f32.mxu0 0.0
      %1332 = vmatmul.mubr.f32.gmra.mrb[0].mxu0 %v1263
      %v1333 = vpop.f32.mrb[0].mxu0
      %v1334 = vadd.f32 0.0, %v1333
      %v1335 = vpop.f32.mrb[0].mxu0
      %1336 = vdwg.mxu0
      %v1337 = vmul.f32 %v1334, 0.35355338
      %v1338 = vadd.f32 %v1337, %v799
      %v1339 = vsel %vm1095, %v1338, -inf
      %1340 = vmax.xlane.f32.xlu0 %v1339
      %v1341 = vpop.xlane.xlu0 %1340
      %v1342 = vsub.f32 %v1338, %v1341
      %v1343 = vmul.f32 %v1342, 1.442695
      %v1344 = vpow.pop %v1343
      %v1345 = vsel %vm1095, %v1344, 0.0
      %1346 = vadd.xlane.f32.xlu0 %v1345
      %v1347 = vpop.xlane.xlu0 %1346
      %v1348 = vrcp.pop %v1347
      %v1349 = vmul.f32 %v1344, %v1348
      %1350 = vrot.lane.b32.xlu0 %v1089, 56
      %v1351 = vpop.permute.xlu0 %1350
      %v1354 = vsel %vm1095, %v1349, 0
      %1356 = vmatprep.subr.mxu0 0.0
      %1357 = vmatpush1.msra.mxu0 %v1351
      %1358 = vmatprep.subr.mxu0 0.0
      %1359 = vmatpush1.msra.mxu0 0.0
      %1360 = vmatprep.subr.mxu0 0.0
      %1361 = vmatpush1.msra.mxu0 0.0
      %1362 = vmatprep.subr.mxu0 0.0
      %1363 = vmatpush1.msra.mxu0 0.0
      %1364 = vmatprep.subr.mxu0 0.0
      %1365 = vmatpush1.msra.mxu0 0.0
      %1366 = vmatprep.subr.mxu0 0.0
      %1367 = vmatpush1.msra.mxu0 0.0
      %1368 = vmatprep.subr.mxu0 0.0
      %1369 = vmatpush1.msra.mxu0 0.0
      %1370 = vmatprep.subr.mxu0 0.0
      %1371 = vmatpush1.msra.mxu0 0.0
      %1372 = vmatprep.subr.mxu0 0.0
      %1373 = vmatpush1.msra.mxu0 0.0
      %1374 = vmatprep.subr.mxu0 0.0
      %1375 = vmatpush1.msra.mxu0 0.0
      %1376 = vmatprep.subr.mxu0 0.0
      %1377 = vmatpush1.msra.mxu0 0.0
      %1378 = vmatprep.subr.mxu0 0.0
      %1379 = vmatpush1.msra.mxu0 0.0
      %1380 = vmatprep.subr.mxu0 0.0
      %1381 = vmatpush1.msra.mxu0 0.0
      %1382 = vmatprep.subr.mxu0 0.0
      %1383 = vmatpush1.msra.mxu0 0.0
      %1384 = vmatprep.subr.mxu0 0.0
      %1385 = vmatpush1.msra.mxu0 0.0
      %1386 = vmatprep.subr.mxu0 0.0
      %1387 = vmatpush1.msra.mxu0 0.0
      %1388 = vmatprep.subr.mxu0 0.0
      %1389 = vmatpush1.msra.mxu0 0.0
      %1390 = vmatprep.subr.mxu0 0.0
      %1391 = vmatpush1.msra.mxu0 0.0
      %1392 = vmatprep.subr.mxu0 0.0
      %1393 = vmatpush1.msra.mxu0 0.0
      %1394 = vmatprep.subr.mxu0 0.0
      %1395 = vmatpush1.msra.mxu0 0.0
      %1396 = vmatprep.subr.mxu0 0.0
      %1397 = vmatpush1.msra.mxu0 0.0
      %1398 = vmatprep.subr.mxu0 0.0
      %1399 = vmatpush1.msra.mxu0 0.0
      %1400 = vmatprep.subr.mxu0 0.0
      %1401 = vmatpush1.msra.mxu0 0.0
      %1402 = vmatprep.subr.mxu0 0.0
      %1403 = vmatpush1.msra.mxu0 0.0
      %1404 = vmatprep.subr.mxu0 0.0
      %1405 = vmatpush1.msra.mxu0 0.0
      %1406 = vmatprep.subr.mxu0 0.0
      %1407 = vmatpush1.msra.mxu0 0.0
      %1408 = vmatprep.subr.mxu0 0.0
      %1409 = vmatpush1.msra.mxu0 0.0
      %1410 = vmatprep.subr.mxu0 0.0
      %1411 = vmatpush1.msra.mxu0 0.0
      %1412 = vmatprep.subr.mxu0 0.0
      %1413 = vmatpush1.msra.mxu0 0.0
      %1414 = vmatprep.subr.mxu0 0.0
      %1415 = vmatpush1.msra.mxu0 0.0
      %1416 = vmatprep.subr.mxu0 0.0
      %1417 = vmatpush1.msra.mxu0 0.0
      %1418 = vmatprep.subr.mxu0 0.0
      %1419 = vmatpush1.msra.mxu0 0.0
      %1420 = vmatprep.mubr.f32.mxu0 0.0
      %1421 = vmatmul.mubr.f32.gmra.mrb[0].mxu0 %v1354
      %v1422 = vpop.f32.mrb[0].mxu0
      %v1423 = vadd.f32 0.0, %v1422
      %v1424 = vpop.f32.mrb[0].mxu0
      %1425 = vdwg.mxu0
      %1426 = vrot.lane.b32.xlu0 %v1089, 112
      %v1427 = vpop.permute.xlu0 %1426
      %1428 = vrot.lane.b32.xlu0 %v1089, 80
      %v1429 = vpop.permute.xlu0 %1428
      %v1430 = vsel %vm1095, %v1427, 0
      %v1432 = vsel %vm1095, %v1429, 0
      %1434 = vmatprep.subr.mxu0 0.0
      %1435 = vmatpush1.xpose.msra.mxu0 %v1432
      %1436 = vmatprep.subr.mxu0 0.0
      %1437 = vmatpush1.xpose.msra.mxu0 0.0
      %1438 = vmatprep.subr.mxu0 0.0
      %1439 = vmatpush1.xpose.msra.mxu0 0.0
      %1440 = vmatprep.subr.mxu0 0.0
      %1441 = vmatpush1.xpose.msra.mxu0 0.0
      %1442 = vmatprep.subr.mxu0 0.0
      %1443 = vmatpush1.xpose.msra.mxu0 0.0
      %1444 = vmatprep.subr.mxu0 0.0
      %1445 = vmatpush1.xpose.msra.mxu0 0.0
      %1446 = vmatprep.subr.mxu0 0.0
      %1447 = vmatpush1.xpose.msra.mxu0 0.0
      %1448 = vmatprep.subr.mxu0 0.0
      %1449 = vmatpush1.xpose.msra.mxu0 0.0
      %1450 = vmatprep.subr.mxu0 0.0
      %1451 = vmatpush1.xpose.msra.mxu0 0.0
      %1452 = vmatprep.subr.mxu0 0.0
      %1453 = vmatpush1.xpose.msra.mxu0 0.0
      %1454 = vmatprep.subr.mxu0 0.0
      %1455 = vmatpush1.xpose.msra.mxu0 0.0
      %1456 = vmatprep.subr.mxu0 0.0
      %1457 = vmatpush1.xpose.msra.mxu0 0.0
      %1458 = vmatprep.subr.mxu0 0.0
      %1459 = vmatpush1.xpose.msra.mxu0 0.0
      %1460 = vmatprep.subr.mxu0 0.0
      %1461 = vmatpush1.xpose.msra.mxu0 0.0
      %1462 = vmatprep.subr.mxu0 0.0
      %1463 = vmatpush1.xpose.msra.mxu0 0.0
      %1464 = vmatprep.subr.mxu0 0.0
      %1465 = vmatpush1.xpose.msra.mxu0 0.0
      %1466 = vmatprep.subr.mxu0 0.0
      %1467 = vmatpush1.xpose.msra.mxu0 0.0
      %1468 = vmatprep.subr.mxu0 0.0
      %1469 = vmatpush1.xpose.msra.mxu0 0.0
      %1470 = vmatprep.subr.mxu0 0.0
      %1471 = vmatpush1.xpose.msra.mxu0 0.0
      %1472 = vmatprep.subr.mxu0 0.0
      %1473 = vmatpush1.xpose.msra.mxu0 0.0
      %1474 = vmatprep.subr.mxu0 0.0
      %1475 = vmatpush1.xpose.msra.mxu0 0.0
      %1476 = vmatprep.subr.mxu0 0.0
      %1477 = vmatpush1.xpose.msra.mxu0 0.0
      %1478 = vmatprep.subr.mxu0 0.0
      %1479 = vmatpush1.xpose.msra.mxu0 0.0
      %1480 = vmatprep.subr.mxu0 0.0
      %1481 = vmatpush1.xpose.msra.mxu0 0.0
      %1482 = vmatprep.subr.mxu0 0.0
      %1483 = vmatpush1.xpose.msra.mxu0 0.0
      %1484 = vmatprep.subr.mxu0 0.0
      %1485 = vmatpush1.xpose.msra.mxu0 0.0
      %1486 = vmatprep.subr.mxu0 0.0
      %1487 = vmatpush1.xpose.msra.mxu0 0.0
      %1488 = vmatprep.subr.mxu0 0.0
      %1489 = vmatpush1.xpose.msra.mxu0 0.0
      %1490 = vmatprep.subr.mxu0 0.0
      %1491 = vmatpush1.xpose.msra.mxu0 0.0
      %1492 = vmatprep.subr.mxu0 0.0
      %1493 = vmatpush1.xpose.msra.mxu0 0.0
      %1494 = vmatprep.subr.mxu0 0.0
      %1495 = vmatpush1.xpose.msra.mxu0 0.0
      %1496 = vmatprep.subr.mxu0 0.0
      %1497 = vmatpush1.xpose.msra.mxu0 0.0
      %1498 = vmatprep.mubr.f32.mxu0 0.0
      %1499 = vmatmul.mubr.f32.gmra.mrb[0].mxu0 %v1430
      %v1500 = vpop.f32.mrb[0].mxu0
      %v1501 = vadd.f32 0.0, %v1500
      %v1502 = vpop.f32.mrb[0].mxu0
      %1503 = vdwg.mxu0
      %v1504 = vmul.f32 %v1501, 0.35355338
      %v1505 = vadd.f32 %v1504, %v799
      %v1506 = vsel %vm1095, %v1505, -inf
      %1507 = vmax.xlane.f32.xlu0 %v1506
      %v1508 = vpop.xlane.xlu0 %1507
      %v1509 = vsub.f32 %v1505, %v1508
      %v1510 = vmul.f32 %v1509, 1.442695
      %v1511 = vpow.pop %v1510
      %v1512 = vsel %vm1095, %v1511, 0.0
      %1513 = vadd.xlane.f32.xlu0 %v1512
      %v1514 = vpop.xlane.xlu0 %1513
      %v1515 = vrcp.pop %v1514
      %v1516 = vmul.f32 %v1511, %v1515
      %1517 = vrot.lane.b32.xlu0 %v1089, 48
      %v1518 = vpop.permute.xlu0 %1517
      %v1521 = vsel %vm1095, %v1516, 0
      %1523 = vmatprep.subr.mxu0 0.0
      %1524 = vmatpush1.msra.mxu0 %v1518
      %1525 = vmatprep.subr.mxu0 0.0
      %1526 = vmatpush1.msra.mxu0 0.0
      %1527 = vmatprep.subr.mxu0 0.0
      %1528 = vmatpush1.msra.mxu0 0.0
      %1529 = vmatprep.subr.mxu0 0.0
      %1530 = vmatpush1.msra.mxu0 0.0
      %1531 = vmatprep.subr.mxu0 0.0
      %1532 = vmatpush1.msra.mxu0 0.0
      %1533 = vmatprep.subr.mxu0 0.0
      %1534 = vmatpush1.msra.mxu0 0.0
      %1535 = vmatprep.subr.mxu0 0.0
      %1536 = vmatpush1.msra.mxu0 0.0
      %1537 = vmatprep.subr.mxu0 0.0
      %1538 = vmatpush1.msra.mxu0 0.0
      %1539 = vmatprep.subr.mxu0 0.0
      %1540 = vmatpush1.msra.mxu0 0.0
      %1541 = vmatprep.subr.mxu0 0.0
      %1542 = vmatpush1.msra.mxu0 0.0
      %1543 = vmatprep.subr.mxu0 0.0
      %1544 = vmatpush1.msra.mxu0 0.0
      %1545 = vmatprep.subr.mxu0 0.0
      %1546 = vmatpush1.msra.mxu0 0.0
      %1547 = vmatprep.subr.mxu0 0.0
      %1548 = vmatpush1.msra.mxu0 0.0
      %1549 = vmatprep.subr.mxu0 0.0
      %1550 = vmatpush1.msra.mxu0 0.0
      %1551 = vmatprep.subr.mxu0 0.0
      %1552 = vmatpush1.msra.mxu0 0.0
      %1553 = vmatprep.subr.mxu0 0.0
      %1554 = vmatpush1.msra.mxu0 0.0
      %1555 = vmatprep.subr.mxu0 0.0
      %1556 = vmatpush1.msra.mxu0 0.0
      %1557 = vmatprep.subr.mxu0 0.0
      %1558 = vmatpush1.msra.mxu0 0.0
      %1559 = vmatprep.subr.mxu0 0.0
      %1560 = vmatpush1.msra.mxu0 0.0
      %1561 = vmatprep.subr.mxu0 0.0
      %1562 = vmatpush1.msra.mxu0 0.0
      %1563 = vmatprep.subr.mxu0 0.0
      %1564 = vmatpush1.msra.mxu0 0.0
      %1565 = vmatprep.subr.mxu0 0.0
      %1566 = vmatpush1.msra.mxu0 0.0
      %1567 = vmatprep.subr.mxu0 0.0
      %1568 = vmatpush1.msra.mxu0 0.0
      %1569 = vmatprep.subr.mxu0 0.0
      %1570 = vmatpush1.msra.mxu0 0.0
      %1571 = vmatprep.subr.mxu0 0.0
      %1572 = vmatpush1.msra.mxu0 0.0
      %1573 = vmatprep.subr.mxu0 0.0
      %1574 = vmatpush1.msra.mxu0 0.0
      %1575 = vmatprep.subr.mxu0 0.0
      %1576 = vmatpush1.msra.mxu0 0.0
      %1577 = vmatprep.subr.mxu0 0.0
      %1578 = vmatpush1.msra.mxu0 0.0
      %1579 = vmatprep.subr.mxu0 0.0
      %1580 = vmatpush1.msra.mxu0 0.0
      %1581 = vmatprep.subr.mxu0 0.0
      %1582 = vmatpush1.msra.mxu0 0.0
      %1583 = vmatprep.subr.mxu0 0.0
      %1584 = vmatpush1.msra.mxu0 0.0
      %1585 = vmatprep.subr.mxu0 0.0
      %1586 = vmatpush1.msra.mxu0 0.0
      %1587 = vmatprep.mubr.f32.mxu0 0.0
      %1588 = vmatmul.mubr.f32.gmra.mrb[0].mxu0 %v1521
      %v1589 = vpop.f32.mrb[0].mxu0
      %v1590 = vadd.f32 0.0, %v1589
      %v1591 = vpop.f32.mrb[0].mxu0
      %1592 = vdwg.mxu0
      %1593 = vrot.lane.b32.xlu0 %v1089, 104
      %v1594 = vpop.permute.xlu0 %1593
      %1595 = vrot.lane.b32.xlu0 %v1089, 72
      %v1596 = vpop.permute.xlu0 %1595
      %v1597 = vsel %vm1095, %v1594, 0
      %v1599 = vsel %vm1095, %v1596, 0
      %1601 = vmatprep.subr.mxu0 0.0
      %1602 = vmatpush1.xpose.msra.mxu0 %v1599
      %1603 = vmatprep.subr.mxu0 0.0
      %1604 = vmatpush1.xpose.msra.mxu0 0.0
      %1605 = vmatprep.subr.mxu0 0.0
      %1606 = vmatpush1.xpose.msra.mxu0 0.0
      %1607 = vmatprep.subr.mxu0 0.0
      %1608 = vmatpush1.xpose.msra.mxu0 0.0
      %1609 = vmatprep.subr.mxu0 0.0
      %1610 = vmatpush1.xpose.msra.mxu0 0.0
      %1611 = vmatprep.subr.mxu0 0.0
      %1612 = vmatpush1.xpose.msra.mxu0 0.0
      %1613 = vmatprep.subr.mxu0 0.0
      %1614 = vmatpush1.xpose.msra.mxu0 0.0
      %1615 = vmatprep.subr.mxu0 0.0
      %1616 = vmatpush1.xpose.msra.mxu0 0.0
      %1617 = vmatprep.subr.mxu0 0.0
      %1618 = vmatpush1.xpose.msra.mxu0 0.0
      %1619 = vmatprep.subr.mxu0 0.0
      %1620 = vmatpush1.xpose.msra.mxu0 0.0
      %1621 = vmatprep.subr.mxu0 0.0
      %1622 = vmatpush1.xpose.msra.mxu0 0.0
      %1623 = vmatprep.subr.mxu0 0.0
      %1624 = vmatpush1.xpose.msra.mxu0 0.0
      %1625 = vmatprep.subr.mxu0 0.0
      %1626 = vmatpush1.xpose.msra.mxu0 0.0
      %1627 = vmatprep.subr.mxu0 0.0
      %1628 = vmatpush1.xpose.msra.mxu0 0.0
      %1629 = vmatprep.subr.mxu0 0.0
      %1630 = vmatpush1.xpose.msra.mxu0 0.0
      %1631 = vmatprep.subr.mxu0 0.0
      %1632 = vmatpush1.xpose.msra.mxu0 0.0
      %1633 = vmatprep.subr.mxu0 0.0
      %1634 = vmatpush1.xpose.msra.mxu0 0.0
      %1635 = vmatprep.subr.mxu0 0.0
      %1636 = vmatpush1.xpose.msra.mxu0 0.0
      %1637 = vmatprep.subr.mxu0 0.0
      %1638 = vmatpush1.xpose.msra.mxu0 0.0
      %1639 = vmatprep.subr.mxu0 0.0
      %1640 = vmatpush1.xpose.msra.mxu0 0.0
      %1641 = vmatprep.subr.mxu0 0.0
      %1642 = vmatpush1.xpose.msra.mxu0 0.0
      %1643 = vmatprep.subr.mxu0 0.0
      %1644 = vmatpush1.xpose.msra.mxu0 0.0
      %1645 = vmatprep.subr.mxu0 0.0
      %1646 = vmatpush1.xpose.msra.mxu0 0.0
      %1647 = vmatprep.subr.mxu0 0.0
      %1648 = vmatpush1.xpose.msra.mxu0 0.0
      %1649 = vmatprep.subr.mxu0 0.0
      %1650 = vmatpush1.xpose.msra.mxu0 0.0
      %1651 = vmatprep.subr.mxu0 0.0
      %1652 = vmatpush1.xpose.msra.mxu0 0.0
      %1653 = vmatprep.subr.mxu0 0.0
      %1654 = vmatpush1.xpose.msra.mxu0 0.0
      %1655 = vmatprep.subr.mxu0 0.0
      %1656 = vmatpush1.xpose.msra.mxu0 0.0
      %1657 = vmatprep.subr.mxu0 0.0
      %1658 = vmatpush1.xpose.msra.mxu0 0.0
      %1659 = vmatprep.subr.mxu0 0.0
      %1660 = vmatpush1.xpose.msra.mxu0 0.0
      %1661 = vmatprep.subr.mxu0 0.0
      %1662 = vmatpush1.xpose.msra.mxu0 0.0
      %1663 = vmatprep.subr.mxu0 0.0
      %1664 = vmatpush1.xpose.msra.mxu0 0.0
      %1665 = vmatprep.mubr.f32.mxu0 0.0
      %1666 = vmatmul.mubr.f32.gmra.mrb[0].mxu0 %v1597
      %v1667 = vpop.f32.mrb[0].mxu0
      %v1668 = vadd.f32 0.0, %v1667
      %v1669 = vpop.f32.mrb[0].mxu0
      %1670 = vdwg.mxu0
      %v1671 = vmul.f32 %v1668, 0.35355338
      %v1672 = vadd.f32 %v1671, %v799
      %v1673 = vsel %vm1095, %v1672, -inf
      %1674 = vmax.xlane.f32.xlu0 %v1673
      %v1675 = vpop.xlane.xlu0 %1674
      %v1676 = vsub.f32 %v1672, %v1675
      %v1677 = vmul.f32 %v1676, 1.442695
      %v1678 = vpow.pop %v1677
      %v1679 = vsel %vm1095, %v1678, 0.0
      %1680 = vadd.xlane.f32.xlu0 %v1679
      %v1681 = vpop.xlane.xlu0 %1680
      %v1682 = vrcp.pop %v1681
      %v1683 = vmul.f32 %v1678, %v1682
      %1684 = vrot.lane.b32.xlu0 %v1089, 40
      %v1685 = vpop.permute.xlu0 %1684
      %v1688 = vsel %vm1095, %v1683, 0
      %1690 = vmatprep.subr.mxu0 0.0
      %1691 = vmatpush1.msra.mxu0 %v1685
      %1692 = vmatprep.subr.mxu0 0.0
      %1693 = vmatpush1.msra.mxu0 0.0
      %1694 = vmatprep.subr.mxu0 0.0
      %1695 = vmatpush1.msra.mxu0 0.0
      %1696 = vmatprep.subr.mxu0 0.0
      %1697 = vmatpush1.msra.mxu0 0.0
      %1698 = vmatprep.subr.mxu0 0.0
      %1699 = vmatpush1.msra.mxu0 0.0
      %1700 = vmatprep.subr.mxu0 0.0
      %1701 = vmatpush1.msra.mxu0 0.0
      %1702 = vmatprep.subr.mxu0 0.0
      %1703 = vmatpush1.msra.mxu0 0.0
      %1704 = vmatprep.subr.mxu0 0.0
      %1705 = vmatpush1.msra.mxu0 0.0
      %1706 = vmatprep.subr.mxu0 0.0
      %1707 = vmatpush1.msra.mxu0 0.0
      %1708 = vmatprep.subr.mxu0 0.0
      %1709 = vmatpush1.msra.mxu0 0.0
      %1710 = vmatprep.subr.mxu0 0.0
      %1711 = vmatpush1.msra.mxu0 0.0
      %1712 = vmatprep.subr.mxu0 0.0
      %1713 = vmatpush1.msra.mxu0 0.0
      %1714 = vmatprep.subr.mxu0 0.0
      %1715 = vmatpush1.msra.mxu0 0.0
      %1716 = vmatprep.subr.mxu0 0.0
      %1717 = vmatpush1.msra.mxu0 0.0
      %1718 = vmatprep.subr.mxu0 0.0
      %1719 = vmatpush1.msra.mxu0 0.0
      %1720 = vmatprep.subr.mxu0 0.0
      %1721 = vmatpush1.msra.mxu0 0.0
      %1722 = vmatprep.subr.mxu0 0.0
      %1723 = vmatpush1.msra.mxu0 0.0
      %1724 = vmatprep.subr.mxu0 0.0
      %1725 = vmatpush1.msra.mxu0 0.0
      %1726 = vmatprep.subr.mxu0 0.0
      %1727 = vmatpush1.msra.mxu0 0.0
      %1728 = vmatprep.subr.mxu0 0.0
      %1729 = vmatpush1.msra.mxu0 0.0
      %1730 = vmatprep.subr.mxu0 0.0
      %1731 = vmatpush1.msra.mxu0 0.0
      %1732 = vmatprep.subr.mxu0 0.0
      %1733 = vmatpush1.msra.mxu0 0.0
      %1734 = vmatprep.subr.mxu0 0.0
      %1735 = vmatpush1.msra.mxu0 0.0
      %1736 = vmatprep.subr.mxu0 0.0
      %1737 = vmatpush1.msra.mxu0 0.0
      %1738 = vmatprep.subr.mxu0 0.0
      %1739 = vmatpush1.msra.mxu0 0.0
      %1740 = vmatprep.subr.mxu0 0.0
      %1741 = vmatpush1.msra.mxu0 0.0
      %1742 = vmatprep.subr.mxu0 0.0
      %1743 = vmatpush1.msra.mxu0 0.0
      %1744 = vmatprep.subr.mxu0 0.0
      %1745 = vmatpush1.msra.mxu0 0.0
      %1746 = vmatprep.subr.mxu0 0.0
      %1747 = vmatpush1.msra.mxu0 0.0
      %1748 = vmatprep.subr.mxu0 0.0
      %1749 = vmatpush1.msra.mxu0 0.0
      %1750 = vmatprep.subr.mxu0 0.0
      %1751 = vmatpush1.msra.mxu0 0.0
      %1752 = vmatprep.subr.mxu0 0.0
      %1753 = vmatpush1.msra.mxu0 0.0
      %1754 = vmatprep.mubr.f32.mxu0 0.0
      %1755 = vmatmul.mubr.f32.gmra.mrb[0].mxu0 %v1688
      %v1756 = vpop.f32.mrb[0].mxu0
      %v1757 = vadd.f32 0.0, %v1756
      %v1758 = vpop.f32.mrb[0].mxu0
      %1759 = vdwg.mxu0
      %1761 = vrot.lane.b32.xlu0 %v1423, 8
      %v1762 = vpop.permute.xlu0 %1761
      %1765 = vrot.lane.b32.xlu0 %v1590, 16
      %v1766 = vpop.permute.xlu0 %1765
      %1769 = vrot.lane.b32.xlu0 %v1757, 24
      %v1770 = vpop.permute.xlu0 %1769
      %v1772 = vsel %vm1095, %v1256, %v1762
      %vm1773 = vcmask 130048
      %v1774 = vsel %vm1773, %v1772, %v1766
      %vm1775 = vcmask 195584
      %v1776 = vsel %vm1775, %v1774, %v1770
      %v1777 = vld [vmem:[%s11] sm:$0xff]
      %v1778 = vld [vmem:[%s11 + $0x8] sm:$0xff]
      %v1779 = vld [vmem:[%s11 + $0x10] sm:$0xff]
      %v1780 = vld [vmem:[%s11 + $0x18] sm:$0xff]
      %v1781 = vld [vmem:[%s12] sm:$0x1]
      %v1783 = vlaneseq
      %v1784 = vshrl.u32 %v1783, 7
      %v1785 = vsub.s32 0, %v1784
      %v1786 = vrot.slane %v1781, %v1785
      %v1789 = vsel %vm979, %v1776, 0
      %1791 = vmatprep.subr.mxu0 0.0
      %1792 = vmatpush1.msra.mxu0 %v1777
      %1793 = vmatprep.subr.mxu0 0.0
      %1794 = vmatpush1.msra.mxu0 %v1778
      %1795 = vmatprep.subr.mxu0 0.0
      %1796 = vmatpush1.msra.mxu0 %v1779
      %1797 = vmatprep.subr.mxu0 0.0
      %1798 = vmatpush1.msra.mxu0 %v1780
      %1799 = vmatprep.subr.mxu0 0.0
      %1800 = vmatpush1.msra.mxu0 0.0
      %1801 = vmatprep.subr.mxu0 0.0
      %1802 = vmatpush1.msra.mxu0 0.0
      %1803 = vmatprep.subr.mxu0 0.0
      %1804 = vmatpush1.msra.mxu0 0.0
      %1805 = vmatprep.subr.mxu0 0.0
      %1806 = vmatpush1.msra.mxu0 0.0
      %1807 = vmatprep.subr.mxu0 0.0
      %1808 = vmatpush1.msra.mxu0 0.0
      %1809 = vmatprep.subr.mxu0 0.0
      %1810 = vmatpush1.msra.mxu0 0.0
      %1811 = vmatprep.subr.mxu0 0.0
      %1812 = vmatpush1.msra.mxu0 0.0
      %1813 = vmatprep.subr.mxu0 0.0
      %1814 = vmatpush1.msra.mxu0 0.0
      %1815 = vmatprep.subr.mxu0 0.0
      %1816 = vmatpush1.msra.mxu0 0.0
      %1817 = vmatprep.subr.mxu0 0.0
      %1818 = vmatpush1.msra.mxu0 0.0
      %1819 = vmatprep.subr.mxu0 0.0
      %1820 = vmatpush1.msra.mxu0 0.0
      %1821 = vmatprep.subr.mxu0 0.0
      %1822 = vmatpush1.msra.mxu0 0.0
      %1823 = vmatprep.subr.mxu0 0.0
      %1824 = vmatpush1.msra.mxu0 0.0
      %1825 = vmatprep.subr.mxu0 0.0
      %1826 = vmatpush1.msra.mxu0 0.0
      %1827 = vmatprep.subr.mxu0 0.0
      %1828 = vmatpush1.msra.mxu0 0.0
      %1829 = vmatprep.subr.mxu0 0.0
      %1830 = vmatpush1.msra.mxu0 0.0
      %1831 = vmatprep.subr.mxu0 0.0
      %1832 = vmatpush1.msra.mxu0 0.0
      %1833 = vmatprep.subr.mxu0 0.0
      %1834 = vmatpush1.msra.mxu0 0.0
      %1835 = vmatprep.subr.mxu0 0.0
      %1836 = vmatpush1.msra.mxu0 0.0
      %1837 = vmatprep.subr.mxu0 0.0
      %1838 = vmatpush1.msra.mxu0 0.0
      %1839 = vmatprep.subr.mxu0 0.0
      %1840 = vmatpush1.msra.mxu0 0.0
      %1841 = vmatprep.subr.mxu0 0.0
      %1842 = vmatpush1.msra.mxu0 0.0
      %1843 = vmatprep.subr.mxu0 0.0
      %1844 = vmatpush1.msra.mxu0 0.0
      %1845 = vmatprep.subr.mxu0 0.0
      %1846 = vmatpush1.msra.mxu0 0.0
      %1847 = vmatprep.subr.mxu0 0.0
      %1848 = vmatpush1.msra.mxu0 0.0
      %1849 = vmatprep.subr.mxu0 0.0
      %1850 = vmatpush1.msra.mxu0 0.0
      %1851 = vmatprep.subr.mxu0 0.0
      %1852 = vmatpush1.msra.mxu0 0.0
      %1853 = vmatprep.subr.mxu0 0.0
      %1854 = vmatpush1.msra.mxu0 0.0
      %1855 = vmatprep.mubr.f32.mxu0 0.0
      %1856 = vmatmul.mubr.f32.gmra.mrb[0].mxu0 %v1789
      %v1857 = vpop.f32.mrb[0].mxu0
      %v1858 = vadd.f32 %v1786, %v1857
      %v1859 = vpop.f32.mrb[0].mxu0
      %1860 = vdwg.mxu0
      %v1861 = vadd.f32 %v1007, %v1858
      %s1862 = scalar_lea.vmem %s7, 1
      %v1863 = vld [vmem:[%s1862] sm:$0x1]
      %s1864 = scalar_lea.vmem %s8, 1
      %v1865 = vld [vmem:[%s1864] sm:$0x1]
      %v1866 = vsel %vm979, %v1861, 0.0
      %1867 = vadd.xlane.f32.xlu0 %v1866
      %v1868 = vpop.xlane.xlu0 %1867
      %v1869 = vmul.f32 %v1868, %v983
      %v1870 = vsub.f32 %v1861, %v1869
      %v1871 = vmul.f32 %v1870, %v1870
      %v1872 = vsel %vm979, %v1871, 0.0
      %1873 = vadd.xlane.f32.xlu0 %v1872
      %v1874 = vpop.xlane.xlu0 %1873
      %v1875 = vmul.f32 %v1874, %v983
      %v1876 = vadd.f32 %v1875, 1e-05
      %v1877 = vrsqrt.pop %v1876
      %v1878 = vmul.f32 %v1870, %v1877
      %v1880 = vlaneseq
      %v1881 = vshrl.u32 %v1880, 7
      %v1882 = vsub.s32 0, %v1881
      %v1883 = vrot.slane %v1863, %v1882
      %v1885 = vmul.f32 %v1878, %v1883
      %v1887 = vlaneseq
      %v1888 = vshrl.u32 %v1887, 7
      %v1889 = vsub.s32 0, %v1888
      %v1890 = vrot.slane %v1865, %v1889
      %v1892 = vadd.f32 %v1885, %v1890
      %v1893 = vld [vmem:[%s13] sm:$0xff]
      %v1894 = vld [vmem:[%s13 + $0x8] sm:$0xff]
      %v1895 = vld [vmem:[%s13 + $0x10] sm:$0xff]
      %v1896 = vld [vmem:[%s13 + $0x18] sm:$0xff]
      %v1897 = vld [vmem:[%s14] sm:$0x1]
      %v1899 = vlaneseq
      %v1900 = vshrl.u32 %v1899, 7
      %v1901 = vsub.s32 0, %v1900
      %v1902 = vrot.slane %v1897, %v1901
      %v1905 = vsel %vm979, %v1892, 0
      %1907 = vmatprep.subr.mxu0 0.0
      %1908 = vmatpush1.msra.mxu0 %v1893
      %1909 = vmatprep.subr.mxu0 0.0
      %1910 = vmatpush1.msra.mxu0 %v1894
      %1911 = vmatprep.subr.mxu0 0.0
      %1912 = vmatpush1.msra.mxu0 %v1895
      %1913 = vmatprep.subr.mxu0 0.0
      %1914 = vmatpush1.msra.mxu0 %v1896
      %1915 = vmatprep.subr.mxu0 0.0
      %1916 = vmatpush1.msra.mxu0 0.0
      %1917 = vmatprep.subr.mxu0 0.0
      %1918 = vmatpush1.msra.mxu0 0.0
      %1919 = vmatprep.subr.mxu0 0.0
      %1920 = vmatpush1.msra.mxu0 0.0
      %1921 = vmatprep.subr.mxu0 0.0
      %1922 = vmatpush1.msra.mxu0 0.0
      %1923 = vmatprep.subr.mxu0 0.0
      %1924 = vmatpush1.msra.mxu0 0.0
      %1925 = vmatprep.subr.mxu0 0.0
      %1926 = vmatpush1.msra.mxu0 0.0
      %1927 = vmatprep.subr.mxu0 0.0
      %1928 = vmatpush1.msra.mxu0 0.0
      %1929 = vmatprep.subr.mxu0 0.0
      %1930 = vmatpush1.msra.mxu0 0.0
      %1931 = vmatprep.subr.mxu0 0.0
      %1932 = vmatpush1.msra.mxu0 0.0
      %1933 = vmatprep.subr.mxu0 0.0
      %1934 = vmatpush1.msra.mxu0 0.0
      %1935 = vmatprep.subr.mxu0 0.0
      %1936 = vmatpush1.msra.mxu0 0.0
      %1937 = vmatprep.subr.mxu0 0.0
      %1938 = vmatpush1.msra.mxu0 0.0
      %1939 = vmatprep.subr.mxu0 0.0
      %1940 = vmatpush1.msra.mxu0 0.0
      %1941 = vmatprep.subr.mxu0 0.0
      %1942 = vmatpush1.msra.mxu0 0.0
      %1943 = vmatprep.subr.mxu0 0.0
      %1944 = vmatpush1.msra.mxu0 0.0
      %1945 = vmatprep.subr.mxu0 0.0
      %1946 = vmatpush1.msra.mxu0 0.0
      %1947 = vmatprep.subr.mxu0 0.0
      %1948 = vmatpush1.msra.mxu0 0.0
      %1949 = vmatprep.subr.mxu0 0.0
      %1950 = vmatpush1.msra.mxu0 0.0
      %1951 = vmatprep.subr.mxu0 0.0
      %1952 = vmatpush1.msra.mxu0 0.0
      %1953 = vmatprep.subr.mxu0 0.0
      %1954 = vmatpush1.msra.mxu0 0.0
      %1955 = vmatprep.subr.mxu0 0.0
      %1956 = vmatpush1.msra.mxu0 0.0
      %1957 = vmatprep.subr.mxu0 0.0
      %1958 = vmatpush1.msra.mxu0 0.0
      %1959 = vmatprep.subr.mxu0 0.0
      %1960 = vmatpush1.msra.mxu0 0.0
      %1961 = vmatprep.subr.mxu0 0.0
      %1962 = vmatpush1.msra.mxu0 0.0
      %1963 = vmatprep.subr.mxu0 0.0
      %1964 = vmatpush1.msra.mxu0 0.0
      %1965 = vmatprep.subr.mxu0 0.0
      %1966 = vmatpush1.msra.mxu0 0.0
      %1967 = vmatprep.subr.mxu0 0.0
      %1968 = vmatpush1.msra.mxu0 0.0
      %1969 = vmatprep.subr.mxu0 0.0
      %1970 = vmatpush1.msra.mxu0 0.0
      %1971 = vmatprep.mubr.f32.mxu0 0.0
      %1972 = vmatmul.mubr.f32.gmra.mrb[0].mxu0 %v1905
      %v1973 = vpop.f32.mrb[0].mxu0
      %v1974 = vadd.f32 %v1902, %v1973
      %v1975 = vpop.f32.mrb[0].mxu0
      %1976 = vdwg.mxu0
      %v1977 = vld [vmem:[%s15] sm:$0xff]
      %v1978 = vld [vmem:[%s15 + $0x8] sm:$0xff]
      %v1979 = vld [vmem:[%s15 + $0x10] sm:$0xff]
      %v1980 = vld [vmem:[%s15 + $0x18] sm:$0xff]
      %v1981 = vld [vmem:[%s16] sm:$0x1]
      %v1983 = vlaneseq
      %v1984 = vshrl.u32 %v1983, 7
      %v1985 = vsub.s32 0, %v1984
      %v1986 = vrot.slane %v1981, %v1985
      %v1989 = vsel %vm979, %v886, 0
      %1991 = vmatprep.subr.mxu0 0.0
      %1992 = vmatpush1.msra.mxu0 %v1977
      %1993 = vmatprep.subr.mxu0 0.0
      %1994 = vmatpush1.msra.mxu0 %v1978
      %1995 = vmatprep.subr.mxu0 0.0
      %1996 = vmatpush1.msra.mxu0 %v1979
      %1997 = vmatprep.subr.mxu0 0.0
      %1998 = vmatpush1.msra.mxu0 %v1980
      %1999 = vmatprep.subr.mxu0 0.0
      %2000 = vmatpush1.msra.mxu0 0.0
      %2001 = vmatprep.subr.mxu0 0.0
      %2002 = vmatpush1.msra.mxu0 0.0
      %2003 = vmatprep.subr.mxu0 0.0
      %2004 = vmatpush1.msra.mxu0 0.0
      %2005 = vmatprep.subr.mxu0 0.0
      %2006 = vmatpush1.msra.mxu0 0.0
      %2007 = vmatprep.subr.mxu0 0.0
      %2008 = vmatpush1.msra.mxu0 0.0
      %2009 = vmatprep.subr.mxu0 0.0
      %2010 = vmatpush1.msra.mxu0 0.0
      %2011 = vmatprep.subr.mxu0 0.0
      %2012 = vmatpush1.msra.mxu0 0.0
      %2013 = vmatprep.subr.mxu0 0.0
      %2014 = vmatpush1.msra.mxu0 0.0
      %2015 = vmatprep.subr.mxu0 0.0
      %2016 = vmatpush1.msra.mxu0 0.0
      %2017 = vmatprep.subr.mxu0 0.0
      %2018 = vmatpush1.msra.mxu0 0.0
      %2019 = vmatprep.subr.mxu0 0.0
      %2020 = vmatpush1.msra.mxu0 0.0
      %2021 = vmatprep.subr.mxu0 0.0
      %2022 = vmatpush1.msra.mxu0 0.0
      %2023 = vmatprep.subr.mxu0 0.0
      %2024 = vmatpush1.msra.mxu0 0.0
      %2025 = vmatprep.subr.mxu0 0.0
      %2026 = vmatpush1.msra.mxu0 0.0
      %2027 = vmatprep.subr.mxu0 0.0
      %2028 = vmatpush1.msra.mxu0 0.0
      %2029 = vmatprep.subr.mxu0 0.0
      %2030 = vmatpush1.msra.mxu0 0.0
      %2031 = vmatprep.subr.mxu0 0.0
      %2032 = vmatpush1.msra.mxu0 0.0
      %2033 = vmatprep.subr.mxu0 0.0
      %2034 = vmatpush1.msra.mxu0 0.0
      %2035 = vmatprep.subr.mxu0 0.0
      %2036 = vmatpush1.msra.mxu0 0.0
      %2037 = vmatprep.subr.mxu0 0.0
      %2038 = vmatpush1.msra.mxu0 0.0
      %2039 = vmatprep.subr.mxu0 0.0
      %2040 = vmatpush1.msra.mxu0 0.0
      %2041 = vmatprep.subr.mxu0 0.0
      %2042 = vmatpush1.msra.mxu0 0.0
      %2043 = vmatprep.subr.mxu0 0.0
      %2044 = vmatpush1.msra.mxu0 0.0
      %2045 = vmatprep.subr.mxu0 0.0
      %2046 = vmatpush1.msra.mxu0 0.0
      %2047 = vmatprep.subr.mxu0 0.0
      %2048 = vmatpush1.msra.mxu0 0.0
      %2049 = vmatprep.subr.mxu0 0.0
      %2050 = vmatpush1.msra.mxu0 0.0
      %2051 = vmatprep.subr.mxu0 0.0
      %2052 = vmatpush1.msra.mxu0 0.0
      %2053 = vmatprep.subr.mxu0 0.0
      %2054 = vmatpush1.msra.mxu0 0.0
      %2055 = vmatprep.mubr.f32.mxu0 0.0
      %2056 = vmatmul.mubr.f32.gmra.mrb[0].mxu0 %v1989
      %v2057 = vpop.f32.mrb[0].mxu0
      %v2058 = vadd.f32 %v1986, %v2057
      %v2059 = vpop.f32.mrb[0].mxu0
      %2060 = vdwg.mxu0
      %v2062 = vsel %vm1095, %v1974, 0
      %v2065 = vsel %vm1095, %v2058, 0
      %2067 = vmatprep.subr.mxu0 0.0
      %2068 = vmatpush1.xpose.msra.mxu0 %v2065
      %2069 = vmatprep.subr.mxu0 0.0
      %2070 = vmatpush1.xpose.msra.mxu0 0.0
      %2071 = vmatprep.subr.mxu0 0.0
      %2072 = vmatpush1.xpose.msra.mxu0 0.0
      %2073 = vmatprep.subr.mxu0 0.0
      %2074 = vmatpush1.xpose.msra.mxu0 0.0
      %2075 = vmatprep.subr.mxu0 0.0
      %2076 = vmatpush1.xpose.msra.mxu0 0.0
      %2077 = vmatprep.subr.mxu0 0.0
      %2078 = vmatpush1.xpose.msra.mxu0 0.0
      %2079 = vmatprep.subr.mxu0 0.0
      %2080 = vmatpush1.xpose.msra.mxu0 0.0
      %2081 = vmatprep.subr.mxu0 0.0
      %2082 = vmatpush1.xpose.msra.mxu0 0.0
      %2083 = vmatprep.subr.mxu0 0.0
      %2084 = vmatpush1.xpose.msra.mxu0 0.0
      %2085 = vmatprep.subr.mxu0 0.0
      %2086 = vmatpush1.xpose.msra.mxu0 0.0
      %2087 = vmatprep.subr.mxu0 0.0
      %2088 = vmatpush1.xpose.msra.mxu0 0.0
      %2089 = vmatprep.subr.mxu0 0.0
      %2090 = vmatpush1.xpose.msra.mxu0 0.0
      %2091 = vmatprep.subr.mxu0 0.0
      %2092 = vmatpush1.xpose.msra.mxu0 0.0
      %2093 = vmatprep.subr.mxu0 0.0
      %2094 = vmatpush1.xpose.msra.mxu0 0.0
      %2095 = vmatprep.subr.mxu0 0.0
      %2096 = vmatpush1.xpose.msra.mxu0 0.0
      %2097 = vmatprep.subr.mxu0 0.0
      %2098 = vmatpush1.xpose.msra.mxu0 0.0
      %2099 = vmatprep.subr.mxu0 0.0
      %2100 = vmatpush1.xpose.msra.mxu0 0.0
      %2101 = vmatprep.subr.mxu0 0.0
      %2102 = vmatpush1.xpose.msra.mxu0 0.0
      %2103 = vmatprep.subr.mxu0 0.0
      %2104 = vmatpush1.xpose.msra.mxu0 0.0
      %2105 = vmatprep.subr.mxu0 0.0
      %2106 = vmatpush1.xpose.msra.mxu0 0.0
      %2107 = vmatprep.subr.mxu0 0.0
      %2108 = vmatpush1.xpose.msra.mxu0 0.0
      %2109 = vmatprep.subr.mxu0 0.0
      %2110 = vmatpush1.xpose.msra.mxu0 0.0
      %2111 = vmatprep.subr.mxu0 0.0
      %2112 = vmatpush1.xpose.msra.mxu0 0.0
      %2113 = vmatprep.subr.mxu0 0.0
      %2114 = vmatpush1.xpose.msra.mxu0 0.0
      %2115 = vmatprep.subr.mxu0 0.0
      %2116 = vmatpush1.xpose.msra.mxu0 0.0
      %2117 = vmatprep.subr.mxu0 0.0
      %2118 = vmatpush1.xpose.msra.mxu0 0.0
      %2119 = vmatprep.subr.mxu0 0.0
      %2120 = vmatpush1.xpose.msra.mxu0 0.0
      %2121 = vmatprep.subr.mxu0 0.0
      %2122 = vmatpush1.xpose.msra.mxu0 0.0
      %2123 = vmatprep.subr.mxu0 0.0
      %2124 = vmatpush1.xpose.msra.mxu0 0.0
      %2125 = vmatprep.subr.mxu0 0.0
      %2126 = vmatpush1.xpose.msra.mxu0 0.0
      %2127 = vmatprep.subr.mxu0 0.0
      %2128 = vmatpush1.xpose.msra.mxu0 0.0
      %2129 = vmatprep.subr.mxu0 0.0
      %2130 = vmatpush1.xpose.msra.mxu0 0.0
      %2131 = vmatprep.mubr.f32.mxu0 0.0
      %2132 = vmatmul.mubr.f32.gmra.mrb[0].mxu0 %v2062
      %v2133 = vpop.f32.mrb[0].mxu0
      %v2134 = vadd.f32 0.0, %v2133
      %v2135 = vpop.f32.mrb[0].mxu0
      %2136 = vdwg.mxu0
      %v2137 = vmul.f32 %v2134, 0.35355338
      %v2138 = vadd.f32 %v2137, %v799
      %v2139 = vsel %vm1095, %v2138, -inf
      %2140 = vmax.xlane.f32.xlu0 %v2139
      %v2141 = vpop.xlane.xlu0 %2140
      %v2142 = vsub.f32 %v2138, %v2141
      %v2143 = vmul.f32 %v2142, 1.442695
      %v2144 = vpow.pop %v2143
      %v2145 = vsel %vm1095, %v2144, 0.0
      %2146 = vadd.xlane.f32.xlu0 %v2145
      %v2147 = vpop.xlane.xlu0 %2146
      %v2148 = vrcp.pop %v2147
      %v2149 = vmul.f32 %v2144, %v2148
      %2150 = vrot.lane.b32.xlu0 %v2058, 96
      %v2151 = vpop.permute.xlu0 %2150
      %v2154 = vsel %vm1095, %v2149, 0
      %2156 = vmatprep.subr.mxu0 0.0
      %2157 = vmatpush1.msra.mxu0 %v2151
      %2158 = vmatprep.subr.mxu0 0.0
      %2159 = vmatpush1.msra.mxu0 0.0
      %2160 = vmatprep.subr.mxu0 0.0
      %2161 = vmatpush1.msra.mxu0 0.0
      %2162 = vmatprep.subr.mxu0 0.0
      %2163 = vmatpush1.msra.mxu0 0.0
      %2164 = vmatprep.subr.mxu0 0.0
      %2165 = vmatpush1.msra.mxu0 0.0
      %2166 = vmatprep.subr.mxu0 0.0
      %2167 = vmatpush1.msra.mxu0 0.0
      %2168 = vmatprep.subr.mxu0 0.0
      %2169 = vmatpush1.msra.mxu0 0.0
      %2170 = vmatprep.subr.mxu0 0.0
      %2171 = vmatpush1.msra.mxu0 0.0
      %2172 = vmatprep.subr.mxu0 0.0
      %2173 = vmatpush1.msra.mxu0 0.0
      %2174 = vmatprep.subr.mxu0 0.0
      %2175 = vmatpush1.msra.mxu0 0.0
      %2176 = vmatprep.subr.mxu0 0.0
      %2177 = vmatpush1.msra.mxu0 0.0
      %2178 = vmatprep.subr.mxu0 0.0
      %2179 = vmatpush1.msra.mxu0 0.0
      %2180 = vmatprep.subr.mxu0 0.0
      %2181 = vmatpush1.msra.mxu0 0.0
      %2182 = vmatprep.subr.mxu0 0.0
      %2183 = vmatpush1.msra.mxu0 0.0
      %2184 = vmatprep.subr.mxu0 0.0
      %2185 = vmatpush1.msra.mxu0 0.0
      %2186 = vmatprep.subr.mxu0 0.0
      %2187 = vmatpush1.msra.mxu0 0.0
      %2188 = vmatprep.subr.mxu0 0.0
      %2189 = vmatpush1.msra.mxu0 0.0
      %2190 = vmatprep.subr.mxu0 0.0
      %2191 = vmatpush1.msra.mxu0 0.0
      %2192 = vmatprep.subr.mxu0 0.0
      %2193 = vmatpush1.msra.mxu0 0.0
      %2194 = vmatprep.subr.mxu0 0.0
      %2195 = vmatpush1.msra.mxu0 0.0
      %2196 = vmatprep.subr.mxu0 0.0
      %2197 = vmatpush1.msra.mxu0 0.0
      %2198 = vmatprep.subr.mxu0 0.0
      %2199 = vmatpush1.msra.mxu0 0.0
      %2200 = vmatprep.subr.mxu0 0.0
      %2201 = vmatpush1.msra.mxu0 0.0
      %2202 = vmatprep.subr.mxu0 0.0
      %2203 = vmatpush1.msra.mxu0 0.0
      %2204 = vmatprep.subr.mxu0 0.0
      %2205 = vmatpush1.msra.mxu0 0.0
      %2206 = vmatprep.subr.mxu0 0.0
      %2207 = vmatpush1.msra.mxu0 0.0
      %2208 = vmatprep.subr.mxu0 0.0
      %2209 = vmatpush1.msra.mxu0 0.0
      %2210 = vmatprep.subr.mxu0 0.0
      %2211 = vmatpush1.msra.mxu0 0.0
      %2212 = vmatprep.subr.mxu0 0.0
      %2213 = vmatpush1.msra.mxu0 0.0
      %2214 = vmatprep.subr.mxu0 0.0
      %2215 = vmatpush1.msra.mxu0 0.0
      %2216 = vmatprep.subr.mxu0 0.0
      %2217 = vmatpush1.msra.mxu0 0.0
      %2218 = vmatprep.subr.mxu0 0.0
      %2219 = vmatpush1.msra.mxu0 0.0
      %2220 = vmatprep.mubr.f32.mxu0 0.0
      %2221 = vmatmul.mubr.f32.gmra.mrb[0].mxu0 %v2154
      %v2222 = vpop.f32.mrb[0].mxu0
      %v2223 = vadd.f32 0.0, %v2222
      %v2224 = vpop.f32.mrb[0].mxu0
      %2225 = vdwg.mxu0
      %2226 = vrot.lane.b32.xlu0 %v1974, 120
      %v2227 = vpop.permute.xlu0 %2226
      %2228 = vrot.lane.b32.xlu0 %v2058, 120
      %v2229 = vpop.permute.xlu0 %2228
      %v2230 = vsel %vm1095, %v2227, 0
      %v2232 = vsel %vm1095, %v2229, 0
      %2234 = vmatprep.subr.mxu0 0.0
      %2235 = vmatpush1.xpose.msra.mxu0 %v2232
      %2236 = vmatprep.subr.mxu0 0.0
      %2237 = vmatpush1.xpose.msra.mxu0 0.0
      %2238 = vmatprep.subr.mxu0 0.0
      %2239 = vmatpush1.xpose.msra.mxu0 0.0
      %2240 = vmatprep.subr.mxu0 0.0
      %2241 = vmatpush1.xpose.msra.mxu0 0.0
      %2242 = vmatprep.subr.mxu0 0.0
      %2243 = vmatpush1.xpose.msra.mxu0 0.0
      %2244 = vmatprep.subr.mxu0 0.0
      %2245 = vmatpush1.xpose.msra.mxu0 0.0
      %2246 = vmatprep.subr.mxu0 0.0
      %2247 = vmatpush1.xpose.msra.mxu0 0.0
      %2248 = vmatprep.subr.mxu0 0.0
      %2249 = vmatpush1.xpose.msra.mxu0 0.0
      %2250 = vmatprep.subr.mxu0 0.0
      %2251 = vmatpush1.xpose.msra.mxu0 0.0
      %2252 = vmatprep.subr.mxu0 0.0
      %2253 = vmatpush1.xpose.msra.mxu0 0.0
      %2254 = vmatprep.subr.mxu0 0.0
      %2255 = vmatpush1.xpose.msra.mxu0 0.0
      %2256 = vmatprep.subr.mxu0 0.0
      %2257 = vmatpush1.xpose.msra.mxu0 0.0
      %2258 = vmatprep.subr.mxu0 0.0
      %2259 = vmatpush1.xpose.msra.mxu0 0.0
      %2260 = vmatprep.subr.mxu0 0.0
      %2261 = vmatpush1.xpose.msra.mxu0 0.0
      %2262 = vmatprep.subr.mxu0 0.0
      %2263 = vmatpush1.xpose.msra.mxu0 0.0
      %2264 = vmatprep.subr.mxu0 0.0
      %2265 = vmatpush1.xpose.msra.mxu0 0.0
      %2266 = vmatprep.subr.mxu0 0.0
      %2267 = vmatpush1.xpose.msra.mxu0 0.0
      %2268 = vmatprep.subr.mxu0 0.0
      %2269 = vmatpush1.xpose.msra.mxu0 0.0
      %2270 = vmatprep.subr.mxu0 0.0
      %2271 = vmatpush1.xpose.msra.mxu0 0.0
      %2272 = vmatprep.subr.mxu0 0.0
      %2273 = vmatpush1.xpose.msra.mxu0 0.0
      %2274 = vmatprep.subr.mxu0 0.0
      %2275 = vmatpush1.xpose.msra.mxu0 0.0
      %2276 = vmatprep.subr.mxu0 0.0
      %2277 = vmatpush1.xpose.msra.mxu0 0.0
      %2278 = vmatprep.subr.mxu0 0.0
      %2279 = vmatpush1.xpose.msra.mxu0 0.0
      %2280 = vmatprep.subr.mxu0 0.0
      %2281 = vmatpush1.xpose.msra.mxu0 0.0
      %2282 = vmatprep.subr.mxu0 0.0
      %2283 = vmatpush1.xpose.msra.mxu0 0.0
      %2284 = vmatprep.subr.mxu0 0.0
      %2285 = vmatpush1.xpose.msra.mxu0 0.0
      %2286 = vmatprep.subr.mxu0 0.0
      %2287 = vmatpush1.xpose.msra.mxu0 0.0
      %2288 = vmatprep.subr.mxu0 0.0
      %2289 = vmatpush1.xpose.msra.mxu0 0.0
      %2290 = vmatprep.subr.mxu0 0.0
      %2291 = vmatpush1.xpose.msra.mxu0 0.0
      %2292 = vmatprep.subr.mxu0 0.0
      %2293 = vmatpush1.xpose.msra.mxu0 0.0
      %2294 = vmatprep.subr.mxu0 0.0
      %2295 = vmatpush1.xpose.msra.mxu0 0.0
      %2296 = vmatprep.subr.mxu0 0.0
      %2297 = vmatpush1.xpose.msra.mxu0 0.0
      %2298 = vmatprep.mubr.f32.mxu0 0.0
      %2299 = vmatmul.mubr.f32.gmra.mrb[0].mxu0 %v2230
      %v2300 = vpop.f32.mrb[0].mxu0
      %v2301 = vadd.f32 0.0, %v2300
      %v2302 = vpop.f32.mrb[0].mxu0
      %2303 = vdwg.mxu0
      %v2304 = vmul.f32 %v2301, 0.35355338
      %v2305 = vadd.f32 %v2304, %v799
      %v2306 = vsel %vm1095, %v2305, -inf
      %2307 = vmax.xlane.f32.xlu0 %v2306
      %v2308 = vpop.xlane.xlu0 %2307
      %v2309 = vsub.f32 %v2305, %v2308
      %v2310 = vmul.f32 %v2309, 1.442695
      %v2311 = vpow.pop %v2310
      %v2312 = vsel %vm1095, %v2311, 0.0
      %2313 = vadd.xlane.f32.xlu0 %v2312
      %v2314 = vpop.xlane.xlu0 %2313
      %v2315 = vrcp.pop %v2314
      %v2316 = vmul.f32 %v2311, %v2315
      %2317 = vrot.lane.b32.xlu0 %v2058, 88
      %v2318 = vpop.permute.xlu0 %2317
      %v2321 = vsel %vm1095, %v2316, 0
      %2323 = vmatprep.subr.mxu0 0.0
      %2324 = vmatpush1.msra.mxu0 %v2318
      %2325 = vmatprep.subr.mxu0 0.0
      %2326 = vmatpush1.msra.mxu0 0.0
      %2327 = vmatprep.subr.mxu0 0.0
      %2328 = vmatpush1.msra.mxu0 0.0
      %2329 = vmatprep.subr.mxu0 0.0
      %2330 = vmatpush1.msra.mxu0 0.0
      %2331 = vmatprep.subr.mxu0 0.0
      %2332 = vmatpush1.msra.mxu0 0.0
      %2333 = vmatprep.subr.mxu0 0.0
      %2334 = vmatpush1.msra.mxu0 0.0
      %2335 = vmatprep.subr.mxu0 0.0
      %2336 = vmatpush1.msra.mxu0 0.0
      %2337 = vmatprep.subr.mxu0 0.0
      %2338 = vmatpush1.msra.mxu0 0.0
      %2339 = vmatprep.subr.mxu0 0.0
      %2340 = vmatpush1.msra.mxu0 0.0
      %2341 = vmatprep.subr.mxu0 0.0
      %2342 = vmatpush1.msra.mxu0 0.0
      %2343 = vmatprep.subr.mxu0 0.0
      %2344 = vmatpush1.msra.mxu0 0.0
      %2345 = vmatprep.subr.mxu0 0.0
      %2346 = vmatpush1.msra.mxu0 0.0
      %2347 = vmatprep.subr.mxu0 0.0
      %2348 = vmatpush1.msra.mxu0 0.0
      %2349 = vmatprep.subr.mxu0 0.0
      %2350 = vmatpush1.msra.mxu0 0.0
      %2351 = vmatprep.subr.mxu0 0.0
      %2352 = vmatpush1.msra.mxu0 0.0
      %2353 = vmatprep.subr.mxu0 0.0
      %2354 = vmatpush1.msra.mxu0 0.0
      %2355 = vmatprep.subr.mxu0 0.0
      %2356 = vmatpush1.msra.mxu0 0.0
      %2357 = vmatprep.subr.mxu0 0.0
      %2358 = vmatpush1.msra.mxu0 0.0
      %2359 = vmatprep.subr.mxu0 0.0
      %2360 = vmatpush1.msra.mxu0 0.0
      %2361 = vmatprep.subr.mxu0 0.0
      %2362 = vmatpush1.msra.mxu0 0.0
      %2363 = vmatprep.subr.mxu0 0.0
      %2364 = vmatpush1.msra.mxu0 0.0
      %2365 = vmatprep.subr.mxu0 0.0
      %2366 = vmatpush1.msra.mxu0 0.0
      %2367 = vmatprep.subr.mxu0 0.0
      %2368 = vmatpush1.msra.mxu0 0.0
      %2369 = vmatprep.subr.mxu0 0.0
      %2370 = vmatpush1.msra.mxu0 0.0
      %2371 = vmatprep.subr.mxu0 0.0
      %2372 = vmatpush1.msra.mxu0 0.0
      %2373 = vmatprep.subr.mxu0 0.0
      %2374 = vmatpush1.msra.mxu0 0.0
      %2375 = vmatprep.subr.mxu0 0.0
      %2376 = vmatpush1.msra.mxu0 0.0
      %2377 = vmatprep.subr.mxu0 0.0
      %2378 = vmatpush1.msra.mxu0 0.0
      %2379 = vmatprep.subr.mxu0 0.0
      %2380 = vmatpush1.msra.mxu0 0.0
      %2381 = vmatprep.subr.mxu0 0.0
      %2382 = vmatpush1.msra.mxu0 0.0
      %2383 = vmatprep.subr.mxu0 0.0
      %2384 = vmatpush1.msra.mxu0 0.0
      %2385 = vmatprep.subr.mxu0 0.0
      %2386 = vmatpush1.msra.mxu0 0.0
      %2387 = vmatprep.mubr.f32.mxu0 0.0
      %2388 = vmatmul.mubr.f32.gmra.mrb[0].mxu0 %v2321
      %v2389 = vpop.f32.mrb[0].mxu0
      %v2390 = vadd.f32 0.0, %v2389
      %v2391 = vpop.f32.mrb[0].mxu0
      %2392 = vdwg.mxu0
      %2393 = vrot.lane.b32.xlu0 %v1974, 112
      %v2394 = vpop.permute.xlu0 %2393
      %2395 = vrot.lane.b32.xlu0 %v2058, 112
      %v2396 = vpop.permute.xlu0 %2395
      %v2397 = vsel %vm1095, %v2394, 0
      %v2399 = vsel %vm1095, %v2396, 0
      %2401 = vmatprep.subr.mxu0 0.0
      %2402 = vmatpush1.xpose.msra.mxu0 %v2399
      %2403 = vmatprep.subr.mxu0 0.0
      %2404 = vmatpush1.xpose.msra.mxu0 0.0
      %2405 = vmatprep.subr.mxu0 0.0
      %2406 = vmatpush1.xpose.msra.mxu0 0.0
      %2407 = vmatprep.subr.mxu0 0.0
      %2408 = vmatpush1.xpose.msra.mxu0 0.0
      %2409 = vmatprep.subr.mxu0 0.0
      %2410 = vmatpush1.xpose.msra.mxu0 0.0
      %2411 = vmatprep.subr.mxu0 0.0
      %2412 = vmatpush1.xpose.msra.mxu0 0.0
      %2413 = vmatprep.subr.mxu0 0.0
      %2414 = vmatpush1.xpose.msra.mxu0 0.0
      %2415 = vmatprep.subr.mxu0 0.0
      %2416 = vmatpush1.xpose.msra.mxu0 0.0
      %2417 = vmatprep.subr.mxu0 0.0
      %2418 = vmatpush1.xpose.msra.mxu0 0.0
      %2419 = vmatprep.subr.mxu0 0.0
      %2420 = vmatpush1.xpose.msra.mxu0 0.0
      %2421 = vmatprep.subr.mxu0 0.0
      %2422 = vmatpush1.xpose.msra.mxu0 0.0
      %2423 = vmatprep.subr.mxu0 0.0
      %2424 = vmatpush1.xpose.msra.mxu0 0.0
      %2425 = vmatprep.subr.mxu0 0.0
      %2426 = vmatpush1.xpose.msra.mxu0 0.0
      %2427 = vmatprep.subr.mxu0 0.0
      %2428 = vmatpush1.xpose.msra.mxu0 0.0
      %2429 = vmatprep.subr.mxu0 0.0
      %2430 = vmatpush1.xpose.msra.mxu0 0.0
      %2431 = vmatprep.subr.mxu0 0.0
      %2432 = vmatpush1.xpose.msra.mxu0 0.0
      %2433 = vmatprep.subr.mxu0 0.0
      %2434 = vmatpush1.xpose.msra.mxu0 0.0
      %2435 = vmatprep.subr.mxu0 0.0
      %2436 = vmatpush1.xpose.msra.mxu0 0.0
      %2437 = vmatprep.subr.mxu0 0.0
      %2438 = vmatpush1.xpose.msra.mxu0 0.0
      %2439 = vmatprep.subr.mxu0 0.0
      %2440 = vmatpush1.xpose.msra.mxu0 0.0
      %2441 = vmatprep.subr.mxu0 0.0
      %2442 = vmatpush1.xpose.msra.mxu0 0.0
      %2443 = vmatprep.subr.mxu0 0.0
      %2444 = vmatpush1.xpose.msra.mxu0 0.0
      %2445 = vmatprep.subr.mxu0 0.0
      %2446 = vmatpush1.xpose.msra.mxu0 0.0
      %2447 = vmatprep.subr.mxu0 0.0
      %2448 = vmatpush1.xpose.msra.mxu0 0.0
      %2449 = vmatprep.subr.mxu0 0.0
      %2450 = vmatpush1.xpose.msra.mxu0 0.0
      %2451 = vmatprep.subr.mxu0 0.0
      %2452 = vmatpush1.xpose.msra.mxu0 0.0
      %2453 = vmatprep.subr.mxu0 0.0
      %2454 = vmatpush1.xpose.msra.mxu0 0.0
      %2455 = vmatprep.subr.mxu0 0.0
      %2456 = vmatpush1.xpose.msra.mxu0 0.0
      %2457 = vmatprep.subr.mxu0 0.0
      %2458 = vmatpush1.xpose.msra.mxu0 0.0
      %2459 = vmatprep.subr.mxu0 0.0
      %2460 = vmatpush1.xpose.msra.mxu0 0.0
      %2461 = vmatprep.subr.mxu0 0.0
      %2462 = vmatpush1.xpose.msra.mxu0 0.0
      %2463 = vmatprep.subr.mxu0 0.0
      %2464 = vmatpush1.xpose.msra.mxu0 0.0
      %2465 = vmatprep.mubr.f32.mxu0 0.0
      %2466 = vmatmul.mubr.f32.gmra.mrb[0].mxu0 %v2397
      %v2467 = vpop.f32.mrb[0].mxu0
      %v2468 = vadd.f32 0.0, %v2467
      %v2469 = vpop.f32.mrb[0].mxu0
      %2470 = vdwg.mxu0
      %v2471 = vmul.f32 %v2468, 0.35355338
      %v2472 = vadd.f32 %v2471, %v799
      %v2473 = vsel %vm1095, %v2472, -inf
      %2474 = vmax.xlane.f32.xlu0 %v2473
      %v2475 = vpop.xlane.xlu0 %2474
      %v2476 = vsub.f32 %v2472, %v2475
      %v2477 = vmul.f32 %v2476, 1.442695
      %v2478 = vpow.pop %v2477
      %v2479 = vsel %vm1095, %v2478, 0.0
      %2480 = vadd.xlane.f32.xlu0 %v2479
      %v2481 = vpop.xlane.xlu0 %2480
      %v2482 = vrcp.pop %v2481
      %v2483 = vmul.f32 %v2478, %v2482
      %2484 = vrot.lane.b32.xlu0 %v2058, 80
      %v2485 = vpop.permute.xlu0 %2484
      %v2488 = vsel %vm1095, %v2483, 0
      %2490 = vmatprep.subr.mxu0 0.0
      %2491 = vmatpush1.msra.mxu0 %v2485
      %2492 = vmatprep.subr.mxu0 0.0
      %2493 = vmatpush1.msra.mxu0 0.0
      %2494 = vmatprep.subr.mxu0 0.0
      %2495 = vmatpush1.msra.mxu0 0.0
      %2496 = vmatprep.subr.mxu0 0.0
      %2497 = vmatpush1.msra.mxu0 0.0
      %2498 = vmatprep.subr.mxu0 0.0
      %2499 = vmatpush1.msra.mxu0 0.0
      %2500 = vmatprep.subr.mxu0 0.0
      %2501 = vmatpush1.msra.mxu0 0.0
      %2502 = vmatprep.subr.mxu0 0.0
      %2503 = vmatpush1.msra.mxu0 0.0
      %2504 = vmatprep.subr.mxu0 0.0
      %2505 = vmatpush1.msra.mxu0 0.0
      %2506 = vmatprep.subr.mxu0 0.0
      %2507 = vmatpush1.msra.mxu0 0.0
      %2508 = vmatprep.subr.mxu0 0.0
      %2509 = vmatpush1.msra.mxu0 0.0
      %2510 = vmatprep.subr.mxu0 0.0
      %2511 = vmatpush1.msra.mxu0 0.0
      %2512 = vmatprep.subr.mxu0 0.0
      %2513 = vmatpush1.msra.mxu0 0.0
      %2514 = vmatprep.subr.mxu0 0.0
      %2515 = vmatpush1.msra.mxu0 0.0
      %2516 = vmatprep.subr.mxu0 0.0
      %2517 = vmatpush1.msra.mxu0 0.0
      %2518 = vmatprep.subr.mxu0 0.0
      %2519 = vmatpush1.msra.mxu0 0.0
      %2520 = vmatprep.subr.mxu0 0.0
      %2521 = vmatpush1.msra.mxu0 0.0
      %2522 = vmatprep.subr.mxu0 0.0
      %2523 = vmatpush1.msra.mxu0 0.0
      %2524 = vmatprep.subr.mxu0 0.0
      %2525 = vmatpush1.msra.mxu0 0.0
      %2526 = vmatprep.subr.mxu0 0.0
      %2527 = vmatpush1.msra.mxu0 0.0
      %2528 = vmatprep.subr.mxu0 0.0
      %2529 = vmatpush1.msra.mxu0 0.0
      %2530 = vmatprep.subr.mxu0 0.0
      %2531 = vmatpush1.msra.mxu0 0.0
      %2532 = vmatprep.subr.mxu0 0.0
      %2533 = vmatpush1.msra.mxu0 0.0
      %2534 = vmatprep.subr.mxu0 0.0
      %2535 = vmatpush1.msra.mxu0 0.0
      %2536 = vmatprep.subr.mxu0 0.0
      %2537 = vmatpush1.msra.mxu0 0.0
      %2538 = vmatprep.subr.mxu0 0.0
      %2539 = vmatpush1.msra.mxu0 0.0
      %2540 = vmatprep.subr.mxu0 0.0
      %2541 = vmatpush1.msra.mxu0 0.0
      %2542 = vmatprep.subr.mxu0 0.0
      %2543 = vmatpush1.msra.mxu0 0.0
      %2544 = vmatprep.subr.mxu0 0.0
      %2545 = vmatpush1.msra.mxu0 0.0
      %2546 = vmatprep.subr.mxu0 0.0
      %2547 = vmatpush1.msra.mxu0 0.0
      %2548 = vmatprep.subr.mxu0 0.0
      %2549 = vmatpush1.msra.mxu0 0.0
      %2550 = vmatprep.subr.mxu0 0.0
      %2551 = vmatpush1.msra.mxu0 0.0
      %2552 = vmatprep.subr.mxu0 0.0
      %2553 = vmatpush1.msra.mxu0 0.0
      %2554 = vmatprep.mubr.f32.mxu0 0.0
      %2555 = vmatmul.mubr.f32.gmra.mrb[0].mxu0 %v2488
      %v2556 = vpop.f32.mrb[0].mxu0
      %v2557 = vadd.f32 0.0, %v2556
      %v2558 = vpop.f32.mrb[0].mxu0
      %2559 = vdwg.mxu0
      %2560 = vrot.lane.b32.xlu0 %v1974, 104
      %v2561 = vpop.permute.xlu0 %2560
      %2562 = vrot.lane.b32.xlu0 %v2058, 104
      %v2563 = vpop.permute.xlu0 %2562
      %v2564 = vsel %vm1095, %v2561, 0
      %v2566 = vsel %vm1095, %v2563, 0
      %2568 = vmatprep.subr.mxu0 0.0
      %2569 = vmatpush1.xpose.msra.mxu0 %v2566
      %2570 = vmatprep.subr.mxu0 0.0
      %2571 = vmatpush1.xpose.msra.mxu0 0.0
      %2572 = vmatprep.subr.mxu0 0.0
      %2573 = vmatpush1.xpose.msra.mxu0 0.0
      %2574 = vmatprep.subr.mxu0 0.0
      %2575 = vmatpush1.xpose.msra.mxu0 0.0
      %2576 = vmatprep.subr.mxu0 0.0
      %2577 = vmatpush1.xpose.msra.mxu0 0.0
      %2578 = vmatprep.subr.mxu0 0.0
      %2579 = vmatpush1.xpose.msra.mxu0 0.0
      %2580 = vmatprep.subr.mxu0 0.0
      %2581 = vmatpush1.xpose.msra.mxu0 0.0
      %2582 = vmatprep.subr.mxu0 0.0
      %2583 = vmatpush1.xpose.msra.mxu0 0.0
      %2584 = vmatprep.subr.mxu0 0.0
      %2585 = vmatpush1.xpose.msra.mxu0 0.0
      %2586 = vmatprep.subr.mxu0 0.0
      %2587 = vmatpush1.xpose.msra.mxu0 0.0
      %2588 = vmatprep.subr.mxu0 0.0
      %2589 = vmatpush1.xpose.msra.mxu0 0.0
      %2590 = vmatprep.subr.mxu0 0.0
      %2591 = vmatpush1.xpose.msra.mxu0 0.0
      %2592 = vmatprep.subr.mxu0 0.0
      %2593 = vmatpush1.xpose.msra.mxu0 0.0
      %2594 = vmatprep.subr.mxu0 0.0
      %2595 = vmatpush1.xpose.msra.mxu0 0.0
      %2596 = vmatprep.subr.mxu0 0.0
      %2597 = vmatpush1.xpose.msra.mxu0 0.0
      %2598 = vmatprep.subr.mxu0 0.0
      %2599 = vmatpush1.xpose.msra.mxu0 0.0
      %2600 = vmatprep.subr.mxu0 0.0
      %2601 = vmatpush1.xpose.msra.mxu0 0.0
      %2602 = vmatprep.subr.mxu0 0.0
      %2603 = vmatpush1.xpose.msra.mxu0 0.0
      %2604 = vmatprep.subr.mxu0 0.0
      %2605 = vmatpush1.xpose.msra.mxu0 0.0
      %2606 = vmatprep.subr.mxu0 0.0
      %2607 = vmatpush1.xpose.msra.mxu0 0.0
      %2608 = vmatprep.subr.mxu0 0.0
      %2609 = vmatpush1.xpose.msra.mxu0 0.0
      %2610 = vmatprep.subr.mxu0 0.0
      %2611 = vmatpush1.xpose.msra.mxu0 0.0
      %2612 = vmatprep.subr.mxu0 0.0
      %2613 = vmatpush1.xpose.msra.mxu0 0.0
      %2614 = vmatprep.subr.mxu0 0.0
      %2615 = vmatpush1.xpose.msra.mxu0 0.0
      %2616 = vmatprep.subr.mxu0 0.0
      %2617 = vmatpush1.xpose.msra.mxu0 0.0
      %2618 = vmatprep.subr.mxu0 0.0
      %2619 = vmatpush1.xpose.msra.mxu0 0.0
      %2620 = vmatprep.subr.mxu0 0.0
      %2621 = vmatpush1.xpose.msra.mxu0 0.0
      %2622 = vmatprep.subr.mxu0 0.0
      %2623 = vmatpush1.xpose.msra.mxu0 0.0
      %2624 = vmatprep.subr.mxu0 0.0
      %2625 = vmatpush1.xpose.msra.mxu0 0.0
      %2626 = vmatprep.subr.mxu0 0.0
      %2627 = vmatpush1.xpose.msra.mxu0 0.0
      %2628 = vmatprep.subr.mxu0 0.0
      %2629 = vmatpush1.xpose.msra.mxu0 0.0
      %2630 = vmatprep.subr.mxu0 0.0
      %2631 = vmatpush1.xpose.msra.mxu0 0.0
      %2632 = vmatprep.mubr.f32.mxu0 0.0
      %2633 = vmatmul.mubr.f32.gmra.mrb[0].mxu0 %v2564
      %v2634 = vpop.f32.mrb[0].mxu0
      %v2635 = vadd.f32 0.0, %v2634
      %v2636 = vpop.f32.mrb[0].mxu0
      %2637 = vdwg.mxu0
      %v2638 = vmul.f32 %v2635, 0.35355338
      %v2639 = vadd.f32 %v2638, %v799
      %v2640 = vsel %vm1095, %v2639, -inf
      %2641 = vmax.xlane.f32.xlu0 %v2640
      %v2642 = vpop.xlane.xlu0 %2641
      %v2643 = vsub.f32 %v2639, %v2642
      %v2644 = vmul.f32 %v2643, 1.442695
      %v2645 = vpow.pop %v2644
      %v2646 = vsel %vm1095, %v2645, 0.0
      %2647 = vadd.xlane.f32.xlu0 %v2646
      %v2648 = vpop.xlane.xlu0 %2647
      %v2649 = vrcp.pop %v2648
      %v2650 = vmul.f32 %v2645, %v2649
      %2651 = vrot.lane.b32.xlu0 %v2058, 72
      %v2652 = vpop.permute.xlu0 %2651
      %v2655 = vsel %vm1095, %v2650, 0
      %2657 = vmatprep.subr.mxu0 0.0
      %2658 = vmatpush1.msra.mxu0 %v2652
      %2659 = vmatprep.subr.mxu0 0.0
      %2660 = vmatpush1.msra.mxu0 0.0
      %2661 = vmatprep.subr.mxu0 0.0
      %2662 = vmatpush1.msra.mxu0 0.0
      %2663 = vmatprep.subr.mxu0 0.0
      %2664 = vmatpush1.msra.mxu0 0.0
      %2665 = vmatprep.subr.mxu0 0.0
      %2666 = vmatpush1.msra.mxu0 0.0
      %2667 = vmatprep.subr.mxu0 0.0
      %2668 = vmatpush1.msra.mxu0 0.0
      %2669 = vmatprep.subr.mxu0 0.0
      %2670 = vmatpush1.msra.mxu0 0.0
      %2671 = vmatprep.subr.mxu0 0.0
      %2672 = vmatpush1.msra.mxu0 0.0
      %2673 = vmatprep.subr.mxu0 0.0
      %2674 = vmatpush1.msra.mxu0 0.0
      %2675 = vmatprep.subr.mxu0 0.0
      %2676 = vmatpush1.msra.mxu0 0.0
      %2677 = vmatprep.subr.mxu0 0.0
      %2678 = vmatpush1.msra.mxu0 0.0
      %2679 = vmatprep.subr.mxu0 0.0
      %2680 = vmatpush1.msra.mxu0 0.0
      %2681 = vmatprep.subr.mxu0 0.0
      %2682 = vmatpush1.msra.mxu0 0.0
      %2683 = vmatprep.subr.mxu0 0.0
      %2684 = vmatpush1.msra.mxu0 0.0
      %2685 = vmatprep.subr.mxu0 0.0
      %2686 = vmatpush1.msra.mxu0 0.0
      %2687 = vmatprep.subr.mxu0 0.0
      %2688 = vmatpush1.msra.mxu0 0.0
      %2689 = vmatprep.subr.mxu0 0.0
      %2690 = vmatpush1.msra.mxu0 0.0
      %2691 = vmatprep.subr.mxu0 0.0
      %2692 = vmatpush1.msra.mxu0 0.0
      %2693 = vmatprep.subr.mxu0 0.0
      %2694 = vmatpush1.msra.mxu0 0.0
      %2695 = vmatprep.subr.mxu0 0.0
      %2696 = vmatpush1.msra.mxu0 0.0
      %2697 = vmatprep.subr.mxu0 0.0
      %2698 = vmatpush1.msra.mxu0 0.0
      %2699 = vmatprep.subr.mxu0 0.0
      %2700 = vmatpush1.msra.mxu0 0.0
      %2701 = vmatprep.subr.mxu0 0.0
      %2702 = vmatpush1.msra.mxu0 0.0
      %2703 = vmatprep.subr.mxu0 0.0
      %2704 = vmatpush1.msra.mxu0 0.0
      %2705 = vmatprep.subr.mxu0 0.0
      %2706 = vmatpush1.msra.mxu0 0.0
      %2707 = vmatprep.subr.mxu0 0.0
      %2708 = vmatpush1.msra.mxu0 0.0
      %2709 = vmatprep.subr.mxu0 0.0
      %2710 = vmatpush1.msra.mxu0 0.0
      %2711 = vmatprep.subr.mxu0 0.0
      %2712 = vmatpush1.msra.mxu0 0.0
      %2713 = vmatprep.subr.mxu0 0.0
      %2714 = vmatpush1.msra.mxu0 0.0
      %2715 = vmatprep.subr.mxu0 0.0
      %2716 = vmatpush1.msra.mxu0 0.0
      %2717 = vmatprep.subr.mxu0 0.0
      %2718 = vmatpush1.msra.mxu0 0.0
      %2719 = vmatprep.subr.mxu0 0.0
      %2720 = vmatpush1.msra.mxu0 0.0
      %2721 = vmatprep.mubr.f32.mxu0 0.0
      %2722 = vmatmul.mubr.f32.gmra.mrb[0].mxu0 %v2655
      %v2723 = vpop.f32.mrb[0].mxu0
      %v2724 = vadd.f32 0.0, %v2723
      %v2725 = vpop.f32.mrb[0].mxu0
      %2726 = vdwg.mxu0
      %2728 = vrot.lane.b32.xlu0 %v2390, 8
      %v2729 = vpop.permute.xlu0 %2728
      %2732 = vrot.lane.b32.xlu0 %v2557, 16
      %v2733 = vpop.permute.xlu0 %2732
      %2736 = vrot.lane.b32.xlu0 %v2724, 24
      %v2737 = vpop.permute.xlu0 %2736
      %v2739 = vsel %vm1095, %v2223, %v2729
      %v2740 = vsel %vm1773, %v2739, %v2733
      %v2741 = vsel %vm1775, %v2740, %v2737
      %v2742 = vld [vmem:[%s17] sm:$0xff]
      %v2743 = vld [vmem:[%s17 + $0x8] sm:$0xff]
      %v2744 = vld [vmem:[%s17 + $0x10] sm:$0xff]
      %v2745 = vld [vmem:[%s17 + $0x18] sm:$0xff]
      %v2746 = vld [vmem:[%s18] sm:$0x1]
      %v2748 = vlaneseq
      %v2749 = vshrl.u32 %v2748, 7
      %v2750 = vsub.s32 0, %v2749
      %v2751 = vrot.slane %v2746, %v2750
      %v2754 = vsel %vm979, %v2741, 0
      %2756 = vmatprep.subr.mxu0 0.0
      %2757 = vmatpush1.msra.mxu0 %v2742
      %2758 = vmatprep.subr.mxu0 0.0
      %2759 = vmatpush1.msra.mxu0 %v2743
      %2760 = vmatprep.subr.mxu0 0.0
      %2761 = vmatpush1.msra.mxu0 %v2744
      %2762 = vmatprep.subr.mxu0 0.0
      %2763 = vmatpush1.msra.mxu0 %v2745
      %2764 = vmatprep.subr.mxu0 0.0
      %2765 = vmatpush1.msra.mxu0 0.0
      %2766 = vmatprep.subr.mxu0 0.0
      %2767 = vmatpush1.msra.mxu0 0.0
      %2768 = vmatprep.subr.mxu0 0.0
      %2769 = vmatpush1.msra.mxu0 0.0
      %2770 = vmatprep.subr.mxu0 0.0
      %2771 = vmatpush1.msra.mxu0 0.0
      %2772 = vmatprep.subr.mxu0 0.0
      %2773 = vmatpush1.msra.mxu0 0.0
      %2774 = vmatprep.subr.mxu0 0.0
      %2775 = vmatpush1.msra.mxu0 0.0
      %2776 = vmatprep.subr.mxu0 0.0
      %2777 = vmatpush1.msra.mxu0 0.0
      %2778 = vmatprep.subr.mxu0 0.0
      %2779 = vmatpush1.msra.mxu0 0.0
      %2780 = vmatprep.subr.mxu0 0.0
      %2781 = vmatpush1.msra.mxu0 0.0
      %2782 = vmatprep.subr.mxu0 0.0
      %2783 = vmatpush1.msra.mxu0 0.0
      %2784 = vmatprep.subr.mxu0 0.0
      %2785 = vmatpush1.msra.mxu0 0.0
      %2786 = vmatprep.subr.mxu0 0.0
      %2787 = vmatpush1.msra.mxu0 0.0
      %2788 = vmatprep.subr.mxu0 0.0
      %2789 = vmatpush1.msra.mxu0 0.0
      %2790 = vmatprep.subr.mxu0 0.0
      %2791 = vmatpush1.msra.mxu0 0.0
      %2792 = vmatprep.subr.mxu0 0.0
      %2793 = vmatpush1.msra.mxu0 0.0
      %2794 = vmatprep.subr.mxu0 0.0
      %2795 = vmatpush1.msra.mxu0 0.0
      %2796 = vmatprep.subr.mxu0 0.0
      %2797 = vmatpush1.msra.mxu0 0.0
      %2798 = vmatprep.subr.mxu0 0.0
      %2799 = vmatpush1.msra.mxu0 0.0
      %2800 = vmatprep.subr.mxu0 0.0
      %2801 = vmatpush1.msra.mxu0 0.0
      %2802 = vmatprep.subr.mxu0 0.0
      %2803 = vmatpush1.msra.mxu0 0.0
      %2804 = vmatprep.subr.mxu0 0.0
      %2805 = vmatpush1.msra.mxu0 0.0
      %2806 = vmatprep.subr.mxu0 0.0
      %2807 = vmatpush1.msra.mxu0 0.0
      %2808 = vmatprep.subr.mxu0 0.0
      %2809 = vmatpush1.msra.mxu0 0.0
      %2810 = vmatprep.subr.mxu0 0.0
      %2811 = vmatpush1.msra.mxu0 0.0
      %2812 = vmatprep.subr.mxu0 0.0
      %2813 = vmatpush1.msra.mxu0 0.0
      %2814 = vmatprep.subr.mxu0 0.0
      %2815 = vmatpush1.msra.mxu0 0.0
      %2816 = vmatprep.subr.mxu0 0.0
      %2817 = vmatpush1.msra.mxu0 0.0
      %2818 = vmatprep.subr.mxu0 0.0
      %2819 = vmatpush1.msra.mxu0 0.0
      %2820 = vmatprep.mubr.f32.mxu0 0.0
      %2821 = vmatmul.mubr.f32.gmra.mrb[0].mxu0 %v2754
      %v2822 = vpop.f32.mrb[0].mxu0
      %v2823 = vadd.f32 %v2751, %v2822
      %v2824 = vpop.f32.mrb[0].mxu0
      %2825 = vdwg.mxu0
      %v2826 = vadd.f32 %v1892, %v2823
      %s2827 = scalar_lea.vmem %s7, 2
      %v2828 = vld [vmem:[%s2827] sm:$0x1]
      %s2829 = scalar_lea.vmem %s8, 2
      %v2830 = vld [vmem:[%s2829] sm:$0x1]
      %v2831 = vsel %vm979, %v2826, 0.0
      %2832 = vadd.xlane.f32.xlu0 %v2831
      %v2833 = vpop.xlane.xlu0 %2832
      %v2834 = vmul.f32 %v2833, %v983
      %v2835 = vsub.f32 %v2826, %v2834
      %v2836 = vmul.f32 %v2835, %v2835
      %v2837 = vsel %vm979, %v2836, 0.0
      %2838 = vadd.xlane.f32.xlu0 %v2837
      %v2839 = vpop.xlane.xlu0 %2838
      %v2840 = vmul.f32 %v2839, %v983
      %v2841 = vadd.f32 %v2840, 1e-05
      %v2842 = vrsqrt.pop %v2841
      %v2843 = vmul.f32 %v2835, %v2842
      %v2845 = vlaneseq
      %v2846 = vshrl.u32 %v2845, 7
      %v2847 = vsub.s32 0, %v2846
      %v2848 = vrot.slane %v2828, %v2847
      %v2850 = vmul.f32 %v2843, %v2848
      %v2852 = vlaneseq
      %v2853 = vshrl.u32 %v2852, 7
      %v2854 = vsub.s32 0, %v2853
      %v2855 = vrot.slane %v2830, %v2854
      %v2857 = vadd.f32 %v2850, %v2855
      %v2858 = vld [vmem:[%s19] sm:$0xff]
      %v2859 = vld [vmem:[%s19 + $0x8] sm:$0xff]
      %v2860 = vld [vmem:[%s19 + $0x10] sm:$0xff]
      %v2861 = vld [vmem:[%s19 + $0x18] sm:$0xff]
      %v2862 = vld [vmem:[%s20] sm:$0x1]
      %v2864 = vlaneseq
      %v2865 = vshrl.u32 %v2864, 7
      %v2866 = vsub.s32 0, %v2865
      %v2867 = vrot.slane %v2862, %v2866
      %v2870 = vsel %vm979, %v2857, 0
      %2872 = vmatprep.subr.mxu0 0.0
      %2873 = vmatpush1.msra.mxu0 %v2858
      %2874 = vmatprep.subr.mxu0 0.0
      %2875 = vmatpush1.msra.mxu0 %v2859
      %2876 = vmatprep.subr.mxu0 0.0
      %2877 = vmatpush1.msra.mxu0 %v2860
      %2878 = vmatprep.subr.mxu0 0.0
      %2879 = vmatpush1.msra.mxu0 %v2861
      %2880 = vmatprep.subr.mxu0 0.0
      %2881 = vmatpush1.msra.mxu0 0.0
      %2882 = vmatprep.subr.mxu0 0.0
      %2883 = vmatpush1.msra.mxu0 0.0
      %2884 = vmatprep.subr.mxu0 0.0
      %2885 = vmatpush1.msra.mxu0 0.0
      %2886 = vmatprep.subr.mxu0 0.0
      %2887 = vmatpush1.msra.mxu0 0.0
      %2888 = vmatprep.subr.mxu0 0.0
      %2889 = vmatpush1.msra.mxu0 0.0
      %2890 = vmatprep.subr.mxu0 0.0
      %2891 = vmatpush1.msra.mxu0 0.0
      %2892 = vmatprep.subr.mxu0 0.0
      %2893 = vmatpush1.msra.mxu0 0.0
      %2894 = vmatprep.subr.mxu0 0.0
      %2895 = vmatpush1.msra.mxu0 0.0
      %2896 = vmatprep.subr.mxu0 0.0
      %2897 = vmatpush1.msra.mxu0 0.0
      %2898 = vmatprep.subr.mxu0 0.0
      %2899 = vmatpush1.msra.mxu0 0.0
      %2900 = vmatprep.subr.mxu0 0.0
      %2901 = vmatpush1.msra.mxu0 0.0
      %2902 = vmatprep.subr.mxu0 0.0
      %2903 = vmatpush1.msra.mxu0 0.0
      %2904 = vmatprep.subr.mxu0 0.0
      %2905 = vmatpush1.msra.mxu0 0.0
      %2906 = vmatprep.subr.mxu0 0.0
      %2907 = vmatpush1.msra.mxu0 0.0
      %2908 = vmatprep.subr.mxu0 0.0
      %2909 = vmatpush1.msra.mxu0 0.0
      %2910 = vmatprep.subr.mxu0 0.0
      %2911 = vmatpush1.msra.mxu0 0.0
      %2912 = vmatprep.subr.mxu0 0.0
      %2913 = vmatpush1.msra.mxu0 0.0
      %2914 = vmatprep.subr.mxu0 0.0
      %2915 = vmatpush1.msra.mxu0 0.0
      %2916 = vmatprep.subr.mxu0 0.0
      %2917 = vmatpush1.msra.mxu0 0.0
      %2918 = vmatprep.subr.mxu0 0.0
      %2919 = vmatpush1.msra.mxu0 0.0
      %2920 = vmatprep.subr.mxu0 0.0
      %2921 = vmatpush1.msra.mxu0 0.0
      %2922 = vmatprep.subr.mxu0 0.0
      %2923 = vmatpush1.msra.mxu0 0.0
      %2924 = vmatprep.subr.mxu0 0.0
      %2925 = vmatpush1.msra.mxu0 0.0
      %2926 = vmatprep.subr.mxu0 0.0
      %2927 = vmatpush1.msra.mxu0 0.0
      %2928 = vmatprep.subr.mxu0 0.0
      %2929 = vmatpush1.msra.mxu0 0.0
      %2930 = vmatprep.subr.mxu0 0.0
      %2931 = vmatpush1.msra.mxu0 0.0
      %2932 = vmatprep.subr.mxu0 0.0
      %2933 = vmatpush1.msra.mxu0 0.0
      %2934 = vmatprep.subr.mxu0 0.0
      %2935 = vmatpush1.msra.mxu0 0.0
      %2936 = vmatprep.mubr.f32.mxu0 0.0
      %2937 = vmatmul.mubr.f32.gmra.mrb[0].mxu0 %v2870
      %v2938 = vpop.f32.mrb[0].mxu0
      %v2939 = vadd.f32 %v2867, %v2938
      %v2940 = vpop.f32.mrb[0].mxu0
      %2941 = vdwg.mxu0
      %v2942 = vmax.f32 %v2939, 0.0
      %v2943 = vld [vmem:[%s21] sm:$0xff]
      %v2944 = vld [vmem:[%s21 + $0x8] sm:$0xff]
      %v2945 = vld [vmem:[%s21 + $0x10] sm:$0xff]
      %v2946 = vld [vmem:[%s21 + $0x18] sm:$0xff]
      %v2947 = vld [vmem:[%s21 + $0x20] sm:$0xff]
      %v2948 = vld [vmem:[%s21 + $0x28] sm:$0xff]
      %v2949 = vld [vmem:[%s21 + $0x30] sm:$0xff]
      %v2950 = vld [vmem:[%s21 + $0x38] sm:$0xff]
      %vm2951 = vcmask 523264
      %v2953 = vsel %vm2951, %v2942, 0
      %2955 = vmatprep.subr.mxu0 0.0
      %2956 = vmatpush1.msra.mxu0 %v2943
      %2957 = vmatprep.subr.mxu0 0.0
      %2958 = vmatpush1.msra.mxu0 %v2944
      %2959 = vmatprep.subr.mxu0 0.0
      %2960 = vmatpush1.msra.mxu0 %v2945
      %2961 = vmatprep.subr.mxu0 0.0
      %2962 = vmatpush1.msra.mxu0 %v2946
      %2963 = vmatprep.subr.mxu0 0.0
      %2964 = vmatpush1.msra.mxu0 %v2947
      %2965 = vmatprep.subr.mxu0 0.0
      %2966 = vmatpush1.msra.mxu0 %v2948
      %2967 = vmatprep.subr.mxu0 0.0
      %2968 = vmatpush1.msra.mxu0 %v2949
      %2969 = vmatprep.subr.mxu0 0.0
      %2970 = vmatpush1.msra.mxu0 %v2950
      %2971 = vmatprep.subr.mxu0 0.0
      %2972 = vmatpush1.msra.mxu0 0.0
      %2973 = vmatprep.subr.mxu0 0.0
      %2974 = vmatpush1.msra.mxu0 0.0
      %2975 = vmatprep.subr.mxu0 0.0
      %2976 = vmatpush1.msra.mxu0 0.0
      %2977 = vmatprep.subr.mxu0 0.0
      %2978 = vmatpush1.msra.mxu0 0.0
      %2979 = vmatprep.subr.mxu0 0.0
      %2980 = vmatpush1.msra.mxu0 0.0
      %2981 = vmatprep.subr.mxu0 0.0
      %2982 = vmatpush1.msra.mxu0 0.0
      %2983 = vmatprep.subr.mxu0 0.0
      %2984 = vmatpush1.msra.mxu0 0.0
      %2985 = vmatprep.subr.mxu0 0.0
      %2986 = vmatpush1.msra.mxu0 0.0
      %2987 = vmatprep.subr.mxu0 0.0
      %2988 = vmatpush1.msra.mxu0 0.0
      %2989 = vmatprep.subr.mxu0 0.0
      %2990 = vmatpush1.msra.mxu0 0.0
      %2991 = vmatprep.subr.mxu0 0.0
      %2992 = vmatpush1.msra.mxu0 0.0
      %2993 = vmatprep.subr.mxu0 0.0
      %2994 = vmatpush1.msra.mxu0 0.0
      %2995 = vmatprep.subr.mxu0 0.0
      %2996 = vmatpush1.msra.mxu0 0.0
      %2997 = vmatprep.subr.mxu0 0.0
      %2998 = vmatpush1.msra.mxu0 0.0
      %2999 = vmatprep.subr.mxu0 0.0
      %3000 = vmatpush1.msra.mxu0 0.0
      %3001 = vmatprep.subr.mxu0 0.0
      %3002 = vmatpush1.msra.mxu0 0.0
      %3003 = vmatprep.subr.mxu0 0.0
      %3004 = vmatpush1.msra.mxu0 0.0
      %3005 = vmatprep.subr.mxu0 0.0
      %3006 = vmatpush1.msra.mxu0 0.0
      %3007 = vmatprep.subr.mxu0 0.0
      %3008 = vmatpush1.msra.mxu0 0.0
      %3009 = vmatprep.subr.mxu0 0.0
      %3010 = vmatpush1.msra.mxu0 0.0
      %3011 = vmatprep.subr.mxu0 0.0
      %3012 = vmatpush1.msra.mxu0 0.0
      %3013 = vmatprep.subr.mxu0 0.0
      %3014 = vmatpush1.msra.mxu0 0.0
      %3015 = vmatprep.subr.mxu0 0.0
      %3016 = vmatpush1.msra.mxu0 0.0
      %3017 = vmatprep.subr.mxu0 0.0
      %3018 = vmatpush1.msra.mxu0 0.0
      %3019 = vmatprep.mubr.f32.mxu0 0.0
      %3020 = vmatmul.mubr.f32.gmra.mrb[0].mxu0 %v2953
      %v3021 = vpop.f32.mrb[0].mxu0
      %v3022 = vadd.f32 0.0, %v3021
      %v3023 = vpop.f32.mrb[0].mxu0
      %3024 = vdwg.mxu0
      %v3025 = vadd.f32 %v2857, %v3022
      %v3026 = vld [vmem:[%s22] sm:$0x1]
      %v3028 = vlaneseq
      %v3029 = vshrl.u32 %v3028, 7
      %v3030 = vsub.s32 0, %v3029
      %v3031 = vrot.slane %v3026, %v3030
      %v3033 = vadd.f32 %v3025, %v3031
      %s3034 = scalar_lea.vmem %s7, 3
      %v3035 = vld [vmem:[%s3034] sm:$0x1]
      %s3036 = scalar_lea.vmem %s8, 3
      %v3037 = vld [vmem:[%s3036] sm:$0x1]
      %v3038 = vsel %vm979, %v3033, 0.0
      %3039 = vadd.xlane.f32.xlu0 %v3038
      %v3040 = vpop.xlane.xlu0 %3039
      %v3041 = vmul.f32 %v3040, %v983
      %v3042 = vsub.f32 %v3033, %v3041
      %v3043 = vmul.f32 %v3042, %v3042
      %v3044 = vsel %vm979, %v3043, 0.0
      %3045 = vadd.xlane.f32.xlu0 %v3044
      %v3046 = vpop.xlane.xlu0 %3045
      %v3047 = vmul.f32 %v3046, %v983
      %v3048 = vadd.f32 %v3047, 1e-05
      %v3049 = vrsqrt.pop %v3048
      %v3050 = vmul.f32 %v3042, %v3049
      %v3052 = vlaneseq
      %v3053 = vshrl.u32 %v3052, 7
      %v3054 = vsub.s32 0, %v3053
      %v3055 = vrot.slane %v3035, %v3054
      %v3057 = vmul.f32 %v3050, %v3055
      %v3059 = vlaneseq
      %v3060 = vshrl.u32 %v3059, 7
      %v3061 = vsub.s32 0, %v3060
      %v3062 = vrot.slane %v3037, %v3061
      %v3064 = vadd.f32 %v3057, %v3062
      %s3065 = scalar_lea.vmem %s9, 32
      %v3066 = vld [vmem:[%s3065] sm:$0xff]
      %v3067 = vld [vmem:[%s3065 + $0x8] sm:$0xff]
      %v3068 = vld [vmem:[%s3065 + $0x10] sm:$0xff]
      %v3069 = vld [vmem:[%s3065 + $0x18] sm:$0xff]
      %s3070 = scalar_lea.vmem %s10, 1
      %v3071 = vld [vmem:[%s3070] sm:$0x1]
      %v3073 = vlaneseq
      %v3074 = vshrl.u32 %v3073, 7
      %v3075 = vsub.s32 0, %v3074
      %v3076 = vrot.slane %v3071, %v3075
      %v3079 = vsel %vm979, %v3064, 0
      %3081 = vmatprep.subr.mxu0 0.0
      %3082 = vmatpush1.msra.mxu0 %v3066
      %3083 = vmatprep.subr.mxu0 0.0
      %3084 = vmatpush1.msra.mxu0 %v3067
      %3085 = vmatprep.subr.mxu0 0.0
      %3086 = vmatpush1.msra.mxu0 %v3068
      %3087 = vmatprep.subr.mxu0 0.0
      %3088 = vmatpush1.msra.mxu0 %v3069
      %3089 = vmatprep.subr.mxu0 0.0
      %3090 = vmatpush1.msra.mxu0 0.0
      %3091 = vmatprep.subr.mxu0 0.0
      %3092 = vmatpush1.msra.mxu0 0.0
      %3093 = vmatprep.subr.mxu0 0.0
      %3094 = vmatpush1.msra.mxu0 0.0
      %3095 = vmatprep.subr.mxu0 0.0
      %3096 = vmatpush1.msra.mxu0 0.0
      %3097 = vmatprep.subr.mxu0 0.0
      %3098 = vmatpush1.msra.mxu0 0.0
      %3099 = vmatprep.subr.mxu0 0.0
      %3100 = vmatpush1.msra.mxu0 0.0
      %3101 = vmatprep.subr.mxu0 0.0
      %3102 = vmatpush1.msra.mxu0 0.0
      %3103 = vmatprep.subr.mxu0 0.0
      %3104 = vmatpush1.msra.mxu0 0.0
      %3105 = vmatprep.subr.mxu0 0.0
      %3106 = vmatpush1.msra.mxu0 0.0
      %3107 = vmatprep.subr.mxu0 0.0
      %3108 = vmatpush1.msra.mxu0 0.0
      %3109 = vmatprep.subr.mxu0 0.0
      %3110 = vmatpush1.msra.mxu0 0.0
      %3111 = vmatprep.subr.mxu0 0.0
      %3112 = vmatpush1.msra.mxu0 0.0
      %3113 = vmatprep.subr.mxu0 0.0
      %3114 = vmatpush1.msra.mxu0 0.0
      %3115 = vmatprep.subr.mxu0 0.0
      %3116 = vmatpush1.msra.mxu0 0.0
      %3117 = vmatprep.subr.mxu0 0.0
      %3118 = vmatpush1.msra.mxu0 0.0
      %3119 = vmatprep.subr.mxu0 0.0
      %3120 = vmatpush1.msra.mxu0 0.0
      %3121 = vmatprep.subr.mxu0 0.0
      %3122 = vmatpush1.msra.mxu0 0.0
      %3123 = vmatprep.subr.mxu0 0.0
      %3124 = vmatpush1.msra.mxu0 0.0
      %3125 = vmatprep.subr.mxu0 0.0
      %3126 = vmatpush1.msra.mxu0 0.0
      %3127 = vmatprep.subr.mxu0 0.0
      %3128 = vmatpush1.msra.mxu0 0.0
      %3129 = vmatprep.subr.mxu0 0.0
      %3130 = vmatpush1.msra.mxu0 0.0
      %3131 = vmatprep.subr.mxu0 0.0
      %3132 = vmatpush1.msra.mxu0 0.0
      %3133 = vmatprep.subr.mxu0 0.0
      %3134 = vmatpush1.msra.mxu0 0.0
      %3135 = vmatprep.subr.mxu0 0.0
      %3136 = vmatpush1.msra.mxu0 0.0
      %3137 = vmatprep.subr.mxu0 0.0
      %3138 = vmatpush1.msra.mxu0 0.0
      %3139 = vmatprep.subr.mxu0 0.0
      %3140 = vmatpush1.msra.mxu0 0.0
      %3141 = vmatprep.subr.mxu0 0.0
      %3142 = vmatpush1.msra.mxu0 0.0
      %3143 = vmatprep.subr.mxu0 0.0
      %3144 = vmatpush1.msra.mxu0 0.0
      %3145 = vmatprep.mubr.f32.mxu0 0.0
      %3146 = vmatmul.mubr.f32.gmra.mrb[0].mxu0 %v3079
      %v3147 = vpop.f32.mrb[0].mxu0
      %v3148 = vadd.f32 %v3076, %v3147
      %v3149 = vpop.f32.mrb[0].mxu0
      %3150 = vdwg.mxu0
      %3152 = vrot.lane.b32.xlu0 %v3148, 96
      %v3153 = vpop.permute.xlu0 %3152
      %v3154 = vsel %vm1095, %v3148, 0
      %v3156 = vsel %vm1095, %v3153, 0
      %3158 = vmatprep.subr.mxu0 0.0
      %3159 = vmatpush1.xpose.msra.mxu0 %v3156
      %3160 = vmatprep.subr.mxu0 0.0
      %3161 = vmatpush1.xpose.msra.mxu0 0.0
      %3162 = vmatprep.subr.mxu0 0.0
      %3163 = vmatpush1.xpose.msra.mxu0 0.0
      %3164 = vmatprep.subr.mxu0 0.0
      %3165 = vmatpush1.xpose.msra.mxu0 0.0
      %3166 = vmatprep.subr.mxu0 0.0
      %3167 = vmatpush1.xpose.msra.mxu0 0.0
      %3168 = vmatprep.subr.mxu0 0.0
      %3169 = vmatpush1.xpose.msra.mxu0 0.0
      %3170 = vmatprep.subr.mxu0 0.0
      %3171 = vmatpush1.xpose.msra.mxu0 0.0
      %3172 = vmatprep.subr.mxu0 0.0
      %3173 = vmatpush1.xpose.msra.mxu0 0.0
      %3174 = vmatprep.subr.mxu0 0.0
      %3175 = vmatpush1.xpose.msra.mxu0 0.0
      %3176 = vmatprep.subr.mxu0 0.0
      %3177 = vmatpush1.xpose.msra.mxu0 0.0
      %3178 = vmatprep.subr.mxu0 0.0
      %3179 = vmatpush1.xpose.msra.mxu0 0.0
      %3180 = vmatprep.subr.mxu0 0.0
      %3181 = vmatpush1.xpose.msra.mxu0 0.0
      %3182 = vmatprep.subr.mxu0 0.0
      %3183 = vmatpush1.xpose.msra.mxu0 0.0
      %3184 = vmatprep.subr.mxu0 0.0
      %3185 = vmatpush1.xpose.msra.mxu0 0.0
      %3186 = vmatprep.subr.mxu0 0.0
      %3187 = vmatpush1.xpose.msra.mxu0 0.0
      %3188 = vmatprep.subr.mxu0 0.0
      %3189 = vmatpush1.xpose.msra.mxu0 0.0
      %3190 = vmatprep.subr.mxu0 0.0
      %3191 = vmatpush1.xpose.msra.mxu0 0.0
      %3192 = vmatprep.subr.mxu0 0.0
      %3193 = vmatpush1.xpose.msra.mxu0 0.0
      %3194 = vmatprep.subr.mxu0 0.0
      %3195 = vmatpush1.xpose.msra.mxu0 0.0
      %3196 = vmatprep.subr.mxu0 0.0
      %3197 = vmatpush1.xpose.msra.mxu0 0.0
      %3198 = vmatprep.subr.mxu0 0.0
      %3199 = vmatpush1.xpose.msra.mxu0 0.0
      %3200 = vmatprep.subr.mxu0 0.0
      %3201 = vmatpush1.xpose.msra.mxu0 0.0
      %3202 = vmatprep.subr.mxu0 0.0
      %3203 = vmatpush1.xpose.msra.mxu0 0.0
      %3204 = vmatprep.subr.mxu0 0.0
      %3205 = vmatpush1.xpose.msra.mxu0 0.0
      %3206 = vmatprep.subr.mxu0 0.0
      %3207 = vmatpush1.xpose.msra.mxu0 0.0
      %3208 = vmatprep.subr.mxu0 0.0
      %3209 = vmatpush1.xpose.msra.mxu0 0.0
      %3210 = vmatprep.subr.mxu0 0.0
      %3211 = vmatpush1.xpose.msra.mxu0 0.0
      %3212 = vmatprep.subr.mxu0 0.0
      %3213 = vmatpush1.xpose.msra.mxu0 0.0
      %3214 = vmatprep.subr.mxu0 0.0
      %3215 = vmatpush1.xpose.msra.mxu0 0.0
      %3216 = vmatprep.subr.mxu0 0.0
      %3217 = vmatpush1.xpose.msra.mxu0 0.0
      %3218 = vmatprep.subr.mxu0 0.0
      %3219 = vmatpush1.xpose.msra.mxu0 0.0
      %3220 = vmatprep.subr.mxu0 0.0
      %3221 = vmatpush1.xpose.msra.mxu0 0.0
      %3222 = vmatprep.mubr.f32.mxu0 0.0
      %3223 = vmatmul.mubr.f32.gmra.mrb[0].mxu0 %v3154
      %v3224 = vpop.f32.mrb[0].mxu0
      %v3225 = vadd.f32 0.0, %v3224
      %v3226 = vpop.f32.mrb[0].mxu0
      %3227 = vdwg.mxu0
      %v3228 = vmul.f32 %v3225, 0.35355338
      %v3229 = vadd.f32 %v3228, %v799
      %v3230 = vsel %vm1095, %v3229, -inf
      %3231 = vmax.xlane.f32.xlu0 %v3230
      %v3232 = vpop.xlane.xlu0 %3231
      %v3233 = vsub.f32 %v3229, %v3232
      %v3234 = vmul.f32 %v3233, 1.442695
      %v3235 = vpow.pop %v3234
      %v3236 = vsel %vm1095, %v3235, 0.0
      %3237 = vadd.xlane.f32.xlu0 %v3236
      %v3238 = vpop.xlane.xlu0 %3237
      %v3239 = vrcp.pop %v3238
      %v3240 = vmul.f32 %v3235, %v3239
      %3241 = vrot.lane.b32.xlu0 %v3148, 64
      %v3242 = vpop.permute.xlu0 %3241
      %v3245 = vsel %vm1095, %v3240, 0
      %3247 = vmatprep.subr.mxu0 0.0
      %3248 = vmatpush1.msra.mxu0 %v3242
      %3249 = vmatprep.subr.mxu0 0.0
      %3250 = vmatpush1.msra.mxu0 0.0
      %3251 = vmatprep.subr.mxu0 0.0
      %3252 = vmatpush1.msra.mxu0 0.0
      %3253 = vmatprep.subr.mxu0 0.0
      %3254 = vmatpush1.msra.mxu0 0.0
      %3255 = vmatprep.subr.mxu0 0.0
      %3256 = vmatpush1.msra.mxu0 0.0
      %3257 = vmatprep.subr.mxu0 0.0
      %3258 = vmatpush1.msra.mxu0 0.0
      %3259 = vmatprep.subr.mxu0 0.0
      %3260 = vmatpush1.msra.mxu0 0.0
      %3261 = vmatprep.subr.mxu0 0.0
      %3262 = vmatpush1.msra.mxu0 0.0
      %3263 = vmatprep.subr.mxu0 0.0
      %3264 = vmatpush1.msra.mxu0 0.0
      %3265 = vmatprep.subr.mxu0 0.0
      %3266 = vmatpush1.msra.mxu0 0.0
      %3267 = vmatprep.subr.mxu0 0.0
      %3268 = vmatpush1.msra.mxu0 0.0
      %3269 = vmatprep.subr.mxu0 0.0
      %3270 = vmatpush1.msra.mxu0 0.0
      %3271 = vmatprep.subr.mxu0 0.0
      %3272 = vmatpush1.msra.mxu0 0.0
      %3273 = vmatprep.subr.mxu0 0.0
      %3274 = vmatpush1.msra.mxu0 0.0
      %3275 = vmatprep.subr.mxu0 0.0
      %3276 = vmatpush1.msra.mxu0 0.0
      %3277 = vmatprep.subr.mxu0 0.0
      %3278 = vmatpush1.msra.mxu0 0.0
      %3279 = vmatprep.subr.mxu0 0.0
      %3280 = vmatpush1.msra.mxu0 0.0
      %3281 = vmatprep.subr.mxu0 0.0
      %3282 = vmatpush1.msra.mxu0 0.0
      %3283 = vmatprep.subr.mxu0 0.0
      %3284 = vmatpush1.msra.mxu0 0.0
      %3285 = vmatprep.subr.mxu0 0.0
      %3286 = vmatpush1.msra.mxu0 0.0
      %3287 = vmatprep.subr.mxu0 0.0
      %3288 = vmatpush1.msra.mxu0 0.0
      %3289 = vmatprep.subr.mxu0 0.0
      %3290 = vmatpush1.msra.mxu0 0.0
      %3291 = vmatprep.subr.mxu0 0.0
      %3292 = vmatpush1.msra.mxu0 0.0
      %3293 = vmatprep.subr.mxu0 0.0
      %3294 = vmatpush1.msra.mxu0 0.0
      %3295 = vmatprep.subr.mxu0 0.0
      %3296 = vmatpush1.msra.mxu0 0.0
      %3297 = vmatprep.subr.mxu0 0.0
      %3298 = vmatpush1.msra.mxu0 0.0
      %3299 = vmatprep.subr.mxu0 0.0
      %3300 = vmatpush1.msra.mxu0 0.0
      %3301 = vmatprep.subr.mxu0 0.0
      %3302 = vmatpush1.msra.mxu0 0.0
      %3303 = vmatprep.subr.mxu0 0.0
      %3304 = vmatpush1.msra.mxu0 0.0
      %3305 = vmatprep.subr.mxu0 0.0
      %3306 = vmatpush1.msra.mxu0 0.0
      %3307 = vmatprep.subr.mxu0 0.0
      %3308 = vmatpush1.msra.mxu0 0.0
      %3309 = vmatprep.subr.mxu0 0.0
      %3310 = vmatpush1.msra.mxu0 0.0
      %3311 = vmatprep.mubr.f32.mxu0 0.0
      %3312 = vmatmul.mubr.f32.gmra.mrb[0].mxu0 %v3245
      %v3313 = vpop.f32.mrb[0].mxu0
      %v3314 = vadd.f32 0.0, %v3313
      %v3315 = vpop.f32.mrb[0].mxu0
      %3316 = vdwg.mxu0
      %3317 = vrot.lane.b32.xlu0 %v3148, 120
      %v3318 = vpop.permute.xlu0 %3317
      %3319 = vrot.lane.b32.xlu0 %v3148, 88
      %v3320 = vpop.permute.xlu0 %3319
      %v3321 = vsel %vm1095, %v3318, 0
      %v3323 = vsel %vm1095, %v3320, 0
      %3325 = vmatprep.subr.mxu0 0.0
      %3326 = vmatpush1.xpose.msra.mxu0 %v3323
      %3327 = vmatprep.subr.mxu0 0.0
      %3328 = vmatpush1.xpose.msra.mxu0 0.0
      %3329 = vmatprep.subr.mxu0 0.0
      %3330 = vmatpush1.xpose.msra.mxu0 0.0
      %3331 = vmatprep.subr.mxu0 0.0
      %3332 = vmatpush1.xpose.msra.mxu0 0.0
      %3333 = vmatprep.subr.mxu0 0.0
      %3334 = vmatpush1.xpose.msra.mxu0 0.0
      %3335 = vmatprep.subr.mxu0 0.0
      %3336 = vmatpush1.xpose.msra.mxu0 0.0
      %3337 = vmatprep.subr.mxu0 0.0
      %3338 = vmatpush1.xpose.msra.mxu0 0.0
      %3339 = vmatprep.subr.mxu0 0.0
      %3340 = vmatpush1.xpose.msra.mxu0 0.0
      %3341 = vmatprep.subr.mxu0 0.0
      %3342 = vmatpush1.xpose.msra.mxu0 0.0
      %3343 = vmatprep.subr.mxu0 0.0
      %3344 = vmatpush1.xpose.msra.mxu0 0.0
      %3345 = vmatprep.subr.mxu0 0.0
      %3346 = vmatpush1.xpose.msra.mxu0 0.0
      %3347 = vmatprep.subr.mxu0 0.0
      %3348 = vmatpush1.xpose.msra.mxu0 0.0
      %3349 = vmatprep.subr.mxu0 0.0
      %3350 = vmatpush1.xpose.msra.mxu0 0.0
      %3351 = vmatprep.subr.mxu0 0.0
      %3352 = vmatpush1.xpose.msra.mxu0 0.0
      %3353 = vmatprep.subr.mxu0 0.0
      %3354 = vmatpush1.xpose.msra.mxu0 0.0
      %3355 = vmatprep.subr.mxu0 0.0
      %3356 = vmatpush1.xpose.msra.mxu0 0.0
      %3357 = vmatprep.subr.mxu0 0.0
      %3358 = vmatpush1.xpose.msra.mxu0 0.0
      %3359 = vmatprep.subr.mxu0 0.0
      %3360 = vmatpush1.xpose.msra.mxu0 0.0
      %3361 = vmatprep.subr.mxu0 0.0
      %3362 = vmatpush1.xpose.msra.mxu0 0.0
      %3363 = vmatprep.subr.mxu0 0.0
      %3364 = vmatpush1.xpose.msra.mxu0 0.0
      %3365 = vmatprep.subr.mxu0 0.0
      %3366 = vmatpush1.xpose.msra.mxu0 0.0
      %3367 = vmatprep.subr.mxu0 0.0
      %3368 = vmatpush1.xpose.msra.mxu0 0.0
      %3369 = vmatprep.subr.mxu0 0.0
      %3370 = vmatpush1.xpose.msra.mxu0 0.0
      %3371 = vmatprep.subr.mxu0 0.0
      %3372 = vmatpush1.xpose.msra.mxu0 0.0
      %3373 = vmatprep.subr.mxu0 0.0
      %3374 = vmatpush1.xpose.msra.mxu0 0.0
      %3375 = vmatprep.subr.mxu0 0.0
      %3376 = vmatpush1.xpose.msra.mxu0 0.0
      %3377 = vmatprep.subr.mxu0 0.0
      %3378 = vmatpush1.xpose.msra.mxu0 0.0
      %3379 = vmatprep.subr.mxu0 0.0
      %3380 = vmatpush1.xpose.msra.mxu0 0.0
      %3381 = vmatprep.subr.mxu0 0.0
      %3382 = vmatpush1.xpose.msra.mxu0 0.0
      %3383 = vmatprep.subr.mxu0 0.0
      %3384 = vmatpush1.xpose.msra.mxu0 0.0
      %3385 = vmatprep.subr.mxu0 0.0
      %3386 = vmatpush1.xpose.msra.mxu0 0.0
      %3387 = vmatprep.subr.mxu0 0.0
      %3388 = vmatpush1.xpose.msra.mxu0 0.0
      %3389 = vmatprep.mubr.f32.mxu0 0.0
      %3390 = vmatmul.mubr.f32.gmra.mrb[0].mxu0 %v3321
      %v3391 = vpop.f32.mrb[0].mxu0
      %v3392 = vadd.f32 0.0, %v3391
      %v3393 = vpop.f32.mrb[0].mxu0
      %3394 = vdwg.mxu0
      %v3395 = vmul.f32 %v3392, 0.35355338
      %v3396 = vadd.f32 %v3395, %v799
      %v3397 = vsel %vm1095, %v3396, -inf
      %3398 = vmax.xlane.f32.xlu0 %v3397
      %v3399 = vpop.xlane.xlu0 %3398
      %v3400 = vsub.f32 %v3396, %v3399
      %v3401 = vmul.f32 %v3400, 1.442695
      %v3402 = vpow.pop %v3401
      %v3403 = vsel %vm1095, %v3402, 0.0
      %3404 = vadd.xlane.f32.xlu0 %v3403
      %v3405 = vpop.xlane.xlu0 %3404
      %v3406 = vrcp.pop %v3405
      %v3407 = vmul.f32 %v3402, %v3406
      %3408 = vrot.lane.b32.xlu0 %v3148, 56
      %v3409 = vpop.permute.xlu0 %3408
      %v3412 = vsel %vm1095, %v3407, 0
      %3414 = vmatprep.subr.mxu0 0.0
      %3415 = vmatpush1.msra.mxu0 %v3409
      %3416 = vmatprep.subr.mxu0 0.0
      %3417 = vmatpush1.msra.mxu0 0.0
      %3418 = vmatprep.subr.mxu0 0.0
      %3419 = vmatpush1.msra.mxu0 0.0
      %3420 = vmatprep.subr.mxu0 0.0
      %3421 = vmatpush1.msra.mxu0 0.0
      %3422 = vmatprep.subr.mxu0 0.0
      %3423 = vmatpush1.msra.mxu0 0.0
      %3424 = vmatprep.subr.mxu0 0.0
      %3425 = vmatpush1.msra.mxu0 0.0
      %3426 = vmatprep.subr.mxu0 0.0
      %3427 = vmatpush1.msra.mxu0 0.0
      %3428 = vmatprep.subr.mxu0 0.0
      %3429 = vmatpush1.msra.mxu0 0.0
      %3430 = vmatprep.subr.mxu0 0.0
      %3431 = vmatpush1.msra.mxu0 0.0
      %3432 = vmatprep.subr.mxu0 0.0
      %3433 = vmatpush1.msra.mxu0 0.0
      %3434 = vmatprep.subr.mxu0 0.0
      %3435 = vmatpush1.msra.mxu0 0.0
      %3436 = vmatprep.subr.mxu0 0.0
      %3437 = vmatpush1.msra.mxu0 0.0
      %3438 = vmatprep.subr.mxu0 0.0
      %3439 = vmatpush1.msra.mxu0 0.0
      %3440 = vmatprep.subr.mxu0 0.0
      %3441 = vmatpush1.msra.mxu0 0.0
      %3442 = vmatprep.subr.mxu0 0.0
      %3443 = vmatpush1.msra.mxu0 0.0
      %3444 = vmatprep.subr.mxu0 0.0
      %3445 = vmatpush1.msra.mxu0 0.0
      %3446 = vmatprep.subr.mxu0 0.0
      %3447 = vmatpush1.msra.mxu0 0.0
      %3448 = vmatprep.subr.mxu0 0.0
      %3449 = vmatpush1.msra.mxu0 0.0
      %3450 = vmatprep.subr.mxu0 0.0
      %3451 = vmatpush1.msra.mxu0 0.0
      %3452 = vmatprep.subr.mxu0 0.0
      %3453 = vmatpush1.msra.mxu0 0.0
      %3454 = vmatprep.subr.mxu0 0.0
      %3455 = vmatpush1.msra.mxu0 0.0
      %3456 = vmatprep.subr.mxu0 0.0
      %3457 = vmatpush1.msra.mxu0 0.0
      %3458 = vmatprep.subr.mxu0 0.0
      %3459 = vmatpush1.msra.mxu0 0.0
      %3460 = vmatprep.subr.mxu0 0.0
      %3461 = vmatpush1.msra.mxu0 0.0
      %3462 = vmatprep.subr.mxu0 0.0
      %3463 = vmatpush1.msra.mxu0 0.0
      %3464 = vmatprep.subr.mxu0 0.0
      %3465 = vmatpush1.msra.mxu0 0.0
      %3466 = vmatprep.subr.mxu0 0.0
      %3467 = vmatpush1.msra.mxu0 0.0
      %3468 = vmatprep.subr.mxu0 0.0
      %3469 = vmatpush1.msra.mxu0 0.0
      %3470 = vmatprep.subr.mxu0 0.0
      %3471 = vmatpush1.msra.mxu0 0.0
      %3472 = vmatprep.subr.mxu0 0.0
      %3473 = vmatpush1.msra.mxu0 0.0
      %3474 = vmatprep.subr.mxu0 0.0
      %3475 = vmatpush1.msra.mxu0 0.0
      %3476 = vmatprep.subr.mxu0 0.0
      %3477 = vmatpush1.msra.mxu0 0.0
      %3478 = vmatprep.mubr.f32.mxu0 0.0
      %3479 = vmatmul.mubr.f32.gmra.mrb[0].mxu0 %v3412
      %v3480 = vpop.f32.mrb[0].mxu0
      %v3481 = vadd.f32 0.0, %v3480
      %v3482 = vpop.f32.mrb[0].mxu0
      %3483 = vdwg.mxu0
      %3484 = vrot.lane.b32.xlu0 %v3148, 112
      %v3485 = vpop.permute.xlu0 %3484
      %3486 = vrot.lane.b32.xlu0 %v3148, 80
      %v3487 = vpop.permute.xlu0 %3486
      %v3488 = vsel %vm1095, %v3485, 0
      %v3490 = vsel %vm1095, %v3487, 0
      %3492 = vmatprep.subr.mxu0 0.0
      %3493 = vmatpush1.xpose.msra.mxu0 %v3490
      %3494 = vmatprep.subr.mxu0 0.0
      %3495 = vmatpush1.xpose.msra.mxu0 0.0
      %3496 = vmatprep.subr.mxu0 0.0
      %3497 = vmatpush1.xpose.msra.mxu0 0.0
      %3498 = vmatprep.subr.mxu0 0.0
      %3499 = vmatpush1.xpose.msra.mxu0 0.0
      %3500 = vmatprep.subr.mxu0 0.0
      %3501 = vmatpush1.xpose.msra.mxu0 0.0
      %3502 = vmatprep.subr.mxu0 0.0
      %3503 = vmatpush1.xpose.msra.mxu0 0.0
      %3504 = vmatprep.subr.mxu0 0.0
      %3505 = vmatpush1.xpose.msra.mxu0 0.0
      %3506 = vmatprep.subr.mxu0 0.0
      %3507 = vmatpush1.xpose.msra.mxu0 0.0
      %3508 = vmatprep.subr.mxu0 0.0
      %3509 = vmatpush1.xpose.msra.mxu0 0.0
      %3510 = vmatprep.subr.mxu0 0.0
      %3511 = vmatpush1.xpose.msra.mxu0 0.0
      %3512 = vmatprep.subr.mxu0 0.0
      %3513 = vmatpush1.xpose.msra.mxu0 0.0
      %3514 = vmatprep.subr.mxu0 0.0
      %3515 = vmatpush1.xpose.msra.mxu0 0.0
      %3516 = vmatprep.subr.mxu0 0.0
      %3517 = vmatpush1.xpose.msra.mxu0 0.0
      %3518 = vmatprep.subr.mxu0 0.0
      %3519 = vmatpush1.xpose.msra.mxu0 0.0
      %3520 = vmatprep.subr.mxu0 0.0
      %3521 = vmatpush1.xpose.msra.mxu0 0.0
      %3522 = vmatprep.subr.mxu0 0.0
      %3523 = vmatpush1.xpose.msra.mxu0 0.0
      %3524 = vmatprep.subr.mxu0 0.0
      %3525 = vmatpush1.xpose.msra.mxu0 0.0
      %3526 = vmatprep.subr.mxu0 0.0
      %3527 = vmatpush1.xpose.msra.mxu0 0.0
      %3528 = vmatprep.subr.mxu0 0.0
      %3529 = vmatpush1.xpose.msra.mxu0 0.0
      %3530 = vmatprep.subr.mxu0 0.0
      %3531 = vmatpush1.xpose.msra.mxu0 0.0
      %3532 = vmatprep.subr.mxu0 0.0
      %3533 = vmatpush1.xpose.msra.mxu0 0.0
      %3534 = vmatprep.subr.mxu0 0.0
      %3535 = vmatpush1.xpose.msra.mxu0 0.0
      %3536 = vmatprep.subr.mxu0 0.0
      %3537 = vmatpush1.xpose.msra.mxu0 0.0
      %3538 = vmatprep.subr.mxu0 0.0
      %3539 = vmatpush1.xpose.msra.mxu0 0.0
      %3540 = vmatprep.subr.mxu0 0.0
      %3541 = vmatpush1.xpose.msra.mxu0 0.0
      %3542 = vmatprep.subr.mxu0 0.0
      %3543 = vmatpush1.xpose.msra.mxu0 0.0
      %3544 = vmatprep.subr.mxu0 0.0
      %3545 = vmatpush1.xpose.msra.mxu0 0.0
      %3546 = vmatprep.subr.mxu0 0.0
      %3547 = vmatpush1.xpose.msra.mxu0 0.0
      %3548 = vmatprep.subr.mxu0 0.0
      %3549 = vmatpush1.xpose.msra.mxu0 0.0
      %3550 = vmatprep.subr.mxu0 0.0
      %3551 = vmatpush1.xpose.msra.mxu0 0.0
      %3552 = vmatprep.subr.mxu0 0.0
      %3553 = vmatpush1.xpose.msra.mxu0 0.0
      %3554 = vmatprep.subr.mxu0 0.0
      %3555 = vmatpush1.xpose.msra.mxu0 0.0
      %3556 = vmatprep.mubr.f32.mxu0 0.0
      %3557 = vmatmul.mubr.f32.gmra.mrb[0].mxu0 %v3488
      %v3558 = vpop.f32.mrb[0].mxu0
      %v3559 = vadd.f32 0.0, %v3558
      %v3560 = vpop.f32.mrb[0].mxu0
      %3561 = vdwg.mxu0
      %v3562 = vmul.f32 %v3559, 0.35355338
      %v3563 = vadd.f32 %v3562, %v799
      %v3564 = vsel %vm1095, %v3563, -inf
      %3565 = vmax.xlane.f32.xlu0 %v3564
      %v3566 = vpop.xlane.xlu0 %3565
      %v3567 = vsub.f32 %v3563, %v3566
      %v3568 = vmul.f32 %v3567, 1.442695
      %v3569 = vpow.pop %v3568
      %v3570 = vsel %vm1095, %v3569, 0.0
      %3571 = vadd.xlane.f32.xlu0 %v3570
      %v3572 = vpop.xlane.xlu0 %3571
      %v3573 = vrcp.pop %v3572
      %v3574 = vmul.f32 %v3569, %v3573
      %3575 = vrot.lane.b32.xlu0 %v3148, 48
      %v3576 = vpop.permute.xlu0 %3575
      %v3579 = vsel %vm1095, %v3574, 0
      %3581 = vmatprep.subr.mxu0 0.0
      %3582 = vmatpush1.msra.mxu0 %v3576
      %3583 = vmatprep.subr.mxu0 0.0
      %3584 = vmatpush1.msra.mxu0 0.0
      %3585 = vmatprep.subr.mxu0 0.0
      %3586 = vmatpush1.msra.mxu0 0.0
      %3587 = vmatprep.subr.mxu0 0.0
      %3588 = vmatpush1.msra.mxu0 0.0
      %3589 = vmatprep.subr.mxu0 0.0
      %3590 = vmatpush1.msra.mxu0 0.0
      %3591 = vmatprep.subr.mxu0 0.0
      %3592 = vmatpush1.msra.mxu0 0.0
      %3593 = vmatprep.subr.mxu0 0.0
      %3594 = vmatpush1.msra.mxu0 0.0
      %3595 = vmatprep.subr.mxu0 0.0
      %3596 = vmatpush1.msra.mxu0 0.0
      %3597 = vmatprep.subr.mxu0 0.0
      %3598 = vmatpush1.msra.mxu0 0.0
      %3599 = vmatprep.subr.mxu0 0.0
      %3600 = vmatpush1.msra.mxu0 0.0
      %3601 = vmatprep.subr.mxu0 0.0
      %3602 = vmatpush1.msra.mxu0 0.0
      %3603 = vmatprep.subr.mxu0 0.0
      %3604 = vmatpush1.msra.mxu0 0.0
      %3605 = vmatprep.subr.mxu0 0.0
      %3606 = vmatpush1.msra.mxu0 0.0
      %3607 = vmatprep.subr.mxu0 0.0
      %3608 = vmatpush1.msra.mxu0 0.0
      %3609 = vmatprep.subr.mxu0 0.0
      %3610 = vmatpush1.msra.mxu0 0.0
      %3611 = vmatprep.subr.mxu0 0.0
      %3612 = vmatpush1.msra.mxu0 0.0
      %3613 = vmatprep.subr.mxu0 0.0
      %3614 = vmatpush1.msra.mxu0 0.0
      %3615 = vmatprep.subr.mxu0 0.0
      %3616 = vmatpush1.msra.mxu0 0.0
      %3617 = vmatprep.subr.mxu0 0.0
      %3618 = vmatpush1.msra.mxu0 0.0
      %3619 = vmatprep.subr.mxu0 0.0
      %3620 = vmatpush1.msra.mxu0 0.0
      %3621 = vmatprep.subr.mxu0 0.0
      %3622 = vmatpush1.msra.mxu0 0.0
      %3623 = vmatprep.subr.mxu0 0.0
      %3624 = vmatpush1.msra.mxu0 0.0
      %3625 = vmatprep.subr.mxu0 0.0
      %3626 = vmatpush1.msra.mxu0 0.0
      %3627 = vmatprep.subr.mxu0 0.0
      %3628 = vmatpush1.msra.mxu0 0.0
      %3629 = vmatprep.subr.mxu0 0.0
      %3630 = vmatpush1.msra.mxu0 0.0
      %3631 = vmatprep.subr.mxu0 0.0
      %3632 = vmatpush1.msra.mxu0 0.0
      %3633 = vmatprep.subr.mxu0 0.0
      %3634 = vmatpush1.msra.mxu0 0.0
      %3635 = vmatprep.subr.mxu0 0.0
      %3636 = vmatpush1.msra.mxu0 0.0
      %3637 = vmatprep.subr.mxu0 0.0
      %3638 = vmatpush1.msra.mxu0 0.0
      %3639 = vmatprep.subr.mxu0 0.0
      %3640 = vmatpush1.msra.mxu0 0.0
      %3641 = vmatprep.subr.mxu0 0.0
      %3642 = vmatpush1.msra.mxu0 0.0
      %3643 = vmatprep.subr.mxu0 0.0
      %3644 = vmatpush1.msra.mxu0 0.0
      %3645 = vmatprep.mubr.f32.mxu0 0.0
      %3646 = vmatmul.mubr.f32.gmra.mrb[0].mxu0 %v3579
      %v3647 = vpop.f32.mrb[0].mxu0
      %v3648 = vadd.f32 0.0, %v3647
      %v3649 = vpop.f32.mrb[0].mxu0
      %3650 = vdwg.mxu0
      %3651 = vrot.lane.b32.xlu0 %v3148, 104
      %v3652 = vpop.permute.xlu0 %3651
      %3653 = vrot.lane.b32.xlu0 %v3148, 72
      %v3654 = vpop.permute.xlu0 %3653
      %v3655 = vsel %vm1095, %v3652, 0
      %v3657 = vsel %vm1095, %v3654, 0
      %3659 = vmatprep.subr.mxu0 0.0
      %3660 = vmatpush1.xpose.msra.mxu0 %v3657
      %3661 = vmatprep.subr.mxu0 0.0
      %3662 = vmatpush1.xpose.msra.mxu0 0.0
      %3663 = vmatprep.subr.mxu0 0.0
      %3664 = vmatpush1.xpose.msra.mxu0 0.0
      %3665 = vmatprep.subr.mxu0 0.0
      %3666 = vmatpush1.xpose.msra.mxu0 0.0
      %3667 = vmatprep.subr.mxu0 0.0
      %3668 = vmatpush1.xpose.msra.mxu0 0.0
      %3669 = vmatprep.subr.mxu0 0.0
      %3670 = vmatpush1.xpose.msra.mxu0 0.0
      %3671 = vmatprep.subr.mxu0 0.0
      %3672 = vmatpush1.xpose.msra.mxu0 0.0
      %3673 = vmatprep.subr.mxu0 0.0
      %3674 = vmatpush1.xpose.msra.mxu0 0.0
      %3675 = vmatprep.subr.mxu0 0.0
      %3676 = vmatpush1.xpose.msra.mxu0 0.0
      %3677 = vmatprep.subr.mxu0 0.0
      %3678 = vmatpush1.xpose.msra.mxu0 0.0
      %3679 = vmatprep.subr.mxu0 0.0
      %3680 = vmatpush1.xpose.msra.mxu0 0.0
      %3681 = vmatprep.subr.mxu0 0.0
      %3682 = vmatpush1.xpose.msra.mxu0 0.0
      %3683 = vmatprep.subr.mxu0 0.0
      %3684 = vmatpush1.xpose.msra.mxu0 0.0
      %3685 = vmatprep.subr.mxu0 0.0
      %3686 = vmatpush1.xpose.msra.mxu0 0.0
      %3687 = vmatprep.subr.mxu0 0.0
      %3688 = vmatpush1.xpose.msra.mxu0 0.0
      %3689 = vmatprep.subr.mxu0 0.0
      %3690 = vmatpush1.xpose.msra.mxu0 0.0
      %3691 = vmatprep.subr.mxu0 0.0
      %3692 = vmatpush1.xpose.msra.mxu0 0.0
      %3693 = vmatprep.subr.mxu0 0.0
      %3694 = vmatpush1.xpose.msra.mxu0 0.0
      %3695 = vmatprep.subr.mxu0 0.0
      %3696 = vmatpush1.xpose.msra.mxu0 0.0
      %3697 = vmatprep.subr.mxu0 0.0
      %3698 = vmatpush1.xpose.msra.mxu0 0.0
      %3699 = vmatprep.subr.mxu0 0.0
      %3700 = vmatpush1.xpose.msra.mxu0 0.0
      %3701 = vmatprep.subr.mxu0 0.0
      %3702 = vmatpush1.xpose.msra.mxu0 0.0
      %3703 = vmatprep.subr.mxu0 0.0
      %3704 = vmatpush1.xpose.msra.mxu0 0.0
      %3705 = vmatprep.subr.mxu0 0.0
      %3706 = vmatpush1.xpose.msra.mxu0 0.0
      %3707 = vmatprep.subr.mxu0 0.0
      %3708 = vmatpush1.xpose.msra.mxu0 0.0
      %3709 = vmatprep.subr.mxu0 0.0
      %3710 = vmatpush1.xpose.msra.mxu0 0.0
      %3711 = vmatprep.subr.mxu0 0.0
      %3712 = vmatpush1.xpose.msra.mxu0 0.0
      %3713 = vmatprep.subr.mxu0 0.0
      %3714 = vmatpush1.xpose.msra.mxu0 0.0
      %3715 = vmatprep.subr.mxu0 0.0
      %3716 = vmatpush1.xpose.msra.mxu0 0.0
      %3717 = vmatprep.subr.mxu0 0.0
      %3718 = vmatpush1.xpose.msra.mxu0 0.0
      %3719 = vmatprep.subr.mxu0 0.0
      %3720 = vmatpush1.xpose.msra.mxu0 0.0
      %3721 = vmatprep.subr.mxu0 0.0
      %3722 = vmatpush1.xpose.msra.mxu0 0.0
      %3723 = vmatprep.mubr.f32.mxu0 0.0
      %3724 = vmatmul.mubr.f32.gmra.mrb[0].mxu0 %v3655
      %v3725 = vpop.f32.mrb[0].mxu0
      %v3726 = vadd.f32 0.0, %v3725
      %v3727 = vpop.f32.mrb[0].mxu0
      %3728 = vdwg.mxu0
      %v3729 = vmul.f32 %v3726, 0.35355338
      %v3730 = vadd.f32 %v3729, %v799
      %v3731 = vsel %vm1095, %v3730, -inf
      %3732 = vmax.xlane.f32.xlu0 %v3731
      %v3733 = vpop.xlane.xlu0 %3732
      %v3734 = vsub.f32 %v3730, %v3733
      %v3735 = vmul.f32 %v3734, 1.442695
      %v3736 = vpow.pop %v3735
      %v3737 = vsel %vm1095, %v3736, 0.0
      %3738 = vadd.xlane.f32.xlu0 %v3737
      %v3739 = vpop.xlane.xlu0 %3738
      %v3740 = vrcp.pop %v3739
      %v3741 = vmul.f32 %v3736, %v3740
      %3742 = vrot.lane.b32.xlu0 %v3148, 40
      %v3743 = vpop.permute.xlu0 %3742
      %v3746 = vsel %vm1095, %v3741, 0
      %3748 = vmatprep.subr.mxu0 0.0
      %3749 = vmatpush1.msra.mxu0 %v3743
      %3750 = vmatprep.subr.mxu0 0.0
      %3751 = vmatpush1.msra.mxu0 0.0
      %3752 = vmatprep.subr.mxu0 0.0
      %3753 = vmatpush1.msra.mxu0 0.0
      %3754 = vmatprep.subr.mxu0 0.0
      %3755 = vmatpush1.msra.mxu0 0.0
      %3756 = vmatprep.subr.mxu0 0.0
      %3757 = vmatpush1.msra.mxu0 0.0
      %3758 = vmatprep.subr.mxu0 0.0
      %3759 = vmatpush1.msra.mxu0 0.0
      %3760 = vmatprep.subr.mxu0 0.0
      %3761 = vmatpush1.msra.mxu0 0.0
      %3762 = vmatprep.subr.mxu0 0.0
      %3763 = vmatpush1.msra.mxu0 0.0
      %3764 = vmatprep.subr.mxu0 0.0
      %3765 = vmatpush1.msra.mxu0 0.0
      %3766 = vmatprep.subr.mxu0 0.0
      %3767 = vmatpush1.msra.mxu0 0.0
      %3768 = vmatprep.subr.mxu0 0.0
      %3769 = vmatpush1.msra.mxu0 0.0
      %3770 = vmatprep.subr.mxu0 0.0
      %3771 = vmatpush1.msra.mxu0 0.0
      %3772 = vmatprep.subr.mxu0 0.0
      %3773 = vmatpush1.msra.mxu0 0.0
      %3774 = vmatprep.subr.mxu0 0.0
      %3775 = vmatpush1.msra.mxu0 0.0
      %3776 = vmatprep.subr.mxu0 0.0
      %3777 = vmatpush1.msra.mxu0 0.0
      %3778 = vmatprep.subr.mxu0 0.0
      %3779 = vmatpush1.msra.mxu0 0.0
      %3780 = vmatprep.subr.mxu0 0.0
      %3781 = vmatpush1.msra.mxu0 0.0
      %3782 = vmatprep.subr.mxu0 0.0
      %3783 = vmatpush1.msra.mxu0 0.0
      %3784 = vmatprep.subr.mxu0 0.0
      %3785 = vmatpush1.msra.mxu0 0.0
      %3786 = vmatprep.subr.mxu0 0.0
      %3787 = vmatpush1.msra.mxu0 0.0
      %3788 = vmatprep.subr.mxu0 0.0
      %3789 = vmatpush1.msra.mxu0 0.0
      %3790 = vmatprep.subr.mxu0 0.0
      %3791 = vmatpush1.msra.mxu0 0.0
      %3792 = vmatprep.subr.mxu0 0.0
      %3793 = vmatpush1.msra.mxu0 0.0
      %3794 = vmatprep.subr.mxu0 0.0
      %3795 = vmatpush1.msra.mxu0 0.0
      %3796 = vmatprep.subr.mxu0 0.0
      %3797 = vmatpush1.msra.mxu0 0.0
      %3798 = vmatprep.subr.mxu0 0.0
      %3799 = vmatpush1.msra.mxu0 0.0
      %3800 = vmatprep.subr.mxu0 0.0
      %3801 = vmatpush1.msra.mxu0 0.0
      %3802 = vmatprep.subr.mxu0 0.0
      %3803 = vmatpush1.msra.mxu0 0.0
      %3804 = vmatprep.subr.mxu0 0.0
      %3805 = vmatpush1.msra.mxu0 0.0
      %3806 = vmatprep.subr.mxu0 0.0
      %3807 = vmatpush1.msra.mxu0 0.0
      %3808 = vmatprep.subr.mxu0 0.0
      %3809 = vmatpush1.msra.mxu0 0.0
      %3810 = vmatprep.subr.mxu0 0.0
      %3811 = vmatpush1.msra.mxu0 0.0
      %3812 = vmatprep.mubr.f32.mxu0 0.0
      %3813 = vmatmul.mubr.f32.gmra.mrb[0].mxu0 %v3746
      %v3814 = vpop.f32.mrb[0].mxu0
      %v3815 = vadd.f32 0.0, %v3814
      %v3816 = vpop.f32.mrb[0].mxu0
      %3817 = vdwg.mxu0
      %3819 = vrot.lane.b32.xlu0 %v3481, 8
      %v3820 = vpop.permute.xlu0 %3819
      %3823 = vrot.lane.b32.xlu0 %v3648, 16
      %v3824 = vpop.permute.xlu0 %3823
      %3827 = vrot.lane.b32.xlu0 %v3815, 24
      %v3828 = vpop.permute.xlu0 %3827
      %v3830 = vsel %vm1095, %v3314, %v3820
      %v3831 = vsel %vm1773, %v3830, %v3824
      %v3832 = vsel %vm1775, %v3831, %v3828
      %s3833 = scalar_lea.vmem %s11, 32
      %v3834 = vld [vmem:[%s3833] sm:$0xff]
      %v3835 = vld [vmem:[%s3833 + $0x8] sm:$0xff]
      %v3836 = vld [vmem:[%s3833 + $0x10] sm:$0xff]
      %v3837 = vld [vmem:[%s3833 + $0x18] sm:$0xff]
      %s3838 = scalar_lea.vmem %s12, 1
      %v3839 = vld [vmem:[%s3838] sm:$0x1]
      %v3841 = vlaneseq
      %v3842 = vshrl.u32 %v3841, 7
      %v3843 = vsub.s32 0, %v3842
      %v3844 = vrot.slane %v3839, %v3843
      %v3847 = vsel %vm979, %v3832, 0
      %3849 = vmatprep.subr.mxu0 0.0
      %3850 = vmatpush1.msra.mxu0 %v3834
      %3851 = vmatprep.subr.mxu0 0.0
      %3852 = vmatpush1.msra.mxu0 %v3835
      %3853 = vmatprep.subr.mxu0 0.0
      %3854 = vmatpush1.msra.mxu0 %v3836
      %3855 = vmatprep.subr.mxu0 0.0
      %3856 = vmatpush1.msra.mxu0 %v3837
      %3857 = vmatprep.subr.mxu0 0.0
      %3858 = vmatpush1.msra.mxu0 0.0
      %3859 = vmatprep.subr.mxu0 0.0
      %3860 = vmatpush1.msra.mxu0 0.0
      %3861 = vmatprep.subr.mxu0 0.0
      %3862 = vmatpush1.msra.mxu0 0.0
      %3863 = vmatprep.subr.mxu0 0.0
      %3864 = vmatpush1.msra.mxu0 0.0
      %3865 = vmatprep.subr.mxu0 0.0
      %3866 = vmatpush1.msra.mxu0 0.0
      %3867 = vmatprep.subr.mxu0 0.0
      %3868 = vmatpush1.msra.mxu0 0.0
      %3869 = vmatprep.subr.mxu0 0.0
      %3870 = vmatpush1.msra.mxu0 0.0
      %3871 = vmatprep.subr.mxu0 0.0
      %3872 = vmatpush1.msra.mxu0 0.0
      %3873 = vmatprep.subr.mxu0 0.0
      %3874 = vmatpush1.msra.mxu0 0.0
      %3875 = vmatprep.subr.mxu0 0.0
      %3876 = vmatpush1.msra.mxu0 0.0
      %3877 = vmatprep.subr.mxu0 0.0
      %3878 = vmatpush1.msra.mxu0 0.0
      %3879 = vmatprep.subr.mxu0 0.0
      %3880 = vmatpush1.msra.mxu0 0.0
      %3881 = vmatprep.subr.mxu0 0.0
      %3882 = vmatpush1.msra.mxu0 0.0
      %3883 = vmatprep.subr.mxu0 0.0
      %3884 = vmatpush1.msra.mxu0 0.0
      %3885 = vmatprep.subr.mxu0 0.0
      %3886 = vmatpush1.msra.mxu0 0.0
      %3887 = vmatprep.subr.mxu0 0.0
      %3888 = vmatpush1.msra.mxu0 0.0
      %3889 = vmatprep.subr.mxu0 0.0
      %3890 = vmatpush1.msra.mxu0 0.0
      %3891 = vmatprep.subr.mxu0 0.0
      %3892 = vmatpush1.msra.mxu0 0.0
      %3893 = vmatprep.subr.mxu0 0.0
      %3894 = vmatpush1.msra.mxu0 0.0
      %3895 = vmatprep.subr.mxu0 0.0
      %3896 = vmatpush1.msra.mxu0 0.0
      %3897 = vmatprep.subr.mxu0 0.0
      %3898 = vmatpush1.msra.mxu0 0.0
      %3899 = vmatprep.subr.mxu0 0.0
      %3900 = vmatpush1.msra.mxu0 0.0
      %3901 = vmatprep.subr.mxu0 0.0
      %3902 = vmatpush1.msra.mxu0 0.0
      %3903 = vmatprep.subr.mxu0 0.0
      %3904 = vmatpush1.msra.mxu0 0.0
      %3905 = vmatprep.subr.mxu0 0.0
      %3906 = vmatpush1.msra.mxu0 0.0
      %3907 = vmatprep.subr.mxu0 0.0
      %3908 = vmatpush1.msra.mxu0 0.0
      %3909 = vmatprep.subr.mxu0 0.0
      %3910 = vmatpush1.msra.mxu0 0.0
      %3911 = vmatprep.subr.mxu0 0.0
      %3912 = vmatpush1.msra.mxu0 0.0
      %3913 = vmatprep.mubr.f32.mxu0 0.0
      %3914 = vmatmul.mubr.f32.gmra.mrb[0].mxu0 %v3847
      %v3915 = vpop.f32.mrb[0].mxu0
      %v3916 = vadd.f32 %v3844, %v3915
      %v3917 = vpop.f32.mrb[0].mxu0
      %3918 = vdwg.mxu0
      %v3919 = vadd.f32 %v3064, %v3916
      %s3920 = scalar_lea.vmem %s7, 4
      %v3921 = vld [vmem:[%s3920] sm:$0x1]
      %s3922 = scalar_lea.vmem %s8, 4
      %v3923 = vld [vmem:[%s3922] sm:$0x1]
      %v3924 = vsel %vm979, %v3919, 0.0
      %3925 = vadd.xlane.f32.xlu0 %v3924
      %v3926 = vpop.xlane.xlu0 %3925
      %v3927 = vmul.f32 %v3926, %v983
      %v3928 = vsub.f32 %v3919, %v3927
      %v3929 = vmul.f32 %v3928, %v3928
      %v3930 = vsel %vm979, %v3929, 0.0
      %3931 = vadd.xlane.f32.xlu0 %v3930
      %v3932 = vpop.xlane.xlu0 %3931
      %v3933 = vmul.f32 %v3932, %v983
      %v3934 = vadd.f32 %v3933, 1e-05
      %v3935 = vrsqrt.pop %v3934
      %v3936 = vmul.f32 %v3928, %v3935
      %v3938 = vlaneseq
      %v3939 = vshrl.u32 %v3938, 7
      %v3940 = vsub.s32 0, %v3939
      %v3941 = vrot.slane %v3921, %v3940
      %v3943 = vmul.f32 %v3936, %v3941
      %v3945 = vlaneseq
      %v3946 = vshrl.u32 %v3945, 7
      %v3947 = vsub.s32 0, %v3946
      %v3948 = vrot.slane %v3923, %v3947
      %v3950 = vadd.f32 %v3943, %v3948
      %s3951 = scalar_lea.vmem %s13, 32
      %v3952 = vld [vmem:[%s3951] sm:$0xff]
      %v3953 = vld [vmem:[%s3951 + $0x8] sm:$0xff]
      %v3954 = vld [vmem:[%s3951 + $0x10] sm:$0xff]
      %v3955 = vld [vmem:[%s3951 + $0x18] sm:$0xff]
      %s3956 = scalar_lea.vmem %s14, 1
      %v3957 = vld [vmem:[%s3956] sm:$0x1]
      %v3959 = vlaneseq
      %v3960 = vshrl.u32 %v3959, 7
      %v3961 = vsub.s32 0, %v3960
      %v3962 = vrot.slane %v3957, %v3961
      %v3965 = vsel %vm979, %v3950, 0
      %3967 = vmatprep.subr.mxu0 0.0
      %3968 = vmatpush1.msra.mxu0 %v3952
      %3969 = vmatprep.subr.mxu0 0.0
      %3970 = vmatpush1.msra.mxu0 %v3953
      %3971 = vmatprep.subr.mxu0 0.0
      %3972 = vmatpush1.msra.mxu0 %v3954
      %3973 = vmatprep.subr.mxu0 0.0
      %3974 = vmatpush1.msra.mxu0 %v3955
      %3975 = vmatprep.subr.mxu0 0.0
      %3976 = vmatpush1.msra.mxu0 0.0
      %3977 = vmatprep.subr.mxu0 0.0
      %3978 = vmatpush1.msra.mxu0 0.0
      %3979 = vmatprep.subr.mxu0 0.0
      %3980 = vmatpush1.msra.mxu0 0.0
      %3981 = vmatprep.subr.mxu0 0.0
      %3982 = vmatpush1.msra.mxu0 0.0
      %3983 = vmatprep.subr.mxu0 0.0
      %3984 = vmatpush1.msra.mxu0 0.0
      %3985 = vmatprep.subr.mxu0 0.0
      %3986 = vmatpush1.msra.mxu0 0.0
      %3987 = vmatprep.subr.mxu0 0.0
      %3988 = vmatpush1.msra.mxu0 0.0
      %3989 = vmatprep.subr.mxu0 0.0
      %3990 = vmatpush1.msra.mxu0 0.0
      %3991 = vmatprep.subr.mxu0 0.0
      %3992 = vmatpush1.msra.mxu0 0.0
      %3993 = vmatprep.subr.mxu0 0.0
      %3994 = vmatpush1.msra.mxu0 0.0
      %3995 = vmatprep.subr.mxu0 0.0
      %3996 = vmatpush1.msra.mxu0 0.0
      %3997 = vmatprep.subr.mxu0 0.0
      %3998 = vmatpush1.msra.mxu0 0.0
      %3999 = vmatprep.subr.mxu0 0.0
      %4000 = vmatpush1.msra.mxu0 0.0
      %4001 = vmatprep.subr.mxu0 0.0
      %4002 = vmatpush1.msra.mxu0 0.0
      %4003 = vmatprep.subr.mxu0 0.0
      %4004 = vmatpush1.msra.mxu0 0.0
      %4005 = vmatprep.subr.mxu0 0.0
      %4006 = vmatpush1.msra.mxu0 0.0
      %4007 = vmatprep.subr.mxu0 0.0
      %4008 = vmatpush1.msra.mxu0 0.0
      %4009 = vmatprep.subr.mxu0 0.0
      %4010 = vmatpush1.msra.mxu0 0.0
      %4011 = vmatprep.subr.mxu0 0.0
      %4012 = vmatpush1.msra.mxu0 0.0
      %4013 = vmatprep.subr.mxu0 0.0
      %4014 = vmatpush1.msra.mxu0 0.0
      %4015 = vmatprep.subr.mxu0 0.0
      %4016 = vmatpush1.msra.mxu0 0.0
      %4017 = vmatprep.subr.mxu0 0.0
      %4018 = vmatpush1.msra.mxu0 0.0
      %4019 = vmatprep.subr.mxu0 0.0
      %4020 = vmatpush1.msra.mxu0 0.0
      %4021 = vmatprep.subr.mxu0 0.0
      %4022 = vmatpush1.msra.mxu0 0.0
      %4023 = vmatprep.subr.mxu0 0.0
      %4024 = vmatpush1.msra.mxu0 0.0
      %4025 = vmatprep.subr.mxu0 0.0
      %4026 = vmatpush1.msra.mxu0 0.0
      %4027 = vmatprep.subr.mxu0 0.0
      %4028 = vmatpush1.msra.mxu0 0.0
      %4029 = vmatprep.subr.mxu0 0.0
      %4030 = vmatpush1.msra.mxu0 0.0
      %4031 = vmatprep.mubr.f32.mxu0 0.0
      %4032 = vmatmul.mubr.f32.gmra.mrb[0].mxu0 %v3965
      %v4033 = vpop.f32.mrb[0].mxu0
      %v4034 = vadd.f32 %v3962, %v4033
      %v4035 = vpop.f32.mrb[0].mxu0
      %4036 = vdwg.mxu0
      %s4037 = scalar_lea.vmem %s15, 32
      %v4038 = vld [vmem:[%s4037] sm:$0xff]
      %v4039 = vld [vmem:[%s4037 + $0x8] sm:$0xff]
      %v4040 = vld [vmem:[%s4037 + $0x10] sm:$0xff]
      %v4041 = vld [vmem:[%s4037 + $0x18] sm:$0xff]
      %s4042 = scalar_lea.vmem %s16, 1
      %v4043 = vld [vmem:[%s4042] sm:$0x1]
      %v4045 = vlaneseq
      %v4046 = vshrl.u32 %v4045, 7
      %v4047 = vsub.s32 0, %v4046
      %v4048 = vrot.slane %v4043, %v4047
      %4050 = vmatprep.subr.mxu0 0.0
      %4051 = vmatpush1.msra.mxu0 %v4038
      %4052 = vmatprep.subr.mxu0 0.0
      %4053 = vmatpush1.msra.mxu0 %v4039
      %4054 = vmatprep.subr.mxu0 0.0
      %4055 = vmatpush1.msra.mxu0 %v4040
      %4056 = vmatprep.subr.mxu0 0.0
      %4057 = vmatpush1.msra.mxu0 %v4041
      %4058 = vmatprep.subr.mxu0 0.0
      %4059 = vmatpush1.msra.mxu0 0.0
      %4060 = vmatprep.subr.mxu0 0.0
      %4061 = vmatpush1.msra.mxu0 0.0
      %4062 = vmatprep.subr.mxu0 0.0
      %4063 = vmatpush1.msra.mxu0 0.0
      %4064 = vmatprep.subr.mxu0 0.0
      %4065 = vmatpush1.msra.mxu0 0.0
      %4066 = vmatprep.subr.mxu0 0.0
      %4067 = vmatpush1.msra.mxu0 0.0
      %4068 = vmatprep.subr.mxu0 0.0
      %4069 = vmatpush1.msra.mxu0 0.0
      %4070 = vmatprep.subr.mxu0 0.0
      %4071 = vmatpush1.msra.mxu0 0.0
      %4072 = vmatprep.subr.mxu0 0.0
      %4073 = vmatpush1.msra.mxu0 0.0
      %4074 = vmatprep.subr.mxu0 0.0
      %4075 = vmatpush1.msra.mxu0 0.0
      %4076 = vmatprep.subr.mxu0 0.0
      %4077 = vmatpush1.msra.mxu0 0.0
      %4078 = vmatprep.subr.mxu0 0.0
      %4079 = vmatpush1.msra.mxu0 0.0
      %4080 = vmatprep.subr.mxu0 0.0
      %4081 = vmatpush1.msra.mxu0 0.0
      %4082 = vmatprep.subr.mxu0 0.0
      %4083 = vmatpush1.msra.mxu0 0.0
      %4084 = vmatprep.subr.mxu0 0.0
      %4085 = vmatpush1.msra.mxu0 0.0
      %4086 = vmatprep.subr.mxu0 0.0
      %4087 = vmatpush1.msra.mxu0 0.0
      %4088 = vmatprep.subr.mxu0 0.0
      %4089 = vmatpush1.msra.mxu0 0.0
      %4090 = vmatprep.subr.mxu0 0.0
      %4091 = vmatpush1.msra.mxu0 0.0
      %4092 = vmatprep.subr.mxu0 0.0
      %4093 = vmatpush1.msra.mxu0 0.0
      %4094 = vmatprep.subr.mxu0 0.0
      %4095 = vmatpush1.msra.mxu0 0.0
      %4096 = vmatprep.subr.mxu0 0.0
      %4097 = vmatpush1.msra.mxu0 0.0
      %4098 = vmatprep.subr.mxu0 0.0
      %4099 = vmatpush1.msra.mxu0 0.0
      %4100 = vmatprep.subr.mxu0 0.0
      %4101 = vmatpush1.msra.mxu0 0.0
      %4102 = vmatprep.subr.mxu0 0.0
      %4103 = vmatpush1.msra.mxu0 0.0
      %4104 = vmatprep.subr.mxu0 0.0
      %4105 = vmatpush1.msra.mxu0 0.0
      %4106 = vmatprep.subr.mxu0 0.0
      %4107 = vmatpush1.msra.mxu0 0.0
      %4108 = vmatprep.subr.mxu0 0.0
      %4109 = vmatpush1.msra.mxu0 0.0
      %4110 = vmatprep.subr.mxu0 0.0
      %4111 = vmatpush1.msra.mxu0 0.0
      %4112 = vmatprep.subr.mxu0 0.0
      %4113 = vmatpush1.msra.mxu0 0.0
      %4114 = vmatprep.mubr.f32.mxu0 0.0
      %4115 = vmatmul.mubr.f32.gmra.mrb[0].mxu0 %v1989
      %v4116 = vpop.f32.mrb[0].mxu0
      %v4117 = vadd.f32 %v4048, %v4116
      %v4118 = vpop.f32.mrb[0].mxu0
      %4119 = vdwg.mxu0
      %v4121 = vsel %vm1095, %v4034, 0
      %v4124 = vsel %vm1095, %v4117, 0
      %4126 = vmatprep.subr.mxu0 0.0
      %4127 = vmatpush1.xpose.msra.mxu0 %v4124
      %4128 = vmatprep.subr.mxu0 0.0
      %4129 = vmatpush1.xpose.msra.mxu0 0.0
      %4130 = vmatprep.subr.mxu0 0.0
      %4131 = vmatpush1.xpose.msra.mxu0 0.0
      %4132 = vmatprep.subr.mxu0 0.0
      %4133 = vmatpush1.xpose.msra.mxu0 0.0
      %4134 = vmatprep.subr.mxu0 0.0
      %4135 = vmatpush1.xpose.msra.mxu0 0.0
      %4136 = vmatprep.subr.mxu0 0.0
      %4137 = vmatpush1.xpose.msra.mxu0 0.0
      %4138 = vmatprep.subr.mxu0 0.0
      %4139 = vmatpush1.xpose.msra.mxu0 0.0
      %4140 = vmatprep.subr.mxu0 0.0
      %4141 = vmatpush1.xpose.msra.mxu0 0.0
      %4142 = vmatprep.subr.mxu0 0.0
      %4143 = vmatpush1.xpose.msra.mxu0 0.0
      %4144 = vmatprep.subr.mxu0 0.0
      %4145 = vmatpush1.xpose.msra.mxu0 0.0
      %4146 = vmatprep.subr.mxu0 0.0
      %4147 = vmatpush1.xpose.msra.mxu0 0.0
      %4148 = vmatprep.subr.mxu0 0.0
      %4149 = vmatpush1.xpose.msra.mxu0 0.0
      %4150 = vmatprep.subr.mxu0 0.0
      %4151 = vmatpush1.xpose.msra.mxu0 0.0
      %4152 = vmatprep.subr.mxu0 0.0
      %4153 = vmatpush1.xpose.msra.mxu0 0.0
      %4154 = vmatprep.subr.mxu0 0.0
      %4155 = vmatpush1.xpose.msra.mxu0 0.0
      %4156 = vmatprep.subr.mxu0 0.0
      %4157 = vmatpush1.xpose.msra.mxu0 0.0
      %4158 = vmatprep.subr.mxu0 0.0
      %4159 = vmatpush1.xpose.msra.mxu0 0.0
      %4160 = vmatprep.subr.mxu0 0.0
      %4161 = vmatpush1.xpose.msra.mxu0 0.0
      %4162 = vmatprep.subr.mxu0 0.0
      %4163 = vmatpush1.xpose.msra.mxu0 0.0
      %4164 = vmatprep.subr.mxu0 0.0
      %4165 = vmatpush1.xpose.msra.mxu0 0.0
      %4166 = vmatprep.subr.mxu0 0.0
      %4167 = vmatpush1.xpose.msra.mxu0 0.0
      %4168 = vmatprep.subr.mxu0 0.0
      %4169 = vmatpush1.xpose.msra.mxu0 0.0
      %4170 = vmatprep.subr.mxu0 0.0
      %4171 = vmatpush1.xpose.msra.mxu0 0.0
      %4172 = vmatprep.subr.mxu0 0.0
      %4173 = vmatpush1.xpose.msra.mxu0 0.0
      %4174 = vmatprep.subr.mxu0 0.0
      %4175 = vmatpush1.xpose.msra.mxu0 0.0
      %4176 = vmatprep.subr.mxu0 0.0
      %4177 = vmatpush1.xpose.msra.mxu0 0.0
      %4178 = vmatprep.subr.mxu0 0.0
      %4179 = vmatpush1.xpose.msra.mxu0 0.0
      %4180 = vmatprep.subr.mxu0 0.0
      %4181 = vmatpush1.xpose.msra.mxu0 0.0
      %4182 = vmatprep.subr.mxu0 0.0
      %4183 = vmatpush1.xpose.msra.mxu0 0.0
      %4184 = vmatprep.subr.mxu0 0.0
      %4185 = vmatpush1.xpose.msra.mxu0 0.0
      %4186 = vmatprep.subr.mxu0 0.0
      %4187 = vmatpush1.xpose.msra.mxu0 0.0
      %4188 = vmatprep.subr.mxu0 0.0
      %4189 = vmatpush1.xpose.msra.mxu0 0.0
      %4190 = vmatprep.mubr.f32.mxu0 0.0
      %4191 = vmatmul.mubr.f32.gmra.mrb[0].mxu0 %v4121
      %v4192 = vpop.f32.mrb[0].mxu0
      %v4193 = vadd.f32 0.0, %v4192
      %v4194 = vpop.f32.mrb[0].mxu0
      %4195 = vdwg.mxu0
      %v4196 = vmul.f32 %v4193, 0.35355338
      %v4197 = vadd.f32 %v4196, %v799
      %v4198 = vsel %vm1095, %v4197, -inf
      %4199 = vmax.xlane.f32.xlu0 %v4198
      %v4200 = vpop.xlane.xlu0 %4199
      %v4201 = vsub.f32 %v4197, %v4200
      %v4202 = vmul.f32 %v4201, 1.442695
      %v4203 = vpow.pop %v4202
      %v4204 = vsel %vm1095, %v4203, 0.0
      %4205 = vadd.xlane.f32.xlu0 %v4204
      %v4206 = vpop.xlane.xlu0 %4205
      %v4207 = vrcp.pop %v4206
      %v4208 = vmul.f32 %v4203, %v4207
      %4209 = vrot.lane.b32.xlu0 %v4117, 96
      %v4210 = vpop.permute.xlu0 %4209
      %v4213 = vsel %vm1095, %v4208, 0
      %4215 = vmatprep.subr.mxu0 0.0
      %4216 = vmatpush1.msra.mxu0 %v4210
      %4217 = vmatprep.subr.mxu0 0.0
      %4218 = vmatpush1.msra.mxu0 0.0
      %4219 = vmatprep.subr.mxu0 0.0
      %4220 = vmatpush1.msra.mxu0 0.0
      %4221 = vmatprep.subr.mxu0 0.0
      %4222 = vmatpush1.msra.mxu0 0.0
      %4223 = vmatprep.subr.mxu0 0.0
      %4224 = vmatpush1.msra.mxu0 0.0
      %4225 = vmatprep.subr.mxu0 0.0
      %4226 = vmatpush1.msra.mxu0 0.0
      %4227 = vmatprep.subr.mxu0 0.0
      %4228 = vmatpush1.msra.mxu0 0.0
      %4229 = vmatprep.subr.mxu0 0.0
      %4230 = vmatpush1.msra.mxu0 0.0
      %4231 = vmatprep.subr.mxu0 0.0
      %4232 = vmatpush1.msra.mxu0 0.0
      %4233 = vmatprep.subr.mxu0 0.0
      %4234 = vmatpush1.msra.mxu0 0.0
      %4235 = vmatprep.subr.mxu0 0.0
      %4236 = vmatpush1.msra.mxu0 0.0
      %4237 = vmatprep.subr.mxu0 0.0
      %4238 = vmatpush1.msra.mxu0 0.0
      %4239 = vmatprep.subr.mxu0 0.0
      %4240 = vmatpush1.msra.mxu0 0.0
      %4241 = vmatprep.subr.mxu0 0.0
      %4242 = vmatpush1.msra.mxu0 0.0
      %4243 = vmatprep.subr.mxu0 0.0
      %4244 = vmatpush1.msra.mxu0 0.0
      %4245 = vmatprep.subr.mxu0 0.0
      %4246 = vmatpush1.msra.mxu0 0.0
      %4247 = vmatprep.subr.mxu0 0.0
      %4248 = vmatpush1.msra.mxu0 0.0
      %4249 = vmatprep.subr.mxu0 0.0
      %4250 = vmatpush1.msra.mxu0 0.0
      %4251 = vmatprep.subr.mxu0 0.0
      %4252 = vmatpush1.msra.mxu0 0.0
      %4253 = vmatprep.subr.mxu0 0.0
      %4254 = vmatpush1.msra.mxu0 0.0
      %4255 = vmatprep.subr.mxu0 0.0
      %4256 = vmatpush1.msra.mxu0 0.0
      %4257 = vmatprep.subr.mxu0 0.0
      %4258 = vmatpush1.msra.mxu0 0.0
      %4259 = vmatprep.subr.mxu0 0.0
      %4260 = vmatpush1.msra.mxu0 0.0
      %4261 = vmatprep.subr.mxu0 0.0
      %4262 = vmatpush1.msra.mxu0 0.0
      %4263 = vmatprep.subr.mxu0 0.0
      %4264 = vmatpush1.msra.mxu0 0.0
      %4265 = vmatprep.subr.mxu0 0.0
      %4266 = vmatpush1.msra.mxu0 0.0
      %4267 = vmatprep.subr.mxu0 0.0
      %4268 = vmatpush1.msra.mxu0 0.0
      %4269 = vmatprep.subr.mxu0 0.0
      %4270 = vmatpush1.msra.mxu0 0.0
      %4271 = vmatprep.subr.mxu0 0.0
      %4272 = vmatpush1.msra.mxu0 0.0
      %4273 = vmatprep.subr.mxu0 0.0
      %4274 = vmatpush1.msra.mxu0 0.0
      %4275 = vmatprep.subr.mxu0 0.0
      %4276 = vmatpush1.msra.mxu0 0.0
      %4277 = vmatprep.subr.mxu0 0.0
      %4278 = vmatpush1.msra.mxu0 0.0
      %4279 = vmatprep.mubr.f32.mxu0 0.0
      %4280 = vmatmul.mubr.f32.gmra.mrb[0].mxu0 %v4213
      %v4281 = vpop.f32.mrb[0].mxu0
      %v4282 = vadd.f32 0.0, %v4281
      %v4283 = vpop.f32.mrb[0].mxu0
      %4284 = vdwg.mxu0
      %4285 = vrot.lane.b32.xlu0 %v4034, 120
      %v4286 = vpop.permute.xlu0 %4285
      %4287 = vrot.lane.b32.xlu0 %v4117, 120
      %v4288 = vpop.permute.xlu0 %4287
      %v4289 = vsel %vm1095, %v4286, 0
      %v4291 = vsel %vm1095, %v4288, 0
      %4293 = vmatprep.subr.mxu0 0.0
      %4294 = vmatpush1.xpose.msra.mxu0 %v4291
      %4295 = vmatprep.subr.mxu0 0.0
      %4296 = vmatpush1.xpose.msra.mxu0 0.0
      %4297 = vmatprep.subr.mxu0 0.0
      %4298 = vmatpush1.xpose.msra.mxu0 0.0
      %4299 = vmatprep.subr.mxu0 0.0
      %4300 = vmatpush1.xpose.msra.mxu0 0.0
      %4301 = vmatprep.subr.mxu0 0.0
      %4302 = vmatpush1.xpose.msra.mxu0 0.0
      %4303 = vmatprep.subr.mxu0 0.0
      %4304 = vmatpush1.xpose.msra.mxu0 0.0
      %4305 = vmatprep.subr.mxu0 0.0
      %4306 = vmatpush1.xpose.msra.mxu0 0.0
      %4307 = vmatprep.subr.mxu0 0.0
      %4308 = vmatpush1.xpose.msra.mxu0 0.0
      %4309 = vmatprep.subr.mxu0 0.0
      %4310 = vmatpush1.xpose.msra.mxu0 0.0
      %4311 = vmatprep.subr.mxu0 0.0
      %4312 = vmatpush1.xpose.msra.mxu0 0.0
      %4313 = vmatprep.subr.mxu0 0.0
      %4314 = vmatpush1.xpose.msra.mxu0 0.0
      %4315 = vmatprep.subr.mxu0 0.0
      %4316 = vmatpush1.xpose.msra.mxu0 0.0
      %4317 = vmatprep.subr.mxu0 0.0
      %4318 = vmatpush1.xpose.msra.mxu0 0.0
      %4319 = vmatprep.subr.mxu0 0.0
      %4320 = vmatpush1.xpose.msra.mxu0 0.0
      %4321 = vmatprep.subr.mxu0 0.0
      %4322 = vmatpush1.xpose.msra.mxu0 0.0
      %4323 = vmatprep.subr.mxu0 0.0
      %4324 = vmatpush1.xpose.msra.mxu0 0.0
      %4325 = vmatprep.subr.mxu0 0.0
      %4326 = vmatpush1.xpose.msra.mxu0 0.0
      %4327 = vmatprep.subr.mxu0 0.0
      %4328 = vmatpush1.xpose.msra.mxu0 0.0
      %4329 = vmatprep.subr.mxu0 0.0
      %4330 = vmatpush1.xpose.msra.mxu0 0.0
      %4331 = vmatprep.subr.mxu0 0.0
      %4332 = vmatpush1.xpose.msra.mxu0 0.0
      %4333 = vmatprep.subr.mxu0 0.0
      %4334 = vmatpush1.xpose.msra.mxu0 0.0
      %4335 = vmatprep.subr.mxu0 0.0
      %4336 = vmatpush1.xpose.msra.mxu0 0.0
      %4337 = vmatprep.subr.mxu0 0.0
      %4338 = vmatpush1.xpose.msra.mxu0 0.0
      %4339 = vmatprep.subr.mxu0 0.0
      %4340 = vmatpush1.xpose.msra.mxu0 0.0
      %4341 = vmatprep.subr.mxu0 0.0
      %4342 = vmatpush1.xpose.msra.mxu0 0.0
      %4343 = vmatprep.subr.mxu0 0.0
      %4344 = vmatpush1.xpose.msra.mxu0 0.0
      %4345 = vmatprep.subr.mxu0 0.0
      %4346 = vmatpush1.xpose.msra.mxu0 0.0
      %4347 = vmatprep.subr.mxu0 0.0
      %4348 = vmatpush1.xpose.msra.mxu0 0.0
      %4349 = vmatprep.subr.mxu0 0.0
      %4350 = vmatpush1.xpose.msra.mxu0 0.0
      %4351 = vmatprep.subr.mxu0 0.0
      %4352 = vmatpush1.xpose.msra.mxu0 0.0
      %4353 = vmatprep.subr.mxu0 0.0
      %4354 = vmatpush1.xpose.msra.mxu0 0.0
      %4355 = vmatprep.subr.mxu0 0.0
      %4356 = vmatpush1.xpose.msra.mxu0 0.0
      %4357 = vmatprep.mubr.f32.mxu0 0.0
      %4358 = vmatmul.mubr.f32.gmra.mrb[0].mxu0 %v4289
      %v4359 = vpop.f32.mrb[0].mxu0
      %v4360 = vadd.f32 0.0, %v4359
      %v4361 = vpop.f32.mrb[0].mxu0
      %4362 = vdwg.mxu0
      %v4363 = vmul.f32 %v4360, 0.35355338
      %v4364 = vadd.f32 %v4363, %v799
      %v4365 = vsel %vm1095, %v4364, -inf
      %4366 = vmax.xlane.f32.xlu0 %v4365
      %v4367 = vpop.xlane.xlu0 %4366
      %v4368 = vsub.f32 %v4364, %v4367
      %v4369 = vmul.f32 %v4368, 1.442695
      %v4370 = vpow.pop %v4369
      %v4371 = vsel %vm1095, %v4370, 0.0
      %4372 = vadd.xlane.f32.xlu0 %v4371
      %v4373 = vpop.xlane.xlu0 %4372
      %v4374 = vrcp.pop %v4373
      %v4375 = vmul.f32 %v4370, %v4374
      %4376 = vrot.lane.b32.xlu0 %v4117, 88
      %v4377 = vpop.permute.xlu0 %4376
      %v4380 = vsel %vm1095, %v4375, 0
      %4382 = vmatprep.subr.mxu0 0.0
      %4383 = vmatpush1.msra.mxu0 %v4377
      %4384 = vmatprep.subr.mxu0 0.0
      %4385 = vmatpush1.msra.mxu0 0.0
      %4386 = vmatprep.subr.mxu0 0.0
      %4387 = vmatpush1.msra.mxu0 0.0
      %4388 = vmatprep.subr.mxu0 0.0
      %4389 = vmatpush1.msra.mxu0 0.0
      %4390 = vmatprep.subr.mxu0 0.0
      %4391 = vmatpush1.msra.mxu0 0.0
      %4392 = vmatprep.subr.mxu0 0.0
      %4393 = vmatpush1.msra.mxu0 0.0
      %4394 = vmatprep.subr.mxu0 0.0
      %4395 = vmatpush1.msra.mxu0 0.0
      %4396 = vmatprep.subr.mxu0 0.0
      %4397 = vmatpush1.msra.mxu0 0.0
      %4398 = vmatprep.subr.mxu0 0.0
      %4399 = vmatpush1.msra.mxu0 0.0
      %4400 = vmatprep.subr.mxu0 0.0
      %4401 = vmatpush1.msra.mxu0 0.0
      %4402 = vmatprep.subr.mxu0 0.0
      %4403 = vmatpush1.msra.mxu0 0.0
      %4404 = vmatprep.subr.mxu0 0.0
      %4405 = vmatpush1.msra.mxu0 0.0
      %4406 = vmatprep.subr.mxu0 0.0
      %4407 = vmatpush1.msra.mxu0 0.0
      %4408 = vmatprep.subr.mxu0 0.0
      %4409 = vmatpush1.msra.mxu0 0.0
      %4410 = vmatprep.subr.mxu0 0.0
      %4411 = vmatpush1.msra.mxu0 0.0
      %4412 = vmatprep.subr.mxu0 0.0
      %4413 = vmatpush1.msra.mxu0 0.0
      %4414 = vmatprep.subr.mxu0 0.0
      %4415 = vmatpush1.msra.mxu0 0.0
      %4416 = vmatprep.subr.mxu0 0.0
      %4417 = vmatpush1.msra.mxu0 0.0
      %4418 = vmatprep.subr.mxu0 0.0
      %4419 = vmatpush1.msra.mxu0 0.0
      %4420 = vmatprep.subr.mxu0 0.0
      %4421 = vmatpush1.msra.mxu0 0.0
      %4422 = vmatprep.subr.mxu0 0.0
      %4423 = vmatpush1.msra.mxu0 0.0
      %4424 = vmatprep.subr.mxu0 0.0
      %4425 = vmatpush1.msra.mxu0 0.0
      %4426 = vmatprep.subr.mxu0 0.0
      %4427 = vmatpush1.msra.mxu0 0.0
      %4428 = vmatprep.subr.mxu0 0.0
      %4429 = vmatpush1.msra.mxu0 0.0
      %4430 = vmatprep.subr.mxu0 0.0
      %4431 = vmatpush1.msra.mxu0 0.0
      %4432 = vmatprep.subr.mxu0 0.0
      %4433 = vmatpush1.msra.mxu0 0.0
      %4434 = vmatprep.subr.mxu0 0.0
      %4435 = vmatpush1.msra.mxu0 0.0
      %4436 = vmatprep.subr.mxu0 0.0
      %4437 = vmatpush1.msra.mxu0 0.0
      %4438 = vmatprep.subr.mxu0 0.0
      %4439 = vmatpush1.msra.mxu0 0.0
      %4440 = vmatprep.subr.mxu0 0.0
      %4441 = vmatpush1.msra.mxu0 0.0
      %4442 = vmatprep.subr.mxu0 0.0
      %4443 = vmatpush1.msra.mxu0 0.0
      %4444 = vmatprep.subr.mxu0 0.0
      %4445 = vmatpush1.msra.mxu0 0.0
      %4446 = vmatprep.mubr.f32.mxu0 0.0
      %4447 = vmatmul.mubr.f32.gmra.mrb[0].mxu0 %v4380
      %v4448 = vpop.f32.mrb[0].mxu0
      %v4449 = vadd.f32 0.0, %v4448
      %v4450 = vpop.f32.mrb[0].mxu0
      %4451 = vdwg.mxu0
      %4452 = vrot.lane.b32.xlu0 %v4034, 112
      %v4453 = vpop.permute.xlu0 %4452
      %4454 = vrot.lane.b32.xlu0 %v4117, 112
      %v4455 = vpop.permute.xlu0 %4454
      %v4456 = vsel %vm1095, %v4453, 0
      %v4458 = vsel %vm1095, %v4455, 0
      %4460 = vmatprep.subr.mxu0 0.0
      %4461 = vmatpush1.xpose.msra.mxu0 %v4458
      %4462 = vmatprep.subr.mxu0 0.0
      %4463 = vmatpush1.xpose.msra.mxu0 0.0
      %4464 = vmatprep.subr.mxu0 0.0
      %4465 = vmatpush1.xpose.msra.mxu0 0.0
      %4466 = vmatprep.subr.mxu0 0.0
      %4467 = vmatpush1.xpose.msra.mxu0 0.0
      %4468 = vmatprep.subr.mxu0 0.0
      %4469 = vmatpush1.xpose.msra.mxu0 0.0
      %4470 = vmatprep.subr.mxu0 0.0
      %4471 = vmatpush1.xpose.msra.mxu0 0.0
      %4472 = vmatprep.subr.mxu0 0.0
      %4473 = vmatpush1.xpose.msra.mxu0 0.0
      %4474 = vmatprep.subr.mxu0 0.0
      %4475 = vmatpush1.xpose.msra.mxu0 0.0
      %4476 = vmatprep.subr.mxu0 0.0
      %4477 = vmatpush1.xpose.msra.mxu0 0.0
      %4478 = vmatprep.subr.mxu0 0.0
      %4479 = vmatpush1.xpose.msra.mxu0 0.0
      %4480 = vmatprep.subr.mxu0 0.0
      %4481 = vmatpush1.xpose.msra.mxu0 0.0
      %4482 = vmatprep.subr.mxu0 0.0
      %4483 = vmatpush1.xpose.msra.mxu0 0.0
      %4484 = vmatprep.subr.mxu0 0.0
      %4485 = vmatpush1.xpose.msra.mxu0 0.0
      %4486 = vmatprep.subr.mxu0 0.0
      %4487 = vmatpush1.xpose.msra.mxu0 0.0
      %4488 = vmatprep.subr.mxu0 0.0
      %4489 = vmatpush1.xpose.msra.mxu0 0.0
      %4490 = vmatprep.subr.mxu0 0.0
      %4491 = vmatpush1.xpose.msra.mxu0 0.0
      %4492 = vmatprep.subr.mxu0 0.0
      %4493 = vmatpush1.xpose.msra.mxu0 0.0
      %4494 = vmatprep.subr.mxu0 0.0
      %4495 = vmatpush1.xpose.msra.mxu0 0.0
      %4496 = vmatprep.subr.mxu0 0.0
      %4497 = vmatpush1.xpose.msra.mxu0 0.0
      %4498 = vmatprep.subr.mxu0 0.0
      %4499 = vmatpush1.xpose.msra.mxu0 0.0
      %4500 = vmatprep.subr.mxu0 0.0
      %4501 = vmatpush1.xpose.msra.mxu0 0.0
      %4502 = vmatprep.subr.mxu0 0.0
      %4503 = vmatpush1.xpose.msra.mxu0 0.0
      %4504 = vmatprep.subr.mxu0 0.0
      %4505 = vmatpush1.xpose.msra.mxu0 0.0
      %4506 = vmatprep.subr.mxu0 0.0
      %4507 = vmatpush1.xpose.msra.mxu0 0.0
      %4508 = vmatprep.subr.mxu0 0.0
      %4509 = vmatpush1.xpose.msra.mxu0 0.0
      %4510 = vmatprep.subr.mxu0 0.0
      %4511 = vmatpush1.xpose.msra.mxu0 0.0
      %4512 = vmatprep.subr.mxu0 0.0
      %4513 = vmatpush1.xpose.msra.mxu0 0.0
      %4514 = vmatprep.subr.mxu0 0.0
      %4515 = vmatpush1.xpose.msra.mxu0 0.0
      %4516 = vmatprep.subr.mxu0 0.0
      %4517 = vmatpush1.xpose.msra.mxu0 0.0
      %4518 = vmatprep.subr.mxu0 0.0
      %4519 = vmatpush1.xpose.msra.mxu0 0.0
      %4520 = vmatprep.subr.mxu0 0.0
      %4521 = vmatpush1.xpose.msra.mxu0 0.0
      %4522 = vmatprep.subr.mxu0 0.0
      %4523 = vmatpush1.xpose.msra.mxu0 0.0
      %4524 = vmatprep.mubr.f32.mxu0 0.0
      %4525 = vmatmul.mubr.f32.gmra.mrb[0].mxu0 %v4456
      %v4526 = vpop.f32.mrb[0].mxu0
      %v4527 = vadd.f32 0.0, %v4526
      %v4528 = vpop.f32.mrb[0].mxu0
      %4529 = vdwg.mxu0
      %v4530 = vmul.f32 %v4527, 0.35355338
      %v4531 = vadd.f32 %v4530, %v799
      %v4532 = vsel %vm1095, %v4531, -inf
      %4533 = vmax.xlane.f32.xlu0 %v4532
      %v4534 = vpop.xlane.xlu0 %4533
      %v4535 = vsub.f32 %v4531, %v4534
      %v4536 = vmul.f32 %v4535, 1.442695
      %v4537 = vpow.pop %v4536
      %v4538 = vsel %vm1095, %v4537, 0.0
      %4539 = vadd.xlane.f32.xlu0 %v4538
      %v4540 = vpop.xlane.xlu0 %4539
      %v4541 = vrcp.pop %v4540
      %v4542 = vmul.f32 %v4537, %v4541
      %4543 = vrot.lane.b32.xlu0 %v4117, 80
      %v4544 = vpop.permute.xlu0 %4543
      %v4547 = vsel %vm1095, %v4542, 0
      %4549 = vmatprep.subr.mxu0 0.0
      %4550 = vmatpush1.msra.mxu0 %v4544
      %4551 = vmatprep.subr.mxu0 0.0
      %4552 = vmatpush1.msra.mxu0 0.0
      %4553 = vmatprep.subr.mxu0 0.0
      %4554 = vmatpush1.msra.mxu0 0.0
      %4555 = vmatprep.subr.mxu0 0.0
      %4556 = vmatpush1.msra.mxu0 0.0
      %4557 = vmatprep.subr.mxu0 0.0
      %4558 = vmatpush1.msra.mxu0 0.0
      %4559 = vmatprep.subr.mxu0 0.0
      %4560 = vmatpush1.msra.mxu0 0.0
      %4561 = vmatprep.subr.mxu0 0.0
      %4562 = vmatpush1.msra.mxu0 0.0
      %4563 = vmatprep.subr.mxu0 0.0
      %4564 = vmatpush1.msra.mxu0 0.0
      %4565 = vmatprep.subr.mxu0 0.0
      %4566 = vmatpush1.msra.mxu0 0.0
      %4567 = vmatprep.subr.mxu0 0.0
      %4568 = vmatpush1.msra.mxu0 0.0
      %4569 = vmatprep.subr.mxu0 0.0
      %4570 = vmatpush1.msra.mxu0 0.0
      %4571 = vmatprep.subr.mxu0 0.0
      %4572 = vmatpush1.msra.mxu0 0.0
      %4573 = vmatprep.subr.mxu0 0.0
      %4574 = vmatpush1.msra.mxu0 0.0
      %4575 = vmatprep.subr.mxu0 0.0
      %4576 = vmatpush1.msra.mxu0 0.0
      %4577 = vmatprep.subr.mxu0 0.0
      %4578 = vmatpush1.msra.mxu0 0.0
      %4579 = vmatprep.subr.mxu0 0.0
      %4580 = vmatpush1.msra.mxu0 0.0
      %4581 = vmatprep.subr.mxu0 0.0
      %4582 = vmatpush1.msra.mxu0 0.0
      %4583 = vmatprep.subr.mxu0 0.0
      %4584 = vmatpush1.msra.mxu0 0.0
      %4585 = vmatprep.subr.mxu0 0.0
      %4586 = vmatpush1.msra.mxu0 0.0
      %4587 = vmatprep.subr.mxu0 0.0
      %4588 = vmatpush1.msra.mxu0 0.0
      %4589 = vmatprep.subr.mxu0 0.0
      %4590 = vmatpush1.msra.mxu0 0.0
      %4591 = vmatprep.subr.mxu0 0.0
      %4592 = vmatpush1.msra.mxu0 0.0
      %4593 = vmatprep.subr.mxu0 0.0
      %4594 = vmatpush1.msra.mxu0 0.0
      %4595 = vmatprep.subr.mxu0 0.0
      %4596 = vmatpush1.msra.mxu0 0.0
      %4597 = vmatprep.subr.mxu0 0.0
      %4598 = vmatpush1.msra.mxu0 0.0
      %4599 = vmatprep.subr.mxu0 0.0
      %4600 = vmatpush1.msra.mxu0 0.0
      %4601 = vmatprep.subr.mxu0 0.0
      %4602 = vmatpush1.msra.mxu0 0.0
      %4603 = vmatprep.subr.mxu0 0.0
      %4604 = vmatpush1.msra.mxu0 0.0
      %4605 = vmatprep.subr.mxu0 0.0
      %4606 = vmatpush1.msra.mxu0 0.0
      %4607 = vmatprep.subr.mxu0 0.0
      %4608 = vmatpush1.msra.mxu0 0.0
      %4609 = vmatprep.subr.mxu0 0.0
      %4610 = vmatpush1.msra.mxu0 0.0
      %4611 = vmatprep.subr.mxu0 0.0
      %4612 = vmatpush1.msra.mxu0 0.0
      %4613 = vmatprep.mubr.f32.mxu0 0.0
      %4614 = vmatmul.mubr.f32.gmra.mrb[0].mxu0 %v4547
      %v4615 = vpop.f32.mrb[0].mxu0
      %v4616 = vadd.f32 0.0, %v4615
      %v4617 = vpop.f32.mrb[0].mxu0
      %4618 = vdwg.mxu0
      %4619 = vrot.lane.b32.xlu0 %v4034, 104
      %v4620 = vpop.permute.xlu0 %4619
      %4621 = vrot.lane.b32.xlu0 %v4117, 104
      %v4622 = vpop.permute.xlu0 %4621
      %v4623 = vsel %vm1095, %v4620, 0
      %v4625 = vsel %vm1095, %v4622, 0
      %4627 = vmatprep.subr.mxu0 0.0
      %4628 = vmatpush1.xpose.msra.mxu0 %v4625
      %4629 = vmatprep.subr.mxu0 0.0
      %4630 = vmatpush1.xpose.msra.mxu0 0.0
      %4631 = vmatprep.subr.mxu0 0.0
      %4632 = vmatpush1.xpose.msra.mxu0 0.0
      %4633 = vmatprep.subr.mxu0 0.0
      %4634 = vmatpush1.xpose.msra.mxu0 0.0
      %4635 = vmatprep.subr.mxu0 0.0
      %4636 = vmatpush1.xpose.msra.mxu0 0.0
      %4637 = vmatprep.subr.mxu0 0.0
      %4638 = vmatpush1.xpose.msra.mxu0 0.0
      %4639 = vmatprep.subr.mxu0 0.0
      %4640 = vmatpush1.xpose.msra.mxu0 0.0
      %4641 = vmatprep.subr.mxu0 0.0
      %4642 = vmatpush1.xpose.msra.mxu0 0.0
      %4643 = vmatprep.subr.mxu0 0.0
      %4644 = vmatpush1.xpose.msra.mxu0 0.0
      %4645 = vmatprep.subr.mxu0 0.0
      %4646 = vmatpush1.xpose.msra.mxu0 0.0
      %4647 = vmatprep.subr.mxu0 0.0
      %4648 = vmatpush1.xpose.msra.mxu0 0.0
      %4649 = vmatprep.subr.mxu0 0.0
      %4650 = vmatpush1.xpose.msra.mxu0 0.0
      %4651 = vmatprep.subr.mxu0 0.0
      %4652 = vmatpush1.xpose.msra.mxu0 0.0
      %4653 = vmatprep.subr.mxu0 0.0
      %4654 = vmatpush1.xpose.msra.mxu0 0.0
      %4655 = vmatprep.subr.mxu0 0.0
      %4656 = vmatpush1.xpose.msra.mxu0 0.0
      %4657 = vmatprep.subr.mxu0 0.0
      %4658 = vmatpush1.xpose.msra.mxu0 0.0
      %4659 = vmatprep.subr.mxu0 0.0
      %4660 = vmatpush1.xpose.msra.mxu0 0.0
      %4661 = vmatprep.subr.mxu0 0.0
      %4662 = vmatpush1.xpose.msra.mxu0 0.0
      %4663 = vmatprep.subr.mxu0 0.0
      %4664 = vmatpush1.xpose.msra.mxu0 0.0
      %4665 = vmatprep.subr.mxu0 0.0
      %4666 = vmatpush1.xpose.msra.mxu0 0.0
      %4667 = vmatprep.subr.mxu0 0.0
      %4668 = vmatpush1.xpose.msra.mxu0 0.0
      %4669 = vmatprep.subr.mxu0 0.0
      %4670 = vmatpush1.xpose.msra.mxu0 0.0
      %4671 = vmatprep.subr.mxu0 0.0
      %4672 = vmatpush1.xpose.msra.mxu0 0.0
      %4673 = vmatprep.subr.mxu0 0.0
      %4674 = vmatpush1.xpose.msra.mxu0 0.0
      %4675 = vmatprep.subr.mxu0 0.0
      %4676 = vmatpush1.xpose.msra.mxu0 0.0
      %4677 = vmatprep.subr.mxu0 0.0
      %4678 = vmatpush1.xpose.msra.mxu0 0.0
      %4679 = vmatprep.subr.mxu0 0.0
      %4680 = vmatpush1.xpose.msra.mxu0 0.0
      %4681 = vmatprep.subr.mxu0 0.0
      %4682 = vmatpush1.xpose.msra.mxu0 0.0
      %4683 = vmatprep.subr.mxu0 0.0
      %4684 = vmatpush1.xpose.msra.mxu0 0.0
      %4685 = vmatprep.subr.mxu0 0.0
      %4686 = vmatpush1.xpose.msra.mxu0 0.0
      %4687 = vmatprep.subr.mxu0 0.0
      %4688 = vmatpush1.xpose.msra.mxu0 0.0
      %4689 = vmatprep.subr.mxu0 0.0
      %4690 = vmatpush1.xpose.msra.mxu0 0.0
      %4691 = vmatprep.mubr.f32.mxu0 0.0
      %4692 = vmatmul.mubr.f32.gmra.mrb[0].mxu0 %v4623
      %v4693 = vpop.f32.mrb[0].mxu0
      %v4694 = vadd.f32 0.0, %v4693
      %v4695 = vpop.f32.mrb[0].mxu0
      %4696 = vdwg.mxu0
      %v4697 = vmul.f32 %v4694, 0.35355338
      %v4698 = vadd.f32 %v4697, %v799
      %v4699 = vsel %vm1095, %v4698, -inf
      %4700 = vmax.xlane.f32.xlu0 %v4699
      %v4701 = vpop.xlane.xlu0 %4700
      %v4702 = vsub.f32 %v4698, %v4701
      %v4703 = vmul.f32 %v4702, 1.442695
      %v4704 = vpow.pop %v4703
      %v4705 = vsel %vm1095, %v4704, 0.0
      %4706 = vadd.xlane.f32.xlu0 %v4705
      %v4707 = vpop.xlane.xlu0 %4706
      %v4708 = vrcp.pop %v4707
      %v4709 = vmul.f32 %v4704, %v4708
      %4710 = vrot.lane.b32.xlu0 %v4117, 72
      %v4711 = vpop.permute.xlu0 %4710
      %v4714 = vsel %vm1095, %v4709, 0
      %4716 = vmatprep.subr.mxu0 0.0
      %4717 = vmatpush1.msra.mxu0 %v4711
      %4718 = vmatprep.subr.mxu0 0.0
      %4719 = vmatpush1.msra.mxu0 0.0
      %4720 = vmatprep.subr.mxu0 0.0
      %4721 = vmatpush1.msra.mxu0 0.0
      %4722 = vmatprep.subr.mxu0 0.0
      %4723 = vmatpush1.msra.mxu0 0.0
      %4724 = vmatprep.subr.mxu0 0.0
      %4725 = vmatpush1.msra.mxu0 0.0
      %4726 = vmatprep.subr.mxu0 0.0
      %4727 = vmatpush1.msra.mxu0 0.0
      %4728 = vmatprep.subr.mxu0 0.0
      %4729 = vmatpush1.msra.mxu0 0.0
      %4730 = vmatprep.subr.mxu0 0.0
      %4731 = vmatpush1.msra.mxu0 0.0
      %4732 = vmatprep.subr.mxu0 0.0
      %4733 = vmatpush1.msra.mxu0 0.0
      %4734 = vmatprep.subr.mxu0 0.0
      %4735 = vmatpush1.msra.mxu0 0.0
      %4736 = vmatprep.subr.mxu0 0.0
      %4737 = vmatpush1.msra.mxu0 0.0
      %4738 = vmatprep.subr.mxu0 0.0
      %4739 = vmatpush1.msra.mxu0 0.0
      %4740 = vmatprep.subr.mxu0 0.0
      %4741 = vmatpush1.msra.mxu0 0.0
      %4742 = vmatprep.subr.mxu0 0.0
      %4743 = vmatpush1.msra.mxu0 0.0
      %4744 = vmatprep.subr.mxu0 0.0
      %4745 = vmatpush1.msra.mxu0 0.0
      %4746 = vmatprep.subr.mxu0 0.0
      %4747 = vmatpush1.msra.mxu0 0.0
      %4748 = vmatprep.subr.mxu0 0.0
      %4749 = vmatpush1.msra.mxu0 0.0
      %4750 = vmatprep.subr.mxu0 0.0
      %4751 = vmatpush1.msra.mxu0 0.0
      %4752 = vmatprep.subr.mxu0 0.0
      %4753 = vmatpush1.msra.mxu0 0.0
      %4754 = vmatprep.subr.mxu0 0.0
      %4755 = vmatpush1.msra.mxu0 0.0
      %4756 = vmatprep.subr.mxu0 0.0
      %4757 = vmatpush1.msra.mxu0 0.0
      %4758 = vmatprep.subr.mxu0 0.0
      %4759 = vmatpush1.msra.mxu0 0.0
      %4760 = vmatprep.subr.mxu0 0.0
      %4761 = vmatpush1.msra.mxu0 0.0
      %4762 = vmatprep.subr.mxu0 0.0
      %4763 = vmatpush1.msra.mxu0 0.0
      %4764 = vmatprep.subr.mxu0 0.0
      %4765 = vmatpush1.msra.mxu0 0.0
      %4766 = vmatprep.subr.mxu0 0.0
      %4767 = vmatpush1.msra.mxu0 0.0
      %4768 = vmatprep.subr.mxu0 0.0
      %4769 = vmatpush1.msra.mxu0 0.0
      %4770 = vmatprep.subr.mxu0 0.0
      %4771 = vmatpush1.msra.mxu0 0.0
      %4772 = vmatprep.subr.mxu0 0.0
      %4773 = vmatpush1.msra.mxu0 0.0
      %4774 = vmatprep.subr.mxu0 0.0
      %4775 = vmatpush1.msra.mxu0 0.0
      %4776 = vmatprep.subr.mxu0 0.0
      %4777 = vmatpush1.msra.mxu0 0.0
      %4778 = vmatprep.subr.mxu0 0.0
      %4779 = vmatpush1.msra.mxu0 0.0
      %4780 = vmatprep.mubr.f32.mxu0 0.0
      %4781 = vmatmul.mubr.f32.gmra.mrb[0].mxu0 %v4714
      %v4782 = vpop.f32.mrb[0].mxu0
      %v4783 = vadd.f32 0.0, %v4782
      %v4784 = vpop.f32.mrb[0].mxu0
      %4785 = vdwg.mxu0
      %4787 = vrot.lane.b32.xlu0 %v4449, 8
      %v4788 = vpop.permute.xlu0 %4787
      %4791 = vrot.lane.b32.xlu0 %v4616, 16
      %v4792 = vpop.permute.xlu0 %4791
      %4795 = vrot.lane.b32.xlu0 %v4783, 24
      %v4796 = vpop.permute.xlu0 %4795
      %v4798 = vsel %vm1095, %v4282, %v4788
      %v4799 = vsel %vm1773, %v4798, %v4792
      %v4800 = vsel %vm1775, %v4799, %v4796
      %s4801 = scalar_lea.vmem %s17, 32
      %v4802 = vld [vmem:[%s4801] sm:$0xff]
      %v4803 = vld [vmem:[%s4801 + $0x8] sm:$0xff]
      %v4804 = vld [vmem:[%s4801 + $0x10] sm:$0xff]
      %v4805 = vld [vmem:[%s4801 + $0x18] sm:$0xff]
      %s4806 = scalar_lea.vmem %s18, 1
      %v4807 = vld [vmem:[%s4806] sm:$0x1]
      %v4809 = vlaneseq
      %v4810 = vshrl.u32 %v4809, 7
      %v4811 = vsub.s32 0, %v4810
      %v4812 = vrot.slane %v4807, %v4811
      %v4815 = vsel %vm979, %v4800, 0
      %4817 = vmatprep.subr.mxu0 0.0
      %4818 = vmatpush1.msra.mxu0 %v4802
      %4819 = vmatprep.subr.mxu0 0.0
      %4820 = vmatpush1.msra.mxu0 %v4803
      %4821 = vmatprep.subr.mxu0 0.0
      %4822 = vmatpush1.msra.mxu0 %v4804
      %4823 = vmatprep.subr.mxu0 0.0
      %4824 = vmatpush1.msra.mxu0 %v4805
      %4825 = vmatprep.subr.mxu0 0.0
      %4826 = vmatpush1.msra.mxu0 0.0
      %4827 = vmatprep.subr.mxu0 0.0
      %4828 = vmatpush1.msra.mxu0 0.0
      %4829 = vmatprep.subr.mxu0 0.0
      %4830 = vmatpush1.msra.mxu0 0.0
      %4831 = vmatprep.subr.mxu0 0.0
      %4832 = vmatpush1.msra.mxu0 0.0
      %4833 = vmatprep.subr.mxu0 0.0
      %4834 = vmatpush1.msra.mxu0 0.0
      %4835 = vmatprep.subr.mxu0 0.0
      %4836 = vmatpush1.msra.mxu0 0.0
      %4837 = vmatprep.subr.mxu0 0.0
      %4838 = vmatpush1.msra.mxu0 0.0
      %4839 = vmatprep.subr.mxu0 0.0
      %4840 = vmatpush1.msra.mxu0 0.0
      %4841 = vmatprep.subr.mxu0 0.0
      %4842 = vmatpush1.msra.mxu0 0.0
      %4843 = vmatprep.subr.mxu0 0.0
      %4844 = vmatpush1.msra.mxu0 0.0
      %4845 = vmatprep.subr.mxu0 0.0
      %4846 = vmatpush1.msra.mxu0 0.0
      %4847 = vmatprep.subr.mxu0 0.0
      %4848 = vmatpush1.msra.mxu0 0.0
      %4849 = vmatprep.subr.mxu0 0.0
      %4850 = vmatpush1.msra.mxu0 0.0
      %4851 = vmatprep.subr.mxu0 0.0
      %4852 = vmatpush1.msra.mxu0 0.0
      %4853 = vmatprep.subr.mxu0 0.0
      %4854 = vmatpush1.msra.mxu0 0.0
      %4855 = vmatprep.subr.mxu0 0.0
      %4856 = vmatpush1.msra.mxu0 0.0
      %4857 = vmatprep.subr.mxu0 0.0
      %4858 = vmatpush1.msra.mxu0 0.0
      %4859 = vmatprep.subr.mxu0 0.0
      %4860 = vmatpush1.msra.mxu0 0.0
      %4861 = vmatprep.subr.mxu0 0.0
      %4862 = vmatpush1.msra.mxu0 0.0
      %4863 = vmatprep.subr.mxu0 0.0
      %4864 = vmatpush1.msra.mxu0 0.0
      %4865 = vmatprep.subr.mxu0 0.0
      %4866 = vmatpush1.msra.mxu0 0.0
      %4867 = vmatprep.subr.mxu0 0.0
      %4868 = vmatpush1.msra.mxu0 0.0
      %4869 = vmatprep.subr.mxu0 0.0
      %4870 = vmatpush1.msra.mxu0 0.0
      %4871 = vmatprep.subr.mxu0 0.0
      %4872 = vmatpush1.msra.mxu0 0.0
      %4873 = vmatprep.subr.mxu0 0.0
      %4874 = vmatpush1.msra.mxu0 0.0
      %4875 = vmatprep.subr.mxu0 0.0
      %4876 = vmatpush1.msra.mxu0 0.0
      %4877 = vmatprep.subr.mxu0 0.0
      %4878 = vmatpush1.msra.mxu0 0.0
      %4879 = vmatprep.subr.mxu0 0.0
      %4880 = vmatpush1.msra.mxu0 0.0
      %4881 = vmatprep.mubr.f32.mxu0 0.0
      %4882 = vmatmul.mubr.f32.gmra.mrb[0].mxu0 %v4815
      %v4883 = vpop.f32.mrb[0].mxu0
      %v4884 = vadd.f32 %v4812, %v4883
      %v4885 = vpop.f32.mrb[0].mxu0
      %4886 = vdwg.mxu0
      %v4887 = vadd.f32 %v3950, %v4884
      %s4888 = scalar_lea.vmem %s7, 5
      %v4889 = vld [vmem:[%s4888] sm:$0x1]
      %s4890 = scalar_lea.vmem %s8, 5
      %v4891 = vld [vmem:[%s4890] sm:$0x1]
      %v4892 = vsel %vm979, %v4887, 0.0
      %4893 = vadd.xlane.f32.xlu0 %v4892
      %v4894 = vpop.xlane.xlu0 %4893
      %v4895 = vmul.f32 %v4894, %v983
      %v4896 = vsub.f32 %v4887, %v4895
      %v4897 = vmul.f32 %v4896, %v4896
      %v4898 = vsel %vm979, %v4897, 0.0
      %4899 = vadd.xlane.f32.xlu0 %v4898
      %v4900 = vpop.xlane.xlu0 %4899
      %v4901 = vmul.f32 %v4900, %v983
      %v4902 = vadd.f32 %v4901, 1e-05
      %v4903 = vrsqrt.pop %v4902
      %v4904 = vmul.f32 %v4896, %v4903
      %v4906 = vlaneseq
      %v4907 = vshrl.u32 %v4906, 7
      %v4908 = vsub.s32 0, %v4907
      %v4909 = vrot.slane %v4889, %v4908
      %v4911 = vmul.f32 %v4904, %v4909
      %v4913 = vlaneseq
      %v4914 = vshrl.u32 %v4913, 7
      %v4915 = vsub.s32 0, %v4914
      %v4916 = vrot.slane %v4891, %v4915
      %v4918 = vadd.f32 %v4911, %v4916
      %s4919 = scalar_lea.vmem %s19, 32
      %v4920 = vld [vmem:[%s4919] sm:$0xff]
      %v4921 = vld [vmem:[%s4919 + $0x8] sm:$0xff]
      %v4922 = vld [vmem:[%s4919 + $0x10] sm:$0xff]
      %v4923 = vld [vmem:[%s4919 + $0x18] sm:$0xff]
      %s4924 = scalar_lea.vmem %s20, 1
      %v4925 = vld [vmem:[%s4924] sm:$0x1]
      %v4927 = vlaneseq
      %v4928 = vshrl.u32 %v4927, 7
      %v4929 = vsub.s32 0, %v4928
      %v4930 = vrot.slane %v4925, %v4929
      %v4933 = vsel %vm979, %v4918, 0
      %4935 = vmatprep.subr.mxu0 0.0
      %4936 = vmatpush1.msra.mxu0 %v4920
      %4937 = vmatprep.subr.mxu0 0.0
      %4938 = vmatpush1.msra.mxu0 %v4921
      %4939 = vmatprep.subr.mxu0 0.0
      %4940 = vmatpush1.msra.mxu0 %v4922
      %4941 = vmatprep.subr.mxu0 0.0
      %4942 = vmatpush1.msra.mxu0 %v4923
      %4943 = vmatprep.subr.mxu0 0.0
      %4944 = vmatpush1.msra.mxu0 0.0
      %4945 = vmatprep.subr.mxu0 0.0
      %4946 = vmatpush1.msra.mxu0 0.0
      %4947 = vmatprep.subr.mxu0 0.0
      %4948 = vmatpush1.msra.mxu0 0.0
      %4949 = vmatprep.subr.mxu0 0.0
      %4950 = vmatpush1.msra.mxu0 0.0
      %4951 = vmatprep.subr.mxu0 0.0
      %4952 = vmatpush1.msra.mxu0 0.0
      %4953 = vmatprep.subr.mxu0 0.0
      %4954 = vmatpush1.msra.mxu0 0.0
      %4955 = vmatprep.subr.mxu0 0.0
      %4956 = vmatpush1.msra.mxu0 0.0
      %4957 = vmatprep.subr.mxu0 0.0
      %4958 = vmatpush1.msra.mxu0 0.0
      %4959 = vmatprep.subr.mxu0 0.0
      %4960 = vmatpush1.msra.mxu0 0.0
      %4961 = vmatprep.subr.mxu0 0.0
      %4962 = vmatpush1.msra.mxu0 0.0
      %4963 = vmatprep.subr.mxu0 0.0
      %4964 = vmatpush1.msra.mxu0 0.0
      %4965 = vmatprep.subr.mxu0 0.0
      %4966 = vmatpush1.msra.mxu0 0.0
      %4967 = vmatprep.subr.mxu0 0.0
      %4968 = vmatpush1.msra.mxu0 0.0
      %4969 = vmatprep.subr.mxu0 0.0
      %4970 = vmatpush1.msra.mxu0 0.0
      %4971 = vmatprep.subr.mxu0 0.0
      %4972 = vmatpush1.msra.mxu0 0.0
      %4973 = vmatprep.subr.mxu0 0.0
      %4974 = vmatpush1.msra.mxu0 0.0
      %4975 = vmatprep.subr.mxu0 0.0
      %4976 = vmatpush1.msra.mxu0 0.0
      %4977 = vmatprep.subr.mxu0 0.0
      %4978 = vmatpush1.msra.mxu0 0.0
      %4979 = vmatprep.subr.mxu0 0.0
      %4980 = vmatpush1.msra.mxu0 0.0
      %4981 = vmatprep.subr.mxu0 0.0
      %4982 = vmatpush1.msra.mxu0 0.0
      %4983 = vmatprep.subr.mxu0 0.0
      %4984 = vmatpush1.msra.mxu0 0.0
      %4985 = vmatprep.subr.mxu0 0.0
      %4986 = vmatpush1.msra.mxu0 0.0
      %4987 = vmatprep.subr.mxu0 0.0
      %4988 = vmatpush1.msra.mxu0 0.0
      %4989 = vmatprep.subr.mxu0 0.0
      %4990 = vmatpush1.msra.mxu0 0.0
      %4991 = vmatprep.subr.mxu0 0.0
      %4992 = vmatpush1.msra.mxu0 0.0
      %4993 = vmatprep.subr.mxu0 0.0
      %4994 = vmatpush1.msra.mxu0 0.0
      %4995 = vmatprep.subr.mxu0 0.0
      %4996 = vmatpush1.msra.mxu0 0.0
      %4997 = vmatprep.subr.mxu0 0.0
      %4998 = vmatpush1.msra.mxu0 0.0
      %4999 = vmatprep.mubr.f32.mxu0 0.0
      %5000 = vmatmul.mubr.f32.gmra.mrb[0].mxu0 %v4933
      %v5001 = vpop.f32.mrb[0].mxu0
      %v5002 = vadd.f32 %v4930, %v5001
      %v5003 = vpop.f32.mrb[0].mxu0
      %5004 = vdwg.mxu0
      %v5005 = vmax.f32 %v5002, 0.0
      %s5006 = scalar_lea.vmem %s21, 64
      %v5007 = vld [vmem:[%s5006] sm:$0xff]
      %v5008 = vld [vmem:[%s5006 + $0x8] sm:$0xff]
      %v5009 = vld [vmem:[%s5006 + $0x10] sm:$0xff]
      %v5010 = vld [vmem:[%s5006 + $0x18] sm:$0xff]
      %v5011 = vld [vmem:[%s5006 + $0x20] sm:$0xff]
      %v5012 = vld [vmem:[%s5006 + $0x28] sm:$0xff]
      %v5013 = vld [vmem:[%s5006 + $0x30] sm:$0xff]
      %v5014 = vld [vmem:[%s5006 + $0x38] sm:$0xff]
      %v5016 = vsel %vm2951, %v5005, 0
      %5018 = vmatprep.subr.mxu0 0.0
      %5019 = vmatpush1.msra.mxu0 %v5007
      %5020 = vmatprep.subr.mxu0 0.0
      %5021 = vmatpush1.msra.mxu0 %v5008
      %5022 = vmatprep.subr.mxu0 0.0
      %5023 = vmatpush1.msra.mxu0 %v5009
      %5024 = vmatprep.subr.mxu0 0.0
      %5025 = vmatpush1.msra.mxu0 %v5010
      %5026 = vmatprep.subr.mxu0 0.0
      %5027 = vmatpush1.msra.mxu0 %v5011
      %5028 = vmatprep.subr.mxu0 0.0
      %5029 = vmatpush1.msra.mxu0 %v5012
      %5030 = vmatprep.subr.mxu0 0.0
      %5031 = vmatpush1.msra.mxu0 %v5013
      %5032 = vmatprep.subr.mxu0 0.0
      %5033 = vmatpush1.msra.mxu0 %v5014
      %5034 = vmatprep.subr.mxu0 0.0
      %5035 = vmatpush1.msra.mxu0 0.0
      %5036 = vmatprep.subr.mxu0 0.0
      %5037 = vmatpush1.msra.mxu0 0.0
      %5038 = vmatprep.subr.mxu0 0.0
      %5039 = vmatpush1.msra.mxu0 0.0
      %5040 = vmatprep.subr.mxu0 0.0
      %5041 = vmatpush1.msra.mxu0 0.0
      %5042 = vmatprep.subr.mxu0 0.0
      %5043 = vmatpush1.msra.mxu0 0.0
      %5044 = vmatprep.subr.mxu0 0.0
      %5045 = vmatpush1.msra.mxu0 0.0
      %5046 = vmatprep.subr.mxu0 0.0
      %5047 = vmatpush1.msra.mxu0 0.0
      %5048 = vmatprep.subr.mxu0 0.0
      %5049 = vmatpush1.msra.mxu0 0.0
      %5050 = vmatprep.subr.mxu0 0.0
      %5051 = vmatpush1.msra.mxu0 0.0
      %5052 = vmatprep.subr.mxu0 0.0
      %5053 = vmatpush1.msra.mxu0 0.0
      %5054 = vmatprep.subr.mxu0 0.0
      %5055 = vmatpush1.msra.mxu0 0.0
      %5056 = vmatprep.subr.mxu0 0.0
      %5057 = vmatpush1.msra.mxu0 0.0
      %5058 = vmatprep.subr.mxu0 0.0
      %5059 = vmatpush1.msra.mxu0 0.0
      %5060 = vmatprep.subr.mxu0 0.0
      %5061 = vmatpush1.msra.mxu0 0.0
      %5062 = vmatprep.subr.mxu0 0.0
      %5063 = vmatpush1.msra.mxu0 0.0
      %5064 = vmatprep.subr.mxu0 0.0
      %5065 = vmatpush1.msra.mxu0 0.0
      %5066 = vmatprep.subr.mxu0 0.0
      %5067 = vmatpush1.msra.mxu0 0.0
      %5068 = vmatprep.subr.mxu0 0.0
      %5069 = vmatpush1.msra.mxu0 0.0
      %5070 = vmatprep.subr.mxu0 0.0
      %5071 = vmatpush1.msra.mxu0 0.0
      %5072 = vmatprep.subr.mxu0 0.0
      %5073 = vmatpush1.msra.mxu0 0.0
      %5074 = vmatprep.subr.mxu0 0.0
      %5075 = vmatpush1.msra.mxu0 0.0
      %5076 = vmatprep.subr.mxu0 0.0
      %5077 = vmatpush1.msra.mxu0 0.0
      %5078 = vmatprep.subr.mxu0 0.0
      %5079 = vmatpush1.msra.mxu0 0.0
      %5080 = vmatprep.subr.mxu0 0.0
      %5081 = vmatpush1.msra.mxu0 0.0
      %5082 = vmatprep.mubr.f32.mxu0 0.0
      %5083 = vmatmul.mubr.f32.gmra.mrb[0].mxu0 %v5016
      %v5084 = vpop.f32.mrb[0].mxu0
      %v5085 = vadd.f32 0.0, %v5084
      %v5086 = vpop.f32.mrb[0].mxu0
      %5087 = vdwg.mxu0
      %v5088 = vadd.f32 %v4918, %v5085
      %s5089 = scalar_lea.vmem %s22, 1
      %v5090 = vld [vmem:[%s5089] sm:$0x1]
      %v5092 = vlaneseq
      %v5093 = vshrl.u32 %v5092, 7
      %v5094 = vsub.s32 0, %v5093
      %v5095 = vrot.slane %v5090, %v5094
      %v5097 = vadd.f32 %v5088, %v5095
      %v5098 = vld [vmem:[%s23] sm:$0xff]
      %v5099 = vld [vmem:[%s23 + $0x8] sm:$0xff]
      %v5100 = vld [vmem:[%s23 + $0x10] sm:$0xff]
      %v5101 = vld [vmem:[%s23 + $0x18] sm:$0xff]
      %v5102 = vld [vmem:[%s24] sm:$0x1]
      %v5104 = vlaneseq
      %v5105 = vshrl.u32 %v5104, 7
      %v5106 = vsub.s32 0, %v5105
      %v5107 = vrot.slane %v5102, %v5106
      %v5110 = vsel %vm979, %v5097, 0
      %5112 = vmatprep.subr.mxu0 0.0
      %5113 = vmatpush1.msra.mxu0 %v5098
      %5114 = vmatprep.subr.mxu0 0.0
      %5115 = vmatpush1.msra.mxu0 %v5099
      %5116 = vmatprep.subr.mxu0 0.0
      %5117 = vmatpush1.msra.mxu0 %v5100
      %5118 = vmatprep.subr.mxu0 0.0
      %5119 = vmatpush1.msra.mxu0 %v5101
      %5120 = vmatprep.subr.mxu0 0.0
      %5121 = vmatpush1.msra.mxu0 0.0
      %5122 = vmatprep.subr.mxu0 0.0
      %5123 = vmatpush1.msra.mxu0 0.0
      %5124 = vmatprep.subr.mxu0 0.0
      %5125 = vmatpush1.msra.mxu0 0.0
      %5126 = vmatprep.subr.mxu0 0.0
      %5127 = vmatpush1.msra.mxu0 0.0
      %5128 = vmatprep.subr.mxu0 0.0
      %5129 = vmatpush1.msra.mxu0 0.0
      %5130 = vmatprep.subr.mxu0 0.0
      %5131 = vmatpush1.msra.mxu0 0.0
      %5132 = vmatprep.subr.mxu0 0.0
      %5133 = vmatpush1.msra.mxu0 0.0
      %5134 = vmatprep.subr.mxu0 0.0
      %5135 = vmatpush1.msra.mxu0 0.0
      %5136 = vmatprep.subr.mxu0 0.0
      %5137 = vmatpush1.msra.mxu0 0.0
      %5138 = vmatprep.subr.mxu0 0.0
      %5139 = vmatpush1.msra.mxu0 0.0
      %5140 = vmatprep.subr.mxu0 0.0
      %5141 = vmatpush1.msra.mxu0 0.0
      %5142 = vmatprep.subr.mxu0 0.0
      %5143 = vmatpush1.msra.mxu0 0.0
      %5144 = vmatprep.subr.mxu0 0.0
      %5145 = vmatpush1.msra.mxu0 0.0
      %5146 = vmatprep.subr.mxu0 0.0
      %5147 = vmatpush1.msra.mxu0 0.0
      %5148 = vmatprep.subr.mxu0 0.0
      %5149 = vmatpush1.msra.mxu0 0.0
      %5150 = vmatprep.subr.mxu0 0.0
      %5151 = vmatpush1.msra.mxu0 0.0
      %5152 = vmatprep.subr.mxu0 0.0
      %5153 = vmatpush1.msra.mxu0 0.0
      %5154 = vmatprep.subr.mxu0 0.0
      %5155 = vmatpush1.msra.mxu0 0.0
      %5156 = vmatprep.subr.mxu0 0.0
      %5157 = vmatpush1.msra.mxu0 0.0
      %5158 = vmatprep.subr.mxu0 0.0
      %5159 = vmatpush1.msra.mxu0 0.0
      %5160 = vmatprep.subr.mxu0 0.0
      %5161 = vmatpush1.msra.mxu0 0.0
      %5162 = vmatprep.subr.mxu0 0.0
      %5163 = vmatpush1.msra.mxu0 0.0
      %5164 = vmatprep.subr.mxu0 0.0
      %5165 = vmatpush1.msra.mxu0 0.0
      %5166 = vmatprep.subr.mxu0 0.0
      %5167 = vmatpush1.msra.mxu0 0.0
      %5168 = vmatprep.subr.mxu0 0.0
      %5169 = vmatpush1.msra.mxu0 0.0
      %5170 = vmatprep.subr.mxu0 0.0
      %5171 = vmatpush1.msra.mxu0 0.0
      %5172 = vmatprep.subr.mxu0 0.0
      %5173 = vmatpush1.msra.mxu0 0.0
      %5174 = vmatprep.subr.mxu0 0.0
      %5175 = vmatpush1.msra.mxu0 0.0
      %5176 = vmatprep.mubr.f32.mxu0 0.0
      %5177 = vmatmul.mubr.f32.gmra.mrb[0].mxu0 %v5110
      %v5178 = vpop.f32.mrb[0].mxu0
      %v5179 = vadd.f32 %v5107, %v5178
      %v5180 = vpop.f32.mrb[0].mxu0
      %5181 = vdwg.mxu0
      %5182 = vst.msk [vmem:[%s793] sm:$0xff] %vm897, %v5179
      %p5183 = scmp.lt.s32.totalorder %s36, 1
      %s5184 = scalar_select %p5183, %s36, 1
      %s5185 = smul.addr %s5184, 8
      %s5186 = scalar_lea.vmem %s25, %s5185
      // Predicated region
      $region121: #{_lambda_.1} parent=119 // pred_check
        %p5187 = pneg %p594
      $region122: #{_lambda_.1} parent=119 // pred_check_branch
        %5189 = sbr.rel (%p5187) target = $region124
      $region123: #{_lambda_.1} parent=119 // pred_region
        _
      $region124: #{_lambda_.1} parent=119 // pred_fallthru
        _
    $region120: #{_lambda_.1} parent=5 // pred_fallthru
      _
    %p5190 = scmp.le.s32.totalorder 2, %s31
    // Predicated region
    $region125: #{_lambda_.1} parent=5 // pred_check
      %p5191 = pneg %p5190
    $region126: #{_lambda_.1} parent=5 // pred_check_branch
      %5193 = sbr.rel (%p5191) target = $region128
    $region127: #{_lambda_.1} parent=5 // pred_region
      %s5194 = ssub.s32 %s31, 2
      // Predicated region
      $region129: #{_lambda_.1} parent=127 // pred_check
        %p5195 = pneg %p600
      $region130: #{_lambda_.1} parent=127 // pred_check_branch
        %5197 = sbr.rel (%p5195) target = $region132
      $region131: #{_lambda_.1} parent=127 // pred_region
        %p5198 = scmp.lt.s32.totalorder %s37, 1
        %s5199 = scalar_select %p5198, %s37, 1
        %s5200 = smul.addr %s5199, 8
        %s5201 = scalar_lea.vmem %s25, %s5200
      $region132: #{_lambda_.1} parent=127 // pred_fallthru
        _
    $region128: #{_lambda_.1} parent=5 // pred_fallthru
      _
  $region6: #{_lambda_.1} parent=0 // loop_footer
    %s35 = sadd.s32 1, %s31
  $region7: #{_lambda_.1} parent=0 // loop_footer_branch
    %30 = sbr.rel target = $region3
  $region8: #{_lambda_.1} parent=0 // loop_exit
    _

</llo_original>
